<compile_context>
chip_gen: v6e
topology: v6e:2x2x1
jax: 0.10.0
libtpu: 0.0.40
codegen_flags: <defaults>
</compile_context>

<pallas_src>
import jax
import jax.numpy as jnp
from jax import lax
from jax.experimental import pallas as pl
from jax.experimental.pallas import tpu as pltpu

# ----- hyperparameters (small, consistent with PILES args) -----
D_EMB = 16
MARKER_NUM = 8
H_DIM = 16
MAX_SEQ_LEN = 16
BETA = 0.6
SEQ_TILE = 8          # sequences per grid step (one per f32 sublane)


# ---------------- fused Pallas kernel (one grid step == SEQ_TILE sequences) --------

def _piles_forward_kernel(t_ref,               # (S, l)       timestamps
                          mk_ref,              # (S, l)       markers (float)
                          eps_ref,             # (S, L_out)   exp(1) draws
                          wmT_ref,             # (m, d)       W_m transposed
                          wt_ref, bt_ref,      # (1, d)
                          wh_ref, wf_ref,      # (d, m)       fused W_tr@W1[:H], W_tr@W1[H:]
                          bc_ref,              # (1, m)       fused bias
                          out_ref):            # (S, 2*L_out) [Ht | Hm]
    S, l = t_ref.shape
    m, d = wmT_ref.shape
    L_out = out_ref.shape[1] // 2
    f32, i32 = jnp.float32, jnp.int32

    # ---- loop-invariant loads (hoisted once) ----
    t = t_ref[...]
    mk = mk_ref[...]
    eps_all = eps_ref[...]
    wmT = wmT_ref[...]
    wt = wt_ref[...]
    bt = bt_ref[...]
    Wh = wh_ref[...]
    Wf = wf_ref[...]
    bc = bc_ref[...]

    col_l = lax.broadcasted_iota(i32, (S, l), 1)
    col_L = lax.broadcasted_iota(i32, (S, L_out), 1)
    m_iota = lax.broadcasted_iota(i32, (S, m), 1)
    m_iota_f = m_iota.astype(f32)

    def embed(tv, mv_int):
        # one row per sequence: beta*W_m[:,marker] + (1-beta)*(W_t*t + b_t), 0 if t<0
        onehot = (m_iota == mv_int).astype(f32)                      # (S, m)
        em = jnp.dot(onehot, wmT, preferred_element_type=f32)        # (S, d)
        out = BETA * em + (1.0 - BETA) * (wt * tv + bt)
        return out * (tv >= 0.0).astype(f32)

    # ---- initial state: H = [x[0]], F = x[1:] ----
    t0 = t[:, 0:1]
    mk0 = mk[:, 0:1]
    neg1 = jnp.full((S, L_out), -1.0, f32)
    Ht0 = jnp.where(col_L == 0, t0, neg1)
    Hm0 = jnp.where(col_L == 0, mk0, neg1)
    sumH0 = embed(t0, (mk0 + 0.5).astype(i32))

    valid = (t >= 0.0).astype(f32)                                   # non-padded rows
    nvalid = jnp.sum(valid, axis=1, keepdims=True)                   # (S, 1)
    vF = valid * (col_l >= 1).astype(f32)                            # valid F rows
    mk_i = (mk + 0.5).astype(i32)
    countsF = jnp.zeros((S, m), f32)
    for j in range(1, l):                                            # static, init-only
        countsF = countsF + vF[:, j:j + 1] * (m_iota == mk_i[:, j:j + 1]).astype(f32)
    tsumF = jnp.sum(t * vF, axis=1, keepdims=True)
    nvF = jnp.sum(vF, axis=1, keepdims=True)
    sumF0 = (BETA * jnp.dot(countsF, wmT, preferred_element_type=f32)
             + (1.0 - BETA) * (wt * tsumF + bt * nvF))

    carry0 = (Ht0, Hm0, sumH0, sumF0,
              jnp.zeros((S, 1), i32),      # cur_index
              jnp.ones((S, 1), i32),       # len(H)
              t0,                          # cur_timestamp
              jnp.zeros((S, 1), i32))      # done flag

    def body(i, carry):
        Ht, Hm, sumH, sumF, cur_idx, h_len, cur_t, done = carry
        active = jnp.logical_and(done == 0, cur_idx < l - 1)         # (S, 1) bool

        # ---- impute: masked mean-pool + fused projection/linear1 ----
        # TODO(synk): reference Transformer class is not provided; stand-in is a
        # masked mean-pool over the sequence followed by a linear projection.
        f_start = cur_idx + 1                                        # F == x[f_start:]
        nF = jnp.maximum(nvalid - f_start.astype(f32), 1.0)
        pooled_H = sumH / h_len.astype(f32)
        pooled_F = sumF / nF
        logits = (jnp.dot(pooled_H, Wh, preferred_element_type=f32)
                  + jnp.dot(pooled_F, Wf, preferred_element_type=f32) + bc)

        lmax = jnp.max(logits, axis=1, keepdims=True)
        mu = jnp.min(jnp.where(logits == lmax, m_iota_f, float(m)),
                     axis=1, keepdims=True)                          # first argmax
        # softmax(logits)[argmax] == 1 / sum(exp(logits - lmax)), hence
        # delta_t = eps / lam_val == eps * sum_e   (no softmax materialised)
        sum_e = jnp.sum(jnp.exp(logits - lmax), axis=1, keepdims=True)
        eps = jnp.sum(jnp.where(col_L == i, eps_all, 0.0), axis=1, keepdims=True)
        delta_t = eps * sum_e

        # F[0] == x[cur_index + 1]
        fmask = (col_l == f_start).astype(f32)
        f0_t = jnp.sum(t * fmask, axis=1, keepdims=True)
        f0_m = jnp.sum(mk * fmask, axis=1, keepdims=True)

        t_imp = cur_t + delta_t
        take_impute = t_imp < f0_t                                   # (S, 1) bool

        new_t = jnp.where(take_impute, t_imp, f0_t)
        new_m = jnp.where(take_impute, mu, f0_m)
        emb_new = embed(new_t, (new_m + 0.5).astype(i32))            # appended row

        sumH_n = sumH + emb_new
        sumF_n = jnp.where(take_impute, sumF, sumF - emb_new)
        cur_idx_n = jnp.where(take_impute, cur_idx, cur_idx + 1)
        h_len_n = h_len + 1
        # TODO(synk): reference has no explicit cap on len(H); cap at max_seq_len
        # so the fixed-length padded output stays well-defined.
        done_n = jnp.maximum(
            done, jnp.logical_or(new_t < 0.0, h_len_n >= L_out).astype(i32))

        wmask = jnp.logical_and(col_L == h_len, active)
        Ht_n = jnp.where(wmask, new_t, Ht)
        Hm_n = jnp.where(wmask, new_m, Hm)

        def sel(n, o):
            return jnp.where(active, n, o)

        return (Ht_n, Hm_n, sel(sumH_n, sumH), sel(sumF_n, sumF),
                sel(cur_idx_n, cur_idx), sel(h_len_n, h_len),
                sel(new_t, cur_t), sel(done_n, done))

    # each active iteration appends exactly one row, so L_out-1 steps is exact.
    # (serial dependence chain; sweep unroll=3..5 vs True if vreg spills show up)
    Ht, Hm, *_ = lax.fori_loop(0, L_out - 1, body, carry0, unroll=True)

    out_ref[...] = jnp.concatenate([Ht, Hm], axis=1)                 # (S, 2*L_out)


# ---------------- pallas_call wrapper ----------------

@jax.jit
def piles_forward(x_batch, eps, params):
    """x_batch: (B, l, 2) [timestamp, marker]; eps: (B, MAX_SEQ_LEN) exp(1) draws."""
    B, l, _ = x_batch.shape
    d, m = params["W_m"].shape
    Hd = params["W_tr"].shape[1]
    L_out = MAX_SEQ_LEN

    B_pad = ((B + SEQ_TILE - 1) // SEQ_TILE) * SEQ_TILE
    pad = B_pad - B

    xb = x_batch.astype(jnp.float32)
    t_all = jnp.pad(xb[:, :, 0], ((0, pad), (0, 0)))                 # (B_pad, l)
    mk_all = jnp.pad(xb[:, :, 1], ((0, pad), (0, 0)))                # (B_pad, l)
    eps_all = jnp.pad(eps.astype(jnp.float32), ((0, pad), (0, 0)))   # (B_pad, L_out)

    wmT = jnp.transpose(params["W_m"]).astype(jnp.float32)           # (m, d)
    wt = params["W_t"].reshape(1, d).astype(jnp.float32)
    bt = params["b_t"].reshape(1, d).astype(jnp.float32)
    W1 = params["W1"].astype(jnp.float32)
    Wtr = params["W_tr"].astype(jnp.float32)
    btr = params["b_tr"].astype(jnp.float32)
    Wh = Wtr @ W1[:Hd]                                               # (d, m)
    Wf = Wtr @ W1[Hd:]                                               # (d, m)
    bc = (btr @ W1[:Hd] + btr @ W1[Hd:] + params["b1"].astype(jnp.float32)
          ).reshape(1, m)

    def full(shape):
        return pl.BlockSpec(shape, lambda b, _s=shape: (0,) * len(_s))

    def row(cols):
        return pl.BlockSpec((SEQ_TILE, cols), lambda b: (b, 0))

    out = pl.pallas_call(
        _piles_forward_kernel,
        out_shape=jax.ShapeDtypeStruct((B_pad, 2 * L_out), jnp.float32),
        grid_spec=pltpu.PrefetchScalarGridSpec(
            num_scalar_prefetch=0,
            grid=(B_pad // SEQ_TILE,),
            in_specs=[
                row(l), row(l), row(L_out),                          # t, marker, eps
                full((m, d)), full((1, d)), full((1, d)),            # W_m^T, W_t, b_t
                full((d, m)), full((d, m)), full((1, m)),            # Wh, Wf, bc
            ],
            out_specs=pl.BlockSpec((SEQ_TILE, 2 * L_out), lambda b: (b, 0)),
        ),
        compiler_params=pltpu.CompilerParams(
            dimension_semantics=("parallel",)),
    )(t_all, mk_all, eps_all, wmT, wt, bt, Wh, Wf, bc)

    # kernel writes [Ht(L) | Hm(L)] per sequence; present as (B, L, 2) like the reference
    out = out[:B].reshape(B, 2, L_out)
    return jnp.transpose(out, (0, 2, 1))


# ---------------- main ----------------

if __name__ == "__main__":
    key = jax.random.PRNGKey(0)
    ks = jax.random.split(key, 10)

    params = {
        # Embedding: W_m (d_emb, marker_num), W_t / b_t (d_emb,)
        "W_m":  jax.random.normal(ks[0], (D_EMB, MARKER_NUM), jnp.float32),
        "W_t":  jax.random.normal(ks[1], (D_EMB,), jnp.float32),
        "b_t":  jax.random.normal(ks[2], (D_EMB,), jnp.float32),
        # Transformer stand-in projection d_emb -> H_dim
        "W_tr": jax.random.normal(ks[3], (D_EMB, H_DIM), jnp.float32) * 0.1,
        "b_tr": jax.random.normal(ks[4], (H_DIM,), jnp.float32) * 0.1,
        # linear1: Linear(2*H_dim, marker_num)
        "W1":   jax.random.normal(ks[5], (2 * H_DIM, MARKER_NUM), jnp.float32) * 0.1,
        "b1":   jax.random.normal(ks[6], (MARKER_NUM,), jnp.float32) * 0.1,
    }

    # Input: batch of event sequences, each row = [timestamp, marker]
    B, L = 16, 6   # 16 sequences -> grid of 2 tiles (keeps both v7x TCs busy)
    times = jnp.sort(jax.random.uniform(ks[7], (B, L), minval=0.0, maxval=10.0), axis=1)
    markers = jax.random.randint(ks[8], (B, L), 0, MARKER_NUM).astype(jnp.float32)
    x_batch = jnp.stack([times, markers], axis=-1)                   # (B, L, 2)

    # host-side exponential(1) draws (random.expovariate(1) in the reference)
    eps = jax.random.exponential(ks[9], (B, MAX_SEQ_LEN), dtype=jnp.float32)

    out = piles_forward(x_batch, eps, params)
    out = jax.block_until_ready(out)

    assert out.shape == (B, MAX_SEQ_LEN, 2), out.shape
    # first H row is always the first raw event, copied verbatim
    assert bool(jnp.allclose(out[:, 0, :], x_batch[:, 0, :])), "row-0 mismatch"
    assert bool(jnp.all(jnp.isfinite(out))), "non-finite output"
    print("KERNEL_OK")
</pallas_src>

<mosaic_0001>
module attributes {stable_mosaic.version = 11 : i64} {
  func.func @_piles_forward_kernel(%arg0: i32, %arg1: memref<8x6xf32, #tpu.memory_space<vmem>>, %arg2: memref<8x6xf32, #tpu.memory_space<vmem>>, %arg3: memref<8x16xf32, #tpu.memory_space<vmem>>, %arg4: memref<8x16xf32, #tpu.memory_space<vmem>>, %arg5: memref<1x16xf32, #tpu.memory_space<vmem>>, %arg6: memref<1x16xf32, #tpu.memory_space<vmem>>, %arg7: memref<16x8xf32, #tpu.memory_space<vmem>>, %arg8: memref<16x8xf32, #tpu.memory_space<vmem>>, %arg9: memref<1x8xf32, #tpu.memory_space<vmem>>, %arg10: memref<8x32xf32, #tpu.memory_space<vmem>>) attributes {dimension_semantics = [#tpu.dimension_semantics<parallel>], iteration_bounds = array<i64: 2>, scalar_prefetch = 0 : i64, scratch_operands = 0 : i64, tpu.core_type = #tpu.core_type<tc>, window_params = [{transform_indices = @transform_0, window_bounds = array<i64: 8, 6>}, {transform_indices = @transform_1, window_bounds = array<i64: 8, 6>}, {transform_indices = @transform_2, window_bounds = array<i64: 8, 16>}, {pipeline_mode = #tpu.pipeline_mode<synchronous>, transform_indices = @transform_3, window_bounds = array<i64: 8, 16>}, {pipeline_mode = #tpu.pipeline_mode<synchronous>, transform_indices = @transform_4, window_bounds = array<i64: 1, 16>}, {pipeline_mode = #tpu.pipeline_mode<synchronous>, transform_indices = @transform_5, window_bounds = array<i64: 1, 16>}, {pipeline_mode = #tpu.pipeline_mode<synchronous>, transform_indices = @transform_6, window_bounds = array<i64: 16, 8>}, {pipeline_mode = #tpu.pipeline_mode<synchronous>, transform_indices = @transform_7, window_bounds = array<i64: 16, 8>}, {pipeline_mode = #tpu.pipeline_mode<synchronous>, transform_indices = @transform_8, window_bounds = array<i64: 1, 8>}, {transform_indices = @transform_9, window_bounds = array<i64: 8, 32>}]} {
    %c0 = arith.constant 0 : index
    %c0_0 = arith.constant 0 : index
    %0 = vector.load %arg1[%c0, %c0_0] : memref<8x6xf32, #tpu.memory_space<vmem>>, vector<8x6xf32>
    %c0_1 = arith.constant 0 : index
    %c0_2 = arith.constant 0 : index
    %1 = vector.load %arg2[%c0_1, %c0_2] : memref<8x6xf32, #tpu.memory_space<vmem>>, vector<8x6xf32>
    %c0_3 = arith.constant 0 : index
    %c0_4 = arith.constant 0 : index
    %2 = vector.load %arg3[%c0_3, %c0_4] : memref<8x16xf32, #tpu.memory_space<vmem>>, vector<8x16xf32>
    %c0_5 = arith.constant 0 : index
    %c0_6 = arith.constant 0 : index
    %3 = vector.load %arg4[%c0_5, %c0_6] : memref<8x16xf32, #tpu.memory_space<vmem>>, vector<8x16xf32>
    %c0_7 = arith.constant 0 : index
    %c0_8 = arith.constant 0 : index
    %4 = vector.load %arg5[%c0_7, %c0_8] : memref<1x16xf32, #tpu.memory_space<vmem>>, vector<1x16xf32>
    %c0_9 = arith.constant 0 : index
    %c0_10 = arith.constant 0 : index
    %5 = vector.load %arg6[%c0_9, %c0_10] : memref<1x16xf32, #tpu.memory_space<vmem>>, vector<1x16xf32>
    %c0_11 = arith.constant 0 : index
    %c0_12 = arith.constant 0 : index
    %6 = vector.load %arg7[%c0_11, %c0_12] : memref<16x8xf32, #tpu.memory_space<vmem>>, vector<16x8xf32>
    %c0_13 = arith.constant 0 : index
    %c0_14 = arith.constant 0 : index
    %7 = vector.load %arg8[%c0_13, %c0_14] : memref<16x8xf32, #tpu.memory_space<vmem>>, vector<16x8xf32>
    %c0_15 = arith.constant 0 : index
    %c0_16 = arith.constant 0 : index
    %8 = vector.load %arg9[%c0_15, %c0_16] : memref<1x8xf32, #tpu.memory_space<vmem>>, vector<1x8xf32>
    %9 = tpu.iota {dimensions = array<i32: 1>} : vector<8x6xi32>
    %10 = tpu.iota {dimensions = array<i32: 1>} : vector<8x16xi32>
    %11 = tpu.iota {dimensions = array<i32: 1>} : vector<8x8xi32>
    %12 = arith.sitofp %11 : vector<8x8xi32> to vector<8x8xf32>
    %13 = vector.extract_strided_slice %0 {offsets = [0, 0], sizes = [8, 1], strides = [1, 1]} : vector<8x6xf32> to vector<8x1xf32>
    %14 = vector.extract_strided_slice %1 {offsets = [0, 0], sizes = [8, 1], strides = [1, 1]} : vector<8x6xf32> to vector<8x1xf32>
    %cst = arith.constant -1.000000e+00 : f32
    %15 = vector.broadcast %cst : f32 to vector<8x16xf32>
    %c0_i32 = arith.constant 0 : i32
    %16 = vector.broadcast %c0_i32 : i32 to vector<8x16xi32>
    %17 = arith.cmpi eq, %10, %16 : vector<8x16xi32>
    %18 = vector.shape_cast %13 : vector<8x1xf32> to vector<8x1xf32>
    %19 = vector.broadcast %18 : vector<8x1xf32> to vector<8x16xf32>
    %20 = arith.select %17, %19, %15 : vector<8x16xi1>, vector<8x16xf32>
    %c0_i32_17 = arith.constant 0 : i32
    %21 = vector.broadcast %c0_i32_17 : i32 to vector<8x16xi32>
    %22 = arith.cmpi eq, %10, %21 : vector<8x16xi32>
    %23 = vector.shape_cast %14 : vector<8x1xf32> to vector<8x1xf32>
    %24 = vector.broadcast %23 : vector<8x1xf32> to vector<8x16xf32>
    %25 = arith.select %22, %24, %15 : vector<8x16xi1>, vector<8x16xf32>
    %cst_18 = arith.constant 5.000000e-01 : f32
    %26 = vector.broadcast %cst_18 : f32 to vector<8x1xf32>
    %27 = arith.addf %14, %26 : vector<8x1xf32>
    %28 = arith.fptosi %27 : vector<8x1xf32> to vector<8x1xi32>
    %29 = vector.broadcast %28 : vector<8x1xi32> to vector<8x8xi32>
    %30 = arith.cmpi eq, %11, %29 : vector<8x8xi32>
    %31 = arith.extui %30 : vector<8x8xi1> to vector<8x8xi32>
    %32 = arith.sitofp %31 : vector<8x8xi32> to vector<8x8xf32>
    %cst_19 = arith.constant dense<0.000000e+00> : vector<8x16xf32>
    %33 = tpu.matmul %32, %3, %cst_19 {dimension_numbers = #tpu.dot_dimension_numbers<[1], [0], [0], [1], [0, 0, 1, 1], [], []>} : vector<8x8xf32>, vector<8x16xf32>, vector<8x16xf32> -> vector<8x16xf32>
    %cst_20 = arith.constant 6.000000e-01 : f32
    %34 = vector.broadcast %cst_20 : f32 to vector<8x16xf32>
    %35 = arith.mulf %34, %33 : vector<8x16xf32>
    %36 = vector.broadcast %4 : vector<1x16xf32> to vector<8x16xf32>
    %37 = vector.broadcast %13 : vector<8x1xf32> to vector<8x16xf32>
    %38 = arith.mulf %36, %37 : vector<8x16xf32>
    %39 = vector.broadcast %5 : vector<1x16xf32> to vector<8x16xf32>
    %40 = arith.addf %38, %39 : vector<8x16xf32>
    %cst_21 = arith.constant 4.000000e-01 : f32
    %41 = vector.broadcast %cst_21 : f32 to vector<8x16xf32>
    %42 = arith.mulf %41, %40 : vector<8x16xf32>
    %43 = arith.addf %35, %42 : vector<8x16xf32>
    %cst_22 = arith.constant 0.000000e+00 : f32
    %44 = vector.broadcast %cst_22 : f32 to vector<8x1xf32>
    %45 = arith.cmpf oge, %13, %44 : vector<8x1xf32>
    %46 = arith.extui %45 : vector<8x1xi1> to vector<8x1xi32>
    %47 = arith.sitofp %46 : vector<8x1xi32> to vector<8x1xf32>
    %48 = vector.broadcast %47 : vector<8x1xf32> to vector<8x16xf32>
    %49 = arith.mulf %43, %48 : vector<8x16xf32>
    %cst_23 = arith.constant 0.000000e+00 : f32
    %50 = vector.broadcast %cst_23 : f32 to vector<8x6xf32>
    %51 = arith.cmpf oge, %0, %50 : vector<8x6xf32>
    %52 = arith.extui %51 : vector<8x6xi1> to vector<8x6xi32>
    %53 = arith.sitofp %52 : vector<8x6xi32> to vector<8x6xf32>
    %cst_24 = arith.constant dense<0.000000e+00> : vector<8xf32>
    %54 = vector.multi_reduction <add>, %53, %cst_24 [1] : vector<8x6xf32> to vector<8xf32>
    %55 = vector.shape_cast %54 : vector<8xf32> to vector<8x1xf32>
    %c1_i32 = arith.constant 1 : i32
    %56 = vector.broadcast %c1_i32 : i32 to vector<8x6xi32>
    %57 = arith.cmpi sge, %9, %56 : vector<8x6xi32>
    %58 = arith.extui %57 : vector<8x6xi1> to vector<8x6xi32>
    %59 = arith.sitofp %58 : vector<8x6xi32> to vector<8x6xf32>
    %60 = arith.mulf %53, %59 : vector<8x6xf32>
    %cst_25 = arith.constant 5.000000e-01 : f32
    %61 = vector.broadcast %cst_25 : f32 to vector<8x6xf32>
    %62 = arith.addf %1, %61 : vector<8x6xf32>
    %63 = arith.fptosi %62 : vector<8x6xf32> to vector<8x6xi32>
    %cst_26 = arith.constant 0.000000e+00 : f32
    %64 = vector.broadcast %cst_26 : f32 to vector<8x8xf32>
    %65 = vector.extract_strided_slice %60 {offsets = [0, 1], sizes = [8, 1], strides = [1, 1]} : vector<8x6xf32> to vector<8x1xf32>
    %66 = vector.extract_strided_slice %63 {offsets = [0, 1], sizes = [8, 1], strides = [1, 1]} : vector<8x6xi32> to vector<8x1xi32>
    %67 = vector.broadcast %66 : vector<8x1xi32> to vector<8x8xi32>
    %68 = arith.cmpi eq, %11, %67 : vector<8x8xi32>
    %69 = arith.extui %68 : vector<8x8xi1> to vector<8x8xi32>
    %70 = arith.sitofp %69 : vector<8x8xi32> to vector<8x8xf32>
    %71 = vector.broadcast %65 : vector<8x1xf32> to vector<8x8xf32>
    %72 = arith.mulf %71, %70 : vector<8x8xf32>
    %73 = arith.addf %64, %72 : vector<8x8xf32>
    %74 = vector.extract_strided_slice %60 {offsets = [0, 2], sizes = [8, 1], strides = [1, 1]} : vector<8x6xf32> to vector<8x1xf32>
    %75 = vector.extract_strided_slice %63 {offsets = [0, 2], sizes = [8, 1], strides = [1, 1]} : vector<8x6xi32> to vector<8x1xi32>
    %76 = vector.broadcast %75 : vector<8x1xi32> to vector<8x8xi32>
    %77 = arith.cmpi eq, %11, %76 : vector<8x8xi32>
    %78 = arith.extui %77 : vector<8x8xi1> to vector<8x8xi32>
    %79 = arith.sitofp %78 : vector<8x8xi32> to vector<8x8xf32>
    %80 = vector.broadcast %74 : vector<8x1xf32> to vector<8x8xf32>
    %81 = arith.mulf %80, %79 : vector<8x8xf32>
    %82 = arith.addf %73, %81 : vector<8x8xf32>
    %83 = vector.extract_strided_slice %60 {offsets = [0, 3], sizes = [8, 1], strides = [1, 1]} : vector<8x6xf32> to vector<8x1xf32>
    %84 = vector.extract_strided_slice %63 {offsets = [0, 3], sizes = [8, 1], strides = [1, 1]} : vector<8x6xi32> to vector<8x1xi32>
    %85 = vector.broadcast %84 : vector<8x1xi32> to vector<8x8xi32>
    %86 = arith.cmpi eq, %11, %85 : vector<8x8xi32>
    %87 = arith.extui %86 : vector<8x8xi1> to vector<8x8xi32>
    %88 = arith.sitofp %87 : vector<8x8xi32> to vector<8x8xf32>
    %89 = vector.broadcast %83 : vector<8x1xf32> to vector<8x8xf32>
    %90 = arith.mulf %89, %88 : vector<8x8xf32>
    %91 = arith.addf %82, %90 : vector<8x8xf32>
    %92 = vector.extract_strided_slice %60 {offsets = [0, 4], sizes = [8, 1], strides = [1, 1]} : vector<8x6xf32> to vector<8x1xf32>
    %93 = vector.extract_strided_slice %63 {offsets = [0, 4], sizes = [8, 1], strides = [1, 1]} : vector<8x6xi32> to vector<8x1xi32>
    %94 = vector.broadcast %93 : vector<8x1xi32> to vector<8x8xi32>
    %95 = arith.cmpi eq, %11, %94 : vector<8x8xi32>
    %96 = arith.extui %95 : vector<8x8xi1> to vector<8x8xi32>
    %97 = arith.sitofp %96 : vector<8x8xi32> to vector<8x8xf32>
    %98 = vector.broadcast %92 : vector<8x1xf32> to vector<8x8xf32>
    %99 = arith.mulf %98, %97 : vector<8x8xf32>
    %100 = arith.addf %91, %99 : vector<8x8xf32>
    %101 = vector.extract_strided_slice %60 {offsets = [0, 5], sizes = [8, 1], strides = [1, 1]} : vector<8x6xf32> to vector<8x1xf32>
    %102 = vector.extract_strided_slice %63 {offsets = [0, 5], sizes = [8, 1], strides = [1, 1]} : vector<8x6xi32> to vector<8x1xi32>
    %103 = vector.broadcast %102 : vector<8x1xi32> to vector<8x8xi32>
    %104 = arith.cmpi eq, %11, %103 : vector<8x8xi32>
    %105 = arith.extui %104 : vector<8x8xi1> to vector<8x8xi32>
    %106 = arith.sitofp %105 : vector<8x8xi32> to vector<8x8xf32>
    %107 = vector.broadcast %101 : vector<8x1xf32> to vector<8x8xf32>
    %108 = arith.mulf %107, %106 : vector<8x8xf32>
    %109 = arith.addf %100, %108 : vector<8x8xf32>
    %110 = arith.mulf %0, %60 : vector<8x6xf32>
    %cst_27 = arith.constant dense<0.000000e+00> : vector<8xf32>
    %111 = vector.multi_reduction <add>, %110, %cst_27 [1] : vector<8x6xf32> to vector<8xf32>
    %112 = vector.shape_cast %111 : vector<8xf32> to vector<8x1xf32>
    %cst_28 = arith.constant dense<0.000000e+00> : vector<8xf32>
    %113 = vector.multi_reduction <add>, %60, %cst_28 [1] : vector<8x6xf32> to vector<8xf32>
    %114 = vector.shape_cast %113 : vector<8xf32> to vector<8x1xf32>
    %cst_29 = arith.constant dense<0.000000e+00> : vector<8x16xf32>
    %115 = tpu.matmul %109, %3, %cst_29 {dimension_numbers = #tpu.dot_dimension_numbers<[1], [0], [0], [1], [0, 0, 1, 1], [], []>} : vector<8x8xf32>, vector<8x16xf32>, vector<8x16xf32> -> vector<8x16xf32>
    %cst_30 = arith.constant 6.000000e-01 : f32
    %116 = vector.broadcast %cst_30 : f32 to vector<8x16xf32>
    %117 = arith.mulf %116, %115 : vector<8x16xf32>
    %118 = vector.broadcast %4 : vector<1x16xf32> to vector<8x16xf32>
    %119 = vector.broadcast %112 : vector<8x1xf32> to vector<8x16xf32>
    %120 = arith.mulf %118, %119 : vector<8x16xf32>
    %121 = vector.broadcast %5 : vector<1x16xf32> to vector<8x16xf32>
    %122 = vector.broadcast %114 : vector<8x1xf32> to vector<8x16xf32>
    %123 = arith.mulf %121, %122 : vector<8x16xf32>
    %124 = arith.addf %120, %123 : vector<8x16xf32>
    %cst_31 = arith.constant 4.000000e-01 : f32
    %125 = vector.broadcast %cst_31 : f32 to vector<8x16xf32>
    %126 = arith.mulf %125, %124 : vector<8x16xf32>
    %127 = arith.addf %117, %126 : vector<8x16xf32>
    %c0_i32_32 = arith.constant 0 : i32
    %128 = vector.broadcast %c0_i32_32 : i32 to vector<8x1xi32>
    %c1_i32_33 = arith.constant 1 : i32
    %129 = vector.broadcast %c1_i32_33 : i32 to vector<8x1xi32>
    %c0_i32_34 = arith.constant 0 : i32
    %130 = vector.broadcast %c0_i32_34 : i32 to vector<8x1xi32>
    %c0_i32_35 = arith.constant 0 : i32
    %c0_i32_36 = arith.constant 0 : i32
    %131 = vector.broadcast %c0_i32_36 : i32 to vector<8x1xi32>
    %132 = arith.cmpi eq, %130, %131 : vector<8x1xi32>
    %c5_i32 = arith.constant 5 : i32
    %133 = vector.broadcast %c5_i32 : i32 to vector<8x1xi32>
    %134 = arith.cmpi slt, %128, %133 : vector<8x1xi32>
    %135 = arith.andi %132, %134 : vector<8x1xi1>
    %c1_i32_37 = arith.constant 1 : i32
    %136 = vector.broadcast %c1_i32_37 : i32 to vector<8x1xi32>
    %137 = arith.addi %128, %136 : vector<8x1xi32>
    %138 = arith.sitofp %137 : vector<8x1xi32> to vector<8x1xf32>
    %139 = arith.subf %55, %138 : vector<8x1xf32>
    %cst_38 = arith.constant 1.000000e+00 : f32
    %140 = vector.broadcast %cst_38 : f32 to vector<8x1xf32>
    %141 = arith.maximumf %139, %140 : vector<8x1xf32>
    %142 = arith.sitofp %129 : vector<8x1xi32> to vector<8x1xf32>
    %143 = vector.broadcast %142 : vector<8x1xf32> to vector<8x16xf32>
    %144 = arith.divf %49, %143 : vector<8x16xf32>
    %145 = vector.broadcast %141 : vector<8x1xf32> to vector<8x16xf32>
    %146 = arith.divf %127, %145 : vector<8x16xf32>
    %cst_39 = arith.constant dense<0.000000e+00> : vector<8x8xf32>
    %147 = tpu.matmul %144, %6, %cst_39 {dimension_numbers = #tpu.dot_dimension_numbers<[1], [0], [0], [1], [0, 0, 1, 1], [], []>} : vector<8x16xf32>, vector<16x8xf32>, vector<8x8xf32> -> vector<8x8xf32>
    %cst_40 = arith.constant dense<0.000000e+00> : vector<8x8xf32>
    %148 = tpu.matmul %146, %7, %cst_40 {dimension_numbers = #tpu.dot_dimension_numbers<[1], [0], [0], [1], [0, 0, 1, 1], [], []>} : vector<8x16xf32>, vector<16x8xf32>, vector<8x8xf32> -> vector<8x8xf32>
    %149 = arith.addf %147, %148 : vector<8x8xf32>
    %150 = vector.broadcast %8 : vector<1x8xf32> to vector<8x8xf32>
    %151 = arith.addf %149, %150 : vector<8x8xf32>
    %cst_41 = arith.constant dense<0xFF800000> : vector<8xf32>
    %152 = vector.multi_reduction <maximumf>, %151, %cst_41 [1] : vector<8x8xf32> to vector<8xf32>
    %153 = vector.shape_cast %152 : vector<8xf32> to vector<8x1xf32>
    %154 = vector.broadcast %153 : vector<8x1xf32> to vector<8x8xf32>
    %155 = arith.cmpf oeq, %151, %154 : vector<8x8xf32>
    %cst_42 = arith.constant 8.000000e+00 : f32
    %156 = vector.broadcast %cst_42 : f32 to vector<8x8xf32>
    %157 = arith.select %155, %12, %156 : vector<8x8xi1>, vector<8x8xf32>
    %cst_43 = arith.constant dense<0x7F800000> : vector<8xf32>
    %158 = vector.multi_reduction <minimumf>, %157, %cst_43 [1] : vector<8x8xf32> to vector<8xf32>
    %159 = vector.shape_cast %158 : vector<8xf32> to vector<8x1xf32>
    %160 = vector.broadcast %153 : vector<8x1xf32> to vector<8x8xf32>
    %161 = arith.subf %151, %160 : vector<8x8xf32>
    %162 = math.exp %161 : vector<8x8xf32>
    %cst_44 = arith.constant dense<0.000000e+00> : vector<8xf32>
    %163 = vector.multi_reduction <add>, %162, %cst_44 [1] : vector<8x8xf32> to vector<8xf32>
    %164 = vector.shape_cast %163 : vector<8xf32> to vector<8x1xf32>
    %165 = vector.broadcast %c0_i32_35 : i32 to vector<8x16xi32>
    %166 = arith.cmpi eq, %10, %165 : vector<8x16xi32>
    %cst_45 = arith.constant 0.000000e+00 : f32
    %167 = vector.broadcast %cst_45 : f32 to vector<8x16xf32>
    %168 = arith.select %166, %2, %167 : vector<8x16xi1>, vector<8x16xf32>
    %cst_46 = arith.constant dense<0.000000e+00> : vector<8xf32>
    %169 = vector.multi_reduction <add>, %168, %cst_46 [1] : vector<8x16xf32> to vector<8xf32>
    %170 = vector.shape_cast %169 : vector<8xf32> to vector<8x1xf32>
    %171 = arith.mulf %170, %164 : vector<8x1xf32>
    %172 = vector.broadcast %137 : vector<8x1xi32> to vector<8x6xi32>
    %173 = arith.cmpi eq, %9, %172 : vector<8x6xi32>
    %174 = arith.extui %173 : vector<8x6xi1> to vector<8x6xi32>
    %175 = arith.sitofp %174 : vector<8x6xi32> to vector<8x6xf32>
    %176 = arith.mulf %0, %175 : vector<8x6xf32>
    %cst_47 = arith.constant dense<0.000000e+00> : vector<8xf32>
    %177 = vector.multi_reduction <add>, %176, %cst_47 [1] : vector<8x6xf32> to vector<8xf32>
    %178 = vector.shape_cast %177 : vector<8xf32> to vector<8x1xf32>
    %179 = arith.mulf %1, %175 : vector<8x6xf32>
    %cst_48 = arith.constant dense<0.000000e+00> : vector<8xf32>
    %180 = vector.multi_reduction <add>, %179, %cst_48 [1] : vector<8x6xf32> to vector<8xf32>
    %181 = vector.shape_cast %180 : vector<8xf32> to vector<8x1xf32>
    %182 = arith.addf %13, %171 : vector<8x1xf32>
    %183 = arith.cmpf olt, %182, %178 : vector<8x1xf32>
    %184 = arith.select %183, %182, %178 : vector<8x1xi1>, vector<8x1xf32>
    %185 = arith.select %183, %159, %181 : vector<8x1xi1>, vector<8x1xf32>
    %cst_49 = arith.constant 5.000000e-01 : f32
    %186 = vector.broadcast %cst_49 : f32 to vector<8x1xf32>
    %187 = arith.addf %185, %186 : vector<8x1xf32>
    %188 = arith.fptosi %187 : vector<8x1xf32> to vector<8x1xi32>
    %189 = vector.broadcast %188 : vector<8x1xi32> to vector<8x8xi32>
    %190 = arith.cmpi eq, %11, %189 : vector<8x8xi32>
    %191 = arith.extui %190 : vector<8x8xi1> to vector<8x8xi32>
    %192 = arith.sitofp %191 : vector<8x8xi32> to vector<8x8xf32>
    %cst_50 = arith.constant dense<0.000000e+00> : vector<8x16xf32>
    %193 = tpu.matmul %192, %3, %cst_50 {dimension_numbers = #tpu.dot_dimension_numbers<[1], [0], [0], [1], [0, 0, 1, 1], [], []>} : vector<8x8xf32>, vector<8x16xf32>, vector<8x16xf32> -> vector<8x16xf32>
    %cst_51 = arith.constant 6.000000e-01 : f32
    %194 = vector.broadcast %cst_51 : f32 to vector<8x16xf32>
    %195 = arith.mulf %194, %193 : vector<8x16xf32>
    %196 = vector.broadcast %4 : vector<1x16xf32> to vector<8x16xf32>
    %197 = vector.broadcast %184 : vector<8x1xf32> to vector<8x16xf32>
    %198 = arith.mulf %196, %197 : vector<8x16xf32>
    %199 = vector.broadcast %5 : vector<1x16xf32> to vector<8x16xf32>
    %200 = arith.addf %198, %199 : vector<8x16xf32>
    %cst_52 = arith.constant 4.000000e-01 : f32
    %201 = vector.broadcast %cst_52 : f32 to vector<8x16xf32>
    %202 = arith.mulf %201, %200 : vector<8x16xf32>
    %203 = arith.addf %195, %202 : vector<8x16xf32>
    %cst_53 = arith.constant 0.000000e+00 : f32
    %204 = vector.broadcast %cst_53 : f32 to vector<8x1xf32>
    %205 = arith.cmpf oge, %184, %204 : vector<8x1xf32>
    %206 = arith.extui %205 : vector<8x1xi1> to vector<8x1xi32>
    %207 = arith.sitofp %206 : vector<8x1xi32> to vector<8x1xf32>
    %208 = vector.broadcast %207 : vector<8x1xf32> to vector<8x16xf32>
    %209 = arith.mulf %203, %208 : vector<8x16xf32>
    %210 = arith.addf %49, %209 : vector<8x16xf32>
    %211 = arith.subf %127, %209 : vector<8x16xf32>
    %212 = vector.shape_cast %183 : vector<8x1xi1> to vector<8x1xi1>
    %213 = vector.broadcast %212 : vector<8x1xi1> to vector<8x16xi1>
    %214 = arith.select %213, %127, %211 : vector<8x16xi1>, vector<8x16xf32>
    %c1_i32_54 = arith.constant 1 : i32
    %215 = vector.broadcast %c1_i32_54 : i32 to vector<8x1xi32>
    %216 = arith.addi %128, %215 : vector<8x1xi32>
    %217 = arith.select %183, %128, %216 : vector<8x1xi1>, vector<8x1xi32>
    %c1_i32_55 = arith.constant 1 : i32
    %218 = vector.broadcast %c1_i32_55 : i32 to vector<8x1xi32>
    %219 = arith.addi %129, %218 : vector<8x1xi32>
    %cst_56 = arith.constant 0.000000e+00 : f32
    %220 = vector.broadcast %cst_56 : f32 to vector<8x1xf32>
    %221 = arith.cmpf olt, %184, %220 : vector<8x1xf32>
    %c16_i32 = arith.constant 16 : i32
    %222 = vector.broadcast %c16_i32 : i32 to vector<8x1xi32>
    %223 = arith.cmpi sge, %219, %222 : vector<8x1xi32>
    %224 = arith.ori %221, %223 : vector<8x1xi1>
    %225 = arith.extui %224 : vector<8x1xi1> to vector<8x1xi32>
    %226 = arith.maxsi %130, %225 : vector<8x1xi32>
    %227 = vector.broadcast %129 : vector<8x1xi32> to vector<8x16xi32>
    %228 = arith.cmpi eq, %10, %227 : vector<8x16xi32>
    %229 = vector.broadcast %135 : vector<8x1xi1> to vector<8x16xi1>
    %230 = arith.andi %228, %229 : vector<8x16xi1>
    %231 = vector.shape_cast %184 : vector<8x1xf32> to vector<8x1xf32>
    %232 = vector.broadcast %231 : vector<8x1xf32> to vector<8x16xf32>
    %233 = arith.select %230, %232, %20 : vector<8x16xi1>, vector<8x16xf32>
    %234 = vector.shape_cast %185 : vector<8x1xf32> to vector<8x1xf32>
    %235 = vector.broadcast %234 : vector<8x1xf32> to vector<8x16xf32>
    %236 = arith.select %230, %235, %25 : vector<8x16xi1>, vector<8x16xf32>
    %237 = vector.shape_cast %135 : vector<8x1xi1> to vector<8x1xi1>
    %238 = vector.broadcast %237 : vector<8x1xi1> to vector<8x16xi1>
    %239 = arith.select %238, %210, %49 : vector<8x16xi1>, vector<8x16xf32>
    %240 = vector.shape_cast %135 : vector<8x1xi1> to vector<8x1xi1>
    %241 = vector.broadcast %240 : vector<8x1xi1> to vector<8x16xi1>
    %242 = arith.select %241, %214, %127 : vector<8x16xi1>, vector<8x16xf32>
    %243 = arith.select %135, %217, %128 : vector<8x1xi1>, vector<8x1xi32>
    %244 = arith.select %135, %219, %129 : vector<8x1xi1>, vector<8x1xi32>
    %245 = arith.select %135, %184, %13 : vector<8x1xi1>, vector<8x1xf32>
    %246 = arith.select %135, %226, %130 : vector<8x1xi1>, vector<8x1xi32>
    %c1_i32_57 = arith.constant 1 : i32
    %c0_i32_58 = arith.constant 0 : i32
    %247 = vector.broadcast %c0_i32_58 : i32 to vector<8x1xi32>
    %248 = arith.cmpi eq, %246, %247 : vector<8x1xi32>
    %c5_i32_59 = arith.constant 5 : i32
    %249 = vector.broadcast %c5_i32_59 : i32 to vector<8x1xi32>
    %250 = arith.cmpi slt, %243, %249 : vector<8x1xi32>
    %251 = arith.andi %248, %250 : vector<8x1xi1>
    %c1_i32_60 = arith.constant 1 : i32
    %252 = vector.broadcast %c1_i32_60 : i32 to vector<8x1xi32>
    %253 = arith.addi %243, %252 : vector<8x1xi32>
    %254 = arith.sitofp %253 : vector<8x1xi32> to vector<8x1xf32>
    %255 = arith.subf %55, %254 : vector<8x1xf32>
    %cst_61 = arith.constant 1.000000e+00 : f32
    %256 = vector.broadcast %cst_61 : f32 to vector<8x1xf32>
    %257 = arith.maximumf %255, %256 : vector<8x1xf32>
    %258 = arith.sitofp %244 : vector<8x1xi32> to vector<8x1xf32>
    %259 = vector.broadcast %258 : vector<8x1xf32> to vector<8x16xf32>
    %260 = arith.divf %239, %259 : vector<8x16xf32>
    %261 = vector.broadcast %257 : vector<8x1xf32> to vector<8x16xf32>
    %262 = arith.divf %242, %261 : vector<8x16xf32>
    %cst_62 = arith.constant dense<0.000000e+00> : vector<8x8xf32>
    %263 = tpu.matmul %260, %6, %cst_62 {dimension_numbers = #tpu.dot_dimension_numbers<[1], [0], [0], [1], [0, 0, 1, 1], [], []>} : vector<8x16xf32>, vector<16x8xf32>, vector<8x8xf32> -> vector<8x8xf32>
    %cst_63 = arith.constant dense<0.000000e+00> : vector<8x8xf32>
    %264 = tpu.matmul %262, %7, %cst_63 {dimension_numbers = #tpu.dot_dimension_numbers<[1], [0], [0], [1], [0, 0, 1, 1], [], []>} : vector<8x16xf32>, vector<16x8xf32>, vector<8x8xf32> -> vector<8x8xf32>
    %265 = arith.addf %263, %264 : vector<8x8xf32>
    %266 = vector.broadcast %8 : vector<1x8xf32> to vector<8x8xf32>
    %267 = arith.addf %265, %266 : vector<8x8xf32>
    %cst_64 = arith.constant dense<0xFF800000> : vector<8xf32>
    %268 = vector.multi_reduction <maximumf>, %267, %cst_64 [1] : vector<8x8xf32> to vector<8xf32>
    %269 = vector.shape_cast %268 : vector<8xf32> to vector<8x1xf32>
    %270 = vector.broadcast %269 : vector<8x1xf32> to vector<8x8xf32>
    %271 = arith.cmpf oeq, %267, %270 : vector<8x8xf32>
    %cst_65 = arith.constant 8.000000e+00 : f32
    %272 = vector.broadcast %cst_65 : f32 to vector<8x8xf32>
    %273 = arith.select %271, %12, %272 : vector<8x8xi1>, vector<8x8xf32>
    %cst_66 = arith.constant dense<0x7F800000> : vector<8xf32>
    %274 = vector.multi_reduction <minimumf>, %273, %cst_66 [1] : vector<8x8xf32> to vector<8xf32>
    %275 = vector.shape_cast %274 : vector<8xf32> to vector<8x1xf32>
    %276 = vector.broadcast %269 : vector<8x1xf32> to vector<8x8xf32>
    %277 = arith.subf %267, %276 : vector<8x8xf32>
    %278 = math.exp %277 : vector<8x8xf32>
    %cst_67 = arith.constant dense<0.000000e+00> : vector<8xf32>
    %279 = vector.multi_reduction <add>, %278, %cst_67 [1] : vector<8x8xf32> to vector<8xf32>
    %280 = vector.shape_cast %279 : vector<8xf32> to vector<8x1xf32>
    %281 = vector.broadcast %c1_i32_57 : i32 to vector<8x16xi32>
    %282 = arith.cmpi eq, %10, %281 : vector<8x16xi32>
    %cst_68 = arith.constant 0.000000e+00 : f32
    %283 = vector.broadcast %cst_68 : f32 to vector<8x16xf32>
    %284 = arith.select %282, %2, %283 : vector<8x16xi1>, vector<8x16xf32>
    %cst_69 = arith.constant dense<0.000000e+00> : vector<8xf32>
    %285 = vector.multi_reduction <add>, %284, %cst_69 [1] : vector<8x16xf32> to vector<8xf32>
    %286 = vector.shape_cast %285 : vector<8xf32> to vector<8x1xf32>
    %287 = arith.mulf %286, %280 : vector<8x1xf32>
    %288 = vector.broadcast %253 : vector<8x1xi32> to vector<8x6xi32>
    %289 = arith.cmpi eq, %9, %288 : vector<8x6xi32>
    %290 = arith.extui %289 : vector<8x6xi1> to vector<8x6xi32>
    %291 = arith.sitofp %290 : vector<8x6xi32> to vector<8x6xf32>
    %292 = arith.mulf %0, %291 : vector<8x6xf32>
    %cst_70 = arith.constant dense<0.000000e+00> : vector<8xf32>
    %293 = vector.multi_reduction <add>, %292, %cst_70 [1] : vector<8x6xf32> to vector<8xf32>
    %294 = vector.shape_cast %293 : vector<8xf32> to vector<8x1xf32>
    %295 = arith.mulf %1, %291 : vector<8x6xf32>
    %cst_71 = arith.constant dense<0.000000e+00> : vector<8xf32>
    %296 = vector.multi_reduction <add>, %295, %cst_71 [1] : vector<8x6xf32> to vector<8xf32>
    %297 = vector.shape_cast %296 : vector<8xf32> to vector<8x1xf32>
    %298 = arith.addf %245, %287 : vector<8x1xf32>
    %299 = arith.cmpf olt, %298, %294 : vector<8x1xf32>
    %300 = arith.select %299, %298, %294 : vector<8x1xi1>, vector<8x1xf32>
    %301 = arith.select %299, %275, %297 : vector<8x1xi1>, vector<8x1xf32>
    %cst_72 = arith.constant 5.000000e-01 : f32
    %302 = vector.broadcast %cst_72 : f32 to vector<8x1xf32>
    %303 = arith.addf %301, %302 : vector<8x1xf32>
    %304 = arith.fptosi %303 : vector<8x1xf32> to vector<8x1xi32>
    %305 = vector.broadcast %304 : vector<8x1xi32> to vector<8x8xi32>
    %306 = arith.cmpi eq, %11, %305 : vector<8x8xi32>
    %307 = arith.extui %306 : vector<8x8xi1> to vector<8x8xi32>
    %308 = arith.sitofp %307 : vector<8x8xi32> to vector<8x8xf32>
    %cst_73 = arith.constant dense<0.000000e+00> : vector<8x16xf32>
    %309 = tpu.matmul %308, %3, %cst_73 {dimension_numbers = #tpu.dot_dimension_numbers<[1], [0], [0], [1], [0, 0, 1, 1], [], []>} : vector<8x8xf32>, vector<8x16xf32>, vector<8x16xf32> -> vector<8x16xf32>
    %cst_74 = arith.constant 6.000000e-01 : f32
    %310 = vector.broadcast %cst_74 : f32 to vector<8x16xf32>
    %311 = arith.mulf %310, %309 : vector<8x16xf32>
    %312 = vector.broadcast %4 : vector<1x16xf32> to vector<8x16xf32>
    %313 = vector.broadcast %300 : vector<8x1xf32> to vector<8x16xf32>
    %314 = arith.mulf %312, %313 : vector<8x16xf32>
    %315 = vector.broadcast %5 : vector<1x16xf32> to vector<8x16xf32>
    %316 = arith.addf %314, %315 : vector<8x16xf32>
    %cst_75 = arith.constant 4.000000e-01 : f32
    %317 = vector.broadcast %cst_75 : f32 to vector<8x16xf32>
    %318 = arith.mulf %317, %316 : vector<8x16xf32>
    %319 = arith.addf %311, %318 : vector<8x16xf32>
    %cst_76 = arith.constant 0.000000e+00 : f32
    %320 = vector.broadcast %cst_76 : f32 to vector<8x1xf32>
    %321 = arith.cmpf oge, %300, %320 : vector<8x1xf32>
    %322 = arith.extui %321 : vector<8x1xi1> to vector<8x1xi32>
    %323 = arith.sitofp %322 : vector<8x1xi32> to vector<8x1xf32>
    %324 = vector.broadcast %323 : vector<8x1xf32> to vector<8x16xf32>
    %325 = arith.mulf %319, %324 : vector<8x16xf32>
    %326 = arith.addf %239, %325 : vector<8x16xf32>
    %327 = arith.subf %242, %325 : vector<8x16xf32>
    %328 = vector.shape_cast %299 : vector<8x1xi1> to vector<8x1xi1>
    %329 = vector.broadcast %328 : vector<8x1xi1> to vector<8x16xi1>
    %330 = arith.select %329, %242, %327 : vector<8x16xi1>, vector<8x16xf32>
    %c1_i32_77 = arith.constant 1 : i32
    %331 = vector.broadcast %c1_i32_77 : i32 to vector<8x1xi32>
    %332 = arith.addi %243, %331 : vector<8x1xi32>
    %333 = arith.select %299, %243, %332 : vector<8x1xi1>, vector<8x1xi32>
    %c1_i32_78 = arith.constant 1 : i32
    %334 = vector.broadcast %c1_i32_78 : i32 to vector<8x1xi32>
    %335 = arith.addi %244, %334 : vector<8x1xi32>
    %cst_79 = arith.constant 0.000000e+00 : f32
    %336 = vector.broadcast %cst_79 : f32 to vector<8x1xf32>
    %337 = arith.cmpf olt, %300, %336 : vector<8x1xf32>
    %c16_i32_80 = arith.constant 16 : i32
    %338 = vector.broadcast %c16_i32_80 : i32 to vector<8x1xi32>
    %339 = arith.cmpi sge, %335, %338 : vector<8x1xi32>
    %340 = arith.ori %337, %339 : vector<8x1xi1>
    %341 = arith.extui %340 : vector<8x1xi1> to vector<8x1xi32>
    %342 = arith.maxsi %246, %341 : vector<8x1xi32>
    %343 = vector.broadcast %244 : vector<8x1xi32> to vector<8x16xi32>
    %344 = arith.cmpi eq, %10, %343 : vector<8x16xi32>
    %345 = vector.broadcast %251 : vector<8x1xi1> to vector<8x16xi1>
    %346 = arith.andi %344, %345 : vector<8x16xi1>
    %347 = vector.shape_cast %300 : vector<8x1xf32> to vector<8x1xf32>
    %348 = vector.broadcast %347 : vector<8x1xf32> to vector<8x16xf32>
    %349 = arith.select %346, %348, %233 : vector<8x16xi1>, vector<8x16xf32>
    %350 = vector.shape_cast %301 : vector<8x1xf32> to vector<8x1xf32>
    %351 = vector.broadcast %350 : vector<8x1xf32> to vector<8x16xf32>
    %352 = arith.select %346, %351, %236 : vector<8x16xi1>, vector<8x16xf32>
    %353 = vector.shape_cast %251 : vector<8x1xi1> to vector<8x1xi1>
    %354 = vector.broadcast %353 : vector<8x1xi1> to vector<8x16xi1>
    %355 = arith.select %354, %326, %239 : vector<8x16xi1>, vector<8x16xf32>
    %356 = vector.shape_cast %251 : vector<8x1xi1> to vector<8x1xi1>
    %357 = vector.broadcast %356 : vector<8x1xi1> to vector<8x16xi1>
    %358 = arith.select %357, %330, %242 : vector<8x16xi1>, vector<8x16xf32>
    %359 = arith.select %251, %333, %243 : vector<8x1xi1>, vector<8x1xi32>
    %360 = arith.select %251, %335, %244 : vector<8x1xi1>, vector<8x1xi32>
    %361 = arith.select %251, %300, %245 : vector<8x1xi1>, vector<8x1xf32>
    %362 = arith.select %251, %342, %246 : vector<8x1xi1>, vector<8x1xi32>
    %c2_i32 = arith.constant 2 : i32
    %c0_i32_81 = arith.constant 0 : i32
    %363 = vector.broadcast %c0_i32_81 : i32 to vector<8x1xi32>
    %364 = arith.cmpi eq, %362, %363 : vector<8x1xi32>
    %c5_i32_82 = arith.constant 5 : i32
    %365 = vector.broadcast %c5_i32_82 : i32 to vector<8x1xi32>
    %366 = arith.cmpi slt, %359, %365 : vector<8x1xi32>
    %367 = arith.andi %364, %366 : vector<8x1xi1>
    %c1_i32_83 = arith.constant 1 : i32
    %368 = vector.broadcast %c1_i32_83 : i32 to vector<8x1xi32>
    %369 = arith.addi %359, %368 : vector<8x1xi32>
    %370 = arith.sitofp %369 : vector<8x1xi32> to vector<8x1xf32>
    %371 = arith.subf %55, %370 : vector<8x1xf32>
    %cst_84 = arith.constant 1.000000e+00 : f32
    %372 = vector.broadcast %cst_84 : f32 to vector<8x1xf32>
    %373 = arith.maximumf %371, %372 : vector<8x1xf32>
    %374 = arith.sitofp %360 : vector<8x1xi32> to vector<8x1xf32>
    %375 = vector.broadcast %374 : vector<8x1xf32> to vector<8x16xf32>
    %376 = arith.divf %355, %375 : vector<8x16xf32>
    %377 = vector.broadcast %373 : vector<8x1xf32> to vector<8x16xf32>
    %378 = arith.divf %358, %377 : vector<8x16xf32>
    %cst_85 = arith.constant dense<0.000000e+00> : vector<8x8xf32>
    %379 = tpu.matmul %376, %6, %cst_85 {dimension_numbers = #tpu.dot_dimension_numbers<[1], [0], [0], [1], [0, 0, 1, 1], [], []>} : vector<8x16xf32>, vector<16x8xf32>, vector<8x8xf32> -> vector<8x8xf32>
    %cst_86 = arith.constant dense<0.000000e+00> : vector<8x8xf32>
    %380 = tpu.matmul %378, %7, %cst_86 {dimension_numbers = #tpu.dot_dimension_numbers<[1], [0], [0], [1], [0, 0, 1, 1], [], []>} : vector<8x16xf32>, vector<16x8xf32>, vector<8x8xf32> -> vector<8x8xf32>
    %381 = arith.addf %379, %380 : vector<8x8xf32>
    %382 = vector.broadcast %8 : vector<1x8xf32> to vector<8x8xf32>
    %383 = arith.addf %381, %382 : vector<8x8xf32>
    %cst_87 = arith.constant dense<0xFF800000> : vector<8xf32>
    %384 = vector.multi_reduction <maximumf>, %383, %cst_87 [1] : vector<8x8xf32> to vector<8xf32>
    %385 = vector.shape_cast %384 : vector<8xf32> to vector<8x1xf32>
    %386 = vector.broadcast %385 : vector<8x1xf32> to vector<8x8xf32>
    %387 = arith.cmpf oeq, %383, %386 : vector<8x8xf32>
    %cst_88 = arith.constant 8.000000e+00 : f32
    %388 = vector.broadcast %cst_88 : f32 to vector<8x8xf32>
    %389 = arith.select %387, %12, %388 : vector<8x8xi1>, vector<8x8xf32>
    %cst_89 = arith.constant dense<0x7F800000> : vector<8xf32>
    %390 = vector.multi_reduction <minimumf>, %389, %cst_89 [1] : vector<8x8xf32> to vector<8xf32>
    %391 = vector.shape_cast %390 : vector<8xf32> to vector<8x1xf32>
    %392 = vector.broadcast %385 : vector<8x1xf32> to vector<8x8xf32>
    %393 = arith.subf %383, %392 : vector<8x8xf32>
    %394 = math.exp %393 : vector<8x8xf32>
    %cst_90 = arith.constant dense<0.000000e+00> : vector<8xf32>
    %395 = vector.multi_reduction <add>, %394, %cst_90 [1] : vector<8x8xf32> to vector<8xf32>
    %396 = vector.shape_cast %395 : vector<8xf32> to vector<8x1xf32>
    %397 = vector.broadcast %c2_i32 : i32 to vector<8x16xi32>
    %398 = arith.cmpi eq, %10, %397 : vector<8x16xi32>
    %cst_91 = arith.constant 0.000000e+00 : f32
    %399 = vector.broadcast %cst_91 : f32 to vector<8x16xf32>
    %400 = arith.select %398, %2, %399 : vector<8x16xi1>, vector<8x16xf32>
    %cst_92 = arith.constant dense<0.000000e+00> : vector<8xf32>
    %401 = vector.multi_reduction <add>, %400, %cst_92 [1] : vector<8x16xf32> to vector<8xf32>
    %402 = vector.shape_cast %401 : vector<8xf32> to vector<8x1xf32>
    %403 = arith.mulf %402, %396 : vector<8x1xf32>
    %404 = vector.broadcast %369 : vector<8x1xi32> to vector<8x6xi32>
    %405 = arith.cmpi eq, %9, %404 : vector<8x6xi32>
    %406 = arith.extui %405 : vector<8x6xi1> to vector<8x6xi32>
    %407 = arith.sitofp %406 : vector<8x6xi32> to vector<8x6xf32>
    %408 = arith.mulf %0, %407 : vector<8x6xf32>
    %cst_93 = arith.constant dense<0.000000e+00> : vector<8xf32>
    %409 = vector.multi_reduction <add>, %408, %cst_93 [1] : vector<8x6xf32> to vector<8xf32>
    %410 = vector.shape_cast %409 : vector<8xf32> to vector<8x1xf32>
    %411 = arith.mulf %1, %407 : vector<8x6xf32>
    %cst_94 = arith.constant dense<0.000000e+00> : vector<8xf32>
    %412 = vector.multi_reduction <add>, %411, %cst_94 [1] : vector<8x6xf32> to vector<8xf32>
    %413 = vector.shape_cast %412 : vector<8xf32> to vector<8x1xf32>
    %414 = arith.addf %361, %403 : vector<8x1xf32>
    %415 = arith.cmpf olt, %414, %410 : vector<8x1xf32>
    %416 = arith.select %415, %414, %410 : vector<8x1xi1>, vector<8x1xf32>
    %417 = arith.select %415, %391, %413 : vector<8x1xi1>, vector<8x1xf32>
    %cst_95 = arith.constant 5.000000e-01 : f32
    %418 = vector.broadcast %cst_95 : f32 to vector<8x1xf32>
    %419 = arith.addf %417, %418 : vector<8x1xf32>
    %420 = arith.fptosi %419 : vector<8x1xf32> to vector<8x1xi32>
    %421 = vector.broadcast %420 : vector<8x1xi32> to vector<8x8xi32>
    %422 = arith.cmpi eq, %11, %421 : vector<8x8xi32>
    %423 = arith.extui %422 : vector<8x8xi1> to vector<8x8xi32>
    %424 = arith.sitofp %423 : vector<8x8xi32> to vector<8x8xf32>
    %cst_96 = arith.constant dense<0.000000e+00> : vector<8x16xf32>
    %425 = tpu.matmul %424, %3, %cst_96 {dimension_numbers = #tpu.dot_dimension_numbers<[1], [0], [0], [1], [0, 0, 1, 1], [], []>} : vector<8x8xf32>, vector<8x16xf32>, vector<8x16xf32> -> vector<8x16xf32>
    %cst_97 = arith.constant 6.000000e-01 : f32
    %426 = vector.broadcast %cst_97 : f32 to vector<8x16xf32>
    %427 = arith.mulf %426, %425 : vector<8x16xf32>
    %428 = vector.broadcast %4 : vector<1x16xf32> to vector<8x16xf32>
    %429 = vector.broadcast %416 : vector<8x1xf32> to vector<8x16xf32>
    %430 = arith.mulf %428, %429 : vector<8x16xf32>
    %431 = vector.broadcast %5 : vector<1x16xf32> to vector<8x16xf32>
    %432 = arith.addf %430, %431 : vector<8x16xf32>
    %cst_98 = arith.constant 4.000000e-01 : f32
    %433 = vector.broadcast %cst_98 : f32 to vector<8x16xf32>
    %434 = arith.mulf %433, %432 : vector<8x16xf32>
    %435 = arith.addf %427, %434 : vector<8x16xf32>
    %cst_99 = arith.constant 0.000000e+00 : f32
    %436 = vector.broadcast %cst_99 : f32 to vector<8x1xf32>
    %437 = arith.cmpf oge, %416, %436 : vector<8x1xf32>
    %438 = arith.extui %437 : vector<8x1xi1> to vector<8x1xi32>
    %439 = arith.sitofp %438 : vector<8x1xi32> to vector<8x1xf32>
    %440 = vector.broadcast %439 : vector<8x1xf32> to vector<8x16xf32>
    %441 = arith.mulf %435, %440 : vector<8x16xf32>
    %442 = arith.addf %355, %441 : vector<8x16xf32>
    %443 = arith.subf %358, %441 : vector<8x16xf32>
    %444 = vector.shape_cast %415 : vector<8x1xi1> to vector<8x1xi1>
    %445 = vector.broadcast %444 : vector<8x1xi1> to vector<8x16xi1>
    %446 = arith.select %445, %358, %443 : vector<8x16xi1>, vector<8x16xf32>
    %c1_i32_100 = arith.constant 1 : i32
    %447 = vector.broadcast %c1_i32_100 : i32 to vector<8x1xi32>
    %448 = arith.addi %359, %447 : vector<8x1xi32>
    %449 = arith.select %415, %359, %448 : vector<8x1xi1>, vector<8x1xi32>
    %c1_i32_101 = arith.constant 1 : i32
    %450 = vector.broadcast %c1_i32_101 : i32 to vector<8x1xi32>
    %451 = arith.addi %360, %450 : vector<8x1xi32>
    %cst_102 = arith.constant 0.000000e+00 : f32
    %452 = vector.broadcast %cst_102 : f32 to vector<8x1xf32>
    %453 = arith.cmpf olt, %416, %452 : vector<8x1xf32>
    %c16_i32_103 = arith.constant 16 : i32
    %454 = vector.broadcast %c16_i32_103 : i32 to vector<8x1xi32>
    %455 = arith.cmpi sge, %451, %454 : vector<8x1xi32>
    %456 = arith.ori %453, %455 : vector<8x1xi1>
    %457 = arith.extui %456 : vector<8x1xi1> to vector<8x1xi32>
    %458 = arith.maxsi %362, %457 : vector<8x1xi32>
    %459 = vector.broadcast %360 : vector<8x1xi32> to vector<8x16xi32>
    %460 = arith.cmpi eq, %10, %459 : vector<8x16xi32>
    %461 = vector.broadcast %367 : vector<8x1xi1> to vector<8x16xi1>
    %462 = arith.andi %460, %461 : vector<8x16xi1>
    %463 = vector.shape_cast %416 : vector<8x1xf32> to vector<8x1xf32>
    %464 = vector.broadcast %463 : vector<8x1xf32> to vector<8x16xf32>
    %465 = arith.select %462, %464, %349 : vector<8x16xi1>, vector<8x16xf32>
    %466 = vector.shape_cast %417 : vector<8x1xf32> to vector<8x1xf32>
    %467 = vector.broadcast %466 : vector<8x1xf32> to vector<8x16xf32>
    %468 = arith.select %462, %467, %352 : vector<8x16xi1>, vector<8x16xf32>
    %469 = vector.shape_cast %367 : vector<8x1xi1> to vector<8x1xi1>
    %470 = vector.broadcast %469 : vector<8x1xi1> to vector<8x16xi1>
    %471 = arith.select %470, %442, %355 : vector<8x16xi1>, vector<8x16xf32>
    %472 = vector.shape_cast %367 : vector<8x1xi1> to vector<8x1xi1>
    %473 = vector.broadcast %472 : vector<8x1xi1> to vector<8x16xi1>
    %474 = arith.select %473, %446, %358 : vector<8x16xi1>, vector<8x16xf32>
    %475 = arith.select %367, %449, %359 : vector<8x1xi1>, vector<8x1xi32>
    %476 = arith.select %367, %451, %360 : vector<8x1xi1>, vector<8x1xi32>
    %477 = arith.select %367, %416, %361 : vector<8x1xi1>, vector<8x1xf32>
    %478 = arith.select %367, %458, %362 : vector<8x1xi1>, vector<8x1xi32>
    %c3_i32 = arith.constant 3 : i32
    %c0_i32_104 = arith.constant 0 : i32
    %479 = vector.broadcast %c0_i32_104 : i32 to vector<8x1xi32>
    %480 = arith.cmpi eq, %478, %479 : vector<8x1xi32>
    %c5_i32_105 = arith.constant 5 : i32
    %481 = vector.broadcast %c5_i32_105 : i32 to vector<8x1xi32>
    %482 = arith.cmpi slt, %475, %481 : vector<8x1xi32>
    %483 = arith.andi %480, %482 : vector<8x1xi1>
    %c1_i32_106 = arith.constant 1 : i32
    %484 = vector.broadcast %c1_i32_106 : i32 to vector<8x1xi32>
    %485 = arith.addi %475, %484 : vector<8x1xi32>
    %486 = arith.sitofp %485 : vector<8x1xi32> to vector<8x1xf32>
    %487 = arith.subf %55, %486 : vector<8x1xf32>
    %cst_107 = arith.constant 1.000000e+00 : f32
    %488 = vector.broadcast %cst_107 : f32 to vector<8x1xf32>
    %489 = arith.maximumf %487, %488 : vector<8x1xf32>
    %490 = arith.sitofp %476 : vector<8x1xi32> to vector<8x1xf32>
    %491 = vector.broadcast %490 : vector<8x1xf32> to vector<8x16xf32>
    %492 = arith.divf %471, %491 : vector<8x16xf32>
    %493 = vector.broadcast %489 : vector<8x1xf32> to vector<8x16xf32>
    %494 = arith.divf %474, %493 : vector<8x16xf32>
    %cst_108 = arith.constant dense<0.000000e+00> : vector<8x8xf32>
    %495 = tpu.matmul %492, %6, %cst_108 {dimension_numbers = #tpu.dot_dimension_numbers<[1], [0], [0], [1], [0, 0, 1, 1], [], []>} : vector<8x16xf32>, vector<16x8xf32>, vector<8x8xf32> -> vector<8x8xf32>
    %cst_109 = arith.constant dense<0.000000e+00> : vector<8x8xf32>
    %496 = tpu.matmul %494, %7, %cst_109 {dimension_numbers = #tpu.dot_dimension_numbers<[1], [0], [0], [1], [0, 0, 1, 1], [], []>} : vector<8x16xf32>, vector<16x8xf32>, vector<8x8xf32> -> vector<8x8xf32>
    %497 = arith.addf %495, %496 : vector<8x8xf32>
    %498 = vector.broadcast %8 : vector<1x8xf32> to vector<8x8xf32>
    %499 = arith.addf %497, %498 : vector<8x8xf32>
    %cst_110 = arith.constant dense<0xFF800000> : vector<8xf32>
    %500 = vector.multi_reduction <maximumf>, %499, %cst_110 [1] : vector<8x8xf32> to vector<8xf32>
    %501 = vector.shape_cast %500 : vector<8xf32> to vector<8x1xf32>
    %502 = vector.broadcast %501 : vector<8x1xf32> to vector<8x8xf32>
    %503 = arith.cmpf oeq, %499, %502 : vector<8x8xf32>
    %cst_111 = arith.constant 8.000000e+00 : f32
    %504 = vector.broadcast %cst_111 : f32 to vector<8x8xf32>
    %505 = arith.select %503, %12, %504 : vector<8x8xi1>, vector<8x8xf32>
    %cst_112 = arith.constant dense<0x7F800000> : vector<8xf32>
    %506 = vector.multi_reduction <minimumf>, %505, %cst_112 [1] : vector<8x8xf32> to vector<8xf32>
    %507 = vector.shape_cast %506 : vector<8xf32> to vector<8x1xf32>
    %508 = vector.broadcast %501 : vector<8x1xf32> to vector<8x8xf32>
    %509 = arith.subf %499, %508 : vector<8x8xf32>
    %510 = math.exp %509 : vector<8x8xf32>
    %cst_113 = arith.constant dense<0.000000e+00> : vector<8xf32>
    %511 = vector.multi_reduction <add>, %510, %cst_113 [1] : vector<8x8xf32> to vector<8xf32>
    %512 = vector.shape_cast %511 : vector<8xf32> to vector<8x1xf32>
    %513 = vector.broadcast %c3_i32 : i32 to vector<8x16xi32>
    %514 = arith.cmpi eq, %10, %513 : vector<8x16xi32>
    %cst_114 = arith.constant 0.000000e+00 : f32
    %515 = vector.broadcast %cst_114 : f32 to vector<8x16xf32>
    %516 = arith.select %514, %2, %515 : vector<8x16xi1>, vector<8x16xf32>
    %cst_115 = arith.constant dense<0.000000e+00> : vector<8xf32>
    %517 = vector.multi_reduction <add>, %516, %cst_115 [1] : vector<8x16xf32> to vector<8xf32>
    %518 = vector.shape_cast %517 : vector<8xf32> to vector<8x1xf32>
    %519 = arith.mulf %518, %512 : vector<8x1xf32>
    %520 = vector.broadcast %485 : vector<8x1xi32> to vector<8x6xi32>
    %521 = arith.cmpi eq, %9, %520 : vector<8x6xi32>
    %522 = arith.extui %521 : vector<8x6xi1> to vector<8x6xi32>
    %523 = arith.sitofp %522 : vector<8x6xi32> to vector<8x6xf32>
    %524 = arith.mulf %0, %523 : vector<8x6xf32>
    %cst_116 = arith.constant dense<0.000000e+00> : vector<8xf32>
    %525 = vector.multi_reduction <add>, %524, %cst_116 [1] : vector<8x6xf32> to vector<8xf32>
    %526 = vector.shape_cast %525 : vector<8xf32> to vector<8x1xf32>
    %527 = arith.mulf %1, %523 : vector<8x6xf32>
    %cst_117 = arith.constant dense<0.000000e+00> : vector<8xf32>
    %528 = vector.multi_reduction <add>, %527, %cst_117 [1] : vector<8x6xf32> to vector<8xf32>
    %529 = vector.shape_cast %528 : vector<8xf32> to vector<8x1xf32>
    %530 = arith.addf %477, %519 : vector<8x1xf32>
    %531 = arith.cmpf olt, %530, %526 : vector<8x1xf32>
    %532 = arith.select %531, %530, %526 : vector<8x1xi1>, vector<8x1xf32>
    %533 = arith.select %531, %507, %529 : vector<8x1xi1>, vector<8x1xf32>
    %cst_118 = arith.constant 5.000000e-01 : f32
    %534 = vector.broadcast %cst_118 : f32 to vector<8x1xf32>
    %535 = arith.addf %533, %534 : vector<8x1xf32>
    %536 = arith.fptosi %535 : vector<8x1xf32> to vector<8x1xi32>
    %537 = vector.broadcast %536 : vector<8x1xi32> to vector<8x8xi32>
    %538 = arith.cmpi eq, %11, %537 : vector<8x8xi32>
    %539 = arith.extui %538 : vector<8x8xi1> to vector<8x8xi32>
    %540 = arith.sitofp %539 : vector<8x8xi32> to vector<8x8xf32>
    %cst_119 = arith.constant dense<0.000000e+00> : vector<8x16xf32>
    %541 = tpu.matmul %540, %3, %cst_119 {dimension_numbers = #tpu.dot_dimension_numbers<[1], [0], [0], [1], [0, 0, 1, 1], [], []>} : vector<8x8xf32>, vector<8x16xf32>, vector<8x16xf32> -> vector<8x16xf32>
    %cst_120 = arith.constant 6.000000e-01 : f32
    %542 = vector.broadcast %cst_120 : f32 to vector<8x16xf32>
    %543 = arith.mulf %542, %541 : vector<8x16xf32>
    %544 = vector.broadcast %4 : vector<1x16xf32> to vector<8x16xf32>
    %545 = vector.broadcast %532 : vector<8x1xf32> to vector<8x16xf32>
    %546 = arith.mulf %544, %545 : vector<8x16xf32>
    %547 = vector.broadcast %5 : vector<1x16xf32> to vector<8x16xf32>
    %548 = arith.addf %546, %547 : vector<8x16xf32>
    %cst_121 = arith.constant 4.000000e-01 : f32
    %549 = vector.broadcast %cst_121 : f32 to vector<8x16xf32>
    %550 = arith.mulf %549, %548 : vector<8x16xf32>
    %551 = arith.addf %543, %550 : vector<8x16xf32>
    %cst_122 = arith.constant 0.000000e+00 : f32
    %552 = vector.broadcast %cst_122 : f32 to vector<8x1xf32>
    %553 = arith.cmpf oge, %532, %552 : vector<8x1xf32>
    %554 = arith.extui %553 : vector<8x1xi1> to vector<8x1xi32>
    %555 = arith.sitofp %554 : vector<8x1xi32> to vector<8x1xf32>
    %556 = vector.broadcast %555 : vector<8x1xf32> to vector<8x16xf32>
    %557 = arith.mulf %551, %556 : vector<8x16xf32>
    %558 = arith.addf %471, %557 : vector<8x16xf32>
    %559 = arith.subf %474, %557 : vector<8x16xf32>
    %560 = vector.shape_cast %531 : vector<8x1xi1> to vector<8x1xi1>
    %561 = vector.broadcast %560 : vector<8x1xi1> to vector<8x16xi1>
    %562 = arith.select %561, %474, %559 : vector<8x16xi1>, vector<8x16xf32>
    %c1_i32_123 = arith.constant 1 : i32
    %563 = vector.broadcast %c1_i32_123 : i32 to vector<8x1xi32>
    %564 = arith.addi %475, %563 : vector<8x1xi32>
    %565 = arith.select %531, %475, %564 : vector<8x1xi1>, vector<8x1xi32>
    %c1_i32_124 = arith.constant 1 : i32
    %566 = vector.broadcast %c1_i32_124 : i32 to vector<8x1xi32>
    %567 = arith.addi %476, %566 : vector<8x1xi32>
    %cst_125 = arith.constant 0.000000e+00 : f32
    %568 = vector.broadcast %cst_125 : f32 to vector<8x1xf32>
    %569 = arith.cmpf olt, %532, %568 : vector<8x1xf32>
    %c16_i32_126 = arith.constant 16 : i32
    %570 = vector.broadcast %c16_i32_126 : i32 to vector<8x1xi32>
    %571 = arith.cmpi sge, %567, %570 : vector<8x1xi32>
    %572 = arith.ori %569, %571 : vector<8x1xi1>
    %573 = arith.extui %572 : vector<8x1xi1> to vector<8x1xi32>
    %574 = arith.maxsi %478, %573 : vector<8x1xi32>
    %575 = vector.broadcast %476 : vector<8x1xi32> to vector<8x16xi32>
    %576 = arith.cmpi eq, %10, %575 : vector<8x16xi32>
    %577 = vector.broadcast %483 : vector<8x1xi1> to vector<8x16xi1>
    %578 = arith.andi %576, %577 : vector<8x16xi1>
    %579 = vector.shape_cast %532 : vector<8x1xf32> to vector<8x1xf32>
    %580 = vector.broadcast %579 : vector<8x1xf32> to vector<8x16xf32>
    %581 = arith.select %578, %580, %465 : vector<8x16xi1>, vector<8x16xf32>
    %582 = vector.shape_cast %533 : vector<8x1xf32> to vector<8x1xf32>
    %583 = vector.broadcast %582 : vector<8x1xf32> to vector<8x16xf32>
    %584 = arith.select %578, %583, %468 : vector<8x16xi1>, vector<8x16xf32>
    %585 = vector.shape_cast %483 : vector<8x1xi1> to vector<8x1xi1>
    %586 = vector.broadcast %585 : vector<8x1xi1> to vector<8x16xi1>
    %587 = arith.select %586, %558, %471 : vector<8x16xi1>, vector<8x16xf32>
    %588 = vector.shape_cast %483 : vector<8x1xi1> to vector<8x1xi1>
    %589 = vector.broadcast %588 : vector<8x1xi1> to vector<8x16xi1>
    %590 = arith.select %589, %562, %474 : vector<8x16xi1>, vector<8x16xf32>
    %591 = arith.select %483, %565, %475 : vector<8x1xi1>, vector<8x1xi32>
    %592 = arith.select %483, %567, %476 : vector<8x1xi1>, vector<8x1xi32>
    %593 = arith.select %483, %532, %477 : vector<8x1xi1>, vector<8x1xf32>
    %594 = arith.select %483, %574, %478 : vector<8x1xi1>, vector<8x1xi32>
    %c4_i32 = arith.constant 4 : i32
    %c0_i32_127 = arith.constant 0 : i32
    %595 = vector.broadcast %c0_i32_127 : i32 to vector<8x1xi32>
    %596 = arith.cmpi eq, %594, %595 : vector<8x1xi32>
    %c5_i32_128 = arith.constant 5 : i32
    %597 = vector.broadcast %c5_i32_128 : i32 to vector<8x1xi32>
    %598 = arith.cmpi slt, %591, %597 : vector<8x1xi32>
    %599 = arith.andi %596, %598 : vector<8x1xi1>
    %c1_i32_129 = arith.constant 1 : i32
    %600 = vector.broadcast %c1_i32_129 : i32 to vector<8x1xi32>
    %601 = arith.addi %591, %600 : vector<8x1xi32>
    %602 = arith.sitofp %601 : vector<8x1xi32> to vector<8x1xf32>
    %603 = arith.subf %55, %602 : vector<8x1xf32>
    %cst_130 = arith.constant 1.000000e+00 : f32
    %604 = vector.broadcast %cst_130 : f32 to vector<8x1xf32>
    %605 = arith.maximumf %603, %604 : vector<8x1xf32>
    %606 = arith.sitofp %592 : vector<8x1xi32> to vector<8x1xf32>
    %607 = vector.broadcast %606 : vector<8x1xf32> to vector<8x16xf32>
    %608 = arith.divf %587, %607 : vector<8x16xf32>
    %609 = vector.broadcast %605 : vector<8x1xf32> to vector<8x16xf32>
    %610 = arith.divf %590, %609 : vector<8x16xf32>
    %cst_131 = arith.constant dense<0.000000e+00> : vector<8x8xf32>
    %611 = tpu.matmul %608, %6, %cst_131 {dimension_numbers = #tpu.dot_dimension_numbers<[1], [0], [0], [1], [0, 0, 1, 1], [], []>} : vector<8x16xf32>, vector<16x8xf32>, vector<8x8xf32> -> vector<8x8xf32>
    %cst_132 = arith.constant dense<0.000000e+00> : vector<8x8xf32>
    %612 = tpu.matmul %610, %7, %cst_132 {dimension_numbers = #tpu.dot_dimension_numbers<[1], [0], [0], [1], [0, 0, 1, 1], [], []>} : vector<8x16xf32>, vector<16x8xf32>, vector<8x8xf32> -> vector<8x8xf32>
    %613 = arith.addf %611, %612 : vector<8x8xf32>
    %614 = vector.broadcast %8 : vector<1x8xf32> to vector<8x8xf32>
    %615 = arith.addf %613, %614 : vector<8x8xf32>
    %cst_133 = arith.constant dense<0xFF800000> : vector<8xf32>
    %616 = vector.multi_reduction <maximumf>, %615, %cst_133 [1] : vector<8x8xf32> to vector<8xf32>
    %617 = vector.shape_cast %616 : vector<8xf32> to vector<8x1xf32>
    %618 = vector.broadcast %617 : vector<8x1xf32> to vector<8x8xf32>
    %619 = arith.cmpf oeq, %615, %618 : vector<8x8xf32>
    %cst_134 = arith.constant 8.000000e+00 : f32
    %620 = vector.broadcast %cst_134 : f32 to vector<8x8xf32>
    %621 = arith.select %619, %12, %620 : vector<8x8xi1>, vector<8x8xf32>
    %cst_135 = arith.constant dense<0x7F800000> : vector<8xf32>
    %622 = vector.multi_reduction <minimumf>, %621, %cst_135 [1] : vector<8x8xf32> to vector<8xf32>
    %623 = vector.shape_cast %622 : vector<8xf32> to vector<8x1xf32>
    %624 = vector.broadcast %617 : vector<8x1xf32> to vector<8x8xf32>
    %625 = arith.subf %615, %624 : vector<8x8xf32>
    %626 = math.exp %625 : vector<8x8xf32>
    %cst_136 = arith.constant dense<0.000000e+00> : vector<8xf32>
    %627 = vector.multi_reduction <add>, %626, %cst_136 [1] : vector<8x8xf32> to vector<8xf32>
    %628 = vector.shape_cast %627 : vector<8xf32> to vector<8x1xf32>
    %629 = vector.broadcast %c4_i32 : i32 to vector<8x16xi32>
    %630 = arith.cmpi eq, %10, %629 : vector<8x16xi32>
    %cst_137 = arith.constant 0.000000e+00 : f32
    %631 = vector.broadcast %cst_137 : f32 to vector<8x16xf32>
    %632 = arith.select %630, %2, %631 : vector<8x16xi1>, vector<8x16xf32>
    %cst_138 = arith.constant dense<0.000000e+00> : vector<8xf32>
    %633 = vector.multi_reduction <add>, %632, %cst_138 [1] : vector<8x16xf32> to vector<8xf32>
    %634 = vector.shape_cast %633 : vector<8xf32> to vector<8x1xf32>
    %635 = arith.mulf %634, %628 : vector<8x1xf32>
    %636 = vector.broadcast %601 : vector<8x1xi32> to vector<8x6xi32>
    %637 = arith.cmpi eq, %9, %636 : vector<8x6xi32>
    %638 = arith.extui %637 : vector<8x6xi1> to vector<8x6xi32>
    %639 = arith.sitofp %638 : vector<8x6xi32> to vector<8x6xf32>
    %640 = arith.mulf %0, %639 : vector<8x6xf32>
    %cst_139 = arith.constant dense<0.000000e+00> : vector<8xf32>
    %641 = vector.multi_reduction <add>, %640, %cst_139 [1] : vector<8x6xf32> to vector<8xf32>
    %642 = vector.shape_cast %641 : vector<8xf32> to vector<8x1xf32>
    %643 = arith.mulf %1, %639 : vector<8x6xf32>
    %cst_140 = arith.constant dense<0.000000e+00> : vector<8xf32>
    %644 = vector.multi_reduction <add>, %643, %cst_140 [1] : vector<8x6xf32> to vector<8xf32>
    %645 = vector.shape_cast %644 : vector<8xf32> to vector<8x1xf32>
    %646 = arith.addf %593, %635 : vector<8x1xf32>
    %647 = arith.cmpf olt, %646, %642 : vector<8x1xf32>
    %648 = arith.select %647, %646, %642 : vector<8x1xi1>, vector<8x1xf32>
    %649 = arith.select %647, %623, %645 : vector<8x1xi1>, vector<8x1xf32>
    %cst_141 = arith.constant 5.000000e-01 : f32
    %650 = vector.broadcast %cst_141 : f32 to vector<8x1xf32>
    %651 = arith.addf %649, %650 : vector<8x1xf32>
    %652 = arith.fptosi %651 : vector<8x1xf32> to vector<8x1xi32>
    %653 = vector.broadcast %652 : vector<8x1xi32> to vector<8x8xi32>
    %654 = arith.cmpi eq, %11, %653 : vector<8x8xi32>
    %655 = arith.extui %654 : vector<8x8xi1> to vector<8x8xi32>
    %656 = arith.sitofp %655 : vector<8x8xi32> to vector<8x8xf32>
    %cst_142 = arith.constant dense<0.000000e+00> : vector<8x16xf32>
    %657 = tpu.matmul %656, %3, %cst_142 {dimension_numbers = #tpu.dot_dimension_numbers<[1], [0], [0], [1], [0, 0, 1, 1], [], []>} : vector<8x8xf32>, vector<8x16xf32>, vector<8x16xf32> -> vector<8x16xf32>
    %cst_143 = arith.constant 6.000000e-01 : f32
    %658 = vector.broadcast %cst_143 : f32 to vector<8x16xf32>
    %659 = arith.mulf %658, %657 : vector<8x16xf32>
    %660 = vector.broadcast %4 : vector<1x16xf32> to vector<8x16xf32>
    %661 = vector.broadcast %648 : vector<8x1xf32> to vector<8x16xf32>
    %662 = arith.mulf %660, %661 : vector<8x16xf32>
    %663 = vector.broadcast %5 : vector<1x16xf32> to vector<8x16xf32>
    %664 = arith.addf %662, %663 : vector<8x16xf32>
    %cst_144 = arith.constant 4.000000e-01 : f32
    %665 = vector.broadcast %cst_144 : f32 to vector<8x16xf32>
    %666 = arith.mulf %665, %664 : vector<8x16xf32>
    %667 = arith.addf %659, %666 : vector<8x16xf32>
    %cst_145 = arith.constant 0.000000e+00 : f32
    %668 = vector.broadcast %cst_145 : f32 to vector<8x1xf32>
    %669 = arith.cmpf oge, %648, %668 : vector<8x1xf32>
    %670 = arith.extui %669 : vector<8x1xi1> to vector<8x1xi32>
    %671 = arith.sitofp %670 : vector<8x1xi32> to vector<8x1xf32>
    %672 = vector.broadcast %671 : vector<8x1xf32> to vector<8x16xf32>
    %673 = arith.mulf %667, %672 : vector<8x16xf32>
    %674 = arith.addf %587, %673 : vector<8x16xf32>
    %675 = arith.subf %590, %673 : vector<8x16xf32>
    %676 = vector.shape_cast %647 : vector<8x1xi1> to vector<8x1xi1>
    %677 = vector.broadcast %676 : vector<8x1xi1> to vector<8x16xi1>
    %678 = arith.select %677, %590, %675 : vector<8x16xi1>, vector<8x16xf32>
    %c1_i32_146 = arith.constant 1 : i32
    %679 = vector.broadcast %c1_i32_146 : i32 to vector<8x1xi32>
    %680 = arith.addi %591, %679 : vector<8x1xi32>
    %681 = arith.select %647, %591, %680 : vector<8x1xi1>, vector<8x1xi32>
    %c1_i32_147 = arith.constant 1 : i32
    %682 = vector.broadcast %c1_i32_147 : i32 to vector<8x1xi32>
    %683 = arith.addi %592, %682 : vector<8x1xi32>
    %cst_148 = arith.constant 0.000000e+00 : f32
    %684 = vector.broadcast %cst_148 : f32 to vector<8x1xf32>
    %685 = arith.cmpf olt, %648, %684 : vector<8x1xf32>
    %c16_i32_149 = arith.constant 16 : i32
    %686 = vector.broadcast %c16_i32_149 : i32 to vector<8x1xi32>
    %687 = arith.cmpi sge, %683, %686 : vector<8x1xi32>
    %688 = arith.ori %685, %687 : vector<8x1xi1>
    %689 = arith.extui %688 : vector<8x1xi1> to vector<8x1xi32>
    %690 = arith.maxsi %594, %689 : vector<8x1xi32>
    %691 = vector.broadcast %592 : vector<8x1xi32> to vector<8x16xi32>
    %692 = arith.cmpi eq, %10, %691 : vector<8x16xi32>
    %693 = vector.broadcast %599 : vector<8x1xi1> to vector<8x16xi1>
    %694 = arith.andi %692, %693 : vector<8x16xi1>
    %695 = vector.shape_cast %648 : vector<8x1xf32> to vector<8x1xf32>
    %696 = vector.broadcast %695 : vector<8x1xf32> to vector<8x16xf32>
    %697 = arith.select %694, %696, %581 : vector<8x16xi1>, vector<8x16xf32>
    %698 = vector.shape_cast %649 : vector<8x1xf32> to vector<8x1xf32>
    %699 = vector.broadcast %698 : vector<8x1xf32> to vector<8x16xf32>
    %700 = arith.select %694, %699, %584 : vector<8x16xi1>, vector<8x16xf32>
    %701 = vector.shape_cast %599 : vector<8x1xi1> to vector<8x1xi1>
    %702 = vector.broadcast %701 : vector<8x1xi1> to vector<8x16xi1>
    %703 = arith.select %702, %674, %587 : vector<8x16xi1>, vector<8x16xf32>
    %704 = vector.shape_cast %599 : vector<8x1xi1> to vector<8x1xi1>
    %705 = vector.broadcast %704 : vector<8x1xi1> to vector<8x16xi1>
    %706 = arith.select %705, %678, %590 : vector<8x16xi1>, vector<8x16xf32>
    %707 = arith.select %599, %681, %591 : vector<8x1xi1>, vector<8x1xi32>
    %708 = arith.select %599, %683, %592 : vector<8x1xi1>, vector<8x1xi32>
    %709 = arith.select %599, %648, %593 : vector<8x1xi1>, vector<8x1xf32>
    %710 = arith.select %599, %690, %594 : vector<8x1xi1>, vector<8x1xi32>
    %c5_i32_150 = arith.constant 5 : i32
    %c0_i32_151 = arith.constant 0 : i32
    %711 = vector.broadcast %c0_i32_151 : i32 to vector<8x1xi32>
    %712 = arith.cmpi eq, %710, %711 : vector<8x1xi32>
    %c5_i32_152 = arith.constant 5 : i32
    %713 = vector.broadcast %c5_i32_152 : i32 to vector<8x1xi32>
    %714 = arith.cmpi slt, %707, %713 : vector<8x1xi32>
    %715 = arith.andi %712, %714 : vector<8x1xi1>
    %c1_i32_153 = arith.constant 1 : i32
    %716 = vector.broadcast %c1_i32_153 : i32 to vector<8x1xi32>
    %717 = arith.addi %707, %716 : vector<8x1xi32>
    %718 = arith.sitofp %717 : vector<8x1xi32> to vector<8x1xf32>
    %719 = arith.subf %55, %718 : vector<8x1xf32>
    %cst_154 = arith.constant 1.000000e+00 : f32
    %720 = vector.broadcast %cst_154 : f32 to vector<8x1xf32>
    %721 = arith.maximumf %719, %720 : vector<8x1xf32>
    %722 = arith.sitofp %708 : vector<8x1xi32> to vector<8x1xf32>
    %723 = vector.broadcast %722 : vector<8x1xf32> to vector<8x16xf32>
    %724 = arith.divf %703, %723 : vector<8x16xf32>
    %725 = vector.broadcast %721 : vector<8x1xf32> to vector<8x16xf32>
    %726 = arith.divf %706, %725 : vector<8x16xf32>
    %cst_155 = arith.constant dense<0.000000e+00> : vector<8x8xf32>
    %727 = tpu.matmul %724, %6, %cst_155 {dimension_numbers = #tpu.dot_dimension_numbers<[1], [0], [0], [1], [0, 0, 1, 1], [], []>} : vector<8x16xf32>, vector<16x8xf32>, vector<8x8xf32> -> vector<8x8xf32>
    %cst_156 = arith.constant dense<0.000000e+00> : vector<8x8xf32>
    %728 = tpu.matmul %726, %7, %cst_156 {dimension_numbers = #tpu.dot_dimension_numbers<[1], [0], [0], [1], [0, 0, 1, 1], [], []>} : vector<8x16xf32>, vector<16x8xf32>, vector<8x8xf32> -> vector<8x8xf32>
    %729 = arith.addf %727, %728 : vector<8x8xf32>
    %730 = vector.broadcast %8 : vector<1x8xf32> to vector<8x8xf32>
    %731 = arith.addf %729, %730 : vector<8x8xf32>
    %cst_157 = arith.constant dense<0xFF800000> : vector<8xf32>
    %732 = vector.multi_reduction <maximumf>, %731, %cst_157 [1] : vector<8x8xf32> to vector<8xf32>
    %733 = vector.shape_cast %732 : vector<8xf32> to vector<8x1xf32>
    %734 = vector.broadcast %733 : vector<8x1xf32> to vector<8x8xf32>
    %735 = arith.cmpf oeq, %731, %734 : vector<8x8xf32>
    %cst_158 = arith.constant 8.000000e+00 : f32
    %736 = vector.broadcast %cst_158 : f32 to vector<8x8xf32>
    %737 = arith.select %735, %12, %736 : vector<8x8xi1>, vector<8x8xf32>
    %cst_159 = arith.constant dense<0x7F800000> : vector<8xf32>
    %738 = vector.multi_reduction <minimumf>, %737, %cst_159 [1] : vector<8x8xf32> to vector<8xf32>
    %739 = vector.shape_cast %738 : vector<8xf32> to vector<8x1xf32>
    %740 = vector.broadcast %733 : vector<8x1xf32> to vector<8x8xf32>
    %741 = arith.subf %731, %740 : vector<8x8xf32>
    %742 = math.exp %741 : vector<8x8xf32>
    %cst_160 = arith.constant dense<0.000000e+00> : vector<8xf32>
    %743 = vector.multi_reduction <add>, %742, %cst_160 [1] : vector<8x8xf32> to vector<8xf32>
    %744 = vector.shape_cast %743 : vector<8xf32> to vector<8x1xf32>
    %745 = vector.broadcast %c5_i32_150 : i32 to vector<8x16xi32>
    %746 = arith.cmpi eq, %10, %745 : vector<8x16xi32>
    %cst_161 = arith.constant 0.000000e+00 : f32
    %747 = vector.broadcast %cst_161 : f32 to vector<8x16xf32>
    %748 = arith.select %746, %2, %747 : vector<8x16xi1>, vector<8x16xf32>
    %cst_162 = arith.constant dense<0.000000e+00> : vector<8xf32>
    %749 = vector.multi_reduction <add>, %748, %cst_162 [1] : vector<8x16xf32> to vector<8xf32>
    %750 = vector.shape_cast %749 : vector<8xf32> to vector<8x1xf32>
    %751 = arith.mulf %750, %744 : vector<8x1xf32>
    %752 = vector.broadcast %717 : vector<8x1xi32> to vector<8x6xi32>
    %753 = arith.cmpi eq, %9, %752 : vector<8x6xi32>
    %754 = arith.extui %753 : vector<8x6xi1> to vector<8x6xi32>
    %755 = arith.sitofp %754 : vector<8x6xi32> to vector<8x6xf32>
    %756 = arith.mulf %0, %755 : vector<8x6xf32>
    %cst_163 = arith.constant dense<0.000000e+00> : vector<8xf32>
    %757 = vector.multi_reduction <add>, %756, %cst_163 [1] : vector<8x6xf32> to vector<8xf32>
    %758 = vector.shape_cast %757 : vector<8xf32> to vector<8x1xf32>
    %759 = arith.mulf %1, %755 : vector<8x6xf32>
    %cst_164 = arith.constant dense<0.000000e+00> : vector<8xf32>
    %760 = vector.multi_reduction <add>, %759, %cst_164 [1] : vector<8x6xf32> to vector<8xf32>
    %761 = vector.shape_cast %760 : vector<8xf32> to vector<8x1xf32>
    %762 = arith.addf %709, %751 : vector<8x1xf32>
    %763 = arith.cmpf olt, %762, %758 : vector<8x1xf32>
    %764 = arith.select %763, %762, %758 : vector<8x1xi1>, vector<8x1xf32>
    %765 = arith.select %763, %739, %761 : vector<8x1xi1>, vector<8x1xf32>
    %cst_165 = arith.constant 5.000000e-01 : f32
    %766 = vector.broadcast %cst_165 : f32 to vector<8x1xf32>
    %767 = arith.addf %765, %766 : vector<8x1xf32>
    %768 = arith.fptosi %767 : vector<8x1xf32> to vector<8x1xi32>
    %769 = vector.broadcast %768 : vector<8x1xi32> to vector<8x8xi32>
    %770 = arith.cmpi eq, %11, %769 : vector<8x8xi32>
    %771 = arith.extui %770 : vector<8x8xi1> to vector<8x8xi32>
    %772 = arith.sitofp %771 : vector<8x8xi32> to vector<8x8xf32>
    %cst_166 = arith.constant dense<0.000000e+00> : vector<8x16xf32>
    %773 = tpu.matmul %772, %3, %cst_166 {dimension_numbers = #tpu.dot_dimension_numbers<[1], [0], [0], [1], [0, 0, 1, 1], [], []>} : vector<8x8xf32>, vector<8x16xf32>, vector<8x16xf32> -> vector<8x16xf32>
    %cst_167 = arith.constant 6.000000e-01 : f32
    %774 = vector.broadcast %cst_167 : f32 to vector<8x16xf32>
    %775 = arith.mulf %774, %773 : vector<8x16xf32>
    %776 = vector.broadcast %4 : vector<1x16xf32> to vector<8x16xf32>
    %777 = vector.broadcast %764 : vector<8x1xf32> to vector<8x16xf32>
    %778 = arith.mulf %776, %777 : vector<8x16xf32>
    %779 = vector.broadcast %5 : vector<1x16xf32> to vector<8x16xf32>
    %780 = arith.addf %778, %779 : vector<8x16xf32>
    %cst_168 = arith.constant 4.000000e-01 : f32
    %781 = vector.broadcast %cst_168 : f32 to vector<8x16xf32>
    %782 = arith.mulf %781, %780 : vector<8x16xf32>
    %783 = arith.addf %775, %782 : vector<8x16xf32>
    %cst_169 = arith.constant 0.000000e+00 : f32
    %784 = vector.broadcast %cst_169 : f32 to vector<8x1xf32>
    %785 = arith.cmpf oge, %764, %784 : vector<8x1xf32>
    %786 = arith.extui %785 : vector<8x1xi1> to vector<8x1xi32>
    %787 = arith.sitofp %786 : vector<8x1xi32> to vector<8x1xf32>
    %788 = vector.broadcast %787 : vector<8x1xf32> to vector<8x16xf32>
    %789 = arith.mulf %783, %788 : vector<8x16xf32>
    %790 = arith.addf %703, %789 : vector<8x16xf32>
    %791 = arith.subf %706, %789 : vector<8x16xf32>
    %792 = vector.shape_cast %763 : vector<8x1xi1> to vector<8x1xi1>
    %793 = vector.broadcast %792 : vector<8x1xi1> to vector<8x16xi1>
    %794 = arith.select %793, %706, %791 : vector<8x16xi1>, vector<8x16xf32>
    %c1_i32_170 = arith.constant 1 : i32
    %795 = vector.broadcast %c1_i32_170 : i32 to vector<8x1xi32>
    %796 = arith.addi %707, %795 : vector<8x1xi32>
    %797 = arith.select %763, %707, %796 : vector<8x1xi1>, vector<8x1xi32>
    %c1_i32_171 = arith.constant 1 : i32
    %798 = vector.broadcast %c1_i32_171 : i32 to vector<8x1xi32>
    %799 = arith.addi %708, %798 : vector<8x1xi32>
    %cst_172 = arith.constant 0.000000e+00 : f32
    %800 = vector.broadcast %cst_172 : f32 to vector<8x1xf32>
    %801 = arith.cmpf olt, %764, %800 : vector<8x1xf32>
    %c16_i32_173 = arith.constant 16 : i32
    %802 = vector.broadcast %c16_i32_173 : i32 to vector<8x1xi32>
    %803 = arith.cmpi sge, %799, %802 : vector<8x1xi32>
    %804 = arith.ori %801, %803 : vector<8x1xi1>
    %805 = arith.extui %804 : vector<8x1xi1> to vector<8x1xi32>
    %806 = arith.maxsi %710, %805 : vector<8x1xi32>
    %807 = vector.broadcast %708 : vector<8x1xi32> to vector<8x16xi32>
    %808 = arith.cmpi eq, %10, %807 : vector<8x16xi32>
    %809 = vector.broadcast %715 : vector<8x1xi1> to vector<8x16xi1>
    %810 = arith.andi %808, %809 : vector<8x16xi1>
    %811 = vector.shape_cast %764 : vector<8x1xf32> to vector<8x1xf32>
    %812 = vector.broadcast %811 : vector<8x1xf32> to vector<8x16xf32>
    %813 = arith.select %810, %812, %697 : vector<8x16xi1>, vector<8x16xf32>
    %814 = vector.shape_cast %765 : vector<8x1xf32> to vector<8x1xf32>
    %815 = vector.broadcast %814 : vector<8x1xf32> to vector<8x16xf32>
    %816 = arith.select %810, %815, %700 : vector<8x16xi1>, vector<8x16xf32>
    %817 = vector.shape_cast %715 : vector<8x1xi1> to vector<8x1xi1>
    %818 = vector.broadcast %817 : vector<8x1xi1> to vector<8x16xi1>
    %819 = arith.select %818, %790, %703 : vector<8x16xi1>, vector<8x16xf32>
    %820 = vector.shape_cast %715 : vector<8x1xi1> to vector<8x1xi1>
    %821 = vector.broadcast %820 : vector<8x1xi1> to vector<8x16xi1>
    %822 = arith.select %821, %794, %706 : vector<8x16xi1>, vector<8x16xf32>
    %823 = arith.select %715, %797, %707 : vector<8x1xi1>, vector<8x1xi32>
    %824 = arith.select %715, %799, %708 : vector<8x1xi1>, vector<8x1xi32>
    %825 = arith.select %715, %764, %709 : vector<8x1xi1>, vector<8x1xf32>
    %826 = arith.select %715, %806, %710 : vector<8x1xi1>, vector<8x1xi32>
    %c6_i32 = arith.constant 6 : i32
    %c0_i32_174 = arith.constant 0 : i32
    %827 = vector.broadcast %c0_i32_174 : i32 to vector<8x1xi32>
    %828 = arith.cmpi eq, %826, %827 : vector<8x1xi32>
    %c5_i32_175 = arith.constant 5 : i32
    %829 = vector.broadcast %c5_i32_175 : i32 to vector<8x1xi32>
    %830 = arith.cmpi slt, %823, %829 : vector<8x1xi32>
    %831 = arith.andi %828, %830 : vector<8x1xi1>
    %c1_i32_176 = arith.constant 1 : i32
    %832 = vector.broadcast %c1_i32_176 : i32 to vector<8x1xi32>
    %833 = arith.addi %823, %832 : vector<8x1xi32>
    %834 = arith.sitofp %833 : vector<8x1xi32> to vector<8x1xf32>
    %835 = arith.subf %55, %834 : vector<8x1xf32>
    %cst_177 = arith.constant 1.000000e+00 : f32
    %836 = vector.broadcast %cst_177 : f32 to vector<8x1xf32>
    %837 = arith.maximumf %835, %836 : vector<8x1xf32>
    %838 = arith.sitofp %824 : vector<8x1xi32> to vector<8x1xf32>
    %839 = vector.broadcast %838 : vector<8x1xf32> to vector<8x16xf32>
    %840 = arith.divf %819, %839 : vector<8x16xf32>
    %841 = vector.broadcast %837 : vector<8x1xf32> to vector<8x16xf32>
    %842 = arith.divf %822, %841 : vector<8x16xf32>
    %cst_178 = arith.constant dense<0.000000e+00> : vector<8x8xf32>
    %843 = tpu.matmul %840, %6, %cst_178 {dimension_numbers = #tpu.dot_dimension_numbers<[1], [0], [0], [1], [0, 0, 1, 1], [], []>} : vector<8x16xf32>, vector<16x8xf32>, vector<8x8xf32> -> vector<8x8xf32>
    %cst_179 = arith.constant dense<0.000000e+00> : vector<8x8xf32>
    %844 = tpu.matmul %842, %7, %cst_179 {dimension_numbers = #tpu.dot_dimension_numbers<[1], [0], [0], [1], [0, 0, 1, 1], [], []>} : vector<8x16xf32>, vector<16x8xf32>, vector<8x8xf32> -> vector<8x8xf32>
    %845 = arith.addf %843, %844 : vector<8x8xf32>
    %846 = vector.broadcast %8 : vector<1x8xf32> to vector<8x8xf32>
    %847 = arith.addf %845, %846 : vector<8x8xf32>
    %cst_180 = arith.constant dense<0xFF800000> : vector<8xf32>
    %848 = vector.multi_reduction <maximumf>, %847, %cst_180 [1] : vector<8x8xf32> to vector<8xf32>
    %849 = vector.shape_cast %848 : vector<8xf32> to vector<8x1xf32>
    %850 = vector.broadcast %849 : vector<8x1xf32> to vector<8x8xf32>
    %851 = arith.cmpf oeq, %847, %850 : vector<8x8xf32>
    %cst_181 = arith.constant 8.000000e+00 : f32
    %852 = vector.broadcast %cst_181 : f32 to vector<8x8xf32>
    %853 = arith.select %851, %12, %852 : vector<8x8xi1>, vector<8x8xf32>
    %cst_182 = arith.constant dense<0x7F800000> : vector<8xf32>
    %854 = vector.multi_reduction <minimumf>, %853, %cst_182 [1] : vector<8x8xf32> to vector<8xf32>
    %855 = vector.shape_cast %854 : vector<8xf32> to vector<8x1xf32>
    %856 = vector.broadcast %849 : vector<8x1xf32> to vector<8x8xf32>
    %857 = arith.subf %847, %856 : vector<8x8xf32>
    %858 = math.exp %857 : vector<8x8xf32>
    %cst_183 = arith.constant dense<0.000000e+00> : vector<8xf32>
    %859 = vector.multi_reduction <add>, %858, %cst_183 [1] : vector<8x8xf32> to vector<8xf32>
    %860 = vector.shape_cast %859 : vector<8xf32> to vector<8x1xf32>
    %861 = vector.broadcast %c6_i32 : i32 to vector<8x16xi32>
    %862 = arith.cmpi eq, %10, %861 : vector<8x16xi32>
    %cst_184 = arith.constant 0.000000e+00 : f32
    %863 = vector.broadcast %cst_184 : f32 to vector<8x16xf32>
    %864 = arith.select %862, %2, %863 : vector<8x16xi1>, vector<8x16xf32>
    %cst_185 = arith.constant dense<0.000000e+00> : vector<8xf32>
    %865 = vector.multi_reduction <add>, %864, %cst_185 [1] : vector<8x16xf32> to vector<8xf32>
    %866 = vector.shape_cast %865 : vector<8xf32> to vector<8x1xf32>
    %867 = arith.mulf %866, %860 : vector<8x1xf32>
    %868 = vector.broadcast %833 : vector<8x1xi32> to vector<8x6xi32>
    %869 = arith.cmpi eq, %9, %868 : vector<8x6xi32>
    %870 = arith.extui %869 : vector<8x6xi1> to vector<8x6xi32>
    %871 = arith.sitofp %870 : vector<8x6xi32> to vector<8x6xf32>
    %872 = arith.mulf %0, %871 : vector<8x6xf32>
    %cst_186 = arith.constant dense<0.000000e+00> : vector<8xf32>
    %873 = vector.multi_reduction <add>, %872, %cst_186 [1] : vector<8x6xf32> to vector<8xf32>
    %874 = vector.shape_cast %873 : vector<8xf32> to vector<8x1xf32>
    %875 = arith.mulf %1, %871 : vector<8x6xf32>
    %cst_187 = arith.constant dense<0.000000e+00> : vector<8xf32>
    %876 = vector.multi_reduction <add>, %875, %cst_187 [1] : vector<8x6xf32> to vector<8xf32>
    %877 = vector.shape_cast %876 : vector<8xf32> to vector<8x1xf32>
    %878 = arith.addf %825, %867 : vector<8x1xf32>
    %879 = arith.cmpf olt, %878, %874 : vector<8x1xf32>
    %880 = arith.select %879, %878, %874 : vector<8x1xi1>, vector<8x1xf32>
    %881 = arith.select %879, %855, %877 : vector<8x1xi1>, vector<8x1xf32>
    %cst_188 = arith.constant 5.000000e-01 : f32
    %882 = vector.broadcast %cst_188 : f32 to vector<8x1xf32>
    %883 = arith.addf %881, %882 : vector<8x1xf32>
    %884 = arith.fptosi %883 : vector<8x1xf32> to vector<8x1xi32>
    %885 = vector.broadcast %884 : vector<8x1xi32> to vector<8x8xi32>
    %886 = arith.cmpi eq, %11, %885 : vector<8x8xi32>
    %887 = arith.extui %886 : vector<8x8xi1> to vector<8x8xi32>
    %888 = arith.sitofp %887 : vector<8x8xi32> to vector<8x8xf32>
    %cst_189 = arith.constant dense<0.000000e+00> : vector<8x16xf32>
    %889 = tpu.matmul %888, %3, %cst_189 {dimension_numbers = #tpu.dot_dimension_numbers<[1], [0], [0], [1], [0, 0, 1, 1], [], []>} : vector<8x8xf32>, vector<8x16xf32>, vector<8x16xf32> -> vector<8x16xf32>
    %cst_190 = arith.constant 6.000000e-01 : f32
    %890 = vector.broadcast %cst_190 : f32 to vector<8x16xf32>
    %891 = arith.mulf %890, %889 : vector<8x16xf32>
    %892 = vector.broadcast %4 : vector<1x16xf32> to vector<8x16xf32>
    %893 = vector.broadcast %880 : vector<8x1xf32> to vector<8x16xf32>
    %894 = arith.mulf %892, %893 : vector<8x16xf32>
    %895 = vector.broadcast %5 : vector<1x16xf32> to vector<8x16xf32>
    %896 = arith.addf %894, %895 : vector<8x16xf32>
    %cst_191 = arith.constant 4.000000e-01 : f32
    %897 = vector.broadcast %cst_191 : f32 to vector<8x16xf32>
    %898 = arith.mulf %897, %896 : vector<8x16xf32>
    %899 = arith.addf %891, %898 : vector<8x16xf32>
    %cst_192 = arith.constant 0.000000e+00 : f32
    %900 = vector.broadcast %cst_192 : f32 to vector<8x1xf32>
    %901 = arith.cmpf oge, %880, %900 : vector<8x1xf32>
    %902 = arith.extui %901 : vector<8x1xi1> to vector<8x1xi32>
    %903 = arith.sitofp %902 : vector<8x1xi32> to vector<8x1xf32>
    %904 = vector.broadcast %903 : vector<8x1xf32> to vector<8x16xf32>
    %905 = arith.mulf %899, %904 : vector<8x16xf32>
    %906 = arith.addf %819, %905 : vector<8x16xf32>
    %907 = arith.subf %822, %905 : vector<8x16xf32>
    %908 = vector.shape_cast %879 : vector<8x1xi1> to vector<8x1xi1>
    %909 = vector.broadcast %908 : vector<8x1xi1> to vector<8x16xi1>
    %910 = arith.select %909, %822, %907 : vector<8x16xi1>, vector<8x16xf32>
    %c1_i32_193 = arith.constant 1 : i32
    %911 = vector.broadcast %c1_i32_193 : i32 to vector<8x1xi32>
    %912 = arith.addi %823, %911 : vector<8x1xi32>
    %913 = arith.select %879, %823, %912 : vector<8x1xi1>, vector<8x1xi32>
    %c1_i32_194 = arith.constant 1 : i32
    %914 = vector.broadcast %c1_i32_194 : i32 to vector<8x1xi32>
    %915 = arith.addi %824, %914 : vector<8x1xi32>
    %cst_195 = arith.constant 0.000000e+00 : f32
    %916 = vector.broadcast %cst_195 : f32 to vector<8x1xf32>
    %917 = arith.cmpf olt, %880, %916 : vector<8x1xf32>
    %c16_i32_196 = arith.constant 16 : i32
    %918 = vector.broadcast %c16_i32_196 : i32 to vector<8x1xi32>
    %919 = arith.cmpi sge, %915, %918 : vector<8x1xi32>
    %920 = arith.ori %917, %919 : vector<8x1xi1>
    %921 = arith.extui %920 : vector<8x1xi1> to vector<8x1xi32>
    %922 = arith.maxsi %826, %921 : vector<8x1xi32>
    %923 = vector.broadcast %824 : vector<8x1xi32> to vector<8x16xi32>
    %924 = arith.cmpi eq, %10, %923 : vector<8x16xi32>
    %925 = vector.broadcast %831 : vector<8x1xi1> to vector<8x16xi1>
    %926 = arith.andi %924, %925 : vector<8x16xi1>
    %927 = vector.shape_cast %880 : vector<8x1xf32> to vector<8x1xf32>
    %928 = vector.broadcast %927 : vector<8x1xf32> to vector<8x16xf32>
    %929 = arith.select %926, %928, %813 : vector<8x16xi1>, vector<8x16xf32>
    %930 = vector.shape_cast %881 : vector<8x1xf32> to vector<8x1xf32>
    %931 = vector.broadcast %930 : vector<8x1xf32> to vector<8x16xf32>
    %932 = arith.select %926, %931, %816 : vector<8x16xi1>, vector<8x16xf32>
    %933 = vector.shape_cast %831 : vector<8x1xi1> to vector<8x1xi1>
    %934 = vector.broadcast %933 : vector<8x1xi1> to vector<8x16xi1>
    %935 = arith.select %934, %906, %819 : vector<8x16xi1>, vector<8x16xf32>
    %936 = vector.shape_cast %831 : vector<8x1xi1> to vector<8x1xi1>
    %937 = vector.broadcast %936 : vector<8x1xi1> to vector<8x16xi1>
    %938 = arith.select %937, %910, %822 : vector<8x16xi1>, vector<8x16xf32>
    %939 = arith.select %831, %913, %823 : vector<8x1xi1>, vector<8x1xi32>
    %940 = arith.select %831, %915, %824 : vector<8x1xi1>, vector<8x1xi32>
    %941 = arith.select %831, %880, %825 : vector<8x1xi1>, vector<8x1xf32>
    %942 = arith.select %831, %922, %826 : vector<8x1xi1>, vector<8x1xi32>
    %c7_i32 = arith.constant 7 : i32
    %c0_i32_197 = arith.constant 0 : i32
    %943 = vector.broadcast %c0_i32_197 : i32 to vector<8x1xi32>
    %944 = arith.cmpi eq, %942, %943 : vector<8x1xi32>
    %c5_i32_198 = arith.constant 5 : i32
    %945 = vector.broadcast %c5_i32_198 : i32 to vector<8x1xi32>
    %946 = arith.cmpi slt, %939, %945 : vector<8x1xi32>
    %947 = arith.andi %944, %946 : vector<8x1xi1>
    %c1_i32_199 = arith.constant 1 : i32
    %948 = vector.broadcast %c1_i32_199 : i32 to vector<8x1xi32>
    %949 = arith.addi %939, %948 : vector<8x1xi32>
    %950 = arith.sitofp %949 : vector<8x1xi32> to vector<8x1xf32>
    %951 = arith.subf %55, %950 : vector<8x1xf32>
    %cst_200 = arith.constant 1.000000e+00 : f32
    %952 = vector.broadcast %cst_200 : f32 to vector<8x1xf32>
    %953 = arith.maximumf %951, %952 : vector<8x1xf32>
    %954 = arith.sitofp %940 : vector<8x1xi32> to vector<8x1xf32>
    %955 = vector.broadcast %954 : vector<8x1xf32> to vector<8x16xf32>
    %956 = arith.divf %935, %955 : vector<8x16xf32>
    %957 = vector.broadcast %953 : vector<8x1xf32> to vector<8x16xf32>
    %958 = arith.divf %938, %957 : vector<8x16xf32>
    %cst_201 = arith.constant dense<0.000000e+00> : vector<8x8xf32>
    %959 = tpu.matmul %956, %6, %cst_201 {dimension_numbers = #tpu.dot_dimension_numbers<[1], [0], [0], [1], [0, 0, 1, 1], [], []>} : vector<8x16xf32>, vector<16x8xf32>, vector<8x8xf32> -> vector<8x8xf32>
    %cst_202 = arith.constant dense<0.000000e+00> : vector<8x8xf32>
    %960 = tpu.matmul %958, %7, %cst_202 {dimension_numbers = #tpu.dot_dimension_numbers<[1], [0], [0], [1], [0, 0, 1, 1], [], []>} : vector<8x16xf32>, vector<16x8xf32>, vector<8x8xf32> -> vector<8x8xf32>
    %961 = arith.addf %959, %960 : vector<8x8xf32>
    %962 = vector.broadcast %8 : vector<1x8xf32> to vector<8x8xf32>
    %963 = arith.addf %961, %962 : vector<8x8xf32>
    %cst_203 = arith.constant dense<0xFF800000> : vector<8xf32>
    %964 = vector.multi_reduction <maximumf>, %963, %cst_203 [1] : vector<8x8xf32> to vector<8xf32>
    %965 = vector.shape_cast %964 : vector<8xf32> to vector<8x1xf32>
    %966 = vector.broadcast %965 : vector<8x1xf32> to vector<8x8xf32>
    %967 = arith.cmpf oeq, %963, %966 : vector<8x8xf32>
    %cst_204 = arith.constant 8.000000e+00 : f32
    %968 = vector.broadcast %cst_204 : f32 to vector<8x8xf32>
    %969 = arith.select %967, %12, %968 : vector<8x8xi1>, vector<8x8xf32>
    %cst_205 = arith.constant dense<0x7F800000> : vector<8xf32>
    %970 = vector.multi_reduction <minimumf>, %969, %cst_205 [1] : vector<8x8xf32> to vector<8xf32>
    %971 = vector.shape_cast %970 : vector<8xf32> to vector<8x1xf32>
    %972 = vector.broadcast %965 : vector<8x1xf32> to vector<8x8xf32>
    %973 = arith.subf %963, %972 : vector<8x8xf32>
    %974 = math.exp %973 : vector<8x8xf32>
    %cst_206 = arith.constant dense<0.000000e+00> : vector<8xf32>
    %975 = vector.multi_reduction <add>, %974, %cst_206 [1] : vector<8x8xf32> to vector<8xf32>
    %976 = vector.shape_cast %975 : vector<8xf32> to vector<8x1xf32>
    %977 = vector.broadcast %c7_i32 : i32 to vector<8x16xi32>
    %978 = arith.cmpi eq, %10, %977 : vector<8x16xi32>
    %cst_207 = arith.constant 0.000000e+00 : f32
    %979 = vector.broadcast %cst_207 : f32 to vector<8x16xf32>
    %980 = arith.select %978, %2, %979 : vector<8x16xi1>, vector<8x16xf32>
    %cst_208 = arith.constant dense<0.000000e+00> : vector<8xf32>
    %981 = vector.multi_reduction <add>, %980, %cst_208 [1] : vector<8x16xf32> to vector<8xf32>
    %982 = vector.shape_cast %981 : vector<8xf32> to vector<8x1xf32>
    %983 = arith.mulf %982, %976 : vector<8x1xf32>
    %984 = vector.broadcast %949 : vector<8x1xi32> to vector<8x6xi32>
    %985 = arith.cmpi eq, %9, %984 : vector<8x6xi32>
    %986 = arith.extui %985 : vector<8x6xi1> to vector<8x6xi32>
    %987 = arith.sitofp %986 : vector<8x6xi32> to vector<8x6xf32>
    %988 = arith.mulf %0, %987 : vector<8x6xf32>
    %cst_209 = arith.constant dense<0.000000e+00> : vector<8xf32>
    %989 = vector.multi_reduction <add>, %988, %cst_209 [1] : vector<8x6xf32> to vector<8xf32>
    %990 = vector.shape_cast %989 : vector<8xf32> to vector<8x1xf32>
    %991 = arith.mulf %1, %987 : vector<8x6xf32>
    %cst_210 = arith.constant dense<0.000000e+00> : vector<8xf32>
    %992 = vector.multi_reduction <add>, %991, %cst_210 [1] : vector<8x6xf32> to vector<8xf32>
    %993 = vector.shape_cast %992 : vector<8xf32> to vector<8x1xf32>
    %994 = arith.addf %941, %983 : vector<8x1xf32>
    %995 = arith.cmpf olt, %994, %990 : vector<8x1xf32>
    %996 = arith.select %995, %994, %990 : vector<8x1xi1>, vector<8x1xf32>
    %997 = arith.select %995, %971, %993 : vector<8x1xi1>, vector<8x1xf32>
    %cst_211 = arith.constant 5.000000e-01 : f32
    %998 = vector.broadcast %cst_211 : f32 to vector<8x1xf32>
    %999 = arith.addf %997, %998 : vector<8x1xf32>
    %1000 = arith.fptosi %999 : vector<8x1xf32> to vector<8x1xi32>
    %1001 = vector.broadcast %1000 : vector<8x1xi32> to vector<8x8xi32>
    %1002 = arith.cmpi eq, %11, %1001 : vector<8x8xi32>
    %1003 = arith.extui %1002 : vector<8x8xi1> to vector<8x8xi32>
    %1004 = arith.sitofp %1003 : vector<8x8xi32> to vector<8x8xf32>
    %cst_212 = arith.constant dense<0.000000e+00> : vector<8x16xf32>
    %1005 = tpu.matmul %1004, %3, %cst_212 {dimension_numbers = #tpu.dot_dimension_numbers<[1], [0], [0], [1], [0, 0, 1, 1], [], []>} : vector<8x8xf32>, vector<8x16xf32>, vector<8x16xf32> -> vector<8x16xf32>
    %cst_213 = arith.constant 6.000000e-01 : f32
    %1006 = vector.broadcast %cst_213 : f32 to vector<8x16xf32>
    %1007 = arith.mulf %1006, %1005 : vector<8x16xf32>
    %1008 = vector.broadcast %4 : vector<1x16xf32> to vector<8x16xf32>
    %1009 = vector.broadcast %996 : vector<8x1xf32> to vector<8x16xf32>
    %1010 = arith.mulf %1008, %1009 : vector<8x16xf32>
    %1011 = vector.broadcast %5 : vector<1x16xf32> to vector<8x16xf32>
    %1012 = arith.addf %1010, %1011 : vector<8x16xf32>
    %cst_214 = arith.constant 4.000000e-01 : f32
    %1013 = vector.broadcast %cst_214 : f32 to vector<8x16xf32>
    %1014 = arith.mulf %1013, %1012 : vector<8x16xf32>
    %1015 = arith.addf %1007, %1014 : vector<8x16xf32>
    %cst_215 = arith.constant 0.000000e+00 : f32
    %1016 = vector.broadcast %cst_215 : f32 to vector<8x1xf32>
    %1017 = arith.cmpf oge, %996, %1016 : vector<8x1xf32>
    %1018 = arith.extui %1017 : vector<8x1xi1> to vector<8x1xi32>
    %1019 = arith.sitofp %1018 : vector<8x1xi32> to vector<8x1xf32>
    %1020 = vector.broadcast %1019 : vector<8x1xf32> to vector<8x16xf32>
    %1021 = arith.mulf %1015, %1020 : vector<8x16xf32>
    %1022 = arith.addf %935, %1021 : vector<8x16xf32>
    %1023 = arith.subf %938, %1021 : vector<8x16xf32>
    %1024 = vector.shape_cast %995 : vector<8x1xi1> to vector<8x1xi1>
    %1025 = vector.broadcast %1024 : vector<8x1xi1> to vector<8x16xi1>
    %1026 = arith.select %1025, %938, %1023 : vector<8x16xi1>, vector<8x16xf32>
    %c1_i32_216 = arith.constant 1 : i32
    %1027 = vector.broadcast %c1_i32_216 : i32 to vector<8x1xi32>
    %1028 = arith.addi %939, %1027 : vector<8x1xi32>
    %1029 = arith.select %995, %939, %1028 : vector<8x1xi1>, vector<8x1xi32>
    %c1_i32_217 = arith.constant 1 : i32
    %1030 = vector.broadcast %c1_i32_217 : i32 to vector<8x1xi32>
    %1031 = arith.addi %940, %1030 : vector<8x1xi32>
    %cst_218 = arith.constant 0.000000e+00 : f32
    %1032 = vector.broadcast %cst_218 : f32 to vector<8x1xf32>
    %1033 = arith.cmpf olt, %996, %1032 : vector<8x1xf32>
    %c16_i32_219 = arith.constant 16 : i32
    %1034 = vector.broadcast %c16_i32_219 : i32 to vector<8x1xi32>
    %1035 = arith.cmpi sge, %1031, %1034 : vector<8x1xi32>
    %1036 = arith.ori %1033, %1035 : vector<8x1xi1>
    %1037 = arith.extui %1036 : vector<8x1xi1> to vector<8x1xi32>
    %1038 = arith.maxsi %942, %1037 : vector<8x1xi32>
    %1039 = vector.broadcast %940 : vector<8x1xi32> to vector<8x16xi32>
    %1040 = arith.cmpi eq, %10, %1039 : vector<8x16xi32>
    %1041 = vector.broadcast %947 : vector<8x1xi1> to vector<8x16xi1>
    %1042 = arith.andi %1040, %1041 : vector<8x16xi1>
    %1043 = vector.shape_cast %996 : vector<8x1xf32> to vector<8x1xf32>
    %1044 = vector.broadcast %1043 : vector<8x1xf32> to vector<8x16xf32>
    %1045 = arith.select %1042, %1044, %929 : vector<8x16xi1>, vector<8x16xf32>
    %1046 = vector.shape_cast %997 : vector<8x1xf32> to vector<8x1xf32>
    %1047 = vector.broadcast %1046 : vector<8x1xf32> to vector<8x16xf32>
    %1048 = arith.select %1042, %1047, %932 : vector<8x16xi1>, vector<8x16xf32>
    %1049 = vector.shape_cast %947 : vector<8x1xi1> to vector<8x1xi1>
    %1050 = vector.broadcast %1049 : vector<8x1xi1> to vector<8x16xi1>
    %1051 = arith.select %1050, %1022, %935 : vector<8x16xi1>, vector<8x16xf32>
    %1052 = vector.shape_cast %947 : vector<8x1xi1> to vector<8x1xi1>
    %1053 = vector.broadcast %1052 : vector<8x1xi1> to vector<8x16xi1>
    %1054 = arith.select %1053, %1026, %938 : vector<8x16xi1>, vector<8x16xf32>
    %1055 = arith.select %947, %1029, %939 : vector<8x1xi1>, vector<8x1xi32>
    %1056 = arith.select %947, %1031, %940 : vector<8x1xi1>, vector<8x1xi32>
    %1057 = arith.select %947, %996, %941 : vector<8x1xi1>, vector<8x1xf32>
    %1058 = arith.select %947, %1038, %942 : vector<8x1xi1>, vector<8x1xi32>
    %c8_i32 = arith.constant 8 : i32
    %c0_i32_220 = arith.constant 0 : i32
    %1059 = vector.broadcast %c0_i32_220 : i32 to vector<8x1xi32>
    %1060 = arith.cmpi eq, %1058, %1059 : vector<8x1xi32>
    %c5_i32_221 = arith.constant 5 : i32
    %1061 = vector.broadcast %c5_i32_221 : i32 to vector<8x1xi32>
    %1062 = arith.cmpi slt, %1055, %1061 : vector<8x1xi32>
    %1063 = arith.andi %1060, %1062 : vector<8x1xi1>
    %c1_i32_222 = arith.constant 1 : i32
    %1064 = vector.broadcast %c1_i32_222 : i32 to vector<8x1xi32>
    %1065 = arith.addi %1055, %1064 : vector<8x1xi32>
    %1066 = arith.sitofp %1065 : vector<8x1xi32> to vector<8x1xf32>
    %1067 = arith.subf %55, %1066 : vector<8x1xf32>
    %cst_223 = arith.constant 1.000000e+00 : f32
    %1068 = vector.broadcast %cst_223 : f32 to vector<8x1xf32>
    %1069 = arith.maximumf %1067, %1068 : vector<8x1xf32>
    %1070 = arith.sitofp %1056 : vector<8x1xi32> to vector<8x1xf32>
    %1071 = vector.broadcast %1070 : vector<8x1xf32> to vector<8x16xf32>
    %1072 = arith.divf %1051, %1071 : vector<8x16xf32>
    %1073 = vector.broadcast %1069 : vector<8x1xf32> to vector<8x16xf32>
    %1074 = arith.divf %1054, %1073 : vector<8x16xf32>
    %cst_224 = arith.constant dense<0.000000e+00> : vector<8x8xf32>
    %1075 = tpu.matmul %1072, %6, %cst_224 {dimension_numbers = #tpu.dot_dimension_numbers<[1], [0], [0], [1], [0, 0, 1, 1], [], []>} : vector<8x16xf32>, vector<16x8xf32>, vector<8x8xf32> -> vector<8x8xf32>
    %cst_225 = arith.constant dense<0.000000e+00> : vector<8x8xf32>
    %1076 = tpu.matmul %1074, %7, %cst_225 {dimension_numbers = #tpu.dot_dimension_numbers<[1], [0], [0], [1], [0, 0, 1, 1], [], []>} : vector<8x16xf32>, vector<16x8xf32>, vector<8x8xf32> -> vector<8x8xf32>
    %1077 = arith.addf %1075, %1076 : vector<8x8xf32>
    %1078 = vector.broadcast %8 : vector<1x8xf32> to vector<8x8xf32>
    %1079 = arith.addf %1077, %1078 : vector<8x8xf32>
    %cst_226 = arith.constant dense<0xFF800000> : vector<8xf32>
    %1080 = vector.multi_reduction <maximumf>, %1079, %cst_226 [1] : vector<8x8xf32> to vector<8xf32>
    %1081 = vector.shape_cast %1080 : vector<8xf32> to vector<8x1xf32>
    %1082 = vector.broadcast %1081 : vector<8x1xf32> to vector<8x8xf32>
    %1083 = arith.cmpf oeq, %1079, %1082 : vector<8x8xf32>
    %cst_227 = arith.constant 8.000000e+00 : f32
    %1084 = vector.broadcast %cst_227 : f32 to vector<8x8xf32>
    %1085 = arith.select %1083, %12, %1084 : vector<8x8xi1>, vector<8x8xf32>
    %cst_228 = arith.constant dense<0x7F800000> : vector<8xf32>
    %1086 = vector.multi_reduction <minimumf>, %1085, %cst_228 [1] : vector<8x8xf32> to vector<8xf32>
    %1087 = vector.shape_cast %1086 : vector<8xf32> to vector<8x1xf32>
    %1088 = vector.broadcast %1081 : vector<8x1xf32> to vector<8x8xf32>
    %1089 = arith.subf %1079, %1088 : vector<8x8xf32>
    %1090 = math.exp %1089 : vector<8x8xf32>
    %cst_229 = arith.constant dense<0.000000e+00> : vector<8xf32>
    %1091 = vector.multi_reduction <add>, %1090, %cst_229 [1] : vector<8x8xf32> to vector<8xf32>
    %1092 = vector.shape_cast %1091 : vector<8xf32> to vector<8x1xf32>
    %1093 = vector.broadcast %c8_i32 : i32 to vector<8x16xi32>
    %1094 = arith.cmpi eq, %10, %1093 : vector<8x16xi32>
    %cst_230 = arith.constant 0.000000e+00 : f32
    %1095 = vector.broadcast %cst_230 : f32 to vector<8x16xf32>
    %1096 = arith.select %1094, %2, %1095 : vector<8x16xi1>, vector<8x16xf32>
    %cst_231 = arith.constant dense<0.000000e+00> : vector<8xf32>
    %1097 = vector.multi_reduction <add>, %1096, %cst_231 [1] : vector<8x16xf32> to vector<8xf32>
    %1098 = vector.shape_cast %1097 : vector<8xf32> to vector<8x1xf32>
    %1099 = arith.mulf %1098, %1092 : vector<8x1xf32>
    %1100 = vector.broadcast %1065 : vector<8x1xi32> to vector<8x6xi32>
    %1101 = arith.cmpi eq, %9, %1100 : vector<8x6xi32>
    %1102 = arith.extui %1101 : vector<8x6xi1> to vector<8x6xi32>
    %1103 = arith.sitofp %1102 : vector<8x6xi32> to vector<8x6xf32>
    %1104 = arith.mulf %0, %1103 : vector<8x6xf32>
    %cst_232 = arith.constant dense<0.000000e+00> : vector<8xf32>
    %1105 = vector.multi_reduction <add>, %1104, %cst_232 [1] : vector<8x6xf32> to vector<8xf32>
    %1106 = vector.shape_cast %1105 : vector<8xf32> to vector<8x1xf32>
    %1107 = arith.mulf %1, %1103 : vector<8x6xf32>
    %cst_233 = arith.constant dense<0.000000e+00> : vector<8xf32>
    %1108 = vector.multi_reduction <add>, %1107, %cst_233 [1] : vector<8x6xf32> to vector<8xf32>
    %1109 = vector.shape_cast %1108 : vector<8xf32> to vector<8x1xf32>
    %1110 = arith.addf %1057, %1099 : vector<8x1xf32>
    %1111 = arith.cmpf olt, %1110, %1106 : vector<8x1xf32>
    %1112 = arith.select %1111, %1110, %1106 : vector<8x1xi1>, vector<8x1xf32>
    %1113 = arith.select %1111, %1087, %1109 : vector<8x1xi1>, vector<8x1xf32>
    %cst_234 = arith.constant 5.000000e-01 : f32
    %1114 = vector.broadcast %cst_234 : f32 to vector<8x1xf32>
    %1115 = arith.addf %1113, %1114 : vector<8x1xf32>
    %1116 = arith.fptosi %1115 : vector<8x1xf32> to vector<8x1xi32>
    %1117 = vector.broadcast %1116 : vector<8x1xi32> to vector<8x8xi32>
    %1118 = arith.cmpi eq, %11, %1117 : vector<8x8xi32>
    %1119 = arith.extui %1118 : vector<8x8xi1> to vector<8x8xi32>
    %1120 = arith.sitofp %1119 : vector<8x8xi32> to vector<8x8xf32>
    %cst_235 = arith.constant dense<0.000000e+00> : vector<8x16xf32>
    %1121 = tpu.matmul %1120, %3, %cst_235 {dimension_numbers = #tpu.dot_dimension_numbers<[1], [0], [0], [1], [0, 0, 1, 1], [], []>} : vector<8x8xf32>, vector<8x16xf32>, vector<8x16xf32> -> vector<8x16xf32>
    %cst_236 = arith.constant 6.000000e-01 : f32
    %1122 = vector.broadcast %cst_236 : f32 to vector<8x16xf32>
    %1123 = arith.mulf %1122, %1121 : vector<8x16xf32>
    %1124 = vector.broadcast %4 : vector<1x16xf32> to vector<8x16xf32>
    %1125 = vector.broadcast %1112 : vector<8x1xf32> to vector<8x16xf32>
    %1126 = arith.mulf %1124, %1125 : vector<8x16xf32>
    %1127 = vector.broadcast %5 : vector<1x16xf32> to vector<8x16xf32>
    %1128 = arith.addf %1126, %1127 : vector<8x16xf32>
    %cst_237 = arith.constant 4.000000e-01 : f32
    %1129 = vector.broadcast %cst_237 : f32 to vector<8x16xf32>
    %1130 = arith.mulf %1129, %1128 : vector<8x16xf32>
    %1131 = arith.addf %1123, %1130 : vector<8x16xf32>
    %cst_238 = arith.constant 0.000000e+00 : f32
    %1132 = vector.broadcast %cst_238 : f32 to vector<8x1xf32>
    %1133 = arith.cmpf oge, %1112, %1132 : vector<8x1xf32>
    %1134 = arith.extui %1133 : vector<8x1xi1> to vector<8x1xi32>
    %1135 = arith.sitofp %1134 : vector<8x1xi32> to vector<8x1xf32>
    %1136 = vector.broadcast %1135 : vector<8x1xf32> to vector<8x16xf32>
    %1137 = arith.mulf %1131, %1136 : vector<8x16xf32>
    %1138 = arith.addf %1051, %1137 : vector<8x16xf32>
    %1139 = arith.subf %1054, %1137 : vector<8x16xf32>
    %1140 = vector.shape_cast %1111 : vector<8x1xi1> to vector<8x1xi1>
    %1141 = vector.broadcast %1140 : vector<8x1xi1> to vector<8x16xi1>
    %1142 = arith.select %1141, %1054, %1139 : vector<8x16xi1>, vector<8x16xf32>
    %c1_i32_239 = arith.constant 1 : i32
    %1143 = vector.broadcast %c1_i32_239 : i32 to vector<8x1xi32>
    %1144 = arith.addi %1055, %1143 : vector<8x1xi32>
    %1145 = arith.select %1111, %1055, %1144 : vector<8x1xi1>, vector<8x1xi32>
    %c1_i32_240 = arith.constant 1 : i32
    %1146 = vector.broadcast %c1_i32_240 : i32 to vector<8x1xi32>
    %1147 = arith.addi %1056, %1146 : vector<8x1xi32>
    %cst_241 = arith.constant 0.000000e+00 : f32
    %1148 = vector.broadcast %cst_241 : f32 to vector<8x1xf32>
    %1149 = arith.cmpf olt, %1112, %1148 : vector<8x1xf32>
    %c16_i32_242 = arith.constant 16 : i32
    %1150 = vector.broadcast %c16_i32_242 : i32 to vector<8x1xi32>
    %1151 = arith.cmpi sge, %1147, %1150 : vector<8x1xi32>
    %1152 = arith.ori %1149, %1151 : vector<8x1xi1>
    %1153 = arith.extui %1152 : vector<8x1xi1> to vector<8x1xi32>
    %1154 = arith.maxsi %1058, %1153 : vector<8x1xi32>
    %1155 = vector.broadcast %1056 : vector<8x1xi32> to vector<8x16xi32>
    %1156 = arith.cmpi eq, %10, %1155 : vector<8x16xi32>
    %1157 = vector.broadcast %1063 : vector<8x1xi1> to vector<8x16xi1>
    %1158 = arith.andi %1156, %1157 : vector<8x16xi1>
    %1159 = vector.shape_cast %1112 : vector<8x1xf32> to vector<8x1xf32>
    %1160 = vector.broadcast %1159 : vector<8x1xf32> to vector<8x16xf32>
    %1161 = arith.select %1158, %1160, %1045 : vector<8x16xi1>, vector<8x16xf32>
    %1162 = vector.shape_cast %1113 : vector<8x1xf32> to vector<8x1xf32>
    %1163 = vector.broadcast %1162 : vector<8x1xf32> to vector<8x16xf32>
    %1164 = arith.select %1158, %1163, %1048 : vector<8x16xi1>, vector<8x16xf32>
    %1165 = vector.shape_cast %1063 : vector<8x1xi1> to vector<8x1xi1>
    %1166 = vector.broadcast %1165 : vector<8x1xi1> to vector<8x16xi1>
    %1167 = arith.select %1166, %1138, %1051 : vector<8x16xi1>, vector<8x16xf32>
    %1168 = vector.shape_cast %1063 : vector<8x1xi1> to vector<8x1xi1>
    %1169 = vector.broadcast %1168 : vector<8x1xi1> to vector<8x16xi1>
    %1170 = arith.select %1169, %1142, %1054 : vector<8x16xi1>, vector<8x16xf32>
    %1171 = arith.select %1063, %1145, %1055 : vector<8x1xi1>, vector<8x1xi32>
    %1172 = arith.select %1063, %1147, %1056 : vector<8x1xi1>, vector<8x1xi32>
    %1173 = arith.select %1063, %1112, %1057 : vector<8x1xi1>, vector<8x1xf32>
    %1174 = arith.select %1063, %1154, %1058 : vector<8x1xi1>, vector<8x1xi32>
    %c9_i32 = arith.constant 9 : i32
    %c0_i32_243 = arith.constant 0 : i32
    %1175 = vector.broadcast %c0_i32_243 : i32 to vector<8x1xi32>
    %1176 = arith.cmpi eq, %1174, %1175 : vector<8x1xi32>
    %c5_i32_244 = arith.constant 5 : i32
    %1177 = vector.broadcast %c5_i32_244 : i32 to vector<8x1xi32>
    %1178 = arith.cmpi slt, %1171, %1177 : vector<8x1xi32>
    %1179 = arith.andi %1176, %1178 : vector<8x1xi1>
    %c1_i32_245 = arith.constant 1 : i32
    %1180 = vector.broadcast %c1_i32_245 : i32 to vector<8x1xi32>
    %1181 = arith.addi %1171, %1180 : vector<8x1xi32>
    %1182 = arith.sitofp %1181 : vector<8x1xi32> to vector<8x1xf32>
    %1183 = arith.subf %55, %1182 : vector<8x1xf32>
    %cst_246 = arith.constant 1.000000e+00 : f32
    %1184 = vector.broadcast %cst_246 : f32 to vector<8x1xf32>
    %1185 = arith.maximumf %1183, %1184 : vector<8x1xf32>
    %1186 = arith.sitofp %1172 : vector<8x1xi32> to vector<8x1xf32>
    %1187 = vector.broadcast %1186 : vector<8x1xf32> to vector<8x16xf32>
    %1188 = arith.divf %1167, %1187 : vector<8x16xf32>
    %1189 = vector.broadcast %1185 : vector<8x1xf32> to vector<8x16xf32>
    %1190 = arith.divf %1170, %1189 : vector<8x16xf32>
    %cst_247 = arith.constant dense<0.000000e+00> : vector<8x8xf32>
    %1191 = tpu.matmul %1188, %6, %cst_247 {dimension_numbers = #tpu.dot_dimension_numbers<[1], [0], [0], [1], [0, 0, 1, 1], [], []>} : vector<8x16xf32>, vector<16x8xf32>, vector<8x8xf32> -> vector<8x8xf32>
    %cst_248 = arith.constant dense<0.000000e+00> : vector<8x8xf32>
    %1192 = tpu.matmul %1190, %7, %cst_248 {dimension_numbers = #tpu.dot_dimension_numbers<[1], [0], [0], [1], [0, 0, 1, 1], [], []>} : vector<8x16xf32>, vector<16x8xf32>, vector<8x8xf32> -> vector<8x8xf32>
    %1193 = arith.addf %1191, %1192 : vector<8x8xf32>
    %1194 = vector.broadcast %8 : vector<1x8xf32> to vector<8x8xf32>
    %1195 = arith.addf %1193, %1194 : vector<8x8xf32>
    %cst_249 = arith.constant dense<0xFF800000> : vector<8xf32>
    %1196 = vector.multi_reduction <maximumf>, %1195, %cst_249 [1] : vector<8x8xf32> to vector<8xf32>
    %1197 = vector.shape_cast %1196 : vector<8xf32> to vector<8x1xf32>
    %1198 = vector.broadcast %1197 : vector<8x1xf32> to vector<8x8xf32>
    %1199 = arith.cmpf oeq, %1195, %1198 : vector<8x8xf32>
    %cst_250 = arith.constant 8.000000e+00 : f32
    %1200 = vector.broadcast %cst_250 : f32 to vector<8x8xf32>
    %1201 = arith.select %1199, %12, %1200 : vector<8x8xi1>, vector<8x8xf32>
    %cst_251 = arith.constant dense<0x7F800000> : vector<8xf32>
    %1202 = vector.multi_reduction <minimumf>, %1201, %cst_251 [1] : vector<8x8xf32> to vector<8xf32>
    %1203 = vector.shape_cast %1202 : vector<8xf32> to vector<8x1xf32>
    %1204 = vector.broadcast %1197 : vector<8x1xf32> to vector<8x8xf32>
    %1205 = arith.subf %1195, %1204 : vector<8x8xf32>
    %1206 = math.exp %1205 : vector<8x8xf32>
    %cst_252 = arith.constant dense<0.000000e+00> : vector<8xf32>
    %1207 = vector.multi_reduction <add>, %1206, %cst_252 [1] : vector<8x8xf32> to vector<8xf32>
    %1208 = vector.shape_cast %1207 : vector<8xf32> to vector<8x1xf32>
    %1209 = vector.broadcast %c9_i32 : i32 to vector<8x16xi32>
    %1210 = arith.cmpi eq, %10, %1209 : vector<8x16xi32>
    %cst_253 = arith.constant 0.000000e+00 : f32
    %1211 = vector.broadcast %cst_253 : f32 to vector<8x16xf32>
    %1212 = arith.select %1210, %2, %1211 : vector<8x16xi1>, vector<8x16xf32>
    %cst_254 = arith.constant dense<0.000000e+00> : vector<8xf32>
    %1213 = vector.multi_reduction <add>, %1212, %cst_254 [1] : vector<8x16xf32> to vector<8xf32>
    %1214 = vector.shape_cast %1213 : vector<8xf32> to vector<8x1xf32>
    %1215 = arith.mulf %1214, %1208 : vector<8x1xf32>
    %1216 = vector.broadcast %1181 : vector<8x1xi32> to vector<8x6xi32>
    %1217 = arith.cmpi eq, %9, %1216 : vector<8x6xi32>
    %1218 = arith.extui %1217 : vector<8x6xi1> to vector<8x6xi32>
    %1219 = arith.sitofp %1218 : vector<8x6xi32> to vector<8x6xf32>
    %1220 = arith.mulf %0, %1219 : vector<8x6xf32>
    %cst_255 = arith.constant dense<0.000000e+00> : vector<8xf32>
    %1221 = vector.multi_reduction <add>, %1220, %cst_255 [1] : vector<8x6xf32> to vector<8xf32>
    %1222 = vector.shape_cast %1221 : vector<8xf32> to vector<8x1xf32>
    %1223 = arith.mulf %1, %1219 : vector<8x6xf32>
    %cst_256 = arith.constant dense<0.000000e+00> : vector<8xf32>
    %1224 = vector.multi_reduction <add>, %1223, %cst_256 [1] : vector<8x6xf32> to vector<8xf32>
    %1225 = vector.shape_cast %1224 : vector<8xf32> to vector<8x1xf32>
    %1226 = arith.addf %1173, %1215 : vector<8x1xf32>
    %1227 = arith.cmpf olt, %1226, %1222 : vector<8x1xf32>
    %1228 = arith.select %1227, %1226, %1222 : vector<8x1xi1>, vector<8x1xf32>
    %1229 = arith.select %1227, %1203, %1225 : vector<8x1xi1>, vector<8x1xf32>
    %cst_257 = arith.constant 5.000000e-01 : f32
    %1230 = vector.broadcast %cst_257 : f32 to vector<8x1xf32>
    %1231 = arith.addf %1229, %1230 : vector<8x1xf32>
    %1232 = arith.fptosi %1231 : vector<8x1xf32> to vector<8x1xi32>
    %1233 = vector.broadcast %1232 : vector<8x1xi32> to vector<8x8xi32>
    %1234 = arith.cmpi eq, %11, %1233 : vector<8x8xi32>
    %1235 = arith.extui %1234 : vector<8x8xi1> to vector<8x8xi32>
    %1236 = arith.sitofp %1235 : vector<8x8xi32> to vector<8x8xf32>
    %cst_258 = arith.constant dense<0.000000e+00> : vector<8x16xf32>
    %1237 = tpu.matmul %1236, %3, %cst_258 {dimension_numbers = #tpu.dot_dimension_numbers<[1], [0], [0], [1], [0, 0, 1, 1], [], []>} : vector<8x8xf32>, vector<8x16xf32>, vector<8x16xf32> -> vector<8x16xf32>
    %cst_259 = arith.constant 6.000000e-01 : f32
    %1238 = vector.broadcast %cst_259 : f32 to vector<8x16xf32>
    %1239 = arith.mulf %1238, %1237 : vector<8x16xf32>
    %1240 = vector.broadcast %4 : vector<1x16xf32> to vector<8x16xf32>
    %1241 = vector.broadcast %1228 : vector<8x1xf32> to vector<8x16xf32>
    %1242 = arith.mulf %1240, %1241 : vector<8x16xf32>
    %1243 = vector.broadcast %5 : vector<1x16xf32> to vector<8x16xf32>
    %1244 = arith.addf %1242, %1243 : vector<8x16xf32>
    %cst_260 = arith.constant 4.000000e-01 : f32
    %1245 = vector.broadcast %cst_260 : f32 to vector<8x16xf32>
    %1246 = arith.mulf %1245, %1244 : vector<8x16xf32>
    %1247 = arith.addf %1239, %1246 : vector<8x16xf32>
    %cst_261 = arith.constant 0.000000e+00 : f32
    %1248 = vector.broadcast %cst_261 : f32 to vector<8x1xf32>
    %1249 = arith.cmpf oge, %1228, %1248 : vector<8x1xf32>
    %1250 = arith.extui %1249 : vector<8x1xi1> to vector<8x1xi32>
    %1251 = arith.sitofp %1250 : vector<8x1xi32> to vector<8x1xf32>
    %1252 = vector.broadcast %1251 : vector<8x1xf32> to vector<8x16xf32>
    %1253 = arith.mulf %1247, %1252 : vector<8x16xf32>
    %1254 = arith.addf %1167, %1253 : vector<8x16xf32>
    %1255 = arith.subf %1170, %1253 : vector<8x16xf32>
    %1256 = vector.shape_cast %1227 : vector<8x1xi1> to vector<8x1xi1>
    %1257 = vector.broadcast %1256 : vector<8x1xi1> to vector<8x16xi1>
    %1258 = arith.select %1257, %1170, %1255 : vector<8x16xi1>, vector<8x16xf32>
    %c1_i32_262 = arith.constant 1 : i32
    %1259 = vector.broadcast %c1_i32_262 : i32 to vector<8x1xi32>
    %1260 = arith.addi %1171, %1259 : vector<8x1xi32>
    %1261 = arith.select %1227, %1171, %1260 : vector<8x1xi1>, vector<8x1xi32>
    %c1_i32_263 = arith.constant 1 : i32
    %1262 = vector.broadcast %c1_i32_263 : i32 to vector<8x1xi32>
    %1263 = arith.addi %1172, %1262 : vector<8x1xi32>
    %cst_264 = arith.constant 0.000000e+00 : f32
    %1264 = vector.broadcast %cst_264 : f32 to vector<8x1xf32>
    %1265 = arith.cmpf olt, %1228, %1264 : vector<8x1xf32>
    %c16_i32_265 = arith.constant 16 : i32
    %1266 = vector.broadcast %c16_i32_265 : i32 to vector<8x1xi32>
    %1267 = arith.cmpi sge, %1263, %1266 : vector<8x1xi32>
    %1268 = arith.ori %1265, %1267 : vector<8x1xi1>
    %1269 = arith.extui %1268 : vector<8x1xi1> to vector<8x1xi32>
    %1270 = arith.maxsi %1174, %1269 : vector<8x1xi32>
    %1271 = vector.broadcast %1172 : vector<8x1xi32> to vector<8x16xi32>
    %1272 = arith.cmpi eq, %10, %1271 : vector<8x16xi32>
    %1273 = vector.broadcast %1179 : vector<8x1xi1> to vector<8x16xi1>
    %1274 = arith.andi %1272, %1273 : vector<8x16xi1>
    %1275 = vector.shape_cast %1228 : vector<8x1xf32> to vector<8x1xf32>
    %1276 = vector.broadcast %1275 : vector<8x1xf32> to vector<8x16xf32>
    %1277 = arith.select %1274, %1276, %1161 : vector<8x16xi1>, vector<8x16xf32>
    %1278 = vector.shape_cast %1229 : vector<8x1xf32> to vector<8x1xf32>
    %1279 = vector.broadcast %1278 : vector<8x1xf32> to vector<8x16xf32>
    %1280 = arith.select %1274, %1279, %1164 : vector<8x16xi1>, vector<8x16xf32>
    %1281 = vector.shape_cast %1179 : vector<8x1xi1> to vector<8x1xi1>
    %1282 = vector.broadcast %1281 : vector<8x1xi1> to vector<8x16xi1>
    %1283 = arith.select %1282, %1254, %1167 : vector<8x16xi1>, vector<8x16xf32>
    %1284 = vector.shape_cast %1179 : vector<8x1xi1> to vector<8x1xi1>
    %1285 = vector.broadcast %1284 : vector<8x1xi1> to vector<8x16xi1>
    %1286 = arith.select %1285, %1258, %1170 : vector<8x16xi1>, vector<8x16xf32>
    %1287 = arith.select %1179, %1261, %1171 : vector<8x1xi1>, vector<8x1xi32>
    %1288 = arith.select %1179, %1263, %1172 : vector<8x1xi1>, vector<8x1xi32>
    %1289 = arith.select %1179, %1228, %1173 : vector<8x1xi1>, vector<8x1xf32>
    %1290 = arith.select %1179, %1270, %1174 : vector<8x1xi1>, vector<8x1xi32>
    %c10_i32 = arith.constant 10 : i32
    %c0_i32_266 = arith.constant 0 : i32
    %1291 = vector.broadcast %c0_i32_266 : i32 to vector<8x1xi32>
    %1292 = arith.cmpi eq, %1290, %1291 : vector<8x1xi32>
    %c5_i32_267 = arith.constant 5 : i32
    %1293 = vector.broadcast %c5_i32_267 : i32 to vector<8x1xi32>
    %1294 = arith.cmpi slt, %1287, %1293 : vector<8x1xi32>
    %1295 = arith.andi %1292, %1294 : vector<8x1xi1>
    %c1_i32_268 = arith.constant 1 : i32
    %1296 = vector.broadcast %c1_i32_268 : i32 to vector<8x1xi32>
    %1297 = arith.addi %1287, %1296 : vector<8x1xi32>
    %1298 = arith.sitofp %1297 : vector<8x1xi32> to vector<8x1xf32>
    %1299 = arith.subf %55, %1298 : vector<8x1xf32>
    %cst_269 = arith.constant 1.000000e+00 : f32
    %1300 = vector.broadcast %cst_269 : f32 to vector<8x1xf32>
    %1301 = arith.maximumf %1299, %1300 : vector<8x1xf32>
    %1302 = arith.sitofp %1288 : vector<8x1xi32> to vector<8x1xf32>
    %1303 = vector.broadcast %1302 : vector<8x1xf32> to vector<8x16xf32>
    %1304 = arith.divf %1283, %1303 : vector<8x16xf32>
    %1305 = vector.broadcast %1301 : vector<8x1xf32> to vector<8x16xf32>
    %1306 = arith.divf %1286, %1305 : vector<8x16xf32>
    %cst_270 = arith.constant dense<0.000000e+00> : vector<8x8xf32>
    %1307 = tpu.matmul %1304, %6, %cst_270 {dimension_numbers = #tpu.dot_dimension_numbers<[1], [0], [0], [1], [0, 0, 1, 1], [], []>} : vector<8x16xf32>, vector<16x8xf32>, vector<8x8xf32> -> vector<8x8xf32>
    %cst_271 = arith.constant dense<0.000000e+00> : vector<8x8xf32>
    %1308 = tpu.matmul %1306, %7, %cst_271 {dimension_numbers = #tpu.dot_dimension_numbers<[1], [0], [0], [1], [0, 0, 1, 1], [], []>} : vector<8x16xf32>, vector<16x8xf32>, vector<8x8xf32> -> vector<8x8xf32>
    %1309 = arith.addf %1307, %1308 : vector<8x8xf32>
    %1310 = vector.broadcast %8 : vector<1x8xf32> to vector<8x8xf32>
    %1311 = arith.addf %1309, %1310 : vector<8x8xf32>
    %cst_272 = arith.constant dense<0xFF800000> : vector<8xf32>
    %1312 = vector.multi_reduction <maximumf>, %1311, %cst_272 [1] : vector<8x8xf32> to vector<8xf32>
    %1313 = vector.shape_cast %1312 : vector<8xf32> to vector<8x1xf32>
    %1314 = vector.broadcast %1313 : vector<8x1xf32> to vector<8x8xf32>
    %1315 = arith.cmpf oeq, %1311, %1314 : vector<8x8xf32>
    %cst_273 = arith.constant 8.000000e+00 : f32
    %1316 = vector.broadcast %cst_273 : f32 to vector<8x8xf32>
    %1317 = arith.select %1315, %12, %1316 : vector<8x8xi1>, vector<8x8xf32>
    %cst_274 = arith.constant dense<0x7F800000> : vector<8xf32>
    %1318 = vector.multi_reduction <minimumf>, %1317, %cst_274 [1] : vector<8x8xf32> to vector<8xf32>
    %1319 = vector.shape_cast %1318 : vector<8xf32> to vector<8x1xf32>
    %1320 = vector.broadcast %1313 : vector<8x1xf32> to vector<8x8xf32>
    %1321 = arith.subf %1311, %1320 : vector<8x8xf32>
    %1322 = math.exp %1321 : vector<8x8xf32>
    %cst_275 = arith.constant dense<0.000000e+00> : vector<8xf32>
    %1323 = vector.multi_reduction <add>, %1322, %cst_275 [1] : vector<8x8xf32> to vector<8xf32>
    %1324 = vector.shape_cast %1323 : vector<8xf32> to vector<8x1xf32>
    %1325 = vector.broadcast %c10_i32 : i32 to vector<8x16xi32>
    %1326 = arith.cmpi eq, %10, %1325 : vector<8x16xi32>
    %cst_276 = arith.constant 0.000000e+00 : f32
    %1327 = vector.broadcast %cst_276 : f32 to vector<8x16xf32>
    %1328 = arith.select %1326, %2, %1327 : vector<8x16xi1>, vector<8x16xf32>
    %cst_277 = arith.constant dense<0.000000e+00> : vector<8xf32>
    %1329 = vector.multi_reduction <add>, %1328, %cst_277 [1] : vector<8x16xf32> to vector<8xf32>
    %1330 = vector.shape_cast %1329 : vector<8xf32> to vector<8x1xf32>
    %1331 = arith.mulf %1330, %1324 : vector<8x1xf32>
    %1332 = vector.broadcast %1297 : vector<8x1xi32> to vector<8x6xi32>
    %1333 = arith.cmpi eq, %9, %1332 : vector<8x6xi32>
    %1334 = arith.extui %1333 : vector<8x6xi1> to vector<8x6xi32>
    %1335 = arith.sitofp %1334 : vector<8x6xi32> to vector<8x6xf32>
    %1336 = arith.mulf %0, %1335 : vector<8x6xf32>
    %cst_278 = arith.constant dense<0.000000e+00> : vector<8xf32>
    %1337 = vector.multi_reduction <add>, %1336, %cst_278 [1] : vector<8x6xf32> to vector<8xf32>
    %1338 = vector.shape_cast %1337 : vector<8xf32> to vector<8x1xf32>
    %1339 = arith.mulf %1, %1335 : vector<8x6xf32>
    %cst_279 = arith.constant dense<0.000000e+00> : vector<8xf32>
    %1340 = vector.multi_reduction <add>, %1339, %cst_279 [1] : vector<8x6xf32> to vector<8xf32>
    %1341 = vector.shape_cast %1340 : vector<8xf32> to vector<8x1xf32>
    %1342 = arith.addf %1289, %1331 : vector<8x1xf32>
    %1343 = arith.cmpf olt, %1342, %1338 : vector<8x1xf32>
    %1344 = arith.select %1343, %1342, %1338 : vector<8x1xi1>, vector<8x1xf32>
    %1345 = arith.select %1343, %1319, %1341 : vector<8x1xi1>, vector<8x1xf32>
    %cst_280 = arith.constant 5.000000e-01 : f32
    %1346 = vector.broadcast %cst_280 : f32 to vector<8x1xf32>
    %1347 = arith.addf %1345, %1346 : vector<8x1xf32>
    %1348 = arith.fptosi %1347 : vector<8x1xf32> to vector<8x1xi32>
    %1349 = vector.broadcast %1348 : vector<8x1xi32> to vector<8x8xi32>
    %1350 = arith.cmpi eq, %11, %1349 : vector<8x8xi32>
    %1351 = arith.extui %1350 : vector<8x8xi1> to vector<8x8xi32>
    %1352 = arith.sitofp %1351 : vector<8x8xi32> to vector<8x8xf32>
    %cst_281 = arith.constant dense<0.000000e+00> : vector<8x16xf32>
    %1353 = tpu.matmul %1352, %3, %cst_281 {dimension_numbers = #tpu.dot_dimension_numbers<[1], [0], [0], [1], [0, 0, 1, 1], [], []>} : vector<8x8xf32>, vector<8x16xf32>, vector<8x16xf32> -> vector<8x16xf32>
    %cst_282 = arith.constant 6.000000e-01 : f32
    %1354 = vector.broadcast %cst_282 : f32 to vector<8x16xf32>
    %1355 = arith.mulf %1354, %1353 : vector<8x16xf32>
    %1356 = vector.broadcast %4 : vector<1x16xf32> to vector<8x16xf32>
    %1357 = vector.broadcast %1344 : vector<8x1xf32> to vector<8x16xf32>
    %1358 = arith.mulf %1356, %1357 : vector<8x16xf32>
    %1359 = vector.broadcast %5 : vector<1x16xf32> to vector<8x16xf32>
    %1360 = arith.addf %1358, %1359 : vector<8x16xf32>
    %cst_283 = arith.constant 4.000000e-01 : f32
    %1361 = vector.broadcast %cst_283 : f32 to vector<8x16xf32>
    %1362 = arith.mulf %1361, %1360 : vector<8x16xf32>
    %1363 = arith.addf %1355, %1362 : vector<8x16xf32>
    %cst_284 = arith.constant 0.000000e+00 : f32
    %1364 = vector.broadcast %cst_284 : f32 to vector<8x1xf32>
    %1365 = arith.cmpf oge, %1344, %1364 : vector<8x1xf32>
    %1366 = arith.extui %1365 : vector<8x1xi1> to vector<8x1xi32>
    %1367 = arith.sitofp %1366 : vector<8x1xi32> to vector<8x1xf32>
    %1368 = vector.broadcast %1367 : vector<8x1xf32> to vector<8x16xf32>
    %1369 = arith.mulf %1363, %1368 : vector<8x16xf32>
    %1370 = arith.addf %1283, %1369 : vector<8x16xf32>
    %1371 = arith.subf %1286, %1369 : vector<8x16xf32>
    %1372 = vector.shape_cast %1343 : vector<8x1xi1> to vector<8x1xi1>
    %1373 = vector.broadcast %1372 : vector<8x1xi1> to vector<8x16xi1>
    %1374 = arith.select %1373, %1286, %1371 : vector<8x16xi1>, vector<8x16xf32>
    %c1_i32_285 = arith.constant 1 : i32
    %1375 = vector.broadcast %c1_i32_285 : i32 to vector<8x1xi32>
    %1376 = arith.addi %1287, %1375 : vector<8x1xi32>
    %1377 = arith.select %1343, %1287, %1376 : vector<8x1xi1>, vector<8x1xi32>
    %c1_i32_286 = arith.constant 1 : i32
    %1378 = vector.broadcast %c1_i32_286 : i32 to vector<8x1xi32>
    %1379 = arith.addi %1288, %1378 : vector<8x1xi32>
    %cst_287 = arith.constant 0.000000e+00 : f32
    %1380 = vector.broadcast %cst_287 : f32 to vector<8x1xf32>
    %1381 = arith.cmpf olt, %1344, %1380 : vector<8x1xf32>
    %c16_i32_288 = arith.constant 16 : i32
    %1382 = vector.broadcast %c16_i32_288 : i32 to vector<8x1xi32>
    %1383 = arith.cmpi sge, %1379, %1382 : vector<8x1xi32>
    %1384 = arith.ori %1381, %1383 : vector<8x1xi1>
    %1385 = arith.extui %1384 : vector<8x1xi1> to vector<8x1xi32>
    %1386 = arith.maxsi %1290, %1385 : vector<8x1xi32>
    %1387 = vector.broadcast %1288 : vector<8x1xi32> to vector<8x16xi32>
    %1388 = arith.cmpi eq, %10, %1387 : vector<8x16xi32>
    %1389 = vector.broadcast %1295 : vector<8x1xi1> to vector<8x16xi1>
    %1390 = arith.andi %1388, %1389 : vector<8x16xi1>
    %1391 = vector.shape_cast %1344 : vector<8x1xf32> to vector<8x1xf32>
    %1392 = vector.broadcast %1391 : vector<8x1xf32> to vector<8x16xf32>
    %1393 = arith.select %1390, %1392, %1277 : vector<8x16xi1>, vector<8x16xf32>
    %1394 = vector.shape_cast %1345 : vector<8x1xf32> to vector<8x1xf32>
    %1395 = vector.broadcast %1394 : vector<8x1xf32> to vector<8x16xf32>
    %1396 = arith.select %1390, %1395, %1280 : vector<8x16xi1>, vector<8x16xf32>
    %1397 = vector.shape_cast %1295 : vector<8x1xi1> to vector<8x1xi1>
    %1398 = vector.broadcast %1397 : vector<8x1xi1> to vector<8x16xi1>
    %1399 = arith.select %1398, %1370, %1283 : vector<8x16xi1>, vector<8x16xf32>
    %1400 = vector.shape_cast %1295 : vector<8x1xi1> to vector<8x1xi1>
    %1401 = vector.broadcast %1400 : vector<8x1xi1> to vector<8x16xi1>
    %1402 = arith.select %1401, %1374, %1286 : vector<8x16xi1>, vector<8x16xf32>
    %1403 = arith.select %1295, %1377, %1287 : vector<8x1xi1>, vector<8x1xi32>
    %1404 = arith.select %1295, %1379, %1288 : vector<8x1xi1>, vector<8x1xi32>
    %1405 = arith.select %1295, %1344, %1289 : vector<8x1xi1>, vector<8x1xf32>
    %1406 = arith.select %1295, %1386, %1290 : vector<8x1xi1>, vector<8x1xi32>
    %c11_i32 = arith.constant 11 : i32
    %c0_i32_289 = arith.constant 0 : i32
    %1407 = vector.broadcast %c0_i32_289 : i32 to vector<8x1xi32>
    %1408 = arith.cmpi eq, %1406, %1407 : vector<8x1xi32>
    %c5_i32_290 = arith.constant 5 : i32
    %1409 = vector.broadcast %c5_i32_290 : i32 to vector<8x1xi32>
    %1410 = arith.cmpi slt, %1403, %1409 : vector<8x1xi32>
    %1411 = arith.andi %1408, %1410 : vector<8x1xi1>
    %c1_i32_291 = arith.constant 1 : i32
    %1412 = vector.broadcast %c1_i32_291 : i32 to vector<8x1xi32>
    %1413 = arith.addi %1403, %1412 : vector<8x1xi32>
    %1414 = arith.sitofp %1413 : vector<8x1xi32> to vector<8x1xf32>
    %1415 = arith.subf %55, %1414 : vector<8x1xf32>
    %cst_292 = arith.constant 1.000000e+00 : f32
    %1416 = vector.broadcast %cst_292 : f32 to vector<8x1xf32>
    %1417 = arith.maximumf %1415, %1416 : vector<8x1xf32>
    %1418 = arith.sitofp %1404 : vector<8x1xi32> to vector<8x1xf32>
    %1419 = vector.broadcast %1418 : vector<8x1xf32> to vector<8x16xf32>
    %1420 = arith.divf %1399, %1419 : vector<8x16xf32>
    %1421 = vector.broadcast %1417 : vector<8x1xf32> to vector<8x16xf32>
    %1422 = arith.divf %1402, %1421 : vector<8x16xf32>
    %cst_293 = arith.constant dense<0.000000e+00> : vector<8x8xf32>
    %1423 = tpu.matmul %1420, %6, %cst_293 {dimension_numbers = #tpu.dot_dimension_numbers<[1], [0], [0], [1], [0, 0, 1, 1], [], []>} : vector<8x16xf32>, vector<16x8xf32>, vector<8x8xf32> -> vector<8x8xf32>
    %cst_294 = arith.constant dense<0.000000e+00> : vector<8x8xf32>
    %1424 = tpu.matmul %1422, %7, %cst_294 {dimension_numbers = #tpu.dot_dimension_numbers<[1], [0], [0], [1], [0, 0, 1, 1], [], []>} : vector<8x16xf32>, vector<16x8xf32>, vector<8x8xf32> -> vector<8x8xf32>
    %1425 = arith.addf %1423, %1424 : vector<8x8xf32>
    %1426 = vector.broadcast %8 : vector<1x8xf32> to vector<8x8xf32>
    %1427 = arith.addf %1425, %1426 : vector<8x8xf32>
    %cst_295 = arith.constant dense<0xFF800000> : vector<8xf32>
    %1428 = vector.multi_reduction <maximumf>, %1427, %cst_295 [1] : vector<8x8xf32> to vector<8xf32>
    %1429 = vector.shape_cast %1428 : vector<8xf32> to vector<8x1xf32>
    %1430 = vector.broadcast %1429 : vector<8x1xf32> to vector<8x8xf32>
    %1431 = arith.cmpf oeq, %1427, %1430 : vector<8x8xf32>
    %cst_296 = arith.constant 8.000000e+00 : f32
    %1432 = vector.broadcast %cst_296 : f32 to vector<8x8xf32>
    %1433 = arith.select %1431, %12, %1432 : vector<8x8xi1>, vector<8x8xf32>
    %cst_297 = arith.constant dense<0x7F800000> : vector<8xf32>
    %1434 = vector.multi_reduction <minimumf>, %1433, %cst_297 [1] : vector<8x8xf32> to vector<8xf32>
    %1435 = vector.shape_cast %1434 : vector<8xf32> to vector<8x1xf32>
    %1436 = vector.broadcast %1429 : vector<8x1xf32> to vector<8x8xf32>
    %1437 = arith.subf %1427, %1436 : vector<8x8xf32>
    %1438 = math.exp %1437 : vector<8x8xf32>
    %cst_298 = arith.constant dense<0.000000e+00> : vector<8xf32>
    %1439 = vector.multi_reduction <add>, %1438, %cst_298 [1] : vector<8x8xf32> to vector<8xf32>
    %1440 = vector.shape_cast %1439 : vector<8xf32> to vector<8x1xf32>
    %1441 = vector.broadcast %c11_i32 : i32 to vector<8x16xi32>
    %1442 = arith.cmpi eq, %10, %1441 : vector<8x16xi32>
    %cst_299 = arith.constant 0.000000e+00 : f32
    %1443 = vector.broadcast %cst_299 : f32 to vector<8x16xf32>
    %1444 = arith.select %1442, %2, %1443 : vector<8x16xi1>, vector<8x16xf32>
    %cst_300 = arith.constant dense<0.000000e+00> : vector<8xf32>
    %1445 = vector.multi_reduction <add>, %1444, %cst_300 [1] : vector<8x16xf32> to vector<8xf32>
    %1446 = vector.shape_cast %1445 : vector<8xf32> to vector<8x1xf32>
    %1447 = arith.mulf %1446, %1440 : vector<8x1xf32>
    %1448 = vector.broadcast %1413 : vector<8x1xi32> to vector<8x6xi32>
    %1449 = arith.cmpi eq, %9, %1448 : vector<8x6xi32>
    %1450 = arith.extui %1449 : vector<8x6xi1> to vector<8x6xi32>
    %1451 = arith.sitofp %1450 : vector<8x6xi32> to vector<8x6xf32>
    %1452 = arith.mulf %0, %1451 : vector<8x6xf32>
    %cst_301 = arith.constant dense<0.000000e+00> : vector<8xf32>
    %1453 = vector.multi_reduction <add>, %1452, %cst_301 [1] : vector<8x6xf32> to vector<8xf32>
    %1454 = vector.shape_cast %1453 : vector<8xf32> to vector<8x1xf32>
    %1455 = arith.mulf %1, %1451 : vector<8x6xf32>
    %cst_302 = arith.constant dense<0.000000e+00> : vector<8xf32>
    %1456 = vector.multi_reduction <add>, %1455, %cst_302 [1] : vector<8x6xf32> to vector<8xf32>
    %1457 = vector.shape_cast %1456 : vector<8xf32> to vector<8x1xf32>
    %1458 = arith.addf %1405, %1447 : vector<8x1xf32>
    %1459 = arith.cmpf olt, %1458, %1454 : vector<8x1xf32>
    %1460 = arith.select %1459, %1458, %1454 : vector<8x1xi1>, vector<8x1xf32>
    %1461 = arith.select %1459, %1435, %1457 : vector<8x1xi1>, vector<8x1xf32>
    %cst_303 = arith.constant 5.000000e-01 : f32
    %1462 = vector.broadcast %cst_303 : f32 to vector<8x1xf32>
    %1463 = arith.addf %1461, %1462 : vector<8x1xf32>
    %1464 = arith.fptosi %1463 : vector<8x1xf32> to vector<8x1xi32>
    %1465 = vector.broadcast %1464 : vector<8x1xi32> to vector<8x8xi32>
    %1466 = arith.cmpi eq, %11, %1465 : vector<8x8xi32>
    %1467 = arith.extui %1466 : vector<8x8xi1> to vector<8x8xi32>
    %1468 = arith.sitofp %1467 : vector<8x8xi32> to vector<8x8xf32>
    %cst_304 = arith.constant dense<0.000000e+00> : vector<8x16xf32>
    %1469 = tpu.matmul %1468, %3, %cst_304 {dimension_numbers = #tpu.dot_dimension_numbers<[1], [0], [0], [1], [0, 0, 1, 1], [], []>} : vector<8x8xf32>, vector<8x16xf32>, vector<8x16xf32> -> vector<8x16xf32>
    %cst_305 = arith.constant 6.000000e-01 : f32
    %1470 = vector.broadcast %cst_305 : f32 to vector<8x16xf32>
    %1471 = arith.mulf %1470, %1469 : vector<8x16xf32>
    %1472 = vector.broadcast %4 : vector<1x16xf32> to vector<8x16xf32>
    %1473 = vector.broadcast %1460 : vector<8x1xf32> to vector<8x16xf32>
    %1474 = arith.mulf %1472, %1473 : vector<8x16xf32>
    %1475 = vector.broadcast %5 : vector<1x16xf32> to vector<8x16xf32>
    %1476 = arith.addf %1474, %1475 : vector<8x16xf32>
    %cst_306 = arith.constant 4.000000e-01 : f32
    %1477 = vector.broadcast %cst_306 : f32 to vector<8x16xf32>
    %1478 = arith.mulf %1477, %1476 : vector<8x16xf32>
    %1479 = arith.addf %1471, %1478 : vector<8x16xf32>
    %cst_307 = arith.constant 0.000000e+00 : f32
    %1480 = vector.broadcast %cst_307 : f32 to vector<8x1xf32>
    %1481 = arith.cmpf oge, %1460, %1480 : vector<8x1xf32>
    %1482 = arith.extui %1481 : vector<8x1xi1> to vector<8x1xi32>
    %1483 = arith.sitofp %1482 : vector<8x1xi32> to vector<8x1xf32>
    %1484 = vector.broadcast %1483 : vector<8x1xf32> to vector<8x16xf32>
    %1485 = arith.mulf %1479, %1484 : vector<8x16xf32>
    %1486 = arith.addf %1399, %1485 : vector<8x16xf32>
    %1487 = arith.subf %1402, %1485 : vector<8x16xf32>
    %1488 = vector.shape_cast %1459 : vector<8x1xi1> to vector<8x1xi1>
    %1489 = vector.broadcast %1488 : vector<8x1xi1> to vector<8x16xi1>
    %1490 = arith.select %1489, %1402, %1487 : vector<8x16xi1>, vector<8x16xf32>
    %c1_i32_308 = arith.constant 1 : i32
    %1491 = vector.broadcast %c1_i32_308 : i32 to vector<8x1xi32>
    %1492 = arith.addi %1403, %1491 : vector<8x1xi32>
    %1493 = arith.select %1459, %1403, %1492 : vector<8x1xi1>, vector<8x1xi32>
    %c1_i32_309 = arith.constant 1 : i32
    %1494 = vector.broadcast %c1_i32_309 : i32 to vector<8x1xi32>
    %1495 = arith.addi %1404, %1494 : vector<8x1xi32>
    %cst_310 = arith.constant 0.000000e+00 : f32
    %1496 = vector.broadcast %cst_310 : f32 to vector<8x1xf32>
    %1497 = arith.cmpf olt, %1460, %1496 : vector<8x1xf32>
    %c16_i32_311 = arith.constant 16 : i32
    %1498 = vector.broadcast %c16_i32_311 : i32 to vector<8x1xi32>
    %1499 = arith.cmpi sge, %1495, %1498 : vector<8x1xi32>
    %1500 = arith.ori %1497, %1499 : vector<8x1xi1>
    %1501 = arith.extui %1500 : vector<8x1xi1> to vector<8x1xi32>
    %1502 = arith.maxsi %1406, %1501 : vector<8x1xi32>
    %1503 = vector.broadcast %1404 : vector<8x1xi32> to vector<8x16xi32>
    %1504 = arith.cmpi eq, %10, %1503 : vector<8x16xi32>
    %1505 = vector.broadcast %1411 : vector<8x1xi1> to vector<8x16xi1>
    %1506 = arith.andi %1504, %1505 : vector<8x16xi1>
    %1507 = vector.shape_cast %1460 : vector<8x1xf32> to vector<8x1xf32>
    %1508 = vector.broadcast %1507 : vector<8x1xf32> to vector<8x16xf32>
    %1509 = arith.select %1506, %1508, %1393 : vector<8x16xi1>, vector<8x16xf32>
    %1510 = vector.shape_cast %1461 : vector<8x1xf32> to vector<8x1xf32>
    %1511 = vector.broadcast %1510 : vector<8x1xf32> to vector<8x16xf32>
    %1512 = arith.select %1506, %1511, %1396 : vector<8x16xi1>, vector<8x16xf32>
    %1513 = vector.shape_cast %1411 : vector<8x1xi1> to vector<8x1xi1>
    %1514 = vector.broadcast %1513 : vector<8x1xi1> to vector<8x16xi1>
    %1515 = arith.select %1514, %1486, %1399 : vector<8x16xi1>, vector<8x16xf32>
    %1516 = vector.shape_cast %1411 : vector<8x1xi1> to vector<8x1xi1>
    %1517 = vector.broadcast %1516 : vector<8x1xi1> to vector<8x16xi1>
    %1518 = arith.select %1517, %1490, %1402 : vector<8x16xi1>, vector<8x16xf32>
    %1519 = arith.select %1411, %1493, %1403 : vector<8x1xi1>, vector<8x1xi32>
    %1520 = arith.select %1411, %1495, %1404 : vector<8x1xi1>, vector<8x1xi32>
    %1521 = arith.select %1411, %1460, %1405 : vector<8x1xi1>, vector<8x1xf32>
    %1522 = arith.select %1411, %1502, %1406 : vector<8x1xi1>, vector<8x1xi32>
    %c12_i32 = arith.constant 12 : i32
    %c0_i32_312 = arith.constant 0 : i32
    %1523 = vector.broadcast %c0_i32_312 : i32 to vector<8x1xi32>
    %1524 = arith.cmpi eq, %1522, %1523 : vector<8x1xi32>
    %c5_i32_313 = arith.constant 5 : i32
    %1525 = vector.broadcast %c5_i32_313 : i32 to vector<8x1xi32>
    %1526 = arith.cmpi slt, %1519, %1525 : vector<8x1xi32>
    %1527 = arith.andi %1524, %1526 : vector<8x1xi1>
    %c1_i32_314 = arith.constant 1 : i32
    %1528 = vector.broadcast %c1_i32_314 : i32 to vector<8x1xi32>
    %1529 = arith.addi %1519, %1528 : vector<8x1xi32>
    %1530 = arith.sitofp %1529 : vector<8x1xi32> to vector<8x1xf32>
    %1531 = arith.subf %55, %1530 : vector<8x1xf32>
    %cst_315 = arith.constant 1.000000e+00 : f32
    %1532 = vector.broadcast %cst_315 : f32 to vector<8x1xf32>
    %1533 = arith.maximumf %1531, %1532 : vector<8x1xf32>
    %1534 = arith.sitofp %1520 : vector<8x1xi32> to vector<8x1xf32>
    %1535 = vector.broadcast %1534 : vector<8x1xf32> to vector<8x16xf32>
    %1536 = arith.divf %1515, %1535 : vector<8x16xf32>
    %1537 = vector.broadcast %1533 : vector<8x1xf32> to vector<8x16xf32>
    %1538 = arith.divf %1518, %1537 : vector<8x16xf32>
    %cst_316 = arith.constant dense<0.000000e+00> : vector<8x8xf32>
    %1539 = tpu.matmul %1536, %6, %cst_316 {dimension_numbers = #tpu.dot_dimension_numbers<[1], [0], [0], [1], [0, 0, 1, 1], [], []>} : vector<8x16xf32>, vector<16x8xf32>, vector<8x8xf32> -> vector<8x8xf32>
    %cst_317 = arith.constant dense<0.000000e+00> : vector<8x8xf32>
    %1540 = tpu.matmul %1538, %7, %cst_317 {dimension_numbers = #tpu.dot_dimension_numbers<[1], [0], [0], [1], [0, 0, 1, 1], [], []>} : vector<8x16xf32>, vector<16x8xf32>, vector<8x8xf32> -> vector<8x8xf32>
    %1541 = arith.addf %1539, %1540 : vector<8x8xf32>
    %1542 = vector.broadcast %8 : vector<1x8xf32> to vector<8x8xf32>
    %1543 = arith.addf %1541, %1542 : vector<8x8xf32>
    %cst_318 = arith.constant dense<0xFF800000> : vector<8xf32>
    %1544 = vector.multi_reduction <maximumf>, %1543, %cst_318 [1] : vector<8x8xf32> to vector<8xf32>
    %1545 = vector.shape_cast %1544 : vector<8xf32> to vector<8x1xf32>
    %1546 = vector.broadcast %1545 : vector<8x1xf32> to vector<8x8xf32>
    %1547 = arith.cmpf oeq, %1543, %1546 : vector<8x8xf32>
    %cst_319 = arith.constant 8.000000e+00 : f32
    %1548 = vector.broadcast %cst_319 : f32 to vector<8x8xf32>
    %1549 = arith.select %1547, %12, %1548 : vector<8x8xi1>, vector<8x8xf32>
    %cst_320 = arith.constant dense<0x7F800000> : vector<8xf32>
    %1550 = vector.multi_reduction <minimumf>, %1549, %cst_320 [1] : vector<8x8xf32> to vector<8xf32>
    %1551 = vector.shape_cast %1550 : vector<8xf32> to vector<8x1xf32>
    %1552 = vector.broadcast %1545 : vector<8x1xf32> to vector<8x8xf32>
    %1553 = arith.subf %1543, %1552 : vector<8x8xf32>
    %1554 = math.exp %1553 : vector<8x8xf32>
    %cst_321 = arith.constant dense<0.000000e+00> : vector<8xf32>
    %1555 = vector.multi_reduction <add>, %1554, %cst_321 [1] : vector<8x8xf32> to vector<8xf32>
    %1556 = vector.shape_cast %1555 : vector<8xf32> to vector<8x1xf32>
    %1557 = vector.broadcast %c12_i32 : i32 to vector<8x16xi32>
    %1558 = arith.cmpi eq, %10, %1557 : vector<8x16xi32>
    %cst_322 = arith.constant 0.000000e+00 : f32
    %1559 = vector.broadcast %cst_322 : f32 to vector<8x16xf32>
    %1560 = arith.select %1558, %2, %1559 : vector<8x16xi1>, vector<8x16xf32>
    %cst_323 = arith.constant dense<0.000000e+00> : vector<8xf32>
    %1561 = vector.multi_reduction <add>, %1560, %cst_323 [1] : vector<8x16xf32> to vector<8xf32>
    %1562 = vector.shape_cast %1561 : vector<8xf32> to vector<8x1xf32>
    %1563 = arith.mulf %1562, %1556 : vector<8x1xf32>
    %1564 = vector.broadcast %1529 : vector<8x1xi32> to vector<8x6xi32>
    %1565 = arith.cmpi eq, %9, %1564 : vector<8x6xi32>
    %1566 = arith.extui %1565 : vector<8x6xi1> to vector<8x6xi32>
    %1567 = arith.sitofp %1566 : vector<8x6xi32> to vector<8x6xf32>
    %1568 = arith.mulf %0, %1567 : vector<8x6xf32>
    %cst_324 = arith.constant dense<0.000000e+00> : vector<8xf32>
    %1569 = vector.multi_reduction <add>, %1568, %cst_324 [1] : vector<8x6xf32> to vector<8xf32>
    %1570 = vector.shape_cast %1569 : vector<8xf32> to vector<8x1xf32>
    %1571 = arith.mulf %1, %1567 : vector<8x6xf32>
    %cst_325 = arith.constant dense<0.000000e+00> : vector<8xf32>
    %1572 = vector.multi_reduction <add>, %1571, %cst_325 [1] : vector<8x6xf32> to vector<8xf32>
    %1573 = vector.shape_cast %1572 : vector<8xf32> to vector<8x1xf32>
    %1574 = arith.addf %1521, %1563 : vector<8x1xf32>
    %1575 = arith.cmpf olt, %1574, %1570 : vector<8x1xf32>
    %1576 = arith.select %1575, %1574, %1570 : vector<8x1xi1>, vector<8x1xf32>
    %1577 = arith.select %1575, %1551, %1573 : vector<8x1xi1>, vector<8x1xf32>
    %cst_326 = arith.constant 5.000000e-01 : f32
    %1578 = vector.broadcast %cst_326 : f32 to vector<8x1xf32>
    %1579 = arith.addf %1577, %1578 : vector<8x1xf32>
    %1580 = arith.fptosi %1579 : vector<8x1xf32> to vector<8x1xi32>
    %1581 = vector.broadcast %1580 : vector<8x1xi32> to vector<8x8xi32>
    %1582 = arith.cmpi eq, %11, %1581 : vector<8x8xi32>
    %1583 = arith.extui %1582 : vector<8x8xi1> to vector<8x8xi32>
    %1584 = arith.sitofp %1583 : vector<8x8xi32> to vector<8x8xf32>
    %cst_327 = arith.constant dense<0.000000e+00> : vector<8x16xf32>
    %1585 = tpu.matmul %1584, %3, %cst_327 {dimension_numbers = #tpu.dot_dimension_numbers<[1], [0], [0], [1], [0, 0, 1, 1], [], []>} : vector<8x8xf32>, vector<8x16xf32>, vector<8x16xf32> -> vector<8x16xf32>
    %cst_328 = arith.constant 6.000000e-01 : f32
    %1586 = vector.broadcast %cst_328 : f32 to vector<8x16xf32>
    %1587 = arith.mulf %1586, %1585 : vector<8x16xf32>
    %1588 = vector.broadcast %4 : vector<1x16xf32> to vector<8x16xf32>
    %1589 = vector.broadcast %1576 : vector<8x1xf32> to vector<8x16xf32>
    %1590 = arith.mulf %1588, %1589 : vector<8x16xf32>
    %1591 = vector.broadcast %5 : vector<1x16xf32> to vector<8x16xf32>
    %1592 = arith.addf %1590, %1591 : vector<8x16xf32>
    %cst_329 = arith.constant 4.000000e-01 : f32
    %1593 = vector.broadcast %cst_329 : f32 to vector<8x16xf32>
    %1594 = arith.mulf %1593, %1592 : vector<8x16xf32>
    %1595 = arith.addf %1587, %1594 : vector<8x16xf32>
    %cst_330 = arith.constant 0.000000e+00 : f32
    %1596 = vector.broadcast %cst_330 : f32 to vector<8x1xf32>
    %1597 = arith.cmpf oge, %1576, %1596 : vector<8x1xf32>
    %1598 = arith.extui %1597 : vector<8x1xi1> to vector<8x1xi32>
    %1599 = arith.sitofp %1598 : vector<8x1xi32> to vector<8x1xf32>
    %1600 = vector.broadcast %1599 : vector<8x1xf32> to vector<8x16xf32>
    %1601 = arith.mulf %1595, %1600 : vector<8x16xf32>
    %1602 = arith.addf %1515, %1601 : vector<8x16xf32>
    %1603 = arith.subf %1518, %1601 : vector<8x16xf32>
    %1604 = vector.shape_cast %1575 : vector<8x1xi1> to vector<8x1xi1>
    %1605 = vector.broadcast %1604 : vector<8x1xi1> to vector<8x16xi1>
    %1606 = arith.select %1605, %1518, %1603 : vector<8x16xi1>, vector<8x16xf32>
    %c1_i32_331 = arith.constant 1 : i32
    %1607 = vector.broadcast %c1_i32_331 : i32 to vector<8x1xi32>
    %1608 = arith.addi %1519, %1607 : vector<8x1xi32>
    %1609 = arith.select %1575, %1519, %1608 : vector<8x1xi1>, vector<8x1xi32>
    %c1_i32_332 = arith.constant 1 : i32
    %1610 = vector.broadcast %c1_i32_332 : i32 to vector<8x1xi32>
    %1611 = arith.addi %1520, %1610 : vector<8x1xi32>
    %cst_333 = arith.constant 0.000000e+00 : f32
    %1612 = vector.broadcast %cst_333 : f32 to vector<8x1xf32>
    %1613 = arith.cmpf olt, %1576, %1612 : vector<8x1xf32>
    %c16_i32_334 = arith.constant 16 : i32
    %1614 = vector.broadcast %c16_i32_334 : i32 to vector<8x1xi32>
    %1615 = arith.cmpi sge, %1611, %1614 : vector<8x1xi32>
    %1616 = arith.ori %1613, %1615 : vector<8x1xi1>
    %1617 = arith.extui %1616 : vector<8x1xi1> to vector<8x1xi32>
    %1618 = arith.maxsi %1522, %1617 : vector<8x1xi32>
    %1619 = vector.broadcast %1520 : vector<8x1xi32> to vector<8x16xi32>
    %1620 = arith.cmpi eq, %10, %1619 : vector<8x16xi32>
    %1621 = vector.broadcast %1527 : vector<8x1xi1> to vector<8x16xi1>
    %1622 = arith.andi %1620, %1621 : vector<8x16xi1>
    %1623 = vector.shape_cast %1576 : vector<8x1xf32> to vector<8x1xf32>
    %1624 = vector.broadcast %1623 : vector<8x1xf32> to vector<8x16xf32>
    %1625 = arith.select %1622, %1624, %1509 : vector<8x16xi1>, vector<8x16xf32>
    %1626 = vector.shape_cast %1577 : vector<8x1xf32> to vector<8x1xf32>
    %1627 = vector.broadcast %1626 : vector<8x1xf32> to vector<8x16xf32>
    %1628 = arith.select %1622, %1627, %1512 : vector<8x16xi1>, vector<8x16xf32>
    %1629 = vector.shape_cast %1527 : vector<8x1xi1> to vector<8x1xi1>
    %1630 = vector.broadcast %1629 : vector<8x1xi1> to vector<8x16xi1>
    %1631 = arith.select %1630, %1602, %1515 : vector<8x16xi1>, vector<8x16xf32>
    %1632 = vector.shape_cast %1527 : vector<8x1xi1> to vector<8x1xi1>
    %1633 = vector.broadcast %1632 : vector<8x1xi1> to vector<8x16xi1>
    %1634 = arith.select %1633, %1606, %1518 : vector<8x16xi1>, vector<8x16xf32>
    %1635 = arith.select %1527, %1609, %1519 : vector<8x1xi1>, vector<8x1xi32>
    %1636 = arith.select %1527, %1611, %1520 : vector<8x1xi1>, vector<8x1xi32>
    %1637 = arith.select %1527, %1576, %1521 : vector<8x1xi1>, vector<8x1xf32>
    %1638 = arith.select %1527, %1618, %1522 : vector<8x1xi1>, vector<8x1xi32>
    %c13_i32 = arith.constant 13 : i32
    %c0_i32_335 = arith.constant 0 : i32
    %1639 = vector.broadcast %c0_i32_335 : i32 to vector<8x1xi32>
    %1640 = arith.cmpi eq, %1638, %1639 : vector<8x1xi32>
    %c5_i32_336 = arith.constant 5 : i32
    %1641 = vector.broadcast %c5_i32_336 : i32 to vector<8x1xi32>
    %1642 = arith.cmpi slt, %1635, %1641 : vector<8x1xi32>
    %1643 = arith.andi %1640, %1642 : vector<8x1xi1>
    %c1_i32_337 = arith.constant 1 : i32
    %1644 = vector.broadcast %c1_i32_337 : i32 to vector<8x1xi32>
    %1645 = arith.addi %1635, %1644 : vector<8x1xi32>
    %1646 = arith.sitofp %1645 : vector<8x1xi32> to vector<8x1xf32>
    %1647 = arith.subf %55, %1646 : vector<8x1xf32>
    %cst_338 = arith.constant 1.000000e+00 : f32
    %1648 = vector.broadcast %cst_338 : f32 to vector<8x1xf32>
    %1649 = arith.maximumf %1647, %1648 : vector<8x1xf32>
    %1650 = arith.sitofp %1636 : vector<8x1xi32> to vector<8x1xf32>
    %1651 = vector.broadcast %1650 : vector<8x1xf32> to vector<8x16xf32>
    %1652 = arith.divf %1631, %1651 : vector<8x16xf32>
    %1653 = vector.broadcast %1649 : vector<8x1xf32> to vector<8x16xf32>
    %1654 = arith.divf %1634, %1653 : vector<8x16xf32>
    %cst_339 = arith.constant dense<0.000000e+00> : vector<8x8xf32>
    %1655 = tpu.matmul %1652, %6, %cst_339 {dimension_numbers = #tpu.dot_dimension_numbers<[1], [0], [0], [1], [0, 0, 1, 1], [], []>} : vector<8x16xf32>, vector<16x8xf32>, vector<8x8xf32> -> vector<8x8xf32>
    %cst_340 = arith.constant dense<0.000000e+00> : vector<8x8xf32>
    %1656 = tpu.matmul %1654, %7, %cst_340 {dimension_numbers = #tpu.dot_dimension_numbers<[1], [0], [0], [1], [0, 0, 1, 1], [], []>} : vector<8x16xf32>, vector<16x8xf32>, vector<8x8xf32> -> vector<8x8xf32>
    %1657 = arith.addf %1655, %1656 : vector<8x8xf32>
    %1658 = vector.broadcast %8 : vector<1x8xf32> to vector<8x8xf32>
    %1659 = arith.addf %1657, %1658 : vector<8x8xf32>
    %cst_341 = arith.constant dense<0xFF800000> : vector<8xf32>
    %1660 = vector.multi_reduction <maximumf>, %1659, %cst_341 [1] : vector<8x8xf32> to vector<8xf32>
    %1661 = vector.shape_cast %1660 : vector<8xf32> to vector<8x1xf32>
    %1662 = vector.broadcast %1661 : vector<8x1xf32> to vector<8x8xf32>
    %1663 = arith.cmpf oeq, %1659, %1662 : vector<8x8xf32>
    %cst_342 = arith.constant 8.000000e+00 : f32
    %1664 = vector.broadcast %cst_342 : f32 to vector<8x8xf32>
    %1665 = arith.select %1663, %12, %1664 : vector<8x8xi1>, vector<8x8xf32>
    %cst_343 = arith.constant dense<0x7F800000> : vector<8xf32>
    %1666 = vector.multi_reduction <minimumf>, %1665, %cst_343 [1] : vector<8x8xf32> to vector<8xf32>
    %1667 = vector.shape_cast %1666 : vector<8xf32> to vector<8x1xf32>
    %1668 = vector.broadcast %1661 : vector<8x1xf32> to vector<8x8xf32>
    %1669 = arith.subf %1659, %1668 : vector<8x8xf32>
    %1670 = math.exp %1669 : vector<8x8xf32>
    %cst_344 = arith.constant dense<0.000000e+00> : vector<8xf32>
    %1671 = vector.multi_reduction <add>, %1670, %cst_344 [1] : vector<8x8xf32> to vector<8xf32>
    %1672 = vector.shape_cast %1671 : vector<8xf32> to vector<8x1xf32>
    %1673 = vector.broadcast %c13_i32 : i32 to vector<8x16xi32>
    %1674 = arith.cmpi eq, %10, %1673 : vector<8x16xi32>
    %cst_345 = arith.constant 0.000000e+00 : f32
    %1675 = vector.broadcast %cst_345 : f32 to vector<8x16xf32>
    %1676 = arith.select %1674, %2, %1675 : vector<8x16xi1>, vector<8x16xf32>
    %cst_346 = arith.constant dense<0.000000e+00> : vector<8xf32>
    %1677 = vector.multi_reduction <add>, %1676, %cst_346 [1] : vector<8x16xf32> to vector<8xf32>
    %1678 = vector.shape_cast %1677 : vector<8xf32> to vector<8x1xf32>
    %1679 = arith.mulf %1678, %1672 : vector<8x1xf32>
    %1680 = vector.broadcast %1645 : vector<8x1xi32> to vector<8x6xi32>
    %1681 = arith.cmpi eq, %9, %1680 : vector<8x6xi32>
    %1682 = arith.extui %1681 : vector<8x6xi1> to vector<8x6xi32>
    %1683 = arith.sitofp %1682 : vector<8x6xi32> to vector<8x6xf32>
    %1684 = arith.mulf %0, %1683 : vector<8x6xf32>
    %cst_347 = arith.constant dense<0.000000e+00> : vector<8xf32>
    %1685 = vector.multi_reduction <add>, %1684, %cst_347 [1] : vector<8x6xf32> to vector<8xf32>
    %1686 = vector.shape_cast %1685 : vector<8xf32> to vector<8x1xf32>
    %1687 = arith.mulf %1, %1683 : vector<8x6xf32>
    %cst_348 = arith.constant dense<0.000000e+00> : vector<8xf32>
    %1688 = vector.multi_reduction <add>, %1687, %cst_348 [1] : vector<8x6xf32> to vector<8xf32>
    %1689 = vector.shape_cast %1688 : vector<8xf32> to vector<8x1xf32>
    %1690 = arith.addf %1637, %1679 : vector<8x1xf32>
    %1691 = arith.cmpf olt, %1690, %1686 : vector<8x1xf32>
    %1692 = arith.select %1691, %1690, %1686 : vector<8x1xi1>, vector<8x1xf32>
    %1693 = arith.select %1691, %1667, %1689 : vector<8x1xi1>, vector<8x1xf32>
    %cst_349 = arith.constant 5.000000e-01 : f32
    %1694 = vector.broadcast %cst_349 : f32 to vector<8x1xf32>
    %1695 = arith.addf %1693, %1694 : vector<8x1xf32>
    %1696 = arith.fptosi %1695 : vector<8x1xf32> to vector<8x1xi32>
    %1697 = vector.broadcast %1696 : vector<8x1xi32> to vector<8x8xi32>
    %1698 = arith.cmpi eq, %11, %1697 : vector<8x8xi32>
    %1699 = arith.extui %1698 : vector<8x8xi1> to vector<8x8xi32>
    %1700 = arith.sitofp %1699 : vector<8x8xi32> to vector<8x8xf32>
    %cst_350 = arith.constant dense<0.000000e+00> : vector<8x16xf32>
    %1701 = tpu.matmul %1700, %3, %cst_350 {dimension_numbers = #tpu.dot_dimension_numbers<[1], [0], [0], [1], [0, 0, 1, 1], [], []>} : vector<8x8xf32>, vector<8x16xf32>, vector<8x16xf32> -> vector<8x16xf32>
    %cst_351 = arith.constant 6.000000e-01 : f32
    %1702 = vector.broadcast %cst_351 : f32 to vector<8x16xf32>
    %1703 = arith.mulf %1702, %1701 : vector<8x16xf32>
    %1704 = vector.broadcast %4 : vector<1x16xf32> to vector<8x16xf32>
    %1705 = vector.broadcast %1692 : vector<8x1xf32> to vector<8x16xf32>
    %1706 = arith.mulf %1704, %1705 : vector<8x16xf32>
    %1707 = vector.broadcast %5 : vector<1x16xf32> to vector<8x16xf32>
    %1708 = arith.addf %1706, %1707 : vector<8x16xf32>
    %cst_352 = arith.constant 4.000000e-01 : f32
    %1709 = vector.broadcast %cst_352 : f32 to vector<8x16xf32>
    %1710 = arith.mulf %1709, %1708 : vector<8x16xf32>
    %1711 = arith.addf %1703, %1710 : vector<8x16xf32>
    %cst_353 = arith.constant 0.000000e+00 : f32
    %1712 = vector.broadcast %cst_353 : f32 to vector<8x1xf32>
    %1713 = arith.cmpf oge, %1692, %1712 : vector<8x1xf32>
    %1714 = arith.extui %1713 : vector<8x1xi1> to vector<8x1xi32>
    %1715 = arith.sitofp %1714 : vector<8x1xi32> to vector<8x1xf32>
    %1716 = vector.broadcast %1715 : vector<8x1xf32> to vector<8x16xf32>
    %1717 = arith.mulf %1711, %1716 : vector<8x16xf32>
    %1718 = arith.addf %1631, %1717 : vector<8x16xf32>
    %1719 = arith.subf %1634, %1717 : vector<8x16xf32>
    %1720 = vector.shape_cast %1691 : vector<8x1xi1> to vector<8x1xi1>
    %1721 = vector.broadcast %1720 : vector<8x1xi1> to vector<8x16xi1>
    %1722 = arith.select %1721, %1634, %1719 : vector<8x16xi1>, vector<8x16xf32>
    %c1_i32_354 = arith.constant 1 : i32
    %1723 = vector.broadcast %c1_i32_354 : i32 to vector<8x1xi32>
    %1724 = arith.addi %1635, %1723 : vector<8x1xi32>
    %1725 = arith.select %1691, %1635, %1724 : vector<8x1xi1>, vector<8x1xi32>
    %c1_i32_355 = arith.constant 1 : i32
    %1726 = vector.broadcast %c1_i32_355 : i32 to vector<8x1xi32>
    %1727 = arith.addi %1636, %1726 : vector<8x1xi32>
    %cst_356 = arith.constant 0.000000e+00 : f32
    %1728 = vector.broadcast %cst_356 : f32 to vector<8x1xf32>
    %1729 = arith.cmpf olt, %1692, %1728 : vector<8x1xf32>
    %c16_i32_357 = arith.constant 16 : i32
    %1730 = vector.broadcast %c16_i32_357 : i32 to vector<8x1xi32>
    %1731 = arith.cmpi sge, %1727, %1730 : vector<8x1xi32>
    %1732 = arith.ori %1729, %1731 : vector<8x1xi1>
    %1733 = arith.extui %1732 : vector<8x1xi1> to vector<8x1xi32>
    %1734 = arith.maxsi %1638, %1733 : vector<8x1xi32>
    %1735 = vector.broadcast %1636 : vector<8x1xi32> to vector<8x16xi32>
    %1736 = arith.cmpi eq, %10, %1735 : vector<8x16xi32>
    %1737 = vector.broadcast %1643 : vector<8x1xi1> to vector<8x16xi1>
    %1738 = arith.andi %1736, %1737 : vector<8x16xi1>
    %1739 = vector.shape_cast %1692 : vector<8x1xf32> to vector<8x1xf32>
    %1740 = vector.broadcast %1739 : vector<8x1xf32> to vector<8x16xf32>
    %1741 = arith.select %1738, %1740, %1625 : vector<8x16xi1>, vector<8x16xf32>
    %1742 = vector.shape_cast %1693 : vector<8x1xf32> to vector<8x1xf32>
    %1743 = vector.broadcast %1742 : vector<8x1xf32> to vector<8x16xf32>
    %1744 = arith.select %1738, %1743, %1628 : vector<8x16xi1>, vector<8x16xf32>
    %1745 = vector.shape_cast %1643 : vector<8x1xi1> to vector<8x1xi1>
    %1746 = vector.broadcast %1745 : vector<8x1xi1> to vector<8x16xi1>
    %1747 = arith.select %1746, %1718, %1631 : vector<8x16xi1>, vector<8x16xf32>
    %1748 = vector.shape_cast %1643 : vector<8x1xi1> to vector<8x1xi1>
    %1749 = vector.broadcast %1748 : vector<8x1xi1> to vector<8x16xi1>
    %1750 = arith.select %1749, %1722, %1634 : vector<8x16xi1>, vector<8x16xf32>
    %1751 = arith.select %1643, %1725, %1635 : vector<8x1xi1>, vector<8x1xi32>
    %1752 = arith.select %1643, %1727, %1636 : vector<8x1xi1>, vector<8x1xi32>
    %1753 = arith.select %1643, %1692, %1637 : vector<8x1xi1>, vector<8x1xf32>
    %1754 = arith.select %1643, %1734, %1638 : vector<8x1xi1>, vector<8x1xi32>
    %c14_i32 = arith.constant 14 : i32
    %c0_i32_358 = arith.constant 0 : i32
    %1755 = vector.broadcast %c0_i32_358 : i32 to vector<8x1xi32>
    %1756 = arith.cmpi eq, %1754, %1755 : vector<8x1xi32>
    %c5_i32_359 = arith.constant 5 : i32
    %1757 = vector.broadcast %c5_i32_359 : i32 to vector<8x1xi32>
    %1758 = arith.cmpi slt, %1751, %1757 : vector<8x1xi32>
    %1759 = arith.andi %1756, %1758 : vector<8x1xi1>
    %c1_i32_360 = arith.constant 1 : i32
    %1760 = vector.broadcast %c1_i32_360 : i32 to vector<8x1xi32>
    %1761 = arith.addi %1751, %1760 : vector<8x1xi32>
    %1762 = arith.sitofp %1761 : vector<8x1xi32> to vector<8x1xf32>
    %1763 = arith.subf %55, %1762 : vector<8x1xf32>
    %cst_361 = arith.constant 1.000000e+00 : f32
    %1764 = vector.broadcast %cst_361 : f32 to vector<8x1xf32>
    %1765 = arith.maximumf %1763, %1764 : vector<8x1xf32>
    %1766 = arith.sitofp %1752 : vector<8x1xi32> to vector<8x1xf32>
    %1767 = vector.broadcast %1766 : vector<8x1xf32> to vector<8x16xf32>
    %1768 = arith.divf %1747, %1767 : vector<8x16xf32>
    %1769 = vector.broadcast %1765 : vector<8x1xf32> to vector<8x16xf32>
    %1770 = arith.divf %1750, %1769 : vector<8x16xf32>
    %cst_362 = arith.constant dense<0.000000e+00> : vector<8x8xf32>
    %1771 = tpu.matmul %1768, %6, %cst_362 {dimension_numbers = #tpu.dot_dimension_numbers<[1], [0], [0], [1], [0, 0, 1, 1], [], []>} : vector<8x16xf32>, vector<16x8xf32>, vector<8x8xf32> -> vector<8x8xf32>
    %cst_363 = arith.constant dense<0.000000e+00> : vector<8x8xf32>
    %1772 = tpu.matmul %1770, %7, %cst_363 {dimension_numbers = #tpu.dot_dimension_numbers<[1], [0], [0], [1], [0, 0, 1, 1], [], []>} : vector<8x16xf32>, vector<16x8xf32>, vector<8x8xf32> -> vector<8x8xf32>
    %1773 = arith.addf %1771, %1772 : vector<8x8xf32>
    %1774 = vector.broadcast %8 : vector<1x8xf32> to vector<8x8xf32>
    %1775 = arith.addf %1773, %1774 : vector<8x8xf32>
    %cst_364 = arith.constant dense<0xFF800000> : vector<8xf32>
    %1776 = vector.multi_reduction <maximumf>, %1775, %cst_364 [1] : vector<8x8xf32> to vector<8xf32>
    %1777 = vector.shape_cast %1776 : vector<8xf32> to vector<8x1xf32>
    %1778 = vector.broadcast %1777 : vector<8x1xf32> to vector<8x8xf32>
    %1779 = arith.cmpf oeq, %1775, %1778 : vector<8x8xf32>
    %cst_365 = arith.constant 8.000000e+00 : f32
    %1780 = vector.broadcast %cst_365 : f32 to vector<8x8xf32>
    %1781 = arith.select %1779, %12, %1780 : vector<8x8xi1>, vector<8x8xf32>
    %cst_366 = arith.constant dense<0x7F800000> : vector<8xf32>
    %1782 = vector.multi_reduction <minimumf>, %1781, %cst_366 [1] : vector<8x8xf32> to vector<8xf32>
    %1783 = vector.shape_cast %1782 : vector<8xf32> to vector<8x1xf32>
    %1784 = vector.broadcast %1777 : vector<8x1xf32> to vector<8x8xf32>
    %1785 = arith.subf %1775, %1784 : vector<8x8xf32>
    %1786 = math.exp %1785 : vector<8x8xf32>
    %cst_367 = arith.constant dense<0.000000e+00> : vector<8xf32>
    %1787 = vector.multi_reduction <add>, %1786, %cst_367 [1] : vector<8x8xf32> to vector<8xf32>
    %1788 = vector.shape_cast %1787 : vector<8xf32> to vector<8x1xf32>
    %1789 = vector.broadcast %c14_i32 : i32 to vector<8x16xi32>
    %1790 = arith.cmpi eq, %10, %1789 : vector<8x16xi32>
    %cst_368 = arith.constant 0.000000e+00 : f32
    %1791 = vector.broadcast %cst_368 : f32 to vector<8x16xf32>
    %1792 = arith.select %1790, %2, %1791 : vector<8x16xi1>, vector<8x16xf32>
    %cst_369 = arith.constant dense<0.000000e+00> : vector<8xf32>
    %1793 = vector.multi_reduction <add>, %1792, %cst_369 [1] : vector<8x16xf32> to vector<8xf32>
    %1794 = vector.shape_cast %1793 : vector<8xf32> to vector<8x1xf32>
    %1795 = arith.mulf %1794, %1788 : vector<8x1xf32>
    %1796 = vector.broadcast %1761 : vector<8x1xi32> to vector<8x6xi32>
    %1797 = arith.cmpi eq, %9, %1796 : vector<8x6xi32>
    %1798 = arith.extui %1797 : vector<8x6xi1> to vector<8x6xi32>
    %1799 = arith.sitofp %1798 : vector<8x6xi32> to vector<8x6xf32>
    %1800 = arith.mulf %0, %1799 : vector<8x6xf32>
    %cst_370 = arith.constant dense<0.000000e+00> : vector<8xf32>
    %1801 = vector.multi_reduction <add>, %1800, %cst_370 [1] : vector<8x6xf32> to vector<8xf32>
    %1802 = vector.shape_cast %1801 : vector<8xf32> to vector<8x1xf32>
    %1803 = arith.mulf %1, %1799 : vector<8x6xf32>
    %cst_371 = arith.constant dense<0.000000e+00> : vector<8xf32>
    %1804 = vector.multi_reduction <add>, %1803, %cst_371 [1] : vector<8x6xf32> to vector<8xf32>
    %1805 = vector.shape_cast %1804 : vector<8xf32> to vector<8x1xf32>
    %1806 = arith.addf %1753, %1795 : vector<8x1xf32>
    %1807 = arith.cmpf olt, %1806, %1802 : vector<8x1xf32>
    %1808 = arith.select %1807, %1806, %1802 : vector<8x1xi1>, vector<8x1xf32>
    %1809 = arith.select %1807, %1783, %1805 : vector<8x1xi1>, vector<8x1xf32>
    %cst_372 = arith.constant 5.000000e-01 : f32
    %1810 = vector.broadcast %cst_372 : f32 to vector<8x1xf32>
    %1811 = arith.addf %1809, %1810 : vector<8x1xf32>
    %1812 = arith.fptosi %1811 : vector<8x1xf32> to vector<8x1xi32>
    %1813 = vector.broadcast %1812 : vector<8x1xi32> to vector<8x8xi32>
    %1814 = arith.cmpi eq, %11, %1813 : vector<8x8xi32>
    %1815 = arith.extui %1814 : vector<8x8xi1> to vector<8x8xi32>
    %1816 = arith.sitofp %1815 : vector<8x8xi32> to vector<8x8xf32>
    %cst_373 = arith.constant dense<0.000000e+00> : vector<8x16xf32>
    %1817 = tpu.matmul %1816, %3, %cst_373 {dimension_numbers = #tpu.dot_dimension_numbers<[1], [0], [0], [1], [0, 0, 1, 1], [], []>} : vector<8x8xf32>, vector<8x16xf32>, vector<8x16xf32> -> vector<8x16xf32>
    %cst_374 = arith.constant 6.000000e-01 : f32
    %1818 = vector.broadcast %cst_374 : f32 to vector<8x16xf32>
    %1819 = arith.mulf %1818, %1817 : vector<8x16xf32>
    %1820 = vector.broadcast %4 : vector<1x16xf32> to vector<8x16xf32>
    %1821 = vector.broadcast %1808 : vector<8x1xf32> to vector<8x16xf32>
    %1822 = arith.mulf %1820, %1821 : vector<8x16xf32>
    %1823 = vector.broadcast %5 : vector<1x16xf32> to vector<8x16xf32>
    %1824 = arith.addf %1822, %1823 : vector<8x16xf32>
    %cst_375 = arith.constant 4.000000e-01 : f32
    %1825 = vector.broadcast %cst_375 : f32 to vector<8x16xf32>
    %1826 = arith.mulf %1825, %1824 : vector<8x16xf32>
    %1827 = arith.addf %1819, %1826 : vector<8x16xf32>
    %cst_376 = arith.constant 0.000000e+00 : f32
    %1828 = vector.broadcast %cst_376 : f32 to vector<8x1xf32>
    %1829 = arith.cmpf oge, %1808, %1828 : vector<8x1xf32>
    %1830 = arith.extui %1829 : vector<8x1xi1> to vector<8x1xi32>
    %1831 = arith.sitofp %1830 : vector<8x1xi32> to vector<8x1xf32>
    %1832 = vector.broadcast %1831 : vector<8x1xf32> to vector<8x16xf32>
    %1833 = arith.mulf %1827, %1832 : vector<8x16xf32>
    %1834 = arith.addf %1747, %1833 : vector<8x16xf32>
    %1835 = arith.subf %1750, %1833 : vector<8x16xf32>
    %1836 = vector.shape_cast %1807 : vector<8x1xi1> to vector<8x1xi1>
    %1837 = vector.broadcast %1836 : vector<8x1xi1> to vector<8x16xi1>
    %1838 = arith.select %1837, %1750, %1835 : vector<8x16xi1>, vector<8x16xf32>
    %c1_i32_377 = arith.constant 1 : i32
    %1839 = vector.broadcast %c1_i32_377 : i32 to vector<8x1xi32>
    %1840 = arith.addi %1751, %1839 : vector<8x1xi32>
    %1841 = arith.select %1807, %1751, %1840 : vector<8x1xi1>, vector<8x1xi32>
    %c1_i32_378 = arith.constant 1 : i32
    %1842 = vector.broadcast %c1_i32_378 : i32 to vector<8x1xi32>
    %1843 = arith.addi %1752, %1842 : vector<8x1xi32>
    %cst_379 = arith.constant 0.000000e+00 : f32
    %1844 = vector.broadcast %cst_379 : f32 to vector<8x1xf32>
    %1845 = arith.cmpf olt, %1808, %1844 : vector<8x1xf32>
    %c16_i32_380 = arith.constant 16 : i32
    %1846 = vector.broadcast %c16_i32_380 : i32 to vector<8x1xi32>
    %1847 = arith.cmpi sge, %1843, %1846 : vector<8x1xi32>
    %1848 = arith.ori %1845, %1847 : vector<8x1xi1>
    %1849 = arith.extui %1848 : vector<8x1xi1> to vector<8x1xi32>
    %1850 = arith.maxsi %1754, %1849 : vector<8x1xi32>
    %1851 = vector.broadcast %1752 : vector<8x1xi32> to vector<8x16xi32>
    %1852 = arith.cmpi eq, %10, %1851 : vector<8x16xi32>
    %1853 = vector.broadcast %1759 : vector<8x1xi1> to vector<8x16xi1>
    %1854 = arith.andi %1852, %1853 : vector<8x16xi1>
    %1855 = vector.shape_cast %1808 : vector<8x1xf32> to vector<8x1xf32>
    %1856 = vector.broadcast %1855 : vector<8x1xf32> to vector<8x16xf32>
    %1857 = arith.select %1854, %1856, %1741 : vector<8x16xi1>, vector<8x16xf32>
    %1858 = vector.shape_cast %1809 : vector<8x1xf32> to vector<8x1xf32>
    %1859 = vector.broadcast %1858 : vector<8x1xf32> to vector<8x16xf32>
    %1860 = arith.select %1854, %1859, %1744 : vector<8x16xi1>, vector<8x16xf32>
    %1861 = vector.shape_cast %1759 : vector<8x1xi1> to vector<8x1xi1>
    %1862 = vector.broadcast %1861 : vector<8x1xi1> to vector<8x16xi1>
    %1863 = arith.select %1862, %1834, %1747 : vector<8x16xi1>, vector<8x16xf32>
    %1864 = vector.shape_cast %1759 : vector<8x1xi1> to vector<8x1xi1>
    %1865 = vector.broadcast %1864 : vector<8x1xi1> to vector<8x16xi1>
    %1866 = arith.select %1865, %1838, %1750 : vector<8x16xi1>, vector<8x16xf32>
    %1867 = arith.select %1759, %1841, %1751 : vector<8x1xi1>, vector<8x1xi32>
    %1868 = arith.select %1759, %1843, %1752 : vector<8x1xi1>, vector<8x1xi32>
    %1869 = arith.select %1759, %1808, %1753 : vector<8x1xi1>, vector<8x1xf32>
    %1870 = arith.select %1759, %1850, %1754 : vector<8x1xi1>, vector<8x1xi32>
    %c15_i32 = arith.constant 15 : i32
    %1871 = tpu.concatenate %1857, %1860 in 1 : vector<8x16xf32>, vector<8x16xf32> -> vector<8x32xf32>
    %c0_381 = arith.constant 0 : index
    %c0_382 = arith.constant 0 : index
    %1872 = vector.load %arg10[%c0_381, %c0_382] : memref<8x32xf32, #tpu.memory_space<vmem>>, vector<8x32xf32>
    tpu.vector_store %arg10[%c0_381, %c0_382], %1871 {strides = array<i32>} : memref<8x32xf32, #tpu.memory_space<vmem>>, vector<8x32xf32>,
    return
  }
  func.func @transform_0(%arg0: i32) -> (i32, i32) {
    %c0_i32 = arith.constant 0 : i32
    %c0_i32_0 = arith.constant 0 : i32
    return %arg0, %c0_i32 : i32, i32
  }
  func.func @transform_1(%arg0: i32) -> (i32, i32) {
    %c0_i32 = arith.constant 0 : i32
    %c0_i32_0 = arith.constant 0 : i32
    return %arg0, %c0_i32 : i32, i32
  }
  func.func @transform_2(%arg0: i32) -> (i32, i32) {
    %c0_i32 = arith.constant 0 : i32
    %c0_i32_0 = arith.constant 0 : i32
    return %arg0, %c0_i32 : i32, i32
  }
  func.func @transform_3(%arg0: i32) -> (i32, i32) {
    %c0_i32 = arith.constant 0 : i32
    %c0_i32_0 = arith.constant 0 : i32
    %c0_i32_1 = arith.constant 0 : i32
    return %c0_i32, %c0_i32_0 : i32, i32
  }
  func.func @transform_4(%arg0: i32) -> (i32, i32) {
    %c0_i32 = arith.constant 0 : i32
    %c0_i32_0 = arith.constant 0 : i32
    %c0_i32_1 = arith.constant 0 : i32
    return %c0_i32, %c0_i32_0 : i32, i32
  }
  func.func @transform_5(%arg0: i32) -> (i32, i32) {
    %c0_i32 = arith.constant 0 : i32
    %c0_i32_0 = arith.constant 0 : i32
    %c0_i32_1 = arith.constant 0 : i32
    return %c0_i32, %c0_i32_0 : i32, i32
  }
  func.func @transform_6(%arg0: i32) -> (i32, i32) {
    %c0_i32 = arith.constant 0 : i32
    %c0_i32_0 = arith.constant 0 : i32
    %c0_i32_1 = arith.constant 0 : i32
    return %c0_i32, %c0_i32_0 : i32, i32
  }
  func.func @transform_7(%arg0: i32) -> (i32, i32) {
    %c0_i32 = arith.constant 0 : i32
    %c0_i32_0 = arith.constant 0 : i32
    %c0_i32_1 = arith.constant 0 : i32
    return %c0_i32, %c0_i32_0 : i32, i32
  }
  func.func @transform_8(%arg0: i32) -> (i32, i32) {
    %c0_i32 = arith.constant 0 : i32
    %c0_i32_0 = arith.constant 0 : i32
    %c0_i32_1 = arith.constant 0 : i32
    return %c0_i32, %c0_i32_0 : i32, i32
  }
  func.func @transform_9(%arg0: i32) -> (i32, i32) {
    %c0_i32 = arith.constant 0 : i32
    %c0_i32_0 = arith.constant 0 : i32
    return %arg0, %c0_i32 : i32, i32
  }
}

</mosaic_0001>

<llo_original>
// kernel: piles_forward.1
$region0: #{piles_forward.1}
  #allocation0 [shape = 'u32[]', space=smem, size = 0x4, offset = 0x4, fixed_abs, tag = 'smem constant byte address 0x4 - core index']
  #allocation1 [shape = 'u32[144,128]{1,0:T(1,128)}', space=vmem, size = 0x12000, scoped, tag = 'internal scratch']
  %s0 = inlined_call_operand.vmem [shape: f32[16,6], index: 0, kind: input, shape index: {}]
  %s1 = inlined_call_operand.vmem [shape: f32[16,6], index: 1, kind: input, shape index: {}]
  %s2 = inlined_call_operand.vmem [shape: f32[16,16], index: 2, kind: input, shape index: {}]
  %s3 = inlined_call_operand.vmem [shape: f32[8,16], index: 3, kind: input, shape index: {}]
  %s4 = inlined_call_operand.vmem [shape: f32[1,16], index: 4, kind: input, shape index: {}]
  %s5 = inlined_call_operand.vmem [shape: f32[1,16], index: 5, kind: input, shape index: {}]
  %s6 = inlined_call_operand.vmem [shape: f32[16,8], index: 6, kind: input, shape index: {}]
  %s7 = inlined_call_operand.vmem [shape: f32[16,8], index: 7, kind: input, shape index: {}]
  %s8 = inlined_call_operand.vmem [shape: f32[1,8], index: 8, kind: input, shape index: {}]
  %s9 = inlined_call_operand.vmem [shape: f32[16,32], index: 9, kind: output, shape index: {}]
  %s10 = sld [smem:[#allocation0]]
  $region69: #{piles_forward.1} parent=0
    _
  %s12 = ssub.s32 1, %s10
  %s13 = scalar_select 0, %s12, %s10
  loop: start=0, step=1, limit=4
  $region2: #{piles_forward.1} parent=0 // loop_pre_header
    _
  $region3: #{piles_forward.1} parent=0 // loop_header
    %s15 = sphi 0, %s19
    %p16 = scmp.ge.s32.totalorder %s15, 4
    %s25 = sphi 0, %s27
    %s28 = sphi 0, %s25
    %s29 = sphi 0, %s28
    %s45 = sphi 0, %s29
    %s51 = sphi 0, %s53
    %s54 = sphi 0, %s51
    %s55 = sphi 0, %s54
    %s71 = sphi 0, %s55
    %s77 = sphi 0, %s79
    %s80 = sphi 0, %s77
    %s81 = sphi 0, %s80
    %s97 = sphi 0, %s81
    %s101 = sphi 0, %s101
    %s103 = sphi 0, %s101
    %s104 = sphi 0, %s103
    %s118 = sphi 0, %s104
    %s122 = sphi 0, %s122
    %s124 = sphi 0, %s122
    %s125 = sphi 0, %s124
    %s139 = sphi 0, %s125
    %s143 = sphi 0, %s143
    %s145 = sphi 0, %s143
    %s146 = sphi 0, %s145
    %s160 = sphi 0, %s146
    %s164 = sphi 0, %s164
    %s166 = sphi 0, %s164
    %s167 = sphi 0, %s166
    %s181 = sphi 0, %s167
    %s185 = sphi 0, %s185
    %s187 = sphi 0, %s185
    %s188 = sphi 0, %s187
    %s202 = sphi 0, %s188
    %s206 = sphi 0, %s206
    %s208 = sphi 0, %s206
    %s209 = sphi 0, %s208
    %s223 = sphi 0, %s209
    %s229 = sphi 0, %s231
    %s232 = sphi 0, %s229
    %s233 = sphi 0, %s232
    %s249 = sphi 0, %s233
  $region4: #{piles_forward.1} parent=0 // loop_header_branch
    %18 = sbr.rel (%p16) target = $region8
  $region5: #{piles_forward.1} parent=0 // loop_body
    %s20 = ssub.s32 %s15, 1
    %s21 = ssub.s32 %s15, 2
    %s22 = sadd.s32 %s15, 1
    %s23 = ssub.s32 %s15, %s22
    %p24 = scmp.eq.s32.totalorder %s23, 0
    %s26 = sadd.s32 %s25, 1
    %s27 = scalar_select %p24, %s25, %s26
    %p30 = pneg %p24
    %p31 = scmp.eq.s32.totalorder %s15, 1
    %p32 = por %p30, %p31
    %p33 = scmp.ne.s32.totalorder %s25, %s28
    %p34 = scmp.eq.s32.totalorder %s15, 0
    %p35 = por %p33, %p34
    %p36 = scmp.ne.s32.totalorder %s25, %s28
    %p37 = scmp.eq.s32.totalorder %s20, 1
    %p38 = por %p36, %p37
    %p39 = scmp.ne.s32.totalorder %s28, %s29
    %p40 = scmp.eq.s32.totalorder %s20, 0
    %p41 = por %p39, %p40
    %p42 = scmp.ne.s32.totalorder %s28, %s29
    %p43 = scmp.eq.s32.totalorder %s21, 1
    %p44 = por %p42, %p43
    %p46 = scmp.ne.s32.totalorder %s29, %s45
    %p47 = scmp.eq.s32.totalorder %s21, 0
    %p48 = por %p46, %p47
    %s49 = ssub.s32 %s15, %s22
    %p50 = scmp.eq.s32.totalorder %s49, 0
    %s52 = sadd.s32 %s51, 1
    %s53 = scalar_select %p50, %s51, %s52
    %p56 = pneg %p50
    %p57 = scmp.eq.s32.totalorder %s15, 1
    %p58 = por %p56, %p57
    %p59 = scmp.ne.s32.totalorder %s51, %s54
    %p60 = scmp.eq.s32.totalorder %s15, 0
    %p61 = por %p59, %p60
    %p62 = scmp.ne.s32.totalorder %s51, %s54
    %p63 = scmp.eq.s32.totalorder %s20, 1
    %p64 = por %p62, %p63
    %p65 = scmp.ne.s32.totalorder %s54, %s55
    %p66 = scmp.eq.s32.totalorder %s20, 0
    %p67 = por %p65, %p66
    %p68 = scmp.ne.s32.totalorder %s54, %s55
    %p69 = scmp.eq.s32.totalorder %s21, 1
    %p70 = por %p68, %p69
    %p72 = scmp.ne.s32.totalorder %s55, %s71
    %p73 = scmp.eq.s32.totalorder %s21, 0
    %p74 = por %p72, %p73
    %s75 = ssub.s32 %s15, %s22
    %p76 = scmp.eq.s32.totalorder %s75, 0
    %s78 = sadd.s32 %s77, 1
    %s79 = scalar_select %p76, %s77, %s78
    %p82 = pneg %p76
    %p83 = scmp.eq.s32.totalorder %s15, 1
    %p84 = por %p82, %p83
    %p85 = scmp.ne.s32.totalorder %s77, %s80
    %p86 = scmp.eq.s32.totalorder %s15, 0
    %p87 = por %p85, %p86
    %p88 = scmp.ne.s32.totalorder %s77, %s80
    %p89 = scmp.eq.s32.totalorder %s20, 1
    %p90 = por %p88, %p89
    %p91 = scmp.ne.s32.totalorder %s80, %s81
    %p92 = scmp.eq.s32.totalorder %s20, 0
    %p93 = por %p91, %p92
    %p94 = scmp.ne.s32.totalorder %s80, %s81
    %p95 = scmp.eq.s32.totalorder %s21, 1
    %p96 = por %p94, %p95
    %p98 = scmp.ne.s32.totalorder %s81, %s97
    %p99 = scmp.eq.s32.totalorder %s21, 0
    %p100 = por %p98, %p99
    %s102 = sadd.s32 %s101, 1
    %p105 = scmp.eq.s32.totalorder %s15, 1
    %p106 = scmp.ne.s32.totalorder %s101, %s103
    %p107 = scmp.eq.s32.totalorder %s15, 0
    %p108 = por %p106, %p107
    %p109 = scmp.ne.s32.totalorder %s101, %s103
    %p110 = scmp.eq.s32.totalorder %s20, 1
    %p111 = por %p109, %p110
    %p112 = scmp.ne.s32.totalorder %s103, %s104
    %p113 = scmp.eq.s32.totalorder %s20, 0
    %p114 = por %p112, %p113
    %p115 = scmp.ne.s32.totalorder %s103, %s104
    %p116 = scmp.eq.s32.totalorder %s21, 1
    %p117 = por %p115, %p116
    %p119 = scmp.ne.s32.totalorder %s104, %s118
    %p120 = scmp.eq.s32.totalorder %s21, 0
    %p121 = por %p119, %p120
    %s123 = sadd.s32 %s122, 1
    %p126 = scmp.eq.s32.totalorder %s15, 1
    %p127 = scmp.ne.s32.totalorder %s122, %s124
    %p128 = scmp.eq.s32.totalorder %s15, 0
    %p129 = por %p127, %p128
    %p130 = scmp.ne.s32.totalorder %s122, %s124
    %p131 = scmp.eq.s32.totalorder %s20, 1
    %p132 = por %p130, %p131
    %p133 = scmp.ne.s32.totalorder %s124, %s125
    %p134 = scmp.eq.s32.totalorder %s20, 0
    %p135 = por %p133, %p134
    %p136 = scmp.ne.s32.totalorder %s124, %s125
    %p137 = scmp.eq.s32.totalorder %s21, 1
    %p138 = por %p136, %p137
    %p140 = scmp.ne.s32.totalorder %s125, %s139
    %p141 = scmp.eq.s32.totalorder %s21, 0
    %p142 = por %p140, %p141
    %s144 = sadd.s32 %s143, 1
    %p147 = scmp.eq.s32.totalorder %s15, 1
    %p148 = scmp.ne.s32.totalorder %s143, %s145
    %p149 = scmp.eq.s32.totalorder %s15, 0
    %p150 = por %p148, %p149
    %p151 = scmp.ne.s32.totalorder %s143, %s145
    %p152 = scmp.eq.s32.totalorder %s20, 1
    %p153 = por %p151, %p152
    %p154 = scmp.ne.s32.totalorder %s145, %s146
    %p155 = scmp.eq.s32.totalorder %s20, 0
    %p156 = por %p154, %p155
    %p157 = scmp.ne.s32.totalorder %s145, %s146
    %p158 = scmp.eq.s32.totalorder %s21, 1
    %p159 = por %p157, %p158
    %p161 = scmp.ne.s32.totalorder %s146, %s160
    %p162 = scmp.eq.s32.totalorder %s21, 0
    %p163 = por %p161, %p162
    %s165 = sadd.s32 %s164, 1
    %p168 = scmp.eq.s32.totalorder %s15, 1
    %p169 = scmp.ne.s32.totalorder %s164, %s166
    %p170 = scmp.eq.s32.totalorder %s15, 0
    %p171 = por %p169, %p170
    %p172 = scmp.ne.s32.totalorder %s164, %s166
    %p173 = scmp.eq.s32.totalorder %s20, 1
    %p174 = por %p172, %p173
    %p175 = scmp.ne.s32.totalorder %s166, %s167
    %p176 = scmp.eq.s32.totalorder %s20, 0
    %p177 = por %p175, %p176
    %p178 = scmp.ne.s32.totalorder %s166, %s167
    %p179 = scmp.eq.s32.totalorder %s21, 1
    %p180 = por %p178, %p179
    %p182 = scmp.ne.s32.totalorder %s167, %s181
    %p183 = scmp.eq.s32.totalorder %s21, 0
    %p184 = por %p182, %p183
    %s186 = sadd.s32 %s185, 1
    %p189 = scmp.eq.s32.totalorder %s15, 1
    %p190 = scmp.ne.s32.totalorder %s185, %s187
    %p191 = scmp.eq.s32.totalorder %s15, 0
    %p192 = por %p190, %p191
    %p193 = scmp.ne.s32.totalorder %s185, %s187
    %p194 = scmp.eq.s32.totalorder %s20, 1
    %p195 = por %p193, %p194
    %p196 = scmp.ne.s32.totalorder %s187, %s188
    %p197 = scmp.eq.s32.totalorder %s20, 0
    %p198 = por %p196, %p197
    %p199 = scmp.ne.s32.totalorder %s187, %s188
    %p200 = scmp.eq.s32.totalorder %s21, 1
    %p201 = por %p199, %p200
    %p203 = scmp.ne.s32.totalorder %s188, %s202
    %p204 = scmp.eq.s32.totalorder %s21, 0
    %p205 = por %p203, %p204
    %s207 = sadd.s32 %s206, 1
    %p210 = scmp.eq.s32.totalorder %s15, 1
    %p211 = scmp.ne.s32.totalorder %s206, %s208
    %p212 = scmp.eq.s32.totalorder %s15, 0
    %p213 = por %p211, %p212
    %p214 = scmp.ne.s32.totalorder %s206, %s208
    %p215 = scmp.eq.s32.totalorder %s20, 1
    %p216 = por %p214, %p215
    %p217 = scmp.ne.s32.totalorder %s208, %s209
    %p218 = scmp.eq.s32.totalorder %s20, 0
    %p219 = por %p217, %p218
    %p220 = scmp.ne.s32.totalorder %s208, %s209
    %p221 = scmp.eq.s32.totalorder %s21, 1
    %p222 = por %p220, %p221
    %p224 = scmp.ne.s32.totalorder %s209, %s223
    %p225 = scmp.eq.s32.totalorder %s21, 0
    %p226 = por %p224, %p225
    %s227 = ssub.s32 %s15, %s22
    %p228 = scmp.eq.s32.totalorder %s227, 0
    %s230 = sadd.s32 %s229, 1
    %s231 = scalar_select %p228, %s229, %s230
    %p234 = pneg %p228
    %p235 = scmp.eq.s32.totalorder %s15, 1
    %p236 = por %p234, %p235
    %p237 = scmp.ne.s32.totalorder %s229, %s232
    %p238 = scmp.eq.s32.totalorder %s15, 0
    %p239 = por %p237, %p238
    %p240 = scmp.ne.s32.totalorder %s229, %s232
    %p241 = scmp.eq.s32.totalorder %s20, 1
    %p242 = por %p240, %p241
    %p243 = scmp.ne.s32.totalorder %s232, %s233
    %p244 = scmp.eq.s32.totalorder %s20, 0
    %p245 = por %p243, %p244
    %p246 = scmp.ne.s32.totalorder %s232, %s233
    %p247 = scmp.eq.s32.totalorder %s21, 1
    %p248 = por %p246, %p247
    %p250 = scmp.ne.s32.totalorder %s233, %s249
    %p251 = scmp.eq.s32.totalorder %s21, 0
    %p252 = por %p250, %p251
    %p253 = scmp.le.s32.totalorder 1, %s15
    %p254 = scmp.lt.s32.totalorder %s15, 3
    %p255 = pnand %p253, %p254
    %p256 = pneg %p255
    // Predicated region
    $region9: #{piles_forward.1} parent=5 // pred_check
      _
    $region10: #{piles_forward.1} parent=5 // pred_check_branch
      %258 = sbr.rel (%p255) target = $region12
    $region11: #{piles_forward.1} parent=5 // pred_region
      %s259 = ssub.s32 %s15, 1
      // Predicated region
      $region13: #{piles_forward.1} parent=11 // pred_check
        %p260 = pneg %p114
      $region14: #{piles_forward.1} parent=11 // pred_check_branch
        %262 = sbr.rel (%p260) target = $region16
      $region15: #{piles_forward.1} parent=11 // pred_region
        _
      $region16: #{piles_forward.1} parent=11 // pred_fallthru
        _
      // Predicated region
      $region17: #{piles_forward.1} parent=11 // pred_check
        %p263 = pneg %p135
      $region18: #{piles_forward.1} parent=11 // pred_check_branch
        %265 = sbr.rel (%p263) target = $region20
      $region19: #{piles_forward.1} parent=11 // pred_region
        _
      $region20: #{piles_forward.1} parent=11 // pred_fallthru
        _
      // Predicated region
      $region21: #{piles_forward.1} parent=11 // pred_check
        %p266 = pneg %p156
      $region22: #{piles_forward.1} parent=11 // pred_check_branch
        %268 = sbr.rel (%p266) target = $region24
      $region23: #{piles_forward.1} parent=11 // pred_region
        _
      $region24: #{piles_forward.1} parent=11 // pred_fallthru
        _
      // Predicated region
      $region25: #{piles_forward.1} parent=11 // pred_check
        %p269 = pneg %p177
      $region26: #{piles_forward.1} parent=11 // pred_check_branch
        %271 = sbr.rel (%p269) target = $region28
      $region27: #{piles_forward.1} parent=11 // pred_region
        _
      $region28: #{piles_forward.1} parent=11 // pred_fallthru
        _
      // Predicated region
      $region29: #{piles_forward.1} parent=11 // pred_check
        %p272 = pneg %p198
      $region30: #{piles_forward.1} parent=11 // pred_check_branch
        %274 = sbr.rel (%p272) target = $region32
      $region31: #{piles_forward.1} parent=11 // pred_region
        _
      $region32: #{piles_forward.1} parent=11 // pred_fallthru
        _
      // Predicated region
      $region33: #{piles_forward.1} parent=11 // pred_check
        %p275 = pneg %p219
      $region34: #{piles_forward.1} parent=11 // pred_check_branch
        %277 = sbr.rel (%p275) target = $region36
      $region35: #{piles_forward.1} parent=11 // pred_region
        _
      $region36: #{piles_forward.1} parent=11 // pred_fallthru
        _
    $region12: #{piles_forward.1} parent=5 // pred_fallthru
      _
    %p278 = scmp.lt.s32.totalorder %s15, 2
    // Predicated region
    $region37: #{piles_forward.1} parent=5 // pred_check
      %p279 = pneg %p278
    $region38: #{piles_forward.1} parent=5 // pred_check_branch
      %281 = sbr.rel (%p279) target = $region40
    $region39: #{piles_forward.1} parent=5 // pred_region
      // Predicated region
      $region41: #{piles_forward.1} parent=39 // pred_check
        %p282 = pneg %p35
      $region42: #{piles_forward.1} parent=39 // pred_check_branch
        %284 = sbr.rel (%p282) target = $region44
      $region43: #{piles_forward.1} parent=39 // pred_region
        %p285 = scmp.lt.s32.totalorder %s15, 1
        %s286 = scalar_select %p285, %s15, 1
        %s287 = smul.addr %s286, 8
        %s288 = scalar_lea.vmem %s0, %s287
      $region44: #{piles_forward.1} parent=39 // pred_fallthru
        _
      // Predicated region
      $region45: #{piles_forward.1} parent=39 // pred_check
        %p289 = pneg %p61
      $region46: #{piles_forward.1} parent=39 // pred_check_branch
        %291 = sbr.rel (%p289) target = $region48
      $region47: #{piles_forward.1} parent=39 // pred_region
        %p292 = scmp.lt.s32.totalorder %s15, 1
        %s293 = scalar_select %p292, %s15, 1
        %s294 = smul.addr %s293, 8
        %s295 = scalar_lea.vmem %s1, %s294
      $region48: #{piles_forward.1} parent=39 // pred_fallthru
        _
      // Predicated region
      $region49: #{piles_forward.1} parent=39 // pred_check
        %p296 = pneg %p87
      $region50: #{piles_forward.1} parent=39 // pred_check_branch
        %298 = sbr.rel (%p296) target = $region52
      $region51: #{piles_forward.1} parent=39 // pred_region
        %p299 = scmp.lt.s32.totalorder %s15, 1
        %s300 = scalar_select %p299, %s15, 1
        %s301 = smul.addr %s300, 8
        %s302 = scalar_lea.vmem %s2, %s301
      $region52: #{piles_forward.1} parent=39 // pred_fallthru
        _
    $region40: #{piles_forward.1} parent=5 // pred_fallthru
      _
    %p303 = scmp.le.s32.totalorder 1, %s15
    %p304 = scmp.lt.s32.totalorder %s15, 3
    %p305 = pnand %p303, %p304
    %p306 = pneg %p305
    // Predicated region
    $region53: #{piles_forward.1} parent=5 // pred_check
      _
    $region54: #{piles_forward.1} parent=5 // pred_check_branch
      %308 = sbr.rel (%p305) target = $region56
    $region55: #{piles_forward.1} parent=5 // pred_region
      %s309 = ssub.s32 %s15, 1
      %p310 = scmp.lt.s32.totalorder %s20, 1
      %s311 = scalar_select %p310, %s20, 1
      %s312 = smul.addr %s311, 8
      %s313 = scalar_lea.vmem %s0, %s312
      %p314 = pneg %p41
      %p315 = pneg %p38
      %p316 = scmp.lt.s32.totalorder %s20, 1
      %s317 = scalar_select %p316, %s20, 1
      %s318 = smul.addr %s317, 8
      %s319 = scalar_lea.vmem %s1, %s318
      %p320 = pneg %p67
      %p321 = pneg %p64
      %p322 = scmp.lt.s32.totalorder %s20, 1
      %s323 = scalar_select %p322, %s20, 1
      %s324 = smul.addr %s323, 8
      %s325 = scalar_lea.vmem %s2, %s324
      %p326 = pneg %p93
      %p327 = pneg %p90
      %p328 = pneg %p114
      %p329 = pneg %p111
      %p330 = pneg %p135
      %p331 = pneg %p132
      %p332 = pneg %p156
      %p333 = pneg %p153
      %p334 = pneg %p177
      %p335 = pneg %p174
      %p336 = pneg %p198
      %p337 = pneg %p195
      %p338 = pneg %p219
      %p339 = pneg %p216
      %p340 = pneg %p245
      %p341 = pneg %p242
      %p342 = scmp.lt.s32.totalorder %s20, 1
      %s343 = scalar_select %p342, %s20, 1
      %s344 = smul.addr %s343, 8
      %s345 = scalar_lea.vmem %s9, %s344
      %p346 = scmp.lt.s32.totalorder %s20, 1
      %s347 = scalar_select %p346, %s20, 1
      %s348 = smul.addr %s347, 8
      %s349 = scalar_lea.vmem %s0, %s348
      %p350 = scmp.lt.s32.totalorder %s20, 1
      %s351 = scalar_select %p350, %s20, 1
      %s352 = smul.addr %s351, 8
      %s353 = scalar_lea.vmem %s1, %s352
      %p354 = scmp.lt.s32.totalorder %s20, 1
      %s355 = scalar_select %p354, %s20, 1
      %s356 = smul.addr %s355, 8
      %s357 = scalar_lea.vmem %s2, %s356
      %p358 = scmp.lt.s32.totalorder %s20, 1
      %s359 = scalar_select %p358, %s20, 1
      %s360 = smul.addr %s359, 8
      %s361 = scalar_lea.vmem %s9, %s360
      %v362 = vld [vmem:[%s349] sm:$0xff]
      %v363 = vld [vmem:[%s353] sm:$0xff]
      %v364 = vld [vmem:[%s357] sm:$0xff]
      %v365 = vld [vmem:[%s3] sm:$0xff]
      %v366 = vld [vmem:[%s4] sm:$0x1]
      %v367 = vld [vmem:[%s5] sm:$0x1]
      %v368 = vld [vmem:[%s6] sm:$0xff]
      %v369 = vld [vmem:[%s6 + $0x8] sm:$0xff]
      %v370 = vld [vmem:[%s7] sm:$0xff]
      %v371 = vld [vmem:[%s7 + $0x8] sm:$0xff]
      %v372 = vld [vmem:[%s8] sm:$0x1]
      %v373 = vlaneseq
      %v374 = vand.u32 %v373, 127
      %v375 = vcvt.s32.f32 %v374
      %vm376 = vcmp.eq.s32.totalorder %v374, 0
      %378 = vset.pattern.permute.xlu0 0
      %379 = vperm.xlu0 %378, %v362
      %v380 = vpop.permute.xlu0 %379
      %v382 = vsel %vm376, %v380, -1.0
      %384 = vset.pattern.permute.xlu0 0
      %385 = vperm.xlu0 %384, %v363
      %v386 = vpop.permute.xlu0 %385
      %v388 = vsel %vm376, %v386, -1.0
      %v389 = vadd.f32 %v363, 0.5
      %v390 = vcvt.f32.s32.to.zero.pseudo %v389
      %391 = vset.pattern.permute.xlu0 0
      %392 = vperm.xlu0 %391, %v390
      %v393 = vpop.permute.xlu0 %392
      %vm394 = vcmp.eq.s32.totalorder %v374, %v393
      %v395 = vsel %vm394, 1, 0
      %v396 = vcvt.s32.f32 %v395
      %vm397 = vcmask 64512
      %v399 = vsel %vm397, %v396, 0
      %401 = vmatprep.subr.mxu0 0.0
      %402 = vmatpush1.msra.mxu0 0.0
      %403 = vmatprep.subr.mxu0 0.0
      %404 = vmatpush1.msra.mxu0 0.0
      %405 = vmatprep.subr.mxu0 0.0
      %406 = vmatpush1.msra.mxu0 0.0
      %407 = vmatprep.subr.mxu0 0.0
      %408 = vmatpush1.msra.mxu0 0.0
      %409 = vmatprep.subr.mxu0 0.0
      %410 = vmatpush1.msra.mxu0 0.0
      %411 = vmatprep.subr.mxu0 0.0
      %412 = vmatpush1.msra.mxu0 0.0
      %413 = vmatprep.subr.mxu0 0.0
      %414 = vmatpush1.msra.mxu0 0.0
      %415 = vmatprep.subr.mxu0 0.0
      %416 = vmatpush1.msra.mxu0 0.0
      %417 = vmatprep.subr.mxu0 0.0
      %418 = vmatpush1.msra.mxu0 0.0
      %419 = vmatprep.subr.mxu0 0.0
      %420 = vmatpush1.msra.mxu0 0.0
      %421 = vmatprep.subr.mxu0 0.0
      %422 = vmatpush1.msra.mxu0 0.0
      %423 = vmatprep.subr.mxu0 0.0
      %424 = vmatpush1.msra.mxu0 0.0
      %425 = vmatprep.subr.mxu0 0.0
      %426 = vmatpush1.msra.mxu0 0.0
      %427 = vmatprep.subr.mxu0 0.0
      %428 = vmatpush1.msra.mxu0 0.0
      %429 = vmatprep.subr.mxu0 0.0
      %430 = vmatpush1.msra.mxu0 0.0
      %431 = vmatprep.subr.mxu0 0.0
      %432 = vmatpush1.msra.mxu0 %v365
      %433 = vmatprep.subr.mxu0 0.0
      %434 = vmatpush2.msra.mxu0 0.0
      %435 = vmatprep.subr.mxu0 0.0
      %436 = vmatpush2.msra.mxu0 0.0
      %437 = vmatprep.subr.mxu0 0.0
      %438 = vmatpush2.msra.mxu0 0.0
      %439 = vmatprep.subr.mxu0 0.0
      %440 = vmatpush2.msra.mxu0 0.0
      %441 = vmatprep.subr.mxu0 0.0
      %442 = vmatpush2.msra.mxu0 0.0
      %443 = vmatprep.subr.mxu0 0.0
      %444 = vmatpush2.msra.mxu0 0.0
      %445 = vmatprep.subr.mxu0 0.0
      %446 = vmatpush2.msra.mxu0 0.0
      %447 = vmatprep.subr.mxu0 0.0
      %448 = vmatpush2.msra.mxu0 0.0
      %449 = vmatprep.subr.mxu0 0.0
      %450 = vmatpush2.msra.mxu0 0.0
      %451 = vmatprep.subr.mxu0 0.0
      %452 = vmatpush2.msra.mxu0 0.0
      %453 = vmatprep.subr.mxu0 0.0
      %454 = vmatpush2.msra.mxu0 0.0
      %455 = vmatprep.subr.mxu0 0.0
      %456 = vmatpush2.msra.mxu0 0.0
      %457 = vmatprep.subr.mxu0 0.0
      %458 = vmatpush2.msra.mxu0 0.0
      %459 = vmatprep.subr.mxu0 0.0
      %460 = vmatpush2.msra.mxu0 0.0
      %461 = vmatprep.subr.mxu0 0.0
      %462 = vmatpush2.msra.mxu0 0.0
      %463 = vmatprep.subr.mxu0 0.0
      %464 = vmatpush2.msra.mxu0 0.0
      %465 = vmatprep.mubr.f32.mxu0 0.0
      %466 = vmatmul.mubr.f32.gmra.mxu0 %v399
      %v467 = vpop.f32.mrf.mxu0
      %v468 = vadd.f32 0.0, %v467
      %v469 = vpop.f32.mrf.mxu0
      %470 = vdwg.mxu0
      %v471 = vmul.f32 %v468, 0.6
      %v473 = vlaneseq
      %v474 = vshrl.u32 %v473, 7
      %v475 = vsub.s32 0, %v474
      %v476 = vrot.slane %v366, %v475
      %v478 = vmul.f32 %v476, %v380
      %v480 = vlaneseq
      %v481 = vshrl.u32 %v480, 7
      %v482 = vsub.s32 0, %v481
      %v483 = vrot.slane %v367, %v482
      %v485 = vadd.f32 %v478, %v483
      %v486 = vmul.f32 %v485, 0.4
      %v487 = vadd.f32 %v471, %v486
      %vm488 = vcmp.ge.f32.partialorder %v362, 0.0
      %v489 = vsel %vm488, 1, 0
      %v490 = vcvt.s32.f32 %v489
      %492 = vset.pattern.permute.xlu0 0
      %493 = vperm.xlu0 %492, %v490
      %v494 = vpop.permute.xlu0 %493
      %v496 = vmul.f32 %v487, %v494
      %vm497 = vcmask 48128
      %v498 = vsel %vm497, %v490, 0.0
      %499 = vadd.xlane.f32.xlu0 %v498
      %v500 = vpop.xlane.xlu0 %499
      %vm501 = vcmp.ge.s32.totalorder %v374, 1
      %v502 = vsel %vm501, 1, 0
      %v503 = vcvt.s32.f32 %v502
      %v504 = vmul.f32 %v490, %v503
      %505 = vset.pattern.permute.xlu0 1
      %506 = vperm.xlu0 %505, %v390
      %v507 = vpop.permute.xlu0 %506
      %vm508 = vcmp.eq.s32.totalorder %v374, %v507
      %v509 = vsel %vm508, 1, 0
      %v510 = vcvt.s32.f32 %v509
      %512 = vset.pattern.permute.xlu0 1
      %513 = vperm.xlu0 %512, %v504
      %v514 = vpop.permute.xlu0 %513
      %v516 = vmul.f32 %v514, %v510
      %v517 = vadd.f32 %v516, 0.0
      %518 = vset.pattern.permute.xlu0 2
      %519 = vperm.xlu0 %518, %v390
      %v520 = vpop.permute.xlu0 %519
      %vm521 = vcmp.eq.s32.totalorder %v374, %v520
      %v522 = vsel %vm521, 1, 0
      %v523 = vcvt.s32.f32 %v522
      %524 = vset.pattern.permute.xlu0 2
      %525 = vperm.xlu0 %524, %v504
      %v526 = vpop.permute.xlu0 %525
      %v528 = vmul.f32 %v526, %v523
      %v529 = vadd.f32 %v517, %v528
      %530 = vset.pattern.permute.xlu0 3
      %531 = vperm.xlu0 %530, %v390
      %v532 = vpop.permute.xlu0 %531
      %vm533 = vcmp.eq.s32.totalorder %v374, %v532
      %v534 = vsel %vm533, 1, 0
      %v535 = vcvt.s32.f32 %v534
      %536 = vset.pattern.permute.xlu0 3
      %537 = vperm.xlu0 %536, %v504
      %v538 = vpop.permute.xlu0 %537
      %v540 = vmul.f32 %v538, %v535
      %v541 = vadd.f32 %v529, %v540
      %542 = vset.pattern.permute.xlu0 4
      %543 = vperm.xlu0 %542, %v390
      %v544 = vpop.permute.xlu0 %543
      %vm545 = vcmp.eq.s32.totalorder %v374, %v544
      %v546 = vsel %vm545, 1, 0
      %v547 = vcvt.s32.f32 %v546
      %548 = vset.pattern.permute.xlu0 4
      %549 = vperm.xlu0 %548, %v504
      %v550 = vpop.permute.xlu0 %549
      %v552 = vmul.f32 %v550, %v547
      %v553 = vadd.f32 %v541, %v552
      %554 = vset.pattern.permute.xlu0 5
      %555 = vperm.xlu0 %554, %v390
      %v556 = vpop.permute.xlu0 %555
      %vm557 = vcmp.eq.s32.totalorder %v374, %v556
      %v558 = vsel %vm557, 1, 0
      %v559 = vcvt.s32.f32 %v558
      %560 = vset.pattern.permute.xlu0 5
      %561 = vperm.xlu0 %560, %v504
      %v562 = vpop.permute.xlu0 %561
      %v564 = vmul.f32 %v562, %v559
      %v565 = vadd.f32 %v553, %v564
      %v566 = vmul.f32 %v362, %v504
      %v567 = vsel %vm497, %v566, 0.0
      %568 = vadd.xlane.f32.xlu0 %v567
      %v569 = vpop.xlane.xlu0 %568
      %v570 = vsel %vm497, %v504, 0.0
      %571 = vadd.xlane.f32.xlu0 %v570
      %v572 = vpop.xlane.xlu0 %571
      %v574 = vsel %vm397, %v565, 0
      %576 = vmatprep.subr.mxu0 0.0
      %577 = vmatpush1.msra.mxu0 0.0
      %578 = vmatprep.subr.mxu0 0.0
      %579 = vmatpush1.msra.mxu0 0.0
      %580 = vmatprep.subr.mxu0 0.0
      %581 = vmatpush1.msra.mxu0 0.0
      %582 = vmatprep.subr.mxu0 0.0
      %583 = vmatpush1.msra.mxu0 0.0
      %584 = vmatprep.subr.mxu0 0.0
      %585 = vmatpush1.msra.mxu0 0.0
      %586 = vmatprep.subr.mxu0 0.0
      %587 = vmatpush1.msra.mxu0 0.0
      %588 = vmatprep.subr.mxu0 0.0
      %589 = vmatpush1.msra.mxu0 0.0
      %590 = vmatprep.subr.mxu0 0.0
      %591 = vmatpush1.msra.mxu0 0.0
      %592 = vmatprep.subr.mxu0 0.0
      %593 = vmatpush1.msra.mxu0 0.0
      %594 = vmatprep.subr.mxu0 0.0
      %595 = vmatpush1.msra.mxu0 0.0
      %596 = vmatprep.subr.mxu0 0.0
      %597 = vmatpush1.msra.mxu0 0.0
      %598 = vmatprep.subr.mxu0 0.0
      %599 = vmatpush1.msra.mxu0 0.0
      %600 = vmatprep.subr.mxu0 0.0
      %601 = vmatpush1.msra.mxu0 0.0
      %602 = vmatprep.subr.mxu0 0.0
      %603 = vmatpush1.msra.mxu0 0.0
      %604 = vmatprep.subr.mxu0 0.0
      %605 = vmatpush1.msra.mxu0 0.0
      %606 = vmatprep.subr.mxu0 0.0
      %607 = vmatpush1.msra.mxu0 %v365
      %608 = vmatprep.subr.mxu0 0.0
      %609 = vmatpush2.msra.mxu0 0.0
      %610 = vmatprep.subr.mxu0 0.0
      %611 = vmatpush2.msra.mxu0 0.0
      %612 = vmatprep.subr.mxu0 0.0
      %613 = vmatpush2.msra.mxu0 0.0
      %614 = vmatprep.subr.mxu0 0.0
      %615 = vmatpush2.msra.mxu0 0.0
      %616 = vmatprep.subr.mxu0 0.0
      %617 = vmatpush2.msra.mxu0 0.0
      %618 = vmatprep.subr.mxu0 0.0
      %619 = vmatpush2.msra.mxu0 0.0
      %620 = vmatprep.subr.mxu0 0.0
      %621 = vmatpush2.msra.mxu0 0.0
      %622 = vmatprep.subr.mxu0 0.0
      %623 = vmatpush2.msra.mxu0 0.0
      %624 = vmatprep.subr.mxu0 0.0
      %625 = vmatpush2.msra.mxu0 0.0
      %626 = vmatprep.subr.mxu0 0.0
      %627 = vmatpush2.msra.mxu0 0.0
      %628 = vmatprep.subr.mxu0 0.0
      %629 = vmatpush2.msra.mxu0 0.0
      %630 = vmatprep.subr.mxu0 0.0
      %631 = vmatpush2.msra.mxu0 0.0
      %632 = vmatprep.subr.mxu0 0.0
      %633 = vmatpush2.msra.mxu0 0.0
      %634 = vmatprep.subr.mxu0 0.0
      %635 = vmatpush2.msra.mxu0 0.0
      %636 = vmatprep.subr.mxu0 0.0
      %637 = vmatpush2.msra.mxu0 0.0
      %638 = vmatprep.subr.mxu0 0.0
      %639 = vmatpush2.msra.mxu0 0.0
      %640 = vmatprep.mubr.f32.mxu0 0.0
      %641 = vmatmul.mubr.f32.gmra.mxu0 %v574
      %v642 = vpop.f32.mrf.mxu0
      %v643 = vadd.f32 0.0, %v642
      %v644 = vpop.f32.mrf.mxu0
      %645 = vdwg.mxu0
      %v646 = vmul.f32 %v643, 0.6
      %v647 = vmul.f32 %v476, %v569
      %v648 = vmul.f32 %v483, %v572
      %v649 = vadd.f32 %v647, %v648
      %v650 = vmul.f32 %v649, 0.4
      %v651 = vadd.f32 %v646, %v650
      %v652 = vsub.f32 %v500, 1.0
      %v653 = vmax.f32 %v652, 1.0
      %v654 = vrcp.pop %v653
      %v655 = vmul.f32 %v651, %v654
      %vm656 = vcmask 130048
      %v658 = vsel %vm656, %v655, 0
      %660 = vmatprep.subr.mxu0 0.0
      %661 = vmatpush1.msra.mxu0 0.0
      %662 = vmatprep.subr.mxu0 0.0
      %663 = vmatpush1.msra.mxu0 0.0
      %664 = vmatprep.subr.mxu0 0.0
      %665 = vmatpush1.msra.mxu0 0.0
      %666 = vmatprep.subr.mxu0 0.0
      %667 = vmatpush1.msra.mxu0 0.0
      %668 = vmatprep.subr.mxu0 0.0
      %669 = vmatpush1.msra.mxu0 0.0
      %670 = vmatprep.subr.mxu0 0.0
      %671 = vmatpush1.msra.mxu0 0.0
      %672 = vmatprep.subr.mxu0 0.0
      %673 = vmatpush1.msra.mxu0 0.0
      %674 = vmatprep.subr.mxu0 0.0
      %675 = vmatpush1.msra.mxu0 0.0
      %676 = vmatprep.subr.mxu0 0.0
      %677 = vmatpush1.msra.mxu0 0.0
      %678 = vmatprep.subr.mxu0 0.0
      %679 = vmatpush1.msra.mxu0 0.0
      %680 = vmatprep.subr.mxu0 0.0
      %681 = vmatpush1.msra.mxu0 0.0
      %682 = vmatprep.subr.mxu0 0.0
      %683 = vmatpush1.msra.mxu0 0.0
      %684 = vmatprep.subr.mxu0 0.0
      %685 = vmatpush1.msra.mxu0 0.0
      %686 = vmatprep.subr.mxu0 0.0
      %687 = vmatpush1.msra.mxu0 0.0
      %688 = vmatprep.subr.mxu0 0.0
      %689 = vmatpush1.msra.mxu0 %v371
      %690 = vmatprep.subr.mxu0 0.0
      %691 = vmatpush1.msra.mxu0 %v370
      %692 = vmatprep.subr.mxu0 0.0
      %693 = vmatpush2.msra.mxu0 0.0
      %694 = vmatprep.subr.mxu0 0.0
      %695 = vmatpush2.msra.mxu0 0.0
      %696 = vmatprep.subr.mxu0 0.0
      %697 = vmatpush2.msra.mxu0 0.0
      %698 = vmatprep.subr.mxu0 0.0
      %699 = vmatpush2.msra.mxu0 0.0
      %700 = vmatprep.subr.mxu0 0.0
      %701 = vmatpush2.msra.mxu0 0.0
      %702 = vmatprep.subr.mxu0 0.0
      %703 = vmatpush2.msra.mxu0 0.0
      %704 = vmatprep.subr.mxu0 0.0
      %705 = vmatpush2.msra.mxu0 0.0
      %706 = vmatprep.subr.mxu0 0.0
      %707 = vmatpush2.msra.mxu0 0.0
      %708 = vmatprep.subr.mxu0 0.0
      %709 = vmatpush2.msra.mxu0 0.0
      %710 = vmatprep.subr.mxu0 0.0
      %711 = vmatpush2.msra.mxu0 0.0
      %712 = vmatprep.subr.mxu0 0.0
      %713 = vmatpush2.msra.mxu0 0.0
      %714 = vmatprep.subr.mxu0 0.0
      %715 = vmatpush2.msra.mxu0 0.0
      %716 = vmatprep.subr.mxu0 0.0
      %717 = vmatpush2.msra.mxu0 0.0
      %718 = vmatprep.subr.mxu0 0.0
      %719 = vmatpush2.msra.mxu0 0.0
      %720 = vmatprep.subr.mxu0 0.0
      %721 = vmatpush2.msra.mxu0 0.0
      %722 = vmatprep.subr.mxu0 0.0
      %723 = vmatpush2.msra.mxu0 0.0
      %724 = vmatprep.mubr.f32.mxu0 0.0
      %725 = vmatmul.mubr.f32.gmra.mxu0 %v658
      %v726 = vpop.f32.mrf.mxu0
      %v727 = vadd.f32 0.0, %v726
      %v728 = vpop.f32.mrf.mxu0
      %729 = vdwg.mxu0
      %v731 = vsel %vm656, %v496, 0
      %733 = vmatprep.subr.mxu0 0.0
      %734 = vmatpush1.msra.mxu0 0.0
      %735 = vmatprep.subr.mxu0 0.0
      %736 = vmatpush1.msra.mxu0 0.0
      %737 = vmatprep.subr.mxu0 0.0
      %738 = vmatpush1.msra.mxu0 0.0
      %739 = vmatprep.subr.mxu0 0.0
      %740 = vmatpush1.msra.mxu0 0.0
      %741 = vmatprep.subr.mxu0 0.0
      %742 = vmatpush1.msra.mxu0 0.0
      %743 = vmatprep.subr.mxu0 0.0
      %744 = vmatpush1.msra.mxu0 0.0
      %745 = vmatprep.subr.mxu0 0.0
      %746 = vmatpush1.msra.mxu0 0.0
      %747 = vmatprep.subr.mxu0 0.0
      %748 = vmatpush1.msra.mxu0 0.0
      %749 = vmatprep.subr.mxu0 0.0
      %750 = vmatpush1.msra.mxu0 0.0
      %751 = vmatprep.subr.mxu0 0.0
      %752 = vmatpush1.msra.mxu0 0.0
      %753 = vmatprep.subr.mxu0 0.0
      %754 = vmatpush1.msra.mxu0 0.0
      %755 = vmatprep.subr.mxu0 0.0
      %756 = vmatpush1.msra.mxu0 0.0
      %757 = vmatprep.subr.mxu0 0.0
      %758 = vmatpush1.msra.mxu0 0.0
      %759 = vmatprep.subr.mxu0 0.0
      %760 = vmatpush1.msra.mxu0 0.0
      %761 = vmatprep.subr.mxu0 0.0
      %762 = vmatpush1.msra.mxu0 %v369
      %763 = vmatprep.subr.mxu0 0.0
      %764 = vmatpush1.msra.mxu0 %v368
      %765 = vmatprep.subr.mxu0 0.0
      %766 = vmatpush2.msra.mxu0 0.0
      %767 = vmatprep.subr.mxu0 0.0
      %768 = vmatpush2.msra.mxu0 0.0
      %769 = vmatprep.subr.mxu0 0.0
      %770 = vmatpush2.msra.mxu0 0.0
      %771 = vmatprep.subr.mxu0 0.0
      %772 = vmatpush2.msra.mxu0 0.0
      %773 = vmatprep.subr.mxu0 0.0
      %774 = vmatpush2.msra.mxu0 0.0
      %775 = vmatprep.subr.mxu0 0.0
      %776 = vmatpush2.msra.mxu0 0.0
      %777 = vmatprep.subr.mxu0 0.0
      %778 = vmatpush2.msra.mxu0 0.0
      %779 = vmatprep.subr.mxu0 0.0
      %780 = vmatpush2.msra.mxu0 0.0
      %781 = vmatprep.subr.mxu0 0.0
      %782 = vmatpush2.msra.mxu0 0.0
      %783 = vmatprep.subr.mxu0 0.0
      %784 = vmatpush2.msra.mxu0 0.0
      %785 = vmatprep.subr.mxu0 0.0
      %786 = vmatpush2.msra.mxu0 0.0
      %787 = vmatprep.subr.mxu0 0.0
      %788 = vmatpush2.msra.mxu0 0.0
      %789 = vmatprep.subr.mxu0 0.0
      %790 = vmatpush2.msra.mxu0 0.0
      %791 = vmatprep.subr.mxu0 0.0
      %792 = vmatpush2.msra.mxu0 0.0
      %793 = vmatprep.subr.mxu0 0.0
      %794 = vmatpush2.msra.mxu0 0.0
      %795 = vmatprep.subr.mxu0 0.0
      %796 = vmatpush2.msra.mxu0 0.0
      %797 = vmatprep.mubr.f32.mxu0 0.0
      %798 = vmatmul.mubr.f32.gmra.mxu0 %v731
      %v799 = vpop.f32.mrf.mxu0
      %v800 = vadd.f32 %v727, %v799
      %v801 = vpop.f32.mrf.mxu0
      %802 = vdwg.mxu0
      %v804 = vlaneseq
      %v805 = vshrl.u32 %v804, 7
      %v806 = vsub.s32 0, %v805
      %v807 = vrot.slane %v372, %v806
      %v809 = vadd.f32 %v800, %v807
      %v810 = vsel %vm397, %v809, -inf
      %811 = vmax.xlane.f32.xlu0 %v810
      %v812 = vpop.xlane.xlu0 %811
      %vm813 = vcmp.eq.f32.partialorder %v809, %v812
      %v814 = vsel %vm813, %v375, 8.0
      %v815 = vsel %vm397, %v814, inf
      %816 = vmin.xlane.f32.xlu0 %v815
      %v817 = vpop.xlane.xlu0 %816
      %v818 = vsub.f32 %v809, %v812
      %v819 = vmul.f32 %v818, 1.442695
      %v820 = vpow.pop %v819
      %v821 = vsel %vm397, %v820, 0.0
      %822 = vadd.xlane.f32.xlu0 %v821
      %v823 = vpop.xlane.xlu0 %822
      %v824 = vsel %vm376, %v364, 0.0
      %v825 = vsel %vm656, %v824, 0.0
      %826 = vadd.xlane.f32.xlu0 %v825
      %v827 = vpop.xlane.xlu0 %826
      %v828 = vmul.f32 %v827, %v823
      %vm829 = vcmp.eq.s32.totalorder %v374, 1
      %v830 = vsel %vm829, 1, 0
      %v831 = vcvt.s32.f32 %v830
      %v832 = vmul.f32 %v362, %v831
      %v833 = vsel %vm497, %v832, 0.0
      %834 = vadd.xlane.f32.xlu0 %v833
      %v835 = vpop.xlane.xlu0 %834
      %v836 = vmul.f32 %v363, %v831
      %v837 = vsel %vm497, %v836, 0.0
      %838 = vadd.xlane.f32.xlu0 %v837
      %v839 = vpop.xlane.xlu0 %838
      %v840 = vadd.f32 %v362, %v828
      %vm841 = vcmp.lt.f32.partialorder %v840, %v835
      %v842 = vsel %vm841, %v840, %v835
      %v843 = vsel %vm841, %v817, %v839
      %v844 = vadd.f32 %v843, 0.5
      %v845 = vcvt.f32.s32.to.zero.pseudo %v844
      %846 = vset.pattern.permute.xlu0 0
      %847 = vperm.xlu0 %846, %v845
      %v848 = vpop.permute.xlu0 %847
      %vm849 = vcmp.eq.s32.totalorder %v374, %v848
      %v850 = vsel %vm849, 1, 0
      %v851 = vcvt.s32.f32 %v850
      %v853 = vsel %vm397, %v851, 0
      %855 = vmatprep.subr.mxu0 0.0
      %856 = vmatpush1.msra.mxu0 0.0
      %857 = vmatprep.subr.mxu0 0.0
      %858 = vmatpush1.msra.mxu0 0.0
      %859 = vmatprep.subr.mxu0 0.0
      %860 = vmatpush1.msra.mxu0 0.0
      %861 = vmatprep.subr.mxu0 0.0
      %862 = vmatpush1.msra.mxu0 0.0
      %863 = vmatprep.subr.mxu0 0.0
      %864 = vmatpush1.msra.mxu0 0.0
      %865 = vmatprep.subr.mxu0 0.0
      %866 = vmatpush1.msra.mxu0 0.0
      %867 = vmatprep.subr.mxu0 0.0
      %868 = vmatpush1.msra.mxu0 0.0
      %869 = vmatprep.subr.mxu0 0.0
      %870 = vmatpush1.msra.mxu0 0.0
      %871 = vmatprep.subr.mxu0 0.0
      %872 = vmatpush1.msra.mxu0 0.0
      %873 = vmatprep.subr.mxu0 0.0
      %874 = vmatpush1.msra.mxu0 0.0
      %875 = vmatprep.subr.mxu0 0.0
      %876 = vmatpush1.msra.mxu0 0.0
      %877 = vmatprep.subr.mxu0 0.0
      %878 = vmatpush1.msra.mxu0 0.0
      %879 = vmatprep.subr.mxu0 0.0
      %880 = vmatpush1.msra.mxu0 0.0
      %881 = vmatprep.subr.mxu0 0.0
      %882 = vmatpush1.msra.mxu0 0.0
      %883 = vmatprep.subr.mxu0 0.0
      %884 = vmatpush1.msra.mxu0 0.0
      %885 = vmatprep.subr.mxu0 0.0
      %886 = vmatpush1.msra.mxu0 %v365
      %887 = vmatprep.subr.mxu0 0.0
      %888 = vmatpush2.msra.mxu0 0.0
      %889 = vmatprep.subr.mxu0 0.0
      %890 = vmatpush2.msra.mxu0 0.0
      %891 = vmatprep.subr.mxu0 0.0
      %892 = vmatpush2.msra.mxu0 0.0
      %893 = vmatprep.subr.mxu0 0.0
      %894 = vmatpush2.msra.mxu0 0.0
      %895 = vmatprep.subr.mxu0 0.0
      %896 = vmatpush2.msra.mxu0 0.0
      %897 = vmatprep.subr.mxu0 0.0
      %898 = vmatpush2.msra.mxu0 0.0
      %899 = vmatprep.subr.mxu0 0.0
      %900 = vmatpush2.msra.mxu0 0.0
      %901 = vmatprep.subr.mxu0 0.0
      %902 = vmatpush2.msra.mxu0 0.0
      %903 = vmatprep.subr.mxu0 0.0
      %904 = vmatpush2.msra.mxu0 0.0
      %905 = vmatprep.subr.mxu0 0.0
      %906 = vmatpush2.msra.mxu0 0.0
      %907 = vmatprep.subr.mxu0 0.0
      %908 = vmatpush2.msra.mxu0 0.0
      %909 = vmatprep.subr.mxu0 0.0
      %910 = vmatpush2.msra.mxu0 0.0
      %911 = vmatprep.subr.mxu0 0.0
      %912 = vmatpush2.msra.mxu0 0.0
      %913 = vmatprep.subr.mxu0 0.0
      %914 = vmatpush2.msra.mxu0 0.0
      %915 = vmatprep.subr.mxu0 0.0
      %916 = vmatpush2.msra.mxu0 0.0
      %917 = vmatprep.subr.mxu0 0.0
      %918 = vmatpush2.msra.mxu0 0.0
      %919 = vmatprep.mubr.f32.mxu0 0.0
      %920 = vmatmul.mubr.f32.gmra.mxu0 %v853
      %v921 = vpop.f32.mrf.mxu0
      %v922 = vadd.f32 0.0, %v921
      %v923 = vpop.f32.mrf.mxu0
      %924 = vdwg.mxu0
      %v925 = vmul.f32 %v922, 0.6
      %927 = vset.pattern.permute.xlu0 0
      %928 = vperm.xlu0 %927, %v842
      %v929 = vpop.permute.xlu0 %928
      %v931 = vmul.f32 %v476, %v929
      %v932 = vadd.f32 %v931, %v483
      %v933 = vmul.f32 %v932, 0.4
      %v934 = vadd.f32 %v925, %v933
      %vm935 = vcmp.ge.f32.partialorder %v842, 0.0
      %v936 = vsel %vm935, 1, 0
      %v937 = vcvt.s32.f32 %v936
      %939 = vset.pattern.permute.xlu0 0
      %940 = vperm.xlu0 %939, %v937
      %v941 = vpop.permute.xlu0 %940
      %v943 = vmul.f32 %v934, %v941
      %v944 = vadd.f32 %v496, %v943
      %v945 = vsub.f32 %v651, %v943
      %v946 = vsel %vm841, 1, 0
      %947 = vset.pattern.permute.xlu0 0
      %948 = vperm.xlu0 %947, %v946
      %v949 = vpop.permute.xlu0 %948
      %vm950 = vcmp.eq.s32.totalorder %v949, 1
      %v951 = vsel %vm950, %v651, %v945
      %v952 = vsel %vm841, 0, 1
      %vm953 = vcmp.lt.f32.partialorder %v842, 0.0
      %v954 = vsel %vm953, 1, 0
      %v955 = vsel %vm953, %v954, 0
      %v956 = vsel %vm829, %v929, %v382
      %958 = vset.pattern.permute.xlu0 0
      %959 = vperm.xlu0 %958, %v843
      %v960 = vpop.permute.xlu0 %959
      %v962 = vsel %vm829, %v960, %v388
      %vm963 = vcmp.eq.s32.totalorder %v955, 0
      %vm964 = vcmp.lt.s32.totalorder %v952, 5
      %vm965 = vmand %vm963, %vm964
      %v966 = vadd.s32 %v952, 1
      %v967 = vcvt.s32.f32 %v966
      %v968 = vsub.f32 %v500, %v967
      %v969 = vmax.f32 %v968, 1.0
      %v970 = vrcp.pop 2.0
      %v971 = vmul.f32 %v944, %v970
      %973 = vset.pattern.permute.xlu0 0
      %974 = vperm.xlu0 %973, %v969
      %v975 = vpop.permute.xlu0 %974
      %v977 = vrcp.pop %v975
      %v978 = vmul.f32 %v951, %v977
      %v980 = vsel %vm656, %v978, 0
      %982 = vmatprep.subr.mxu0 0.0
      %983 = vmatpush1.msra.mxu0 0.0
      %984 = vmatprep.subr.mxu0 0.0
      %985 = vmatpush1.msra.mxu0 0.0
      %986 = vmatprep.subr.mxu0 0.0
      %987 = vmatpush1.msra.mxu0 0.0
      %988 = vmatprep.subr.mxu0 0.0
      %989 = vmatpush1.msra.mxu0 0.0
      %990 = vmatprep.subr.mxu0 0.0
      %991 = vmatpush1.msra.mxu0 0.0
      %992 = vmatprep.subr.mxu0 0.0
      %993 = vmatpush1.msra.mxu0 0.0
      %994 = vmatprep.subr.mxu0 0.0
      %995 = vmatpush1.msra.mxu0 0.0
      %996 = vmatprep.subr.mxu0 0.0
      %997 = vmatpush1.msra.mxu0 0.0
      %998 = vmatprep.subr.mxu0 0.0
      %999 = vmatpush1.msra.mxu0 0.0
      %1000 = vmatprep.subr.mxu0 0.0
      %1001 = vmatpush1.msra.mxu0 0.0
      %1002 = vmatprep.subr.mxu0 0.0
      %1003 = vmatpush1.msra.mxu0 0.0
      %1004 = vmatprep.subr.mxu0 0.0
      %1005 = vmatpush1.msra.mxu0 0.0
      %1006 = vmatprep.subr.mxu0 0.0
      %1007 = vmatpush1.msra.mxu0 0.0
      %1008 = vmatprep.subr.mxu0 0.0
      %1009 = vmatpush1.msra.mxu0 0.0
      %1010 = vmatprep.subr.mxu0 0.0
      %1011 = vmatpush1.msra.mxu0 %v371
      %1012 = vmatprep.subr.mxu0 0.0
      %1013 = vmatpush1.msra.mxu0 %v370
      %1014 = vmatprep.subr.mxu0 0.0
      %1015 = vmatpush2.msra.mxu0 0.0
      %1016 = vmatprep.subr.mxu0 0.0
      %1017 = vmatpush2.msra.mxu0 0.0
      %1018 = vmatprep.subr.mxu0 0.0
      %1019 = vmatpush2.msra.mxu0 0.0
      %1020 = vmatprep.subr.mxu0 0.0
      %1021 = vmatpush2.msra.mxu0 0.0
      %1022 = vmatprep.subr.mxu0 0.0
      %1023 = vmatpush2.msra.mxu0 0.0
      %1024 = vmatprep.subr.mxu0 0.0
      %1025 = vmatpush2.msra.mxu0 0.0
      %1026 = vmatprep.subr.mxu0 0.0
      %1027 = vmatpush2.msra.mxu0 0.0
      %1028 = vmatprep.subr.mxu0 0.0
      %1029 = vmatpush2.msra.mxu0 0.0
      %1030 = vmatprep.subr.mxu0 0.0
      %1031 = vmatpush2.msra.mxu0 0.0
      %1032 = vmatprep.subr.mxu0 0.0
      %1033 = vmatpush2.msra.mxu0 0.0
      %1034 = vmatprep.subr.mxu0 0.0
      %1035 = vmatpush2.msra.mxu0 0.0
      %1036 = vmatprep.subr.mxu0 0.0
      %1037 = vmatpush2.msra.mxu0 0.0
      %1038 = vmatprep.subr.mxu0 0.0
      %1039 = vmatpush2.msra.mxu0 0.0
      %1040 = vmatprep.subr.mxu0 0.0
      %1041 = vmatpush2.msra.mxu0 0.0
      %1042 = vmatprep.subr.mxu0 0.0
      %1043 = vmatpush2.msra.mxu0 0.0
      %1044 = vmatprep.subr.mxu0 0.0
      %1045 = vmatpush2.msra.mxu0 0.0
      %1046 = vmatprep.mubr.f32.mxu0 0.0
      %1047 = vmatmul.mubr.f32.gmra.mxu0 %v980
      %v1048 = vpop.f32.mrf.mxu0
      %v1049 = vadd.f32 0.0, %v1048
      %v1050 = vpop.f32.mrf.mxu0
      %1051 = vdwg.mxu0
      %v1053 = vsel %vm656, %v971, 0
      %1055 = vmatprep.subr.mxu0 0.0
      %1056 = vmatpush1.msra.mxu0 0.0
      %1057 = vmatprep.subr.mxu0 0.0
      %1058 = vmatpush1.msra.mxu0 0.0
      %1059 = vmatprep.subr.mxu0 0.0
      %1060 = vmatpush1.msra.mxu0 0.0
      %1061 = vmatprep.subr.mxu0 0.0
      %1062 = vmatpush1.msra.mxu0 0.0
      %1063 = vmatprep.subr.mxu0 0.0
      %1064 = vmatpush1.msra.mxu0 0.0
      %1065 = vmatprep.subr.mxu0 0.0
      %1066 = vmatpush1.msra.mxu0 0.0
      %1067 = vmatprep.subr.mxu0 0.0
      %1068 = vmatpush1.msra.mxu0 0.0
      %1069 = vmatprep.subr.mxu0 0.0
      %1070 = vmatpush1.msra.mxu0 0.0
      %1071 = vmatprep.subr.mxu0 0.0
      %1072 = vmatpush1.msra.mxu0 0.0
      %1073 = vmatprep.subr.mxu0 0.0
      %1074 = vmatpush1.msra.mxu0 0.0
      %1075 = vmatprep.subr.mxu0 0.0
      %1076 = vmatpush1.msra.mxu0 0.0
      %1077 = vmatprep.subr.mxu0 0.0
      %1078 = vmatpush1.msra.mxu0 0.0
      %1079 = vmatprep.subr.mxu0 0.0
      %1080 = vmatpush1.msra.mxu0 0.0
      %1081 = vmatprep.subr.mxu0 0.0
      %1082 = vmatpush1.msra.mxu0 0.0
      %1083 = vmatprep.subr.mxu0 0.0
      %1084 = vmatpush1.msra.mxu0 %v369
      %1085 = vmatprep.subr.mxu0 0.0
      %1086 = vmatpush1.msra.mxu0 %v368
      %1087 = vmatprep.subr.mxu0 0.0
      %1088 = vmatpush2.msra.mxu0 0.0
      %1089 = vmatprep.subr.mxu0 0.0
      %1090 = vmatpush2.msra.mxu0 0.0
      %1091 = vmatprep.subr.mxu0 0.0
      %1092 = vmatpush2.msra.mxu0 0.0
      %1093 = vmatprep.subr.mxu0 0.0
      %1094 = vmatpush2.msra.mxu0 0.0
      %1095 = vmatprep.subr.mxu0 0.0
      %1096 = vmatpush2.msra.mxu0 0.0
      %1097 = vmatprep.subr.mxu0 0.0
      %1098 = vmatpush2.msra.mxu0 0.0
      %1099 = vmatprep.subr.mxu0 0.0
      %1100 = vmatpush2.msra.mxu0 0.0
      %1101 = vmatprep.subr.mxu0 0.0
      %1102 = vmatpush2.msra.mxu0 0.0
      %1103 = vmatprep.subr.mxu0 0.0
      %1104 = vmatpush2.msra.mxu0 0.0
      %1105 = vmatprep.subr.mxu0 0.0
      %1106 = vmatpush2.msra.mxu0 0.0
      %1107 = vmatprep.subr.mxu0 0.0
      %1108 = vmatpush2.msra.mxu0 0.0
      %1109 = vmatprep.subr.mxu0 0.0
      %1110 = vmatpush2.msra.mxu0 0.0
      %1111 = vmatprep.subr.mxu0 0.0
      %1112 = vmatpush2.msra.mxu0 0.0
      %1113 = vmatprep.subr.mxu0 0.0
      %1114 = vmatpush2.msra.mxu0 0.0
      %1115 = vmatprep.subr.mxu0 0.0
      %1116 = vmatpush2.msra.mxu0 0.0
      %1117 = vmatprep.subr.mxu0 0.0
      %1118 = vmatpush2.msra.mxu0 0.0
      %1119 = vmatprep.mubr.f32.mxu0 0.0
      %1120 = vmatmul.mubr.f32.gmra.mxu0 %v1053
      %v1121 = vpop.f32.mrf.mxu0
      %v1122 = vadd.f32 %v1049, %v1121
      %v1123 = vpop.f32.mrf.mxu0
      %1124 = vdwg.mxu0
      %v1125 = vadd.f32 %v1122, %v807
      %v1126 = vsel %vm397, %v1125, -inf
      %1127 = vmax.xlane.f32.xlu0 %v1126
      %v1128 = vpop.xlane.xlu0 %1127
      %vm1129 = vcmp.eq.f32.partialorder %v1125, %v1128
      %v1130 = vsel %vm1129, %v375, 8.0
      %v1131 = vsel %vm397, %v1130, inf
      %1132 = vmin.xlane.f32.xlu0 %v1131
      %v1133 = vpop.xlane.xlu0 %1132
      %v1134 = vsub.f32 %v1125, %v1128
      %v1135 = vmul.f32 %v1134, 1.442695
      %v1136 = vpow.pop %v1135
      %v1137 = vsel %vm397, %v1136, 0.0
      %1138 = vadd.xlane.f32.xlu0 %v1137
      %v1139 = vpop.xlane.xlu0 %1138
      %v1140 = vsel %vm829, %v364, 0.0
      %v1141 = vsel %vm656, %v1140, 0.0
      %1142 = vadd.xlane.f32.xlu0 %v1141
      %v1143 = vpop.xlane.xlu0 %1142
      %v1144 = vmul.f32 %v1143, %v1139
      %1145 = vset.pattern.permute.xlu0 0
      %1146 = vperm.xlu0 %1145, %v966
      %v1147 = vpop.permute.xlu0 %1146
      %vm1148 = vcmp.eq.s32.totalorder %v374, %v1147
      %v1149 = vsel %vm1148, 1, 0
      %v1150 = vcvt.s32.f32 %v1149
      %v1151 = vmul.f32 %v362, %v1150
      %v1152 = vsel %vm497, %v1151, 0.0
      %1153 = vadd.xlane.f32.xlu0 %v1152
      %v1154 = vpop.xlane.xlu0 %1153
      %v1155 = vmul.f32 %v363, %v1150
      %v1156 = vsel %vm497, %v1155, 0.0
      %1157 = vadd.xlane.f32.xlu0 %v1156
      %v1158 = vpop.xlane.xlu0 %1157
      %v1159 = vadd.f32 %v842, %v1144
      %vm1160 = vcmp.lt.f32.partialorder %v1159, %v1154
      %v1161 = vsel %vm1160, %v1159, %v1154
      %v1162 = vsel %vm1160, %v1133, %v1158
      %v1163 = vadd.f32 %v1162, 0.5
      %v1164 = vcvt.f32.s32.to.zero.pseudo %v1163
      %1165 = vset.pattern.permute.xlu0 0
      %1166 = vperm.xlu0 %1165, %v1164
      %v1167 = vpop.permute.xlu0 %1166
      %vm1168 = vcmp.eq.s32.totalorder %v374, %v1167
      %v1169 = vsel %vm1168, 1, 0
      %v1170 = vcvt.s32.f32 %v1169
      %v1172 = vsel %vm397, %v1170, 0
      %1174 = vmatprep.subr.mxu0 0.0
      %1175 = vmatpush1.msra.mxu0 0.0
      %1176 = vmatprep.subr.mxu0 0.0
      %1177 = vmatpush1.msra.mxu0 0.0
      %1178 = vmatprep.subr.mxu0 0.0
      %1179 = vmatpush1.msra.mxu0 0.0
      %1180 = vmatprep.subr.mxu0 0.0
      %1181 = vmatpush1.msra.mxu0 0.0
      %1182 = vmatprep.subr.mxu0 0.0
      %1183 = vmatpush1.msra.mxu0 0.0
      %1184 = vmatprep.subr.mxu0 0.0
      %1185 = vmatpush1.msra.mxu0 0.0
      %1186 = vmatprep.subr.mxu0 0.0
      %1187 = vmatpush1.msra.mxu0 0.0
      %1188 = vmatprep.subr.mxu0 0.0
      %1189 = vmatpush1.msra.mxu0 0.0
      %1190 = vmatprep.subr.mxu0 0.0
      %1191 = vmatpush1.msra.mxu0 0.0
      %1192 = vmatprep.subr.mxu0 0.0
      %1193 = vmatpush1.msra.mxu0 0.0
      %1194 = vmatprep.subr.mxu0 0.0
      %1195 = vmatpush1.msra.mxu0 0.0
      %1196 = vmatprep.subr.mxu0 0.0
      %1197 = vmatpush1.msra.mxu0 0.0
      %1198 = vmatprep.subr.mxu0 0.0
      %1199 = vmatpush1.msra.mxu0 0.0
      %1200 = vmatprep.subr.mxu0 0.0
      %1201 = vmatpush1.msra.mxu0 0.0
      %1202 = vmatprep.subr.mxu0 0.0
      %1203 = vmatpush1.msra.mxu0 0.0
      %1204 = vmatprep.subr.mxu0 0.0
      %1205 = vmatpush1.msra.mxu0 %v365
      %1206 = vmatprep.subr.mxu0 0.0
      %1207 = vmatpush2.msra.mxu0 0.0
      %1208 = vmatprep.subr.mxu0 0.0
      %1209 = vmatpush2.msra.mxu0 0.0
      %1210 = vmatprep.subr.mxu0 0.0
      %1211 = vmatpush2.msra.mxu0 0.0
      %1212 = vmatprep.subr.mxu0 0.0
      %1213 = vmatpush2.msra.mxu0 0.0
      %1214 = vmatprep.subr.mxu0 0.0
      %1215 = vmatpush2.msra.mxu0 0.0
      %1216 = vmatprep.subr.mxu0 0.0
      %1217 = vmatpush2.msra.mxu0 0.0
      %1218 = vmatprep.subr.mxu0 0.0
      %1219 = vmatpush2.msra.mxu0 0.0
      %1220 = vmatprep.subr.mxu0 0.0
      %1221 = vmatpush2.msra.mxu0 0.0
      %1222 = vmatprep.subr.mxu0 0.0
      %1223 = vmatpush2.msra.mxu0 0.0
      %1224 = vmatprep.subr.mxu0 0.0
      %1225 = vmatpush2.msra.mxu0 0.0
      %1226 = vmatprep.subr.mxu0 0.0
      %1227 = vmatpush2.msra.mxu0 0.0
      %1228 = vmatprep.subr.mxu0 0.0
      %1229 = vmatpush2.msra.mxu0 0.0
      %1230 = vmatprep.subr.mxu0 0.0
      %1231 = vmatpush2.msra.mxu0 0.0
      %1232 = vmatprep.subr.mxu0 0.0
      %1233 = vmatpush2.msra.mxu0 0.0
      %1234 = vmatprep.subr.mxu0 0.0
      %1235 = vmatpush2.msra.mxu0 0.0
      %1236 = vmatprep.subr.mxu0 0.0
      %1237 = vmatpush2.msra.mxu0 0.0
      %1238 = vmatprep.mubr.f32.mxu0 0.0
      %1239 = vmatmul.mubr.f32.gmra.mxu0 %v1172
      %v1240 = vpop.f32.mrf.mxu0
      %v1241 = vadd.f32 0.0, %v1240
      %v1242 = vpop.f32.mrf.mxu0
      %1243 = vdwg.mxu0
      %v1244 = vmul.f32 %v1241, 0.6
      %1246 = vset.pattern.permute.xlu0 0
      %1247 = vperm.xlu0 %1246, %v1161
      %v1248 = vpop.permute.xlu0 %1247
      %v1250 = vmul.f32 %v476, %v1248
      %v1251 = vadd.f32 %v1250, %v483
      %v1252 = vmul.f32 %v1251, 0.4
      %v1253 = vadd.f32 %v1244, %v1252
      %vm1254 = vcmp.ge.f32.partialorder %v1161, 0.0
      %v1255 = vsel %vm1254, 1, 0
      %v1256 = vcvt.s32.f32 %v1255
      %1258 = vset.pattern.permute.xlu0 0
      %1259 = vperm.xlu0 %1258, %v1256
      %v1260 = vpop.permute.xlu0 %1259
      %v1262 = vmul.f32 %v1253, %v1260
      %v1263 = vadd.f32 %v944, %v1262
      %v1264 = vsub.f32 %v951, %v1262
      %v1265 = vsel %vm1160, 1, 0
      %1266 = vset.pattern.permute.xlu0 0
      %1267 = vperm.xlu0 %1266, %v1265
      %v1268 = vpop.permute.xlu0 %1267
      %vm1269 = vcmp.eq.s32.totalorder %v1268, 1
      %v1270 = vsel %vm1269, %v951, %v1264
      %v1271 = vsel %vm1160, %v952, %v966
      %vm1272 = vcmp.lt.f32.partialorder %v1161, 0.0
      %v1273 = vsel %vm1272, 1, 0
      %vm1274 = vcmp.gt.s32.totalorder %v955, %v1273
      %v1275 = vsel %vm1274, %v955, %v1273
      %vm1276 = vcmp.eq.s32.totalorder %v374, 2
      %v1277 = vsel %vm965, 1, 0
      %1278 = vset.pattern.permute.xlu0 0
      %1279 = vperm.xlu0 %1278, %v1277
      %v1280 = vpop.permute.xlu0 %1279
      %vm1281 = vcmp.eq.s32.totalorder %v1280, 1
      %vm1282 = vmand %vm1276, %vm1281
      %v1283 = vsel %vm1282, %v1248, %v956
      %1285 = vset.pattern.permute.xlu0 0
      %1286 = vperm.xlu0 %1285, %v1162
      %v1287 = vpop.permute.xlu0 %1286
      %v1289 = vsel %vm1282, %v1287, %v962
      %v1290 = vsel %vm1281, %v1263, %v944
      %v1291 = vsel %vm1281, %v1270, %v951
      %v1292 = vsel %vm965, %v1271, %v952
      %v1293 = vsel %vm965, 3, 2
      %v1294 = vsel %vm965, %v1161, %v842
      %v1295 = vsel %vm965, %v1275, %v955
      %vm1296 = vcmp.eq.s32.totalorder %v1295, 0
      %vm1297 = vcmp.lt.s32.totalorder %v1292, 5
      %vm1298 = vmand %vm1296, %vm1297
      %v1299 = vadd.s32 %v1292, 1
      %v1300 = vcvt.s32.f32 %v1299
      %v1301 = vsub.f32 %v500, %v1300
      %v1302 = vmax.f32 %v1301, 1.0
      %v1303 = vcvt.s32.f32 %v1293
      %1305 = vset.pattern.permute.xlu0 0
      %1306 = vperm.xlu0 %1305, %v1303
      %v1307 = vpop.permute.xlu0 %1306
      %v1309 = vrcp.pop %v1307
      %v1310 = vmul.f32 %v1290, %v1309
      %1312 = vset.pattern.permute.xlu0 0
      %1313 = vperm.xlu0 %1312, %v1302
      %v1314 = vpop.permute.xlu0 %1313
      %v1316 = vrcp.pop %v1314
      %v1317 = vmul.f32 %v1291, %v1316
      %v1319 = vsel %vm656, %v1317, 0
      %1321 = vmatprep.subr.mxu0 0.0
      %1322 = vmatpush1.msra.mxu0 0.0
      %1323 = vmatprep.subr.mxu0 0.0
      %1324 = vmatpush1.msra.mxu0 0.0
      %1325 = vmatprep.subr.mxu0 0.0
      %1326 = vmatpush1.msra.mxu0 0.0
      %1327 = vmatprep.subr.mxu0 0.0
      %1328 = vmatpush1.msra.mxu0 0.0
      %1329 = vmatprep.subr.mxu0 0.0
      %1330 = vmatpush1.msra.mxu0 0.0
      %1331 = vmatprep.subr.mxu0 0.0
      %1332 = vmatpush1.msra.mxu0 0.0
      %1333 = vmatprep.subr.mxu0 0.0
      %1334 = vmatpush1.msra.mxu0 0.0
      %1335 = vmatprep.subr.mxu0 0.0
      %1336 = vmatpush1.msra.mxu0 0.0
      %1337 = vmatprep.subr.mxu0 0.0
      %1338 = vmatpush1.msra.mxu0 0.0
      %1339 = vmatprep.subr.mxu0 0.0
      %1340 = vmatpush1.msra.mxu0 0.0
      %1341 = vmatprep.subr.mxu0 0.0
      %1342 = vmatpush1.msra.mxu0 0.0
      %1343 = vmatprep.subr.mxu0 0.0
      %1344 = vmatpush1.msra.mxu0 0.0
      %1345 = vmatprep.subr.mxu0 0.0
      %1346 = vmatpush1.msra.mxu0 0.0
      %1347 = vmatprep.subr.mxu0 0.0
      %1348 = vmatpush1.msra.mxu0 0.0
      %1349 = vmatprep.subr.mxu0 0.0
      %1350 = vmatpush1.msra.mxu0 %v371
      %1351 = vmatprep.subr.mxu0 0.0
      %1352 = vmatpush1.msra.mxu0 %v370
      %1353 = vmatprep.subr.mxu0 0.0
      %1354 = vmatpush2.msra.mxu0 0.0
      %1355 = vmatprep.subr.mxu0 0.0
      %1356 = vmatpush2.msra.mxu0 0.0
      %1357 = vmatprep.subr.mxu0 0.0
      %1358 = vmatpush2.msra.mxu0 0.0
      %1359 = vmatprep.subr.mxu0 0.0
      %1360 = vmatpush2.msra.mxu0 0.0
      %1361 = vmatprep.subr.mxu0 0.0
      %1362 = vmatpush2.msra.mxu0 0.0
      %1363 = vmatprep.subr.mxu0 0.0
      %1364 = vmatpush2.msra.mxu0 0.0
      %1365 = vmatprep.subr.mxu0 0.0
      %1366 = vmatpush2.msra.mxu0 0.0
      %1367 = vmatprep.subr.mxu0 0.0
      %1368 = vmatpush2.msra.mxu0 0.0
      %1369 = vmatprep.subr.mxu0 0.0
      %1370 = vmatpush2.msra.mxu0 0.0
      %1371 = vmatprep.subr.mxu0 0.0
      %1372 = vmatpush2.msra.mxu0 0.0
      %1373 = vmatprep.subr.mxu0 0.0
      %1374 = vmatpush2.msra.mxu0 0.0
      %1375 = vmatprep.subr.mxu0 0.0
      %1376 = vmatpush2.msra.mxu0 0.0
      %1377 = vmatprep.subr.mxu0 0.0
      %1378 = vmatpush2.msra.mxu0 0.0
      %1379 = vmatprep.subr.mxu0 0.0
      %1380 = vmatpush2.msra.mxu0 0.0
      %1381 = vmatprep.subr.mxu0 0.0
      %1382 = vmatpush2.msra.mxu0 0.0
      %1383 = vmatprep.subr.mxu0 0.0
      %1384 = vmatpush2.msra.mxu0 0.0
      %1385 = vmatprep.mubr.f32.mxu0 0.0
      %1386 = vmatmul.mubr.f32.gmra.mxu0 %v1319
      %v1387 = vpop.f32.mrf.mxu0
      %v1388 = vadd.f32 0.0, %v1387
      %v1389 = vpop.f32.mrf.mxu0
      %1390 = vdwg.mxu0
      %v1392 = vsel %vm656, %v1310, 0
      %1394 = vmatprep.subr.mxu0 0.0
      %1395 = vmatpush1.msra.mxu0 0.0
      %1396 = vmatprep.subr.mxu0 0.0
      %1397 = vmatpush1.msra.mxu0 0.0
      %1398 = vmatprep.subr.mxu0 0.0
      %1399 = vmatpush1.msra.mxu0 0.0
      %1400 = vmatprep.subr.mxu0 0.0
      %1401 = vmatpush1.msra.mxu0 0.0
      %1402 = vmatprep.subr.mxu0 0.0
      %1403 = vmatpush1.msra.mxu0 0.0
      %1404 = vmatprep.subr.mxu0 0.0
      %1405 = vmatpush1.msra.mxu0 0.0
      %1406 = vmatprep.subr.mxu0 0.0
      %1407 = vmatpush1.msra.mxu0 0.0
      %1408 = vmatprep.subr.mxu0 0.0
      %1409 = vmatpush1.msra.mxu0 0.0
      %1410 = vmatprep.subr.mxu0 0.0
      %1411 = vmatpush1.msra.mxu0 0.0
      %1412 = vmatprep.subr.mxu0 0.0
      %1413 = vmatpush1.msra.mxu0 0.0
      %1414 = vmatprep.subr.mxu0 0.0
      %1415 = vmatpush1.msra.mxu0 0.0
      %1416 = vmatprep.subr.mxu0 0.0
      %1417 = vmatpush1.msra.mxu0 0.0
      %1418 = vmatprep.subr.mxu0 0.0
      %1419 = vmatpush1.msra.mxu0 0.0
      %1420 = vmatprep.subr.mxu0 0.0
      %1421 = vmatpush1.msra.mxu0 0.0
      %1422 = vmatprep.subr.mxu0 0.0
      %1423 = vmatpush1.msra.mxu0 %v369
      %1424 = vmatprep.subr.mxu0 0.0
      %1425 = vmatpush1.msra.mxu0 %v368
      %1426 = vmatprep.subr.mxu0 0.0
      %1427 = vmatpush2.msra.mxu0 0.0
      %1428 = vmatprep.subr.mxu0 0.0
      %1429 = vmatpush2.msra.mxu0 0.0
      %1430 = vmatprep.subr.mxu0 0.0
      %1431 = vmatpush2.msra.mxu0 0.0
      %1432 = vmatprep.subr.mxu0 0.0
      %1433 = vmatpush2.msra.mxu0 0.0
      %1434 = vmatprep.subr.mxu0 0.0
      %1435 = vmatpush2.msra.mxu0 0.0
      %1436 = vmatprep.subr.mxu0 0.0
      %1437 = vmatpush2.msra.mxu0 0.0
      %1438 = vmatprep.subr.mxu0 0.0
      %1439 = vmatpush2.msra.mxu0 0.0
      %1440 = vmatprep.subr.mxu0 0.0
      %1441 = vmatpush2.msra.mxu0 0.0
      %1442 = vmatprep.subr.mxu0 0.0
      %1443 = vmatpush2.msra.mxu0 0.0
      %1444 = vmatprep.subr.mxu0 0.0
      %1445 = vmatpush2.msra.mxu0 0.0
      %1446 = vmatprep.subr.mxu0 0.0
      %1447 = vmatpush2.msra.mxu0 0.0
      %1448 = vmatprep.subr.mxu0 0.0
      %1449 = vmatpush2.msra.mxu0 0.0
      %1450 = vmatprep.subr.mxu0 0.0
      %1451 = vmatpush2.msra.mxu0 0.0
      %1452 = vmatprep.subr.mxu0 0.0
      %1453 = vmatpush2.msra.mxu0 0.0
      %1454 = vmatprep.subr.mxu0 0.0
      %1455 = vmatpush2.msra.mxu0 0.0
      %1456 = vmatprep.subr.mxu0 0.0
      %1457 = vmatpush2.msra.mxu0 0.0
      %1458 = vmatprep.mubr.f32.mxu0 0.0
      %1459 = vmatmul.mubr.f32.gmra.mxu0 %v1392
      %v1460 = vpop.f32.mrf.mxu0
      %v1461 = vadd.f32 %v1388, %v1460
      %v1462 = vpop.f32.mrf.mxu0
      %1463 = vdwg.mxu0
      %v1464 = vadd.f32 %v1461, %v807
      %v1465 = vsel %vm397, %v1464, -inf
      %1466 = vmax.xlane.f32.xlu0 %v1465
      %v1467 = vpop.xlane.xlu0 %1466
      %vm1468 = vcmp.eq.f32.partialorder %v1464, %v1467
      %v1469 = vsel %vm1468, %v375, 8.0
      %v1470 = vsel %vm397, %v1469, inf
      %1471 = vmin.xlane.f32.xlu0 %v1470
      %v1472 = vpop.xlane.xlu0 %1471
      %v1473 = vsub.f32 %v1464, %v1467
      %v1474 = vmul.f32 %v1473, 1.442695
      %v1475 = vpow.pop %v1474
      %v1476 = vsel %vm397, %v1475, 0.0
      %1477 = vadd.xlane.f32.xlu0 %v1476
      %v1478 = vpop.xlane.xlu0 %1477
      %v1479 = vsel %vm1276, %v364, 0.0
      %v1480 = vsel %vm656, %v1479, 0.0
      %1481 = vadd.xlane.f32.xlu0 %v1480
      %v1482 = vpop.xlane.xlu0 %1481
      %v1483 = vmul.f32 %v1482, %v1478
      %1484 = vset.pattern.permute.xlu0 0
      %1485 = vperm.xlu0 %1484, %v1299
      %v1486 = vpop.permute.xlu0 %1485
      %vm1487 = vcmp.eq.s32.totalorder %v374, %v1486
      %v1488 = vsel %vm1487, 1, 0
      %v1489 = vcvt.s32.f32 %v1488
      %v1490 = vmul.f32 %v362, %v1489
      %v1491 = vsel %vm497, %v1490, 0.0
      %1492 = vadd.xlane.f32.xlu0 %v1491
      %v1493 = vpop.xlane.xlu0 %1492
      %v1494 = vmul.f32 %v363, %v1489
      %v1495 = vsel %vm497, %v1494, 0.0
      %1496 = vadd.xlane.f32.xlu0 %v1495
      %v1497 = vpop.xlane.xlu0 %1496
      %v1498 = vadd.f32 %v1294, %v1483
      %vm1499 = vcmp.lt.f32.partialorder %v1498, %v1493
      %v1500 = vsel %vm1499, %v1498, %v1493
      %v1501 = vsel %vm1499, %v1472, %v1497
      %v1502 = vadd.f32 %v1501, 0.5
      %v1503 = vcvt.f32.s32.to.zero.pseudo %v1502
      %1504 = vset.pattern.permute.xlu0 0
      %1505 = vperm.xlu0 %1504, %v1503
      %v1506 = vpop.permute.xlu0 %1505
      %vm1507 = vcmp.eq.s32.totalorder %v374, %v1506
      %v1508 = vsel %vm1507, 1, 0
      %v1509 = vcvt.s32.f32 %v1508
      %v1511 = vsel %vm397, %v1509, 0
      %1513 = vmatprep.subr.mxu0 0.0
      %1514 = vmatpush1.msra.mxu0 0.0
      %1515 = vmatprep.subr.mxu0 0.0
      %1516 = vmatpush1.msra.mxu0 0.0
      %1517 = vmatprep.subr.mxu0 0.0
      %1518 = vmatpush1.msra.mxu0 0.0
      %1519 = vmatprep.subr.mxu0 0.0
      %1520 = vmatpush1.msra.mxu0 0.0
      %1521 = vmatprep.subr.mxu0 0.0
      %1522 = vmatpush1.msra.mxu0 0.0
      %1523 = vmatprep.subr.mxu0 0.0
      %1524 = vmatpush1.msra.mxu0 0.0
      %1525 = vmatprep.subr.mxu0 0.0
      %1526 = vmatpush1.msra.mxu0 0.0
      %1527 = vmatprep.subr.mxu0 0.0
      %1528 = vmatpush1.msra.mxu0 0.0
      %1529 = vmatprep.subr.mxu0 0.0
      %1530 = vmatpush1.msra.mxu0 0.0
      %1531 = vmatprep.subr.mxu0 0.0
      %1532 = vmatpush1.msra.mxu0 0.0
      %1533 = vmatprep.subr.mxu0 0.0
      %1534 = vmatpush1.msra.mxu0 0.0
      %1535 = vmatprep.subr.mxu0 0.0
      %1536 = vmatpush1.msra.mxu0 0.0
      %1537 = vmatprep.subr.mxu0 0.0
      %1538 = vmatpush1.msra.mxu0 0.0
      %1539 = vmatprep.subr.mxu0 0.0
      %1540 = vmatpush1.msra.mxu0 0.0
      %1541 = vmatprep.subr.mxu0 0.0
      %1542 = vmatpush1.msra.mxu0 0.0
      %1543 = vmatprep.subr.mxu0 0.0
      %1544 = vmatpush1.msra.mxu0 %v365
      %1545 = vmatprep.subr.mxu0 0.0
      %1546 = vmatpush2.msra.mxu0 0.0
      %1547 = vmatprep.subr.mxu0 0.0
      %1548 = vmatpush2.msra.mxu0 0.0
      %1549 = vmatprep.subr.mxu0 0.0
      %1550 = vmatpush2.msra.mxu0 0.0
      %1551 = vmatprep.subr.mxu0 0.0
      %1552 = vmatpush2.msra.mxu0 0.0
      %1553 = vmatprep.subr.mxu0 0.0
      %1554 = vmatpush2.msra.mxu0 0.0
      %1555 = vmatprep.subr.mxu0 0.0
      %1556 = vmatpush2.msra.mxu0 0.0
      %1557 = vmatprep.subr.mxu0 0.0
      %1558 = vmatpush2.msra.mxu0 0.0
      %1559 = vmatprep.subr.mxu0 0.0
      %1560 = vmatpush2.msra.mxu0 0.0
      %1561 = vmatprep.subr.mxu0 0.0
      %1562 = vmatpush2.msra.mxu0 0.0
      %1563 = vmatprep.subr.mxu0 0.0
      %1564 = vmatpush2.msra.mxu0 0.0
      %1565 = vmatprep.subr.mxu0 0.0
      %1566 = vmatpush2.msra.mxu0 0.0
      %1567 = vmatprep.subr.mxu0 0.0
      %1568 = vmatpush2.msra.mxu0 0.0
      %1569 = vmatprep.subr.mxu0 0.0
      %1570 = vmatpush2.msra.mxu0 0.0
      %1571 = vmatprep.subr.mxu0 0.0
      %1572 = vmatpush2.msra.mxu0 0.0
      %1573 = vmatprep.subr.mxu0 0.0
      %1574 = vmatpush2.msra.mxu0 0.0
      %1575 = vmatprep.subr.mxu0 0.0
      %1576 = vmatpush2.msra.mxu0 0.0
      %1577 = vmatprep.mubr.f32.mxu0 0.0
      %1578 = vmatmul.mubr.f32.gmra.mxu0 %v1511
      %v1579 = vpop.f32.mrf.mxu0
      %v1580 = vadd.f32 0.0, %v1579
      %v1581 = vpop.f32.mrf.mxu0
      %1582 = vdwg.mxu0
      %v1583 = vmul.f32 %v1580, 0.6
      %1585 = vset.pattern.permute.xlu0 0
      %1586 = vperm.xlu0 %1585, %v1500
      %v1587 = vpop.permute.xlu0 %1586
      %v1589 = vmul.f32 %v476, %v1587
      %v1590 = vadd.f32 %v1589, %v483
      %v1591 = vmul.f32 %v1590, 0.4
      %v1592 = vadd.f32 %v1583, %v1591
      %vm1593 = vcmp.ge.f32.partialorder %v1500, 0.0
      %v1594 = vsel %vm1593, 1, 0
      %v1595 = vcvt.s32.f32 %v1594
      %1597 = vset.pattern.permute.xlu0 0
      %1598 = vperm.xlu0 %1597, %v1595
      %v1599 = vpop.permute.xlu0 %1598
      %v1601 = vmul.f32 %v1592, %v1599
      %v1602 = vadd.f32 %v1290, %v1601
      %v1603 = vsub.f32 %v1291, %v1601
      %v1604 = vsel %vm1499, 1, 0
      %1605 = vset.pattern.permute.xlu0 0
      %1606 = vperm.xlu0 %1605, %v1604
      %v1607 = vpop.permute.xlu0 %1606
      %vm1608 = vcmp.eq.s32.totalorder %v1607, 1
      %v1609 = vsel %vm1608, %v1291, %v1603
      %v1610 = vsel %vm1499, %v1292, %v1299
      %v1611 = vadd.s32 %v1293, 1
      %vm1612 = vcmp.lt.f32.partialorder %v1500, 0.0
      %vm1613 = vcmp.ge.s32.totalorder %v1611, 16
      %vm1614 = vmor %vm1612, %vm1613
      %v1615 = vsel %vm1614, 1, 0
      %vm1616 = vcmp.gt.s32.totalorder %v1295, %v1615
      %v1617 = vsel %vm1616, %v1295, %v1615
      %1618 = vset.pattern.permute.xlu0 0
      %1619 = vperm.xlu0 %1618, %v1293
      %v1620 = vpop.permute.xlu0 %1619
      %vm1621 = vcmp.eq.s32.totalorder %v374, %v1620
      %v1622 = vsel %vm1298, 1, 0
      %1623 = vset.pattern.permute.xlu0 0
      %1624 = vperm.xlu0 %1623, %v1622
      %v1625 = vpop.permute.xlu0 %1624
      %vm1626 = vcmp.eq.s32.totalorder %v1625, 1
      %vm1627 = vmand %vm1621, %vm1626
      %v1628 = vsel %vm1627, %v1587, %v1283
      %1630 = vset.pattern.permute.xlu0 0
      %1631 = vperm.xlu0 %1630, %v1501
      %v1632 = vpop.permute.xlu0 %1631
      %v1634 = vsel %vm1627, %v1632, %v1289
      %v1635 = vsel %vm1626, %v1602, %v1290
      %v1636 = vsel %vm1626, %v1609, %v1291
      %v1637 = vsel %vm1298, %v1610, %v1292
      %v1638 = vsel %vm1298, %v1611, %v1293
      %v1639 = vsel %vm1298, %v1500, %v1294
      %v1640 = vsel %vm1298, %v1617, %v1295
      %vm1641 = vcmp.eq.s32.totalorder %v1640, 0
      %vm1642 = vcmp.lt.s32.totalorder %v1637, 5
      %vm1643 = vmand %vm1641, %vm1642
      %v1644 = vadd.s32 %v1637, 1
      %v1645 = vcvt.s32.f32 %v1644
      %v1646 = vsub.f32 %v500, %v1645
      %v1647 = vmax.f32 %v1646, 1.0
      %v1648 = vcvt.s32.f32 %v1638
      %1650 = vset.pattern.permute.xlu0 0
      %1651 = vperm.xlu0 %1650, %v1648
      %v1652 = vpop.permute.xlu0 %1651
      %v1654 = vrcp.pop %v1652
      %v1655 = vmul.f32 %v1635, %v1654
      %1657 = vset.pattern.permute.xlu0 0
      %1658 = vperm.xlu0 %1657, %v1647
      %v1659 = vpop.permute.xlu0 %1658
      %v1661 = vrcp.pop %v1659
      %v1662 = vmul.f32 %v1636, %v1661
      %v1664 = vsel %vm656, %v1662, 0
      %1666 = vmatprep.subr.mxu0 0.0
      %1667 = vmatpush1.msra.mxu0 0.0
      %1668 = vmatprep.subr.mxu0 0.0
      %1669 = vmatpush1.msra.mxu0 0.0
      %1670 = vmatprep.subr.mxu0 0.0
      %1671 = vmatpush1.msra.mxu0 0.0
      %1672 = vmatprep.subr.mxu0 0.0
      %1673 = vmatpush1.msra.mxu0 0.0
      %1674 = vmatprep.subr.mxu0 0.0
      %1675 = vmatpush1.msra.mxu0 0.0
      %1676 = vmatprep.subr.mxu0 0.0
      %1677 = vmatpush1.msra.mxu0 0.0
      %1678 = vmatprep.subr.mxu0 0.0
      %1679 = vmatpush1.msra.mxu0 0.0
      %1680 = vmatprep.subr.mxu0 0.0
      %1681 = vmatpush1.msra.mxu0 0.0
      %1682 = vmatprep.subr.mxu0 0.0
      %1683 = vmatpush1.msra.mxu0 0.0
      %1684 = vmatprep.subr.mxu0 0.0
      %1685 = vmatpush1.msra.mxu0 0.0
      %1686 = vmatprep.subr.mxu0 0.0
      %1687 = vmatpush1.msra.mxu0 0.0
      %1688 = vmatprep.subr.mxu0 0.0
      %1689 = vmatpush1.msra.mxu0 0.0
      %1690 = vmatprep.subr.mxu0 0.0
      %1691 = vmatpush1.msra.mxu0 0.0
      %1692 = vmatprep.subr.mxu0 0.0
      %1693 = vmatpush1.msra.mxu0 0.0
      %1694 = vmatprep.subr.mxu0 0.0
      %1695 = vmatpush1.msra.mxu0 %v371
      %1696 = vmatprep.subr.mxu0 0.0
      %1697 = vmatpush1.msra.mxu0 %v370
      %1698 = vmatprep.subr.mxu0 0.0
      %1699 = vmatpush2.msra.mxu0 0.0
      %1700 = vmatprep.subr.mxu0 0.0
      %1701 = vmatpush2.msra.mxu0 0.0
      %1702 = vmatprep.subr.mxu0 0.0
      %1703 = vmatpush2.msra.mxu0 0.0
      %1704 = vmatprep.subr.mxu0 0.0
      %1705 = vmatpush2.msra.mxu0 0.0
      %1706 = vmatprep.subr.mxu0 0.0
      %1707 = vmatpush2.msra.mxu0 0.0
      %1708 = vmatprep.subr.mxu0 0.0
      %1709 = vmatpush2.msra.mxu0 0.0
      %1710 = vmatprep.subr.mxu0 0.0
      %1711 = vmatpush2.msra.mxu0 0.0
      %1712 = vmatprep.subr.mxu0 0.0
      %1713 = vmatpush2.msra.mxu0 0.0
      %1714 = vmatprep.subr.mxu0 0.0
      %1715 = vmatpush2.msra.mxu0 0.0
      %1716 = vmatprep.subr.mxu0 0.0
      %1717 = vmatpush2.msra.mxu0 0.0
      %1718 = vmatprep.subr.mxu0 0.0
      %1719 = vmatpush2.msra.mxu0 0.0
      %1720 = vmatprep.subr.mxu0 0.0
      %1721 = vmatpush2.msra.mxu0 0.0
      %1722 = vmatprep.subr.mxu0 0.0
      %1723 = vmatpush2.msra.mxu0 0.0
      %1724 = vmatprep.subr.mxu0 0.0
      %1725 = vmatpush2.msra.mxu0 0.0
      %1726 = vmatprep.subr.mxu0 0.0
      %1727 = vmatpush2.msra.mxu0 0.0
      %1728 = vmatprep.subr.mxu0 0.0
      %1729 = vmatpush2.msra.mxu0 0.0
      %1730 = vmatprep.mubr.f32.mxu0 0.0
      %1731 = vmatmul.mubr.f32.gmra.mxu0 %v1664
      %v1732 = vpop.f32.mrf.mxu0
      %v1733 = vadd.f32 0.0, %v1732
      %v1734 = vpop.f32.mrf.mxu0
      %1735 = vdwg.mxu0
      %v1737 = vsel %vm656, %v1655, 0
      %1739 = vmatprep.subr.mxu0 0.0
      %1740 = vmatpush1.msra.mxu0 0.0
      %1741 = vmatprep.subr.mxu0 0.0
      %1742 = vmatpush1.msra.mxu0 0.0
      %1743 = vmatprep.subr.mxu0 0.0
      %1744 = vmatpush1.msra.mxu0 0.0
      %1745 = vmatprep.subr.mxu0 0.0
      %1746 = vmatpush1.msra.mxu0 0.0
      %1747 = vmatprep.subr.mxu0 0.0
      %1748 = vmatpush1.msra.mxu0 0.0
      %1749 = vmatprep.subr.mxu0 0.0
      %1750 = vmatpush1.msra.mxu0 0.0
      %1751 = vmatprep.subr.mxu0 0.0
      %1752 = vmatpush1.msra.mxu0 0.0
      %1753 = vmatprep.subr.mxu0 0.0
      %1754 = vmatpush1.msra.mxu0 0.0
      %1755 = vmatprep.subr.mxu0 0.0
      %1756 = vmatpush1.msra.mxu0 0.0
      %1757 = vmatprep.subr.mxu0 0.0
      %1758 = vmatpush1.msra.mxu0 0.0
      %1759 = vmatprep.subr.mxu0 0.0
      %1760 = vmatpush1.msra.mxu0 0.0
      %1761 = vmatprep.subr.mxu0 0.0
      %1762 = vmatpush1.msra.mxu0 0.0
      %1763 = vmatprep.subr.mxu0 0.0
      %1764 = vmatpush1.msra.mxu0 0.0
      %1765 = vmatprep.subr.mxu0 0.0
      %1766 = vmatpush1.msra.mxu0 0.0
      %1767 = vmatprep.subr.mxu0 0.0
      %1768 = vmatpush1.msra.mxu0 %v369
      %1769 = vmatprep.subr.mxu0 0.0
      %1770 = vmatpush1.msra.mxu0 %v368
      %1771 = vmatprep.subr.mxu0 0.0
      %1772 = vmatpush2.msra.mxu0 0.0
      %1773 = vmatprep.subr.mxu0 0.0
      %1774 = vmatpush2.msra.mxu0 0.0
      %1775 = vmatprep.subr.mxu0 0.0
      %1776 = vmatpush2.msra.mxu0 0.0
      %1777 = vmatprep.subr.mxu0 0.0
      %1778 = vmatpush2.msra.mxu0 0.0
      %1779 = vmatprep.subr.mxu0 0.0
      %1780 = vmatpush2.msra.mxu0 0.0
      %1781 = vmatprep.subr.mxu0 0.0
      %1782 = vmatpush2.msra.mxu0 0.0
      %1783 = vmatprep.subr.mxu0 0.0
      %1784 = vmatpush2.msra.mxu0 0.0
      %1785 = vmatprep.subr.mxu0 0.0
      %1786 = vmatpush2.msra.mxu0 0.0
      %1787 = vmatprep.subr.mxu0 0.0
      %1788 = vmatpush2.msra.mxu0 0.0
      %1789 = vmatprep.subr.mxu0 0.0
      %1790 = vmatpush2.msra.mxu0 0.0
      %1791 = vmatprep.subr.mxu0 0.0
      %1792 = vmatpush2.msra.mxu0 0.0
      %1793 = vmatprep.subr.mxu0 0.0
      %1794 = vmatpush2.msra.mxu0 0.0
      %1795 = vmatprep.subr.mxu0 0.0
      %1796 = vmatpush2.msra.mxu0 0.0
      %1797 = vmatprep.subr.mxu0 0.0
      %1798 = vmatpush2.msra.mxu0 0.0
      %1799 = vmatprep.subr.mxu0 0.0
      %1800 = vmatpush2.msra.mxu0 0.0
      %1801 = vmatprep.subr.mxu0 0.0
      %1802 = vmatpush2.msra.mxu0 0.0
      %1803 = vmatprep.mubr.f32.mxu0 0.0
      %1804 = vmatmul.mubr.f32.gmra.mxu0 %v1737
      %v1805 = vpop.f32.mrf.mxu0
      %v1806 = vadd.f32 %v1733, %v1805
      %v1807 = vpop.f32.mrf.mxu0
      %1808 = vdwg.mxu0
      %v1809 = vadd.f32 %v1806, %v807
      %v1810 = vsel %vm397, %v1809, -inf
      %1811 = vmax.xlane.f32.xlu0 %v1810
      %v1812 = vpop.xlane.xlu0 %1811
      %vm1813 = vcmp.eq.f32.partialorder %v1809, %v1812
      %v1814 = vsel %vm1813, %v375, 8.0
      %v1815 = vsel %vm397, %v1814, inf
      %1816 = vmin.xlane.f32.xlu0 %v1815
      %v1817 = vpop.xlane.xlu0 %1816
      %v1818 = vsub.f32 %v1809, %v1812
      %v1819 = vmul.f32 %v1818, 1.442695
      %v1820 = vpow.pop %v1819
      %v1821 = vsel %vm397, %v1820, 0.0
      %1822 = vadd.xlane.f32.xlu0 %v1821
      %v1823 = vpop.xlane.xlu0 %1822
      %vm1824 = vcmp.eq.s32.totalorder %v374, 3
      %v1825 = vsel %vm1824, %v364, 0.0
      %v1826 = vsel %vm656, %v1825, 0.0
      %1827 = vadd.xlane.f32.xlu0 %v1826
      %v1828 = vpop.xlane.xlu0 %1827
      %v1829 = vmul.f32 %v1828, %v1823
      %1830 = vset.pattern.permute.xlu0 0
      %1831 = vperm.xlu0 %1830, %v1644
      %v1832 = vpop.permute.xlu0 %1831
      %vm1833 = vcmp.eq.s32.totalorder %v374, %v1832
      %v1834 = vsel %vm1833, 1, 0
      %v1835 = vcvt.s32.f32 %v1834
      %v1836 = vmul.f32 %v362, %v1835
      %v1837 = vsel %vm497, %v1836, 0.0
      %1838 = vadd.xlane.f32.xlu0 %v1837
      %v1839 = vpop.xlane.xlu0 %1838
      %v1840 = vmul.f32 %v363, %v1835
      %v1841 = vsel %vm497, %v1840, 0.0
      %1842 = vadd.xlane.f32.xlu0 %v1841
      %v1843 = vpop.xlane.xlu0 %1842
      %v1844 = vadd.f32 %v1639, %v1829
      %vm1845 = vcmp.lt.f32.partialorder %v1844, %v1839
      %v1846 = vsel %vm1845, %v1844, %v1839
      %v1847 = vsel %vm1845, %v1817, %v1843
      %v1848 = vadd.f32 %v1847, 0.5
      %v1849 = vcvt.f32.s32.to.zero.pseudo %v1848
      %1850 = vset.pattern.permute.xlu0 0
      %1851 = vperm.xlu0 %1850, %v1849
      %v1852 = vpop.permute.xlu0 %1851
      %vm1853 = vcmp.eq.s32.totalorder %v374, %v1852
      %v1854 = vsel %vm1853, 1, 0
      %v1855 = vcvt.s32.f32 %v1854
      %v1857 = vsel %vm397, %v1855, 0
      %1859 = vmatprep.subr.mxu0 0.0
      %1860 = vmatpush1.msra.mxu0 0.0
      %1861 = vmatprep.subr.mxu0 0.0
      %1862 = vmatpush1.msra.mxu0 0.0
      %1863 = vmatprep.subr.mxu0 0.0
      %1864 = vmatpush1.msra.mxu0 0.0
      %1865 = vmatprep.subr.mxu0 0.0
      %1866 = vmatpush1.msra.mxu0 0.0
      %1867 = vmatprep.subr.mxu0 0.0
      %1868 = vmatpush1.msra.mxu0 0.0
      %1869 = vmatprep.subr.mxu0 0.0
      %1870 = vmatpush1.msra.mxu0 0.0
      %1871 = vmatprep.subr.mxu0 0.0
      %1872 = vmatpush1.msra.mxu0 0.0
      %1873 = vmatprep.subr.mxu0 0.0
      %1874 = vmatpush1.msra.mxu0 0.0
      %1875 = vmatprep.subr.mxu0 0.0
      %1876 = vmatpush1.msra.mxu0 0.0
      %1877 = vmatprep.subr.mxu0 0.0
      %1878 = vmatpush1.msra.mxu0 0.0
      %1879 = vmatprep.subr.mxu0 0.0
      %1880 = vmatpush1.msra.mxu0 0.0
      %1881 = vmatprep.subr.mxu0 0.0
      %1882 = vmatpush1.msra.mxu0 0.0
      %1883 = vmatprep.subr.mxu0 0.0
      %1884 = vmatpush1.msra.mxu0 0.0
      %1885 = vmatprep.subr.mxu0 0.0
      %1886 = vmatpush1.msra.mxu0 0.0
      %1887 = vmatprep.subr.mxu0 0.0
      %1888 = vmatpush1.msra.mxu0 0.0
      %1889 = vmatprep.subr.mxu0 0.0
      %1890 = vmatpush1.msra.mxu0 %v365
      %1891 = vmatprep.subr.mxu0 0.0
      %1892 = vmatpush2.msra.mxu0 0.0
      %1893 = vmatprep.subr.mxu0 0.0
      %1894 = vmatpush2.msra.mxu0 0.0
      %1895 = vmatprep.subr.mxu0 0.0
      %1896 = vmatpush2.msra.mxu0 0.0
      %1897 = vmatprep.subr.mxu0 0.0
      %1898 = vmatpush2.msra.mxu0 0.0
      %1899 = vmatprep.subr.mxu0 0.0
      %1900 = vmatpush2.msra.mxu0 0.0
      %1901 = vmatprep.subr.mxu0 0.0
      %1902 = vmatpush2.msra.mxu0 0.0
      %1903 = vmatprep.subr.mxu0 0.0
      %1904 = vmatpush2.msra.mxu0 0.0
      %1905 = vmatprep.subr.mxu0 0.0
      %1906 = vmatpush2.msra.mxu0 0.0
      %1907 = vmatprep.subr.mxu0 0.0
      %1908 = vmatpush2.msra.mxu0 0.0
      %1909 = vmatprep.subr.mxu0 0.0
      %1910 = vmatpush2.msra.mxu0 0.0
      %1911 = vmatprep.subr.mxu0 0.0
      %1912 = vmatpush2.msra.mxu0 0.0
      %1913 = vmatprep.subr.mxu0 0.0
      %1914 = vmatpush2.msra.mxu0 0.0
      %1915 = vmatprep.subr.mxu0 0.0
      %1916 = vmatpush2.msra.mxu0 0.0
      %1917 = vmatprep.subr.mxu0 0.0
      %1918 = vmatpush2.msra.mxu0 0.0
      %1919 = vmatprep.subr.mxu0 0.0
      %1920 = vmatpush2.msra.mxu0 0.0
      %1921 = vmatprep.subr.mxu0 0.0
      %1922 = vmatpush2.msra.mxu0 0.0
      %1923 = vmatprep.mubr.f32.mxu0 0.0
      %1924 = vmatmul.mubr.f32.gmra.mxu0 %v1857
      %v1925 = vpop.f32.mrf.mxu0
      %v1926 = vadd.f32 0.0, %v1925
      %v1927 = vpop.f32.mrf.mxu0
      %1928 = vdwg.mxu0
      %v1929 = vmul.f32 %v1926, 0.6
      %1931 = vset.pattern.permute.xlu0 0
      %1932 = vperm.xlu0 %1931, %v1846
      %v1933 = vpop.permute.xlu0 %1932
      %v1935 = vmul.f32 %v476, %v1933
      %v1936 = vadd.f32 %v1935, %v483
      %v1937 = vmul.f32 %v1936, 0.4
      %v1938 = vadd.f32 %v1929, %v1937
      %vm1939 = vcmp.ge.f32.partialorder %v1846, 0.0
      %v1940 = vsel %vm1939, 1, 0
      %v1941 = vcvt.s32.f32 %v1940
      %1943 = vset.pattern.permute.xlu0 0
      %1944 = vperm.xlu0 %1943, %v1941
      %v1945 = vpop.permute.xlu0 %1944
      %v1947 = vmul.f32 %v1938, %v1945
      %v1948 = vadd.f32 %v1635, %v1947
      %v1949 = vsub.f32 %v1636, %v1947
      %v1950 = vsel %vm1845, 1, 0
      %1951 = vset.pattern.permute.xlu0 0
      %1952 = vperm.xlu0 %1951, %v1950
      %v1953 = vpop.permute.xlu0 %1952
      %vm1954 = vcmp.eq.s32.totalorder %v1953, 1
      %v1955 = vsel %vm1954, %v1636, %v1949
      %v1956 = vsel %vm1845, %v1637, %v1644
      %v1957 = vadd.s32 %v1638, 1
      %vm1958 = vcmp.lt.f32.partialorder %v1846, 0.0
      %vm1959 = vcmp.ge.s32.totalorder %v1957, 16
      %vm1960 = vmor %vm1958, %vm1959
      %v1961 = vsel %vm1960, 1, 0
      %vm1962 = vcmp.gt.s32.totalorder %v1640, %v1961
      %v1963 = vsel %vm1962, %v1640, %v1961
      %1964 = vset.pattern.permute.xlu0 0
      %1965 = vperm.xlu0 %1964, %v1638
      %v1966 = vpop.permute.xlu0 %1965
      %vm1967 = vcmp.eq.s32.totalorder %v374, %v1966
      %v1968 = vsel %vm1643, 1, 0
      %1969 = vset.pattern.permute.xlu0 0
      %1970 = vperm.xlu0 %1969, %v1968
      %v1971 = vpop.permute.xlu0 %1970
      %vm1972 = vcmp.eq.s32.totalorder %v1971, 1
      %vm1973 = vmand %vm1967, %vm1972
      %v1974 = vsel %vm1973, %v1933, %v1628
      %1976 = vset.pattern.permute.xlu0 0
      %1977 = vperm.xlu0 %1976, %v1847
      %v1978 = vpop.permute.xlu0 %1977
      %v1980 = vsel %vm1973, %v1978, %v1634
      %v1981 = vsel %vm1972, %v1948, %v1635
      %v1982 = vsel %vm1972, %v1955, %v1636
      %v1983 = vsel %vm1643, %v1956, %v1637
      %v1984 = vsel %vm1643, %v1957, %v1638
      %v1985 = vsel %vm1643, %v1846, %v1639
      %v1986 = vsel %vm1643, %v1963, %v1640
      %vm1987 = vcmp.eq.s32.totalorder %v1986, 0
      %vm1988 = vcmp.lt.s32.totalorder %v1983, 5
      %vm1989 = vmand %vm1987, %vm1988
      %v1990 = vadd.s32 %v1983, 1
      %v1991 = vcvt.s32.f32 %v1990
      %v1992 = vsub.f32 %v500, %v1991
      %v1993 = vmax.f32 %v1992, 1.0
      %v1994 = vcvt.s32.f32 %v1984
      %1996 = vset.pattern.permute.xlu0 0
      %1997 = vperm.xlu0 %1996, %v1994
      %v1998 = vpop.permute.xlu0 %1997
      %v2000 = vrcp.pop %v1998
      %v2001 = vmul.f32 %v1981, %v2000
      %2003 = vset.pattern.permute.xlu0 0
      %2004 = vperm.xlu0 %2003, %v1993
      %v2005 = vpop.permute.xlu0 %2004
      %v2007 = vrcp.pop %v2005
      %v2008 = vmul.f32 %v1982, %v2007
      %v2010 = vsel %vm656, %v2008, 0
      %2012 = vmatprep.subr.mxu0 0.0
      %2013 = vmatpush1.msra.mxu0 0.0
      %2014 = vmatprep.subr.mxu0 0.0
      %2015 = vmatpush1.msra.mxu0 0.0
      %2016 = vmatprep.subr.mxu0 0.0
      %2017 = vmatpush1.msra.mxu0 0.0
      %2018 = vmatprep.subr.mxu0 0.0
      %2019 = vmatpush1.msra.mxu0 0.0
      %2020 = vmatprep.subr.mxu0 0.0
      %2021 = vmatpush1.msra.mxu0 0.0
      %2022 = vmatprep.subr.mxu0 0.0
      %2023 = vmatpush1.msra.mxu0 0.0
      %2024 = vmatprep.subr.mxu0 0.0
      %2025 = vmatpush1.msra.mxu0 0.0
      %2026 = vmatprep.subr.mxu0 0.0
      %2027 = vmatpush1.msra.mxu0 0.0
      %2028 = vmatprep.subr.mxu0 0.0
      %2029 = vmatpush1.msra.mxu0 0.0
      %2030 = vmatprep.subr.mxu0 0.0
      %2031 = vmatpush1.msra.mxu0 0.0
      %2032 = vmatprep.subr.mxu0 0.0
      %2033 = vmatpush1.msra.mxu0 0.0
      %2034 = vmatprep.subr.mxu0 0.0
      %2035 = vmatpush1.msra.mxu0 0.0
      %2036 = vmatprep.subr.mxu0 0.0
      %2037 = vmatpush1.msra.mxu0 0.0
      %2038 = vmatprep.subr.mxu0 0.0
      %2039 = vmatpush1.msra.mxu0 0.0
      %2040 = vmatprep.subr.mxu0 0.0
      %2041 = vmatpush1.msra.mxu0 %v371
      %2042 = vmatprep.subr.mxu0 0.0
      %2043 = vmatpush1.msra.mxu0 %v370
      %2044 = vmatprep.subr.mxu0 0.0
      %2045 = vmatpush2.msra.mxu0 0.0
      %2046 = vmatprep.subr.mxu0 0.0
      %2047 = vmatpush2.msra.mxu0 0.0
      %2048 = vmatprep.subr.mxu0 0.0
      %2049 = vmatpush2.msra.mxu0 0.0
      %2050 = vmatprep.subr.mxu0 0.0
      %2051 = vmatpush2.msra.mxu0 0.0
      %2052 = vmatprep.subr.mxu0 0.0
      %2053 = vmatpush2.msra.mxu0 0.0
      %2054 = vmatprep.subr.mxu0 0.0
      %2055 = vmatpush2.msra.mxu0 0.0
      %2056 = vmatprep.subr.mxu0 0.0
      %2057 = vmatpush2.msra.mxu0 0.0
      %2058 = vmatprep.subr.mxu0 0.0
      %2059 = vmatpush2.msra.mxu0 0.0
      %2060 = vmatprep.subr.mxu0 0.0
      %2061 = vmatpush2.msra.mxu0 0.0
      %2062 = vmatprep.subr.mxu0 0.0
      %2063 = vmatpush2.msra.mxu0 0.0
      %2064 = vmatprep.subr.mxu0 0.0
      %2065 = vmatpush2.msra.mxu0 0.0
      %2066 = vmatprep.subr.mxu0 0.0
      %2067 = vmatpush2.msra.mxu0 0.0
      %2068 = vmatprep.subr.mxu0 0.0
      %2069 = vmatpush2.msra.mxu0 0.0
      %2070 = vmatprep.subr.mxu0 0.0
      %2071 = vmatpush2.msra.mxu0 0.0
      %2072 = vmatprep.subr.mxu0 0.0
      %2073 = vmatpush2.msra.mxu0 0.0
      %2074 = vmatprep.subr.mxu0 0.0
      %2075 = vmatpush2.msra.mxu0 0.0
      %2076 = vmatprep.mubr.f32.mxu0 0.0
      %2077 = vmatmul.mubr.f32.gmra.mxu0 %v2010
      %v2078 = vpop.f32.mrf.mxu0
      %v2079 = vadd.f32 0.0, %v2078
      %v2080 = vpop.f32.mrf.mxu0
      %2081 = vdwg.mxu0
      %v2083 = vsel %vm656, %v2001, 0
      %2085 = vmatprep.subr.mxu0 0.0
      %2086 = vmatpush1.msra.mxu0 0.0
      %2087 = vmatprep.subr.mxu0 0.0
      %2088 = vmatpush1.msra.mxu0 0.0
      %2089 = vmatprep.subr.mxu0 0.0
      %2090 = vmatpush1.msra.mxu0 0.0
      %2091 = vmatprep.subr.mxu0 0.0
      %2092 = vmatpush1.msra.mxu0 0.0
      %2093 = vmatprep.subr.mxu0 0.0
      %2094 = vmatpush1.msra.mxu0 0.0
      %2095 = vmatprep.subr.mxu0 0.0
      %2096 = vmatpush1.msra.mxu0 0.0
      %2097 = vmatprep.subr.mxu0 0.0
      %2098 = vmatpush1.msra.mxu0 0.0
      %2099 = vmatprep.subr.mxu0 0.0
      %2100 = vmatpush1.msra.mxu0 0.0
      %2101 = vmatprep.subr.mxu0 0.0
      %2102 = vmatpush1.msra.mxu0 0.0
      %2103 = vmatprep.subr.mxu0 0.0
      %2104 = vmatpush1.msra.mxu0 0.0
      %2105 = vmatprep.subr.mxu0 0.0
      %2106 = vmatpush1.msra.mxu0 0.0
      %2107 = vmatprep.subr.mxu0 0.0
      %2108 = vmatpush1.msra.mxu0 0.0
      %2109 = vmatprep.subr.mxu0 0.0
      %2110 = vmatpush1.msra.mxu0 0.0
      %2111 = vmatprep.subr.mxu0 0.0
      %2112 = vmatpush1.msra.mxu0 0.0
      %2113 = vmatprep.subr.mxu0 0.0
      %2114 = vmatpush1.msra.mxu0 %v369
      %2115 = vmatprep.subr.mxu0 0.0
      %2116 = vmatpush1.msra.mxu0 %v368
      %2117 = vmatprep.subr.mxu0 0.0
      %2118 = vmatpush2.msra.mxu0 0.0
      %2119 = vmatprep.subr.mxu0 0.0
      %2120 = vmatpush2.msra.mxu0 0.0
      %2121 = vmatprep.subr.mxu0 0.0
      %2122 = vmatpush2.msra.mxu0 0.0
      %2123 = vmatprep.subr.mxu0 0.0
      %2124 = vmatpush2.msra.mxu0 0.0
      %2125 = vmatprep.subr.mxu0 0.0
      %2126 = vmatpush2.msra.mxu0 0.0
      %2127 = vmatprep.subr.mxu0 0.0
      %2128 = vmatpush2.msra.mxu0 0.0
      %2129 = vmatprep.subr.mxu0 0.0
      %2130 = vmatpush2.msra.mxu0 0.0
      %2131 = vmatprep.subr.mxu0 0.0
      %2132 = vmatpush2.msra.mxu0 0.0
      %2133 = vmatprep.subr.mxu0 0.0
      %2134 = vmatpush2.msra.mxu0 0.0
      %2135 = vmatprep.subr.mxu0 0.0
      %2136 = vmatpush2.msra.mxu0 0.0
      %2137 = vmatprep.subr.mxu0 0.0
      %2138 = vmatpush2.msra.mxu0 0.0
      %2139 = vmatprep.subr.mxu0 0.0
      %2140 = vmatpush2.msra.mxu0 0.0
      %2141 = vmatprep.subr.mxu0 0.0
      %2142 = vmatpush2.msra.mxu0 0.0
      %2143 = vmatprep.subr.mxu0 0.0
      %2144 = vmatpush2.msra.mxu0 0.0
      %2145 = vmatprep.subr.mxu0 0.0
      %2146 = vmatpush2.msra.mxu0 0.0
      %2147 = vmatprep.subr.mxu0 0.0
      %2148 = vmatpush2.msra.mxu0 0.0
      %2149 = vmatprep.mubr.f32.mxu0 0.0
      %2150 = vmatmul.mubr.f32.gmra.mxu0 %v2083
      %v2151 = vpop.f32.mrf.mxu0
      %v2152 = vadd.f32 %v2079, %v2151
      %v2153 = vpop.f32.mrf.mxu0
      %2154 = vdwg.mxu0
      %v2155 = vadd.f32 %v2152, %v807
      %v2156 = vsel %vm397, %v2155, -inf
      %2157 = vmax.xlane.f32.xlu0 %v2156
      %v2158 = vpop.xlane.xlu0 %2157
      %vm2159 = vcmp.eq.f32.partialorder %v2155, %v2158
      %v2160 = vsel %vm2159, %v375, 8.0
      %v2161 = vsel %vm397, %v2160, inf
      %2162 = vmin.xlane.f32.xlu0 %v2161
      %v2163 = vpop.xlane.xlu0 %2162
      %v2164 = vsub.f32 %v2155, %v2158
      %v2165 = vmul.f32 %v2164, 1.442695
      %v2166 = vpow.pop %v2165
      %v2167 = vsel %vm397, %v2166, 0.0
      %2168 = vadd.xlane.f32.xlu0 %v2167
      %v2169 = vpop.xlane.xlu0 %2168
      %vm2170 = vcmp.eq.s32.totalorder %v374, 4
      %v2171 = vsel %vm2170, %v364, 0.0
      %v2172 = vsel %vm656, %v2171, 0.0
      %2173 = vadd.xlane.f32.xlu0 %v2172
      %v2174 = vpop.xlane.xlu0 %2173
      %v2175 = vmul.f32 %v2174, %v2169
      %2176 = vset.pattern.permute.xlu0 0
      %2177 = vperm.xlu0 %2176, %v1990
      %v2178 = vpop.permute.xlu0 %2177
      %vm2179 = vcmp.eq.s32.totalorder %v374, %v2178
      %v2180 = vsel %vm2179, 1, 0
      %v2181 = vcvt.s32.f32 %v2180
      %v2182 = vmul.f32 %v362, %v2181
      %v2183 = vsel %vm497, %v2182, 0.0
      %2184 = vadd.xlane.f32.xlu0 %v2183
      %v2185 = vpop.xlane.xlu0 %2184
      %v2186 = vmul.f32 %v363, %v2181
      %v2187 = vsel %vm497, %v2186, 0.0
      %2188 = vadd.xlane.f32.xlu0 %v2187
      %v2189 = vpop.xlane.xlu0 %2188
      %v2190 = vadd.f32 %v1985, %v2175
      %vm2191 = vcmp.lt.f32.partialorder %v2190, %v2185
      %v2192 = vsel %vm2191, %v2190, %v2185
      %v2193 = vsel %vm2191, %v2163, %v2189
      %v2194 = vadd.f32 %v2193, 0.5
      %v2195 = vcvt.f32.s32.to.zero.pseudo %v2194
      %2196 = vset.pattern.permute.xlu0 0
      %2197 = vperm.xlu0 %2196, %v2195
      %v2198 = vpop.permute.xlu0 %2197
      %vm2199 = vcmp.eq.s32.totalorder %v374, %v2198
      %v2200 = vsel %vm2199, 1, 0
      %v2201 = vcvt.s32.f32 %v2200
      %v2203 = vsel %vm397, %v2201, 0
      %2205 = vmatprep.subr.mxu0 0.0
      %2206 = vmatpush1.msra.mxu0 0.0
      %2207 = vmatprep.subr.mxu0 0.0
      %2208 = vmatpush1.msra.mxu0 0.0
      %2209 = vmatprep.subr.mxu0 0.0
      %2210 = vmatpush1.msra.mxu0 0.0
      %2211 = vmatprep.subr.mxu0 0.0
      %2212 = vmatpush1.msra.mxu0 0.0
      %2213 = vmatprep.subr.mxu0 0.0
      %2214 = vmatpush1.msra.mxu0 0.0
      %2215 = vmatprep.subr.mxu0 0.0
      %2216 = vmatpush1.msra.mxu0 0.0
      %2217 = vmatprep.subr.mxu0 0.0
      %2218 = vmatpush1.msra.mxu0 0.0
      %2219 = vmatprep.subr.mxu0 0.0
      %2220 = vmatpush1.msra.mxu0 0.0
      %2221 = vmatprep.subr.mxu0 0.0
      %2222 = vmatpush1.msra.mxu0 0.0
      %2223 = vmatprep.subr.mxu0 0.0
      %2224 = vmatpush1.msra.mxu0 0.0
      %2225 = vmatprep.subr.mxu0 0.0
      %2226 = vmatpush1.msra.mxu0 0.0
      %2227 = vmatprep.subr.mxu0 0.0
      %2228 = vmatpush1.msra.mxu0 0.0
      %2229 = vmatprep.subr.mxu0 0.0
      %2230 = vmatpush1.msra.mxu0 0.0
      %2231 = vmatprep.subr.mxu0 0.0
      %2232 = vmatpush1.msra.mxu0 0.0
      %2233 = vmatprep.subr.mxu0 0.0
      %2234 = vmatpush1.msra.mxu0 0.0
      %2235 = vmatprep.subr.mxu0 0.0
      %2236 = vmatpush1.msra.mxu0 %v365
      %2237 = vmatprep.subr.mxu0 0.0
      %2238 = vmatpush2.msra.mxu0 0.0
      %2239 = vmatprep.subr.mxu0 0.0
      %2240 = vmatpush2.msra.mxu0 0.0
      %2241 = vmatprep.subr.mxu0 0.0
      %2242 = vmatpush2.msra.mxu0 0.0
      %2243 = vmatprep.subr.mxu0 0.0
      %2244 = vmatpush2.msra.mxu0 0.0
      %2245 = vmatprep.subr.mxu0 0.0
      %2246 = vmatpush2.msra.mxu0 0.0
      %2247 = vmatprep.subr.mxu0 0.0
      %2248 = vmatpush2.msra.mxu0 0.0
      %2249 = vmatprep.subr.mxu0 0.0
      %2250 = vmatpush2.msra.mxu0 0.0
      %2251 = vmatprep.subr.mxu0 0.0
      %2252 = vmatpush2.msra.mxu0 0.0
      %2253 = vmatprep.subr.mxu0 0.0
      %2254 = vmatpush2.msra.mxu0 0.0
      %2255 = vmatprep.subr.mxu0 0.0
      %2256 = vmatpush2.msra.mxu0 0.0
      %2257 = vmatprep.subr.mxu0 0.0
      %2258 = vmatpush2.msra.mxu0 0.0
      %2259 = vmatprep.subr.mxu0 0.0
      %2260 = vmatpush2.msra.mxu0 0.0
      %2261 = vmatprep.subr.mxu0 0.0
      %2262 = vmatpush2.msra.mxu0 0.0
      %2263 = vmatprep.subr.mxu0 0.0
      %2264 = vmatpush2.msra.mxu0 0.0
      %2265 = vmatprep.subr.mxu0 0.0
      %2266 = vmatpush2.msra.mxu0 0.0
      %2267 = vmatprep.subr.mxu0 0.0
      %2268 = vmatpush2.msra.mxu0 0.0
      %2269 = vmatprep.mubr.f32.mxu0 0.0
      %2270 = vmatmul.mubr.f32.gmra.mxu0 %v2203
      %v2271 = vpop.f32.mrf.mxu0
      %v2272 = vadd.f32 0.0, %v2271
      %v2273 = vpop.f32.mrf.mxu0
      %2274 = vdwg.mxu0
      %v2275 = vmul.f32 %v2272, 0.6
      %2277 = vset.pattern.permute.xlu0 0
      %2278 = vperm.xlu0 %2277, %v2192
      %v2279 = vpop.permute.xlu0 %2278
      %v2281 = vmul.f32 %v476, %v2279
      %v2282 = vadd.f32 %v2281, %v483
      %v2283 = vmul.f32 %v2282, 0.4
      %v2284 = vadd.f32 %v2275, %v2283
      %vm2285 = vcmp.ge.f32.partialorder %v2192, 0.0
      %v2286 = vsel %vm2285, 1, 0
      %v2287 = vcvt.s32.f32 %v2286
      %2289 = vset.pattern.permute.xlu0 0
      %2290 = vperm.xlu0 %2289, %v2287
      %v2291 = vpop.permute.xlu0 %2290
      %v2293 = vmul.f32 %v2284, %v2291
      %v2294 = vadd.f32 %v1981, %v2293
      %v2295 = vsub.f32 %v1982, %v2293
      %v2296 = vsel %vm2191, 1, 0
      %2297 = vset.pattern.permute.xlu0 0
      %2298 = vperm.xlu0 %2297, %v2296
      %v2299 = vpop.permute.xlu0 %2298
      %vm2300 = vcmp.eq.s32.totalorder %v2299, 1
      %v2301 = vsel %vm2300, %v1982, %v2295
      %v2302 = vsel %vm2191, %v1983, %v1990
      %v2303 = vadd.s32 %v1984, 1
      %vm2304 = vcmp.lt.f32.partialorder %v2192, 0.0
      %vm2305 = vcmp.ge.s32.totalorder %v2303, 16
      %vm2306 = vmor %vm2304, %vm2305
      %v2307 = vsel %vm2306, 1, 0
      %vm2308 = vcmp.gt.s32.totalorder %v1986, %v2307
      %v2309 = vsel %vm2308, %v1986, %v2307
      %2310 = vset.pattern.permute.xlu0 0
      %2311 = vperm.xlu0 %2310, %v1984
      %v2312 = vpop.permute.xlu0 %2311
      %vm2313 = vcmp.eq.s32.totalorder %v374, %v2312
      %v2314 = vsel %vm1989, 1, 0
      %2315 = vset.pattern.permute.xlu0 0
      %2316 = vperm.xlu0 %2315, %v2314
      %v2317 = vpop.permute.xlu0 %2316
      %vm2318 = vcmp.eq.s32.totalorder %v2317, 1
      %vm2319 = vmand %vm2313, %vm2318
      %v2320 = vsel %vm2319, %v2279, %v1974
      %2322 = vset.pattern.permute.xlu0 0
      %2323 = vperm.xlu0 %2322, %v2193
      %v2324 = vpop.permute.xlu0 %2323
      %v2326 = vsel %vm2319, %v2324, %v1980
      %v2327 = vsel %vm2318, %v2294, %v1981
      %v2328 = vsel %vm2318, %v2301, %v1982
      %v2329 = vsel %vm1989, %v2302, %v1983
      %v2330 = vsel %vm1989, %v2303, %v1984
      %v2331 = vsel %vm1989, %v2192, %v1985
      %v2332 = vsel %vm1989, %v2309, %v1986
      %vm2333 = vcmp.eq.s32.totalorder %v2332, 0
      %vm2334 = vcmp.lt.s32.totalorder %v2329, 5
      %vm2335 = vmand %vm2333, %vm2334
      %v2336 = vadd.s32 %v2329, 1
      %v2337 = vcvt.s32.f32 %v2336
      %v2338 = vsub.f32 %v500, %v2337
      %v2339 = vmax.f32 %v2338, 1.0
      %v2340 = vcvt.s32.f32 %v2330
      %2342 = vset.pattern.permute.xlu0 0
      %2343 = vperm.xlu0 %2342, %v2340
      %v2344 = vpop.permute.xlu0 %2343
      %v2346 = vrcp.pop %v2344
      %v2347 = vmul.f32 %v2327, %v2346
      %2349 = vset.pattern.permute.xlu0 0
      %2350 = vperm.xlu0 %2349, %v2339
      %v2351 = vpop.permute.xlu0 %2350
      %v2353 = vrcp.pop %v2351
      %v2354 = vmul.f32 %v2328, %v2353
      %v2356 = vsel %vm656, %v2354, 0
      %2358 = vmatprep.subr.mxu0 0.0
      %2359 = vmatpush1.msra.mxu0 0.0
      %2360 = vmatprep.subr.mxu0 0.0
      %2361 = vmatpush1.msra.mxu0 0.0
      %2362 = vmatprep.subr.mxu0 0.0
      %2363 = vmatpush1.msra.mxu0 0.0
      %2364 = vmatprep.subr.mxu0 0.0
      %2365 = vmatpush1.msra.mxu0 0.0
      %2366 = vmatprep.subr.mxu0 0.0
      %2367 = vmatpush1.msra.mxu0 0.0
      %2368 = vmatprep.subr.mxu0 0.0
      %2369 = vmatpush1.msra.mxu0 0.0
      %2370 = vmatprep.subr.mxu0 0.0
      %2371 = vmatpush1.msra.mxu0 0.0
      %2372 = vmatprep.subr.mxu0 0.0
      %2373 = vmatpush1.msra.mxu0 0.0
      %2374 = vmatprep.subr.mxu0 0.0
      %2375 = vmatpush1.msra.mxu0 0.0
      %2376 = vmatprep.subr.mxu0 0.0
      %2377 = vmatpush1.msra.mxu0 0.0
      %2378 = vmatprep.subr.mxu0 0.0
      %2379 = vmatpush1.msra.mxu0 0.0
      %2380 = vmatprep.subr.mxu0 0.0
      %2381 = vmatpush1.msra.mxu0 0.0
      %2382 = vmatprep.subr.mxu0 0.0
      %2383 = vmatpush1.msra.mxu0 0.0
      %2384 = vmatprep.subr.mxu0 0.0
      %2385 = vmatpush1.msra.mxu0 0.0
      %2386 = vmatprep.subr.mxu0 0.0
      %2387 = vmatpush1.msra.mxu0 %v371
      %2388 = vmatprep.subr.mxu0 0.0
      %2389 = vmatpush1.msra.mxu0 %v370
      %2390 = vmatprep.subr.mxu0 0.0
      %2391 = vmatpush2.msra.mxu0 0.0
      %2392 = vmatprep.subr.mxu0 0.0
      %2393 = vmatpush2.msra.mxu0 0.0
      %2394 = vmatprep.subr.mxu0 0.0
      %2395 = vmatpush2.msra.mxu0 0.0
      %2396 = vmatprep.subr.mxu0 0.0
      %2397 = vmatpush2.msra.mxu0 0.0
      %2398 = vmatprep.subr.mxu0 0.0
      %2399 = vmatpush2.msra.mxu0 0.0
      %2400 = vmatprep.subr.mxu0 0.0
      %2401 = vmatpush2.msra.mxu0 0.0
      %2402 = vmatprep.subr.mxu0 0.0
      %2403 = vmatpush2.msra.mxu0 0.0
      %2404 = vmatprep.subr.mxu0 0.0
      %2405 = vmatpush2.msra.mxu0 0.0
      %2406 = vmatprep.subr.mxu0 0.0
      %2407 = vmatpush2.msra.mxu0 0.0
      %2408 = vmatprep.subr.mxu0 0.0
      %2409 = vmatpush2.msra.mxu0 0.0
      %2410 = vmatprep.subr.mxu0 0.0
      %2411 = vmatpush2.msra.mxu0 0.0
      %2412 = vmatprep.subr.mxu0 0.0
      %2413 = vmatpush2.msra.mxu0 0.0
      %2414 = vmatprep.subr.mxu0 0.0
      %2415 = vmatpush2.msra.mxu0 0.0
      %2416 = vmatprep.subr.mxu0 0.0
      %2417 = vmatpush2.msra.mxu0 0.0
      %2418 = vmatprep.subr.mxu0 0.0
      %2419 = vmatpush2.msra.mxu0 0.0
      %2420 = vmatprep.subr.mxu0 0.0
      %2421 = vmatpush2.msra.mxu0 0.0
      %2422 = vmatprep.mubr.f32.mxu0 0.0
      %2423 = vmatmul.mubr.f32.gmra.mxu0 %v2356
      %v2424 = vpop.f32.mrf.mxu0
      %v2425 = vadd.f32 0.0, %v2424
      %v2426 = vpop.f32.mrf.mxu0
      %2427 = vdwg.mxu0
      %v2429 = vsel %vm656, %v2347, 0
      %2431 = vmatprep.subr.mxu0 0.0
      %2432 = vmatpush1.msra.mxu0 0.0
      %2433 = vmatprep.subr.mxu0 0.0
      %2434 = vmatpush1.msra.mxu0 0.0
      %2435 = vmatprep.subr.mxu0 0.0
      %2436 = vmatpush1.msra.mxu0 0.0
      %2437 = vmatprep.subr.mxu0 0.0
      %2438 = vmatpush1.msra.mxu0 0.0
      %2439 = vmatprep.subr.mxu0 0.0
      %2440 = vmatpush1.msra.mxu0 0.0
      %2441 = vmatprep.subr.mxu0 0.0
      %2442 = vmatpush1.msra.mxu0 0.0
      %2443 = vmatprep.subr.mxu0 0.0
      %2444 = vmatpush1.msra.mxu0 0.0
      %2445 = vmatprep.subr.mxu0 0.0
      %2446 = vmatpush1.msra.mxu0 0.0
      %2447 = vmatprep.subr.mxu0 0.0
      %2448 = vmatpush1.msra.mxu0 0.0
      %2449 = vmatprep.subr.mxu0 0.0
      %2450 = vmatpush1.msra.mxu0 0.0
      %2451 = vmatprep.subr.mxu0 0.0
      %2452 = vmatpush1.msra.mxu0 0.0
      %2453 = vmatprep.subr.mxu0 0.0
      %2454 = vmatpush1.msra.mxu0 0.0
      %2455 = vmatprep.subr.mxu0 0.0
      %2456 = vmatpush1.msra.mxu0 0.0
      %2457 = vmatprep.subr.mxu0 0.0
      %2458 = vmatpush1.msra.mxu0 0.0
      %2459 = vmatprep.subr.mxu0 0.0
      %2460 = vmatpush1.msra.mxu0 %v369
      %2461 = vmatprep.subr.mxu0 0.0
      %2462 = vmatpush1.msra.mxu0 %v368
      %2463 = vmatprep.subr.mxu0 0.0
      %2464 = vmatpush2.msra.mxu0 0.0
      %2465 = vmatprep.subr.mxu0 0.0
      %2466 = vmatpush2.msra.mxu0 0.0
      %2467 = vmatprep.subr.mxu0 0.0
      %2468 = vmatpush2.msra.mxu0 0.0
      %2469 = vmatprep.subr.mxu0 0.0
      %2470 = vmatpush2.msra.mxu0 0.0
      %2471 = vmatprep.subr.mxu0 0.0
      %2472 = vmatpush2.msra.mxu0 0.0
      %2473 = vmatprep.subr.mxu0 0.0
      %2474 = vmatpush2.msra.mxu0 0.0
      %2475 = vmatprep.subr.mxu0 0.0
      %2476 = vmatpush2.msra.mxu0 0.0
      %2477 = vmatprep.subr.mxu0 0.0
      %2478 = vmatpush2.msra.mxu0 0.0
      %2479 = vmatprep.subr.mxu0 0.0
      %2480 = vmatpush2.msra.mxu0 0.0
      %2481 = vmatprep.subr.mxu0 0.0
      %2482 = vmatpush2.msra.mxu0 0.0
      %2483 = vmatprep.subr.mxu0 0.0
      %2484 = vmatpush2.msra.mxu0 0.0
      %2485 = vmatprep.subr.mxu0 0.0
      %2486 = vmatpush2.msra.mxu0 0.0
      %2487 = vmatprep.subr.mxu0 0.0
      %2488 = vmatpush2.msra.mxu0 0.0
      %2489 = vmatprep.subr.mxu0 0.0
      %2490 = vmatpush2.msra.mxu0 0.0
      %2491 = vmatprep.subr.mxu0 0.0
      %2492 = vmatpush2.msra.mxu0 0.0
      %2493 = vmatprep.subr.mxu0 0.0
      %2494 = vmatpush2.msra.mxu0 0.0
      %2495 = vmatprep.mubr.f32.mxu0 0.0
      %2496 = vmatmul.mubr.f32.gmra.mxu0 %v2429
      %v2497 = vpop.f32.mrf.mxu0
      %v2498 = vadd.f32 %v2425, %v2497
      %v2499 = vpop.f32.mrf.mxu0
      %2500 = vdwg.mxu0
      %v2501 = vadd.f32 %v2498, %v807
      %v2502 = vsel %vm397, %v2501, -inf
      %2503 = vmax.xlane.f32.xlu0 %v2502
      %v2504 = vpop.xlane.xlu0 %2503
      %vm2505 = vcmp.eq.f32.partialorder %v2501, %v2504
      %v2506 = vsel %vm2505, %v375, 8.0
      %v2507 = vsel %vm397, %v2506, inf
      %2508 = vmin.xlane.f32.xlu0 %v2507
      %v2509 = vpop.xlane.xlu0 %2508
      %v2510 = vsub.f32 %v2501, %v2504
      %v2511 = vmul.f32 %v2510, 1.442695
      %v2512 = vpow.pop %v2511
      %v2513 = vsel %vm397, %v2512, 0.0
      %2514 = vadd.xlane.f32.xlu0 %v2513
      %v2515 = vpop.xlane.xlu0 %2514
      %vm2516 = vcmp.eq.s32.totalorder %v374, 5
      %v2517 = vsel %vm2516, %v364, 0.0
      %v2518 = vsel %vm656, %v2517, 0.0
      %2519 = vadd.xlane.f32.xlu0 %v2518
      %v2520 = vpop.xlane.xlu0 %2519
      %v2521 = vmul.f32 %v2520, %v2515
      %2522 = vset.pattern.permute.xlu0 0
      %2523 = vperm.xlu0 %2522, %v2336
      %v2524 = vpop.permute.xlu0 %2523
      %vm2525 = vcmp.eq.s32.totalorder %v374, %v2524
      %v2526 = vsel %vm2525, 1, 0
      %v2527 = vcvt.s32.f32 %v2526
      %v2528 = vmul.f32 %v362, %v2527
      %v2529 = vsel %vm497, %v2528, 0.0
      %2530 = vadd.xlane.f32.xlu0 %v2529
      %v2531 = vpop.xlane.xlu0 %2530
      %v2532 = vmul.f32 %v363, %v2527
      %v2533 = vsel %vm497, %v2532, 0.0
      %2534 = vadd.xlane.f32.xlu0 %v2533
      %v2535 = vpop.xlane.xlu0 %2534
      %v2536 = vadd.f32 %v2331, %v2521
      %vm2537 = vcmp.lt.f32.partialorder %v2536, %v2531
      %v2538 = vsel %vm2537, %v2536, %v2531
      %v2539 = vsel %vm2537, %v2509, %v2535
      %v2540 = vadd.f32 %v2539, 0.5
      %v2541 = vcvt.f32.s32.to.zero.pseudo %v2540
      %2542 = vset.pattern.permute.xlu0 0
      %2543 = vperm.xlu0 %2542, %v2541
      %v2544 = vpop.permute.xlu0 %2543
      %vm2545 = vcmp.eq.s32.totalorder %v374, %v2544
      %v2546 = vsel %vm2545, 1, 0
      %v2547 = vcvt.s32.f32 %v2546
      %v2549 = vsel %vm397, %v2547, 0
      %2551 = vmatprep.subr.mxu0 0.0
      %2552 = vmatpush1.msra.mxu0 0.0
      %2553 = vmatprep.subr.mxu0 0.0
      %2554 = vmatpush1.msra.mxu0 0.0
      %2555 = vmatprep.subr.mxu0 0.0
      %2556 = vmatpush1.msra.mxu0 0.0
      %2557 = vmatprep.subr.mxu0 0.0
      %2558 = vmatpush1.msra.mxu0 0.0
      %2559 = vmatprep.subr.mxu0 0.0
      %2560 = vmatpush1.msra.mxu0 0.0
      %2561 = vmatprep.subr.mxu0 0.0
      %2562 = vmatpush1.msra.mxu0 0.0
      %2563 = vmatprep.subr.mxu0 0.0
      %2564 = vmatpush1.msra.mxu0 0.0
      %2565 = vmatprep.subr.mxu0 0.0
      %2566 = vmatpush1.msra.mxu0 0.0
      %2567 = vmatprep.subr.mxu0 0.0
      %2568 = vmatpush1.msra.mxu0 0.0
      %2569 = vmatprep.subr.mxu0 0.0
      %2570 = vmatpush1.msra.mxu0 0.0
      %2571 = vmatprep.subr.mxu0 0.0
      %2572 = vmatpush1.msra.mxu0 0.0
      %2573 = vmatprep.subr.mxu0 0.0
      %2574 = vmatpush1.msra.mxu0 0.0
      %2575 = vmatprep.subr.mxu0 0.0
      %2576 = vmatpush1.msra.mxu0 0.0
      %2577 = vmatprep.subr.mxu0 0.0
      %2578 = vmatpush1.msra.mxu0 0.0
      %2579 = vmatprep.subr.mxu0 0.0
      %2580 = vmatpush1.msra.mxu0 0.0
      %2581 = vmatprep.subr.mxu0 0.0
      %2582 = vmatpush1.msra.mxu0 %v365
      %2583 = vmatprep.subr.mxu0 0.0
      %2584 = vmatpush2.msra.mxu0 0.0
      %2585 = vmatprep.subr.mxu0 0.0
      %2586 = vmatpush2.msra.mxu0 0.0
      %2587 = vmatprep.subr.mxu0 0.0
      %2588 = vmatpush2.msra.mxu0 0.0
      %2589 = vmatprep.subr.mxu0 0.0
      %2590 = vmatpush2.msra.mxu0 0.0
      %2591 = vmatprep.subr.mxu0 0.0
      %2592 = vmatpush2.msra.mxu0 0.0
      %2593 = vmatprep.subr.mxu0 0.0
      %2594 = vmatpush2.msra.mxu0 0.0
      %2595 = vmatprep.subr.mxu0 0.0
      %2596 = vmatpush2.msra.mxu0 0.0
      %2597 = vmatprep.subr.mxu0 0.0
      %2598 = vmatpush2.msra.mxu0 0.0
      %2599 = vmatprep.subr.mxu0 0.0
      %2600 = vmatpush2.msra.mxu0 0.0
      %2601 = vmatprep.subr.mxu0 0.0
      %2602 = vmatpush2.msra.mxu0 0.0
      %2603 = vmatprep.subr.mxu0 0.0
      %2604 = vmatpush2.msra.mxu0 0.0
      %2605 = vmatprep.subr.mxu0 0.0
      %2606 = vmatpush2.msra.mxu0 0.0
      %2607 = vmatprep.subr.mxu0 0.0
      %2608 = vmatpush2.msra.mxu0 0.0
      %2609 = vmatprep.subr.mxu0 0.0
      %2610 = vmatpush2.msra.mxu0 0.0
      %2611 = vmatprep.subr.mxu0 0.0
      %2612 = vmatpush2.msra.mxu0 0.0
      %2613 = vmatprep.subr.mxu0 0.0
      %2614 = vmatpush2.msra.mxu0 0.0
      %2615 = vmatprep.mubr.f32.mxu0 0.0
      %2616 = vmatmul.mubr.f32.gmra.mxu0 %v2549
      %v2617 = vpop.f32.mrf.mxu0
      %v2618 = vadd.f32 0.0, %v2617
      %v2619 = vpop.f32.mrf.mxu0
      %2620 = vdwg.mxu0
      %v2621 = vmul.f32 %v2618, 0.6
      %2623 = vset.pattern.permute.xlu0 0
      %2624 = vperm.xlu0 %2623, %v2538
      %v2625 = vpop.permute.xlu0 %2624
      %v2627 = vmul.f32 %v476, %v2625
      %v2628 = vadd.f32 %v2627, %v483
      %v2629 = vmul.f32 %v2628, 0.4
      %v2630 = vadd.f32 %v2621, %v2629
      %vm2631 = vcmp.ge.f32.partialorder %v2538, 0.0
      %v2632 = vsel %vm2631, 1, 0
      %v2633 = vcvt.s32.f32 %v2632
      %2635 = vset.pattern.permute.xlu0 0
      %2636 = vperm.xlu0 %2635, %v2633
      %v2637 = vpop.permute.xlu0 %2636
      %v2639 = vmul.f32 %v2630, %v2637
      %v2640 = vadd.f32 %v2327, %v2639
      %v2641 = vsub.f32 %v2328, %v2639
      %v2642 = vsel %vm2537, 1, 0
      %2643 = vset.pattern.permute.xlu0 0
      %2644 = vperm.xlu0 %2643, %v2642
      %v2645 = vpop.permute.xlu0 %2644
      %vm2646 = vcmp.eq.s32.totalorder %v2645, 1
      %v2647 = vsel %vm2646, %v2328, %v2641
      %v2648 = vsel %vm2537, %v2329, %v2336
      %v2649 = vadd.s32 %v2330, 1
      %vm2650 = vcmp.lt.f32.partialorder %v2538, 0.0
      %vm2651 = vcmp.ge.s32.totalorder %v2649, 16
      %vm2652 = vmor %vm2650, %vm2651
      %v2653 = vsel %vm2652, 1, 0
      %vm2654 = vcmp.gt.s32.totalorder %v2332, %v2653
      %v2655 = vsel %vm2654, %v2332, %v2653
      %2656 = vset.pattern.permute.xlu0 0
      %2657 = vperm.xlu0 %2656, %v2330
      %v2658 = vpop.permute.xlu0 %2657
      %vm2659 = vcmp.eq.s32.totalorder %v374, %v2658
      %v2660 = vsel %vm2335, 1, 0
      %2661 = vset.pattern.permute.xlu0 0
      %2662 = vperm.xlu0 %2661, %v2660
      %v2663 = vpop.permute.xlu0 %2662
      %vm2664 = vcmp.eq.s32.totalorder %v2663, 1
      %vm2665 = vmand %vm2659, %vm2664
      %v2666 = vsel %vm2665, %v2625, %v2320
      %2668 = vset.pattern.permute.xlu0 0
      %2669 = vperm.xlu0 %2668, %v2539
      %v2670 = vpop.permute.xlu0 %2669
      %v2672 = vsel %vm2665, %v2670, %v2326
      %v2673 = vsel %vm2664, %v2640, %v2327
      %v2674 = vsel %vm2664, %v2647, %v2328
      %v2675 = vsel %vm2335, %v2648, %v2329
      %v2676 = vsel %vm2335, %v2649, %v2330
      %v2677 = vsel %vm2335, %v2538, %v2331
      %v2678 = vsel %vm2335, %v2655, %v2332
      %vm2679 = vcmp.eq.s32.totalorder %v2678, 0
      %vm2680 = vcmp.lt.s32.totalorder %v2675, 5
      %vm2681 = vmand %vm2679, %vm2680
      %v2682 = vadd.s32 %v2675, 1
      %v2683 = vcvt.s32.f32 %v2682
      %v2684 = vsub.f32 %v500, %v2683
      %v2685 = vmax.f32 %v2684, 1.0
      %v2686 = vcvt.s32.f32 %v2676
      %2688 = vset.pattern.permute.xlu0 0
      %2689 = vperm.xlu0 %2688, %v2686
      %v2690 = vpop.permute.xlu0 %2689
      %v2692 = vrcp.pop %v2690
      %v2693 = vmul.f32 %v2673, %v2692
      %2695 = vset.pattern.permute.xlu0 0
      %2696 = vperm.xlu0 %2695, %v2685
      %v2697 = vpop.permute.xlu0 %2696
      %v2699 = vrcp.pop %v2697
      %v2700 = vmul.f32 %v2674, %v2699
      %v2702 = vsel %vm656, %v2700, 0
      %2704 = vmatprep.subr.mxu0 0.0
      %2705 = vmatpush1.msra.mxu0 0.0
      %2706 = vmatprep.subr.mxu0 0.0
      %2707 = vmatpush1.msra.mxu0 0.0
      %2708 = vmatprep.subr.mxu0 0.0
      %2709 = vmatpush1.msra.mxu0 0.0
      %2710 = vmatprep.subr.mxu0 0.0
      %2711 = vmatpush1.msra.mxu0 0.0
      %2712 = vmatprep.subr.mxu0 0.0
      %2713 = vmatpush1.msra.mxu0 0.0
      %2714 = vmatprep.subr.mxu0 0.0
      %2715 = vmatpush1.msra.mxu0 0.0
      %2716 = vmatprep.subr.mxu0 0.0
      %2717 = vmatpush1.msra.mxu0 0.0
      %2718 = vmatprep.subr.mxu0 0.0
      %2719 = vmatpush1.msra.mxu0 0.0
      %2720 = vmatprep.subr.mxu0 0.0
      %2721 = vmatpush1.msra.mxu0 0.0
      %2722 = vmatprep.subr.mxu0 0.0
      %2723 = vmatpush1.msra.mxu0 0.0
      %2724 = vmatprep.subr.mxu0 0.0
      %2725 = vmatpush1.msra.mxu0 0.0
      %2726 = vmatprep.subr.mxu0 0.0
      %2727 = vmatpush1.msra.mxu0 0.0
      %2728 = vmatprep.subr.mxu0 0.0
      %2729 = vmatpush1.msra.mxu0 0.0
      %2730 = vmatprep.subr.mxu0 0.0
      %2731 = vmatpush1.msra.mxu0 0.0
      %2732 = vmatprep.subr.mxu0 0.0
      %2733 = vmatpush1.msra.mxu0 %v371
      %2734 = vmatprep.subr.mxu0 0.0
      %2735 = vmatpush1.msra.mxu0 %v370
      %2736 = vmatprep.subr.mxu0 0.0
      %2737 = vmatpush2.msra.mxu0 0.0
      %2738 = vmatprep.subr.mxu0 0.0
      %2739 = vmatpush2.msra.mxu0 0.0
      %2740 = vmatprep.subr.mxu0 0.0
      %2741 = vmatpush2.msra.mxu0 0.0
      %2742 = vmatprep.subr.mxu0 0.0
      %2743 = vmatpush2.msra.mxu0 0.0
      %2744 = vmatprep.subr.mxu0 0.0
      %2745 = vmatpush2.msra.mxu0 0.0
      %2746 = vmatprep.subr.mxu0 0.0
      %2747 = vmatpush2.msra.mxu0 0.0
      %2748 = vmatprep.subr.mxu0 0.0
      %2749 = vmatpush2.msra.mxu0 0.0
      %2750 = vmatprep.subr.mxu0 0.0
      %2751 = vmatpush2.msra.mxu0 0.0
      %2752 = vmatprep.subr.mxu0 0.0
      %2753 = vmatpush2.msra.mxu0 0.0
      %2754 = vmatprep.subr.mxu0 0.0
      %2755 = vmatpush2.msra.mxu0 0.0
      %2756 = vmatprep.subr.mxu0 0.0
      %2757 = vmatpush2.msra.mxu0 0.0
      %2758 = vmatprep.subr.mxu0 0.0
      %2759 = vmatpush2.msra.mxu0 0.0
      %2760 = vmatprep.subr.mxu0 0.0
      %2761 = vmatpush2.msra.mxu0 0.0
      %2762 = vmatprep.subr.mxu0 0.0
      %2763 = vmatpush2.msra.mxu0 0.0
      %2764 = vmatprep.subr.mxu0 0.0
      %2765 = vmatpush2.msra.mxu0 0.0
      %2766 = vmatprep.subr.mxu0 0.0
      %2767 = vmatpush2.msra.mxu0 0.0
      %2768 = vmatprep.mubr.f32.mxu0 0.0
      %2769 = vmatmul.mubr.f32.gmra.mxu0 %v2702
      %v2770 = vpop.f32.mrf.mxu0
      %v2771 = vadd.f32 0.0, %v2770
      %v2772 = vpop.f32.mrf.mxu0
      %2773 = vdwg.mxu0
      %v2775 = vsel %vm656, %v2693, 0
      %2777 = vmatprep.subr.mxu0 0.0
      %2778 = vmatpush1.msra.mxu0 0.0
      %2779 = vmatprep.subr.mxu0 0.0
      %2780 = vmatpush1.msra.mxu0 0.0
      %2781 = vmatprep.subr.mxu0 0.0
      %2782 = vmatpush1.msra.mxu0 0.0
      %2783 = vmatprep.subr.mxu0 0.0
      %2784 = vmatpush1.msra.mxu0 0.0
      %2785 = vmatprep.subr.mxu0 0.0
      %2786 = vmatpush1.msra.mxu0 0.0
      %2787 = vmatprep.subr.mxu0 0.0
      %2788 = vmatpush1.msra.mxu0 0.0
      %2789 = vmatprep.subr.mxu0 0.0
      %2790 = vmatpush1.msra.mxu0 0.0
      %2791 = vmatprep.subr.mxu0 0.0
      %2792 = vmatpush1.msra.mxu0 0.0
      %2793 = vmatprep.subr.mxu0 0.0
      %2794 = vmatpush1.msra.mxu0 0.0
      %2795 = vmatprep.subr.mxu0 0.0
      %2796 = vmatpush1.msra.mxu0 0.0
      %2797 = vmatprep.subr.mxu0 0.0
      %2798 = vmatpush1.msra.mxu0 0.0
      %2799 = vmatprep.subr.mxu0 0.0
      %2800 = vmatpush1.msra.mxu0 0.0
      %2801 = vmatprep.subr.mxu0 0.0
      %2802 = vmatpush1.msra.mxu0 0.0
      %2803 = vmatprep.subr.mxu0 0.0
      %2804 = vmatpush1.msra.mxu0 0.0
      %2805 = vmatprep.subr.mxu0 0.0
      %2806 = vmatpush1.msra.mxu0 %v369
      %2807 = vmatprep.subr.mxu0 0.0
      %2808 = vmatpush1.msra.mxu0 %v368
      %2809 = vmatprep.subr.mxu0 0.0
      %2810 = vmatpush2.msra.mxu0 0.0
      %2811 = vmatprep.subr.mxu0 0.0
      %2812 = vmatpush2.msra.mxu0 0.0
      %2813 = vmatprep.subr.mxu0 0.0
      %2814 = vmatpush2.msra.mxu0 0.0
      %2815 = vmatprep.subr.mxu0 0.0
      %2816 = vmatpush2.msra.mxu0 0.0
      %2817 = vmatprep.subr.mxu0 0.0
      %2818 = vmatpush2.msra.mxu0 0.0
      %2819 = vmatprep.subr.mxu0 0.0
      %2820 = vmatpush2.msra.mxu0 0.0
      %2821 = vmatprep.subr.mxu0 0.0
      %2822 = vmatpush2.msra.mxu0 0.0
      %2823 = vmatprep.subr.mxu0 0.0
      %2824 = vmatpush2.msra.mxu0 0.0
      %2825 = vmatprep.subr.mxu0 0.0
      %2826 = vmatpush2.msra.mxu0 0.0
      %2827 = vmatprep.subr.mxu0 0.0
      %2828 = vmatpush2.msra.mxu0 0.0
      %2829 = vmatprep.subr.mxu0 0.0
      %2830 = vmatpush2.msra.mxu0 0.0
      %2831 = vmatprep.subr.mxu0 0.0
      %2832 = vmatpush2.msra.mxu0 0.0
      %2833 = vmatprep.subr.mxu0 0.0
      %2834 = vmatpush2.msra.mxu0 0.0
      %2835 = vmatprep.subr.mxu0 0.0
      %2836 = vmatpush2.msra.mxu0 0.0
      %2837 = vmatprep.subr.mxu0 0.0
      %2838 = vmatpush2.msra.mxu0 0.0
      %2839 = vmatprep.subr.mxu0 0.0
      %2840 = vmatpush2.msra.mxu0 0.0
      %2841 = vmatprep.mubr.f32.mxu0 0.0
      %2842 = vmatmul.mubr.f32.gmra.mxu0 %v2775
      %v2843 = vpop.f32.mrf.mxu0
      %v2844 = vadd.f32 %v2771, %v2843
      %v2845 = vpop.f32.mrf.mxu0
      %2846 = vdwg.mxu0
      %v2847 = vadd.f32 %v2844, %v807
      %v2848 = vsel %vm397, %v2847, -inf
      %2849 = vmax.xlane.f32.xlu0 %v2848
      %v2850 = vpop.xlane.xlu0 %2849
      %vm2851 = vcmp.eq.f32.partialorder %v2847, %v2850
      %v2852 = vsel %vm2851, %v375, 8.0
      %v2853 = vsel %vm397, %v2852, inf
      %2854 = vmin.xlane.f32.xlu0 %v2853
      %v2855 = vpop.xlane.xlu0 %2854
      %v2856 = vsub.f32 %v2847, %v2850
      %v2857 = vmul.f32 %v2856, 1.442695
      %v2858 = vpow.pop %v2857
      %v2859 = vsel %vm397, %v2858, 0.0
      %2860 = vadd.xlane.f32.xlu0 %v2859
      %v2861 = vpop.xlane.xlu0 %2860
      %vm2862 = vcmp.eq.s32.totalorder %v374, 6
      %v2863 = vsel %vm2862, %v364, 0.0
      %v2864 = vsel %vm656, %v2863, 0.0
      %2865 = vadd.xlane.f32.xlu0 %v2864
      %v2866 = vpop.xlane.xlu0 %2865
      %v2867 = vmul.f32 %v2866, %v2861
      %2868 = vset.pattern.permute.xlu0 0
      %2869 = vperm.xlu0 %2868, %v2682
      %v2870 = vpop.permute.xlu0 %2869
      %vm2871 = vcmp.eq.s32.totalorder %v374, %v2870
      %v2872 = vsel %vm2871, 1, 0
      %v2873 = vcvt.s32.f32 %v2872
      %v2874 = vmul.f32 %v362, %v2873
      %v2875 = vsel %vm497, %v2874, 0.0
      %2876 = vadd.xlane.f32.xlu0 %v2875
      %v2877 = vpop.xlane.xlu0 %2876
      %v2878 = vmul.f32 %v363, %v2873
      %v2879 = vsel %vm497, %v2878, 0.0
      %2880 = vadd.xlane.f32.xlu0 %v2879
      %v2881 = vpop.xlane.xlu0 %2880
      %v2882 = vadd.f32 %v2677, %v2867
      %vm2883 = vcmp.lt.f32.partialorder %v2882, %v2877
      %v2884 = vsel %vm2883, %v2882, %v2877
      %v2885 = vsel %vm2883, %v2855, %v2881
      %v2886 = vadd.f32 %v2885, 0.5
      %v2887 = vcvt.f32.s32.to.zero.pseudo %v2886
      %2888 = vset.pattern.permute.xlu0 0
      %2889 = vperm.xlu0 %2888, %v2887
      %v2890 = vpop.permute.xlu0 %2889
      %vm2891 = vcmp.eq.s32.totalorder %v374, %v2890
      %v2892 = vsel %vm2891, 1, 0
      %v2893 = vcvt.s32.f32 %v2892
      %v2895 = vsel %vm397, %v2893, 0
      %2897 = vmatprep.subr.mxu0 0.0
      %2898 = vmatpush1.msra.mxu0 0.0
      %2899 = vmatprep.subr.mxu0 0.0
      %2900 = vmatpush1.msra.mxu0 0.0
      %2901 = vmatprep.subr.mxu0 0.0
      %2902 = vmatpush1.msra.mxu0 0.0
      %2903 = vmatprep.subr.mxu0 0.0
      %2904 = vmatpush1.msra.mxu0 0.0
      %2905 = vmatprep.subr.mxu0 0.0
      %2906 = vmatpush1.msra.mxu0 0.0
      %2907 = vmatprep.subr.mxu0 0.0
      %2908 = vmatpush1.msra.mxu0 0.0
      %2909 = vmatprep.subr.mxu0 0.0
      %2910 = vmatpush1.msra.mxu0 0.0
      %2911 = vmatprep.subr.mxu0 0.0
      %2912 = vmatpush1.msra.mxu0 0.0
      %2913 = vmatprep.subr.mxu0 0.0
      %2914 = vmatpush1.msra.mxu0 0.0
      %2915 = vmatprep.subr.mxu0 0.0
      %2916 = vmatpush1.msra.mxu0 0.0
      %2917 = vmatprep.subr.mxu0 0.0
      %2918 = vmatpush1.msra.mxu0 0.0
      %2919 = vmatprep.subr.mxu0 0.0
      %2920 = vmatpush1.msra.mxu0 0.0
      %2921 = vmatprep.subr.mxu0 0.0
      %2922 = vmatpush1.msra.mxu0 0.0
      %2923 = vmatprep.subr.mxu0 0.0
      %2924 = vmatpush1.msra.mxu0 0.0
      %2925 = vmatprep.subr.mxu0 0.0
      %2926 = vmatpush1.msra.mxu0 0.0
      %2927 = vmatprep.subr.mxu0 0.0
      %2928 = vmatpush1.msra.mxu0 %v365
      %2929 = vmatprep.subr.mxu0 0.0
      %2930 = vmatpush2.msra.mxu0 0.0
      %2931 = vmatprep.subr.mxu0 0.0
      %2932 = vmatpush2.msra.mxu0 0.0
      %2933 = vmatprep.subr.mxu0 0.0
      %2934 = vmatpush2.msra.mxu0 0.0
      %2935 = vmatprep.subr.mxu0 0.0
      %2936 = vmatpush2.msra.mxu0 0.0
      %2937 = vmatprep.subr.mxu0 0.0
      %2938 = vmatpush2.msra.mxu0 0.0
      %2939 = vmatprep.subr.mxu0 0.0
      %2940 = vmatpush2.msra.mxu0 0.0
      %2941 = vmatprep.subr.mxu0 0.0
      %2942 = vmatpush2.msra.mxu0 0.0
      %2943 = vmatprep.subr.mxu0 0.0
      %2944 = vmatpush2.msra.mxu0 0.0
      %2945 = vmatprep.subr.mxu0 0.0
      %2946 = vmatpush2.msra.mxu0 0.0
      %2947 = vmatprep.subr.mxu0 0.0
      %2948 = vmatpush2.msra.mxu0 0.0
      %2949 = vmatprep.subr.mxu0 0.0
      %2950 = vmatpush2.msra.mxu0 0.0
      %2951 = vmatprep.subr.mxu0 0.0
      %2952 = vmatpush2.msra.mxu0 0.0
      %2953 = vmatprep.subr.mxu0 0.0
      %2954 = vmatpush2.msra.mxu0 0.0
      %2955 = vmatprep.subr.mxu0 0.0
      %2956 = vmatpush2.msra.mxu0 0.0
      %2957 = vmatprep.subr.mxu0 0.0
      %2958 = vmatpush2.msra.mxu0 0.0
      %2959 = vmatprep.subr.mxu0 0.0
      %2960 = vmatpush2.msra.mxu0 0.0
      %2961 = vmatprep.mubr.f32.mxu0 0.0
      %2962 = vmatmul.mubr.f32.gmra.mxu0 %v2895
      %v2963 = vpop.f32.mrf.mxu0
      %v2964 = vadd.f32 0.0, %v2963
      %v2965 = vpop.f32.mrf.mxu0
      %2966 = vdwg.mxu0
      %v2967 = vmul.f32 %v2964, 0.6
      %2969 = vset.pattern.permute.xlu0 0
      %2970 = vperm.xlu0 %2969, %v2884
      %v2971 = vpop.permute.xlu0 %2970
      %v2973 = vmul.f32 %v476, %v2971
      %v2974 = vadd.f32 %v2973, %v483
      %v2975 = vmul.f32 %v2974, 0.4
      %v2976 = vadd.f32 %v2967, %v2975
      %vm2977 = vcmp.ge.f32.partialorder %v2884, 0.0
      %v2978 = vsel %vm2977, 1, 0
      %v2979 = vcvt.s32.f32 %v2978
      %2981 = vset.pattern.permute.xlu0 0
      %2982 = vperm.xlu0 %2981, %v2979
      %v2983 = vpop.permute.xlu0 %2982
      %v2985 = vmul.f32 %v2976, %v2983
      %v2986 = vadd.f32 %v2673, %v2985
      %v2987 = vsub.f32 %v2674, %v2985
      %v2988 = vsel %vm2883, 1, 0
      %2989 = vset.pattern.permute.xlu0 0
      %2990 = vperm.xlu0 %2989, %v2988
      %v2991 = vpop.permute.xlu0 %2990
      %vm2992 = vcmp.eq.s32.totalorder %v2991, 1
      %v2993 = vsel %vm2992, %v2674, %v2987
      %v2994 = vsel %vm2883, %v2675, %v2682
      %v2995 = vadd.s32 %v2676, 1
      %vm2996 = vcmp.lt.f32.partialorder %v2884, 0.0
      %vm2997 = vcmp.ge.s32.totalorder %v2995, 16
      %vm2998 = vmor %vm2996, %vm2997
      %v2999 = vsel %vm2998, 1, 0
      %vm3000 = vcmp.gt.s32.totalorder %v2678, %v2999
      %v3001 = vsel %vm3000, %v2678, %v2999
      %3002 = vset.pattern.permute.xlu0 0
      %3003 = vperm.xlu0 %3002, %v2676
      %v3004 = vpop.permute.xlu0 %3003
      %vm3005 = vcmp.eq.s32.totalorder %v374, %v3004
      %v3006 = vsel %vm2681, 1, 0
      %3007 = vset.pattern.permute.xlu0 0
      %3008 = vperm.xlu0 %3007, %v3006
      %v3009 = vpop.permute.xlu0 %3008
      %vm3010 = vcmp.eq.s32.totalorder %v3009, 1
      %vm3011 = vmand %vm3005, %vm3010
      %v3012 = vsel %vm3011, %v2971, %v2666
      %3014 = vset.pattern.permute.xlu0 0
      %3015 = vperm.xlu0 %3014, %v2885
      %v3016 = vpop.permute.xlu0 %3015
      %v3018 = vsel %vm3011, %v3016, %v2672
      %v3019 = vsel %vm3010, %v2986, %v2673
      %v3020 = vsel %vm3010, %v2993, %v2674
      %v3021 = vsel %vm2681, %v2994, %v2675
      %v3022 = vsel %vm2681, %v2995, %v2676
      %v3023 = vsel %vm2681, %v2884, %v2677
      %v3024 = vsel %vm2681, %v3001, %v2678
      %vm3025 = vcmp.eq.s32.totalorder %v3024, 0
      %vm3026 = vcmp.lt.s32.totalorder %v3021, 5
      %vm3027 = vmand %vm3025, %vm3026
      %v3028 = vadd.s32 %v3021, 1
      %v3029 = vcvt.s32.f32 %v3028
      %v3030 = vsub.f32 %v500, %v3029
      %v3031 = vmax.f32 %v3030, 1.0
      %v3032 = vcvt.s32.f32 %v3022
      %3034 = vset.pattern.permute.xlu0 0
      %3035 = vperm.xlu0 %3034, %v3032
      %v3036 = vpop.permute.xlu0 %3035
      %v3038 = vrcp.pop %v3036
      %v3039 = vmul.f32 %v3019, %v3038
      %3041 = vset.pattern.permute.xlu0 0
      %3042 = vperm.xlu0 %3041, %v3031
      %v3043 = vpop.permute.xlu0 %3042
      %v3045 = vrcp.pop %v3043
      %v3046 = vmul.f32 %v3020, %v3045
      %v3048 = vsel %vm656, %v3046, 0
      %3050 = vmatprep.subr.mxu0 0.0
      %3051 = vmatpush1.msra.mxu0 0.0
      %3052 = vmatprep.subr.mxu0 0.0
      %3053 = vmatpush1.msra.mxu0 0.0
      %3054 = vmatprep.subr.mxu0 0.0
      %3055 = vmatpush1.msra.mxu0 0.0
      %3056 = vmatprep.subr.mxu0 0.0
      %3057 = vmatpush1.msra.mxu0 0.0
      %3058 = vmatprep.subr.mxu0 0.0
      %3059 = vmatpush1.msra.mxu0 0.0
      %3060 = vmatprep.subr.mxu0 0.0
      %3061 = vmatpush1.msra.mxu0 0.0
      %3062 = vmatprep.subr.mxu0 0.0
      %3063 = vmatpush1.msra.mxu0 0.0
      %3064 = vmatprep.subr.mxu0 0.0
      %3065 = vmatpush1.msra.mxu0 0.0
      %3066 = vmatprep.subr.mxu0 0.0
      %3067 = vmatpush1.msra.mxu0 0.0
      %3068 = vmatprep.subr.mxu0 0.0
      %3069 = vmatpush1.msra.mxu0 0.0
      %3070 = vmatprep.subr.mxu0 0.0
      %3071 = vmatpush1.msra.mxu0 0.0
      %3072 = vmatprep.subr.mxu0 0.0
      %3073 = vmatpush1.msra.mxu0 0.0
      %3074 = vmatprep.subr.mxu0 0.0
      %3075 = vmatpush1.msra.mxu0 0.0
      %3076 = vmatprep.subr.mxu0 0.0
      %3077 = vmatpush1.msra.mxu0 0.0
      %3078 = vmatprep.subr.mxu0 0.0
      %3079 = vmatpush1.msra.mxu0 %v371
      %3080 = vmatprep.subr.mxu0 0.0
      %3081 = vmatpush1.msra.mxu0 %v370
      %3082 = vmatprep.subr.mxu0 0.0
      %3083 = vmatpush2.msra.mxu0 0.0
      %3084 = vmatprep.subr.mxu0 0.0
      %3085 = vmatpush2.msra.mxu0 0.0
      %3086 = vmatprep.subr.mxu0 0.0
      %3087 = vmatpush2.msra.mxu0 0.0
      %3088 = vmatprep.subr.mxu0 0.0
      %3089 = vmatpush2.msra.mxu0 0.0
      %3090 = vmatprep.subr.mxu0 0.0
      %3091 = vmatpush2.msra.mxu0 0.0
      %3092 = vmatprep.subr.mxu0 0.0
      %3093 = vmatpush2.msra.mxu0 0.0
      %3094 = vmatprep.subr.mxu0 0.0
      %3095 = vmatpush2.msra.mxu0 0.0
      %3096 = vmatprep.subr.mxu0 0.0
      %3097 = vmatpush2.msra.mxu0 0.0
      %3098 = vmatprep.subr.mxu0 0.0
      %3099 = vmatpush2.msra.mxu0 0.0
      %3100 = vmatprep.subr.mxu0 0.0
      %3101 = vmatpush2.msra.mxu0 0.0
      %3102 = vmatprep.subr.mxu0 0.0
      %3103 = vmatpush2.msra.mxu0 0.0
      %3104 = vmatprep.subr.mxu0 0.0
      %3105 = vmatpush2.msra.mxu0 0.0
      %3106 = vmatprep.subr.mxu0 0.0
      %3107 = vmatpush2.msra.mxu0 0.0
      %3108 = vmatprep.subr.mxu0 0.0
      %3109 = vmatpush2.msra.mxu0 0.0
      %3110 = vmatprep.subr.mxu0 0.0
      %3111 = vmatpush2.msra.mxu0 0.0
      %3112 = vmatprep.subr.mxu0 0.0
      %3113 = vmatpush2.msra.mxu0 0.0
      %3114 = vmatprep.mubr.f32.mxu0 0.0
      %3115 = vmatmul.mubr.f32.gmra.mxu0 %v3048
      %v3116 = vpop.f32.mrf.mxu0
      %v3117 = vadd.f32 0.0, %v3116
      %v3118 = vpop.f32.mrf.mxu0
      %3119 = vdwg.mxu0
      %v3121 = vsel %vm656, %v3039, 0
      %3123 = vmatprep.subr.mxu0 0.0
      %3124 = vmatpush1.msra.mxu0 0.0
      %3125 = vmatprep.subr.mxu0 0.0
      %3126 = vmatpush1.msra.mxu0 0.0
      %3127 = vmatprep.subr.mxu0 0.0
      %3128 = vmatpush1.msra.mxu0 0.0
      %3129 = vmatprep.subr.mxu0 0.0
      %3130 = vmatpush1.msra.mxu0 0.0
      %3131 = vmatprep.subr.mxu0 0.0
      %3132 = vmatpush1.msra.mxu0 0.0
      %3133 = vmatprep.subr.mxu0 0.0
      %3134 = vmatpush1.msra.mxu0 0.0
      %3135 = vmatprep.subr.mxu0 0.0
      %3136 = vmatpush1.msra.mxu0 0.0
      %3137 = vmatprep.subr.mxu0 0.0
      %3138 = vmatpush1.msra.mxu0 0.0
      %3139 = vmatprep.subr.mxu0 0.0
      %3140 = vmatpush1.msra.mxu0 0.0
      %3141 = vmatprep.subr.mxu0 0.0
      %3142 = vmatpush1.msra.mxu0 0.0
      %3143 = vmatprep.subr.mxu0 0.0
      %3144 = vmatpush1.msra.mxu0 0.0
      %3145 = vmatprep.subr.mxu0 0.0
      %3146 = vmatpush1.msra.mxu0 0.0
      %3147 = vmatprep.subr.mxu0 0.0
      %3148 = vmatpush1.msra.mxu0 0.0
      %3149 = vmatprep.subr.mxu0 0.0
      %3150 = vmatpush1.msra.mxu0 0.0
      %3151 = vmatprep.subr.mxu0 0.0
      %3152 = vmatpush1.msra.mxu0 %v369
      %3153 = vmatprep.subr.mxu0 0.0
      %3154 = vmatpush1.msra.mxu0 %v368
      %3155 = vmatprep.subr.mxu0 0.0
      %3156 = vmatpush2.msra.mxu0 0.0
      %3157 = vmatprep.subr.mxu0 0.0
      %3158 = vmatpush2.msra.mxu0 0.0
      %3159 = vmatprep.subr.mxu0 0.0
      %3160 = vmatpush2.msra.mxu0 0.0
      %3161 = vmatprep.subr.mxu0 0.0
      %3162 = vmatpush2.msra.mxu0 0.0
      %3163 = vmatprep.subr.mxu0 0.0
      %3164 = vmatpush2.msra.mxu0 0.0
      %3165 = vmatprep.subr.mxu0 0.0
      %3166 = vmatpush2.msra.mxu0 0.0
      %3167 = vmatprep.subr.mxu0 0.0
      %3168 = vmatpush2.msra.mxu0 0.0
      %3169 = vmatprep.subr.mxu0 0.0
      %3170 = vmatpush2.msra.mxu0 0.0
      %3171 = vmatprep.subr.mxu0 0.0
      %3172 = vmatpush2.msra.mxu0 0.0
      %3173 = vmatprep.subr.mxu0 0.0
      %3174 = vmatpush2.msra.mxu0 0.0
      %3175 = vmatprep.subr.mxu0 0.0
      %3176 = vmatpush2.msra.mxu0 0.0
      %3177 = vmatprep.subr.mxu0 0.0
      %3178 = vmatpush2.msra.mxu0 0.0
      %3179 = vmatprep.subr.mxu0 0.0
      %3180 = vmatpush2.msra.mxu0 0.0
      %3181 = vmatprep.subr.mxu0 0.0
      %3182 = vmatpush2.msra.mxu0 0.0
      %3183 = vmatprep.subr.mxu0 0.0
      %3184 = vmatpush2.msra.mxu0 0.0
      %3185 = vmatprep.subr.mxu0 0.0
      %3186 = vmatpush2.msra.mxu0 0.0
      %3187 = vmatprep.mubr.f32.mxu0 0.0
      %3188 = vmatmul.mubr.f32.gmra.mxu0 %v3121
      %v3189 = vpop.f32.mrf.mxu0
      %v3190 = vadd.f32 %v3117, %v3189
      %v3191 = vpop.f32.mrf.mxu0
      %3192 = vdwg.mxu0
      %v3193 = vadd.f32 %v3190, %v807
      %v3194 = vsel %vm397, %v3193, -inf
      %3195 = vmax.xlane.f32.xlu0 %v3194
      %v3196 = vpop.xlane.xlu0 %3195
      %vm3197 = vcmp.eq.f32.partialorder %v3193, %v3196
      %v3198 = vsel %vm3197, %v375, 8.0
      %v3199 = vsel %vm397, %v3198, inf
      %3200 = vmin.xlane.f32.xlu0 %v3199
      %v3201 = vpop.xlane.xlu0 %3200
      %v3202 = vsub.f32 %v3193, %v3196
      %v3203 = vmul.f32 %v3202, 1.442695
      %v3204 = vpow.pop %v3203
      %v3205 = vsel %vm397, %v3204, 0.0
      %3206 = vadd.xlane.f32.xlu0 %v3205
      %v3207 = vpop.xlane.xlu0 %3206
      %vm3208 = vcmp.eq.s32.totalorder %v374, 7
      %v3209 = vsel %vm3208, %v364, 0.0
      %v3210 = vsel %vm656, %v3209, 0.0
      %3211 = vadd.xlane.f32.xlu0 %v3210
      %v3212 = vpop.xlane.xlu0 %3211
      %v3213 = vmul.f32 %v3212, %v3207
      %3214 = vset.pattern.permute.xlu0 0
      %3215 = vperm.xlu0 %3214, %v3028
      %v3216 = vpop.permute.xlu0 %3215
      %vm3217 = vcmp.eq.s32.totalorder %v374, %v3216
      %v3218 = vsel %vm3217, 1, 0
      %v3219 = vcvt.s32.f32 %v3218
      %v3220 = vmul.f32 %v362, %v3219
      %v3221 = vsel %vm497, %v3220, 0.0
      %3222 = vadd.xlane.f32.xlu0 %v3221
      %v3223 = vpop.xlane.xlu0 %3222
      %v3224 = vmul.f32 %v363, %v3219
      %v3225 = vsel %vm497, %v3224, 0.0
      %3226 = vadd.xlane.f32.xlu0 %v3225
      %v3227 = vpop.xlane.xlu0 %3226
      %v3228 = vadd.f32 %v3023, %v3213
      %vm3229 = vcmp.lt.f32.partialorder %v3228, %v3223
      %v3230 = vsel %vm3229, %v3228, %v3223
      %v3231 = vsel %vm3229, %v3201, %v3227
      %v3232 = vadd.f32 %v3231, 0.5
      %v3233 = vcvt.f32.s32.to.zero.pseudo %v3232
      %3234 = vset.pattern.permute.xlu0 0
      %3235 = vperm.xlu0 %3234, %v3233
      %v3236 = vpop.permute.xlu0 %3235
      %vm3237 = vcmp.eq.s32.totalorder %v374, %v3236
      %v3238 = vsel %vm3237, 1, 0
      %v3239 = vcvt.s32.f32 %v3238
      %v3241 = vsel %vm397, %v3239, 0
      %3243 = vmatprep.subr.mxu0 0.0
      %3244 = vmatpush1.msra.mxu0 0.0
      %3245 = vmatprep.subr.mxu0 0.0
      %3246 = vmatpush1.msra.mxu0 0.0
      %3247 = vmatprep.subr.mxu0 0.0
      %3248 = vmatpush1.msra.mxu0 0.0
      %3249 = vmatprep.subr.mxu0 0.0
      %3250 = vmatpush1.msra.mxu0 0.0
      %3251 = vmatprep.subr.mxu0 0.0
      %3252 = vmatpush1.msra.mxu0 0.0
      %3253 = vmatprep.subr.mxu0 0.0
      %3254 = vmatpush1.msra.mxu0 0.0
      %3255 = vmatprep.subr.mxu0 0.0
      %3256 = vmatpush1.msra.mxu0 0.0
      %3257 = vmatprep.subr.mxu0 0.0
      %3258 = vmatpush1.msra.mxu0 0.0
      %3259 = vmatprep.subr.mxu0 0.0
      %3260 = vmatpush1.msra.mxu0 0.0
      %3261 = vmatprep.subr.mxu0 0.0
      %3262 = vmatpush1.msra.mxu0 0.0
      %3263 = vmatprep.subr.mxu0 0.0
      %3264 = vmatpush1.msra.mxu0 0.0
      %3265 = vmatprep.subr.mxu0 0.0
      %3266 = vmatpush1.msra.mxu0 0.0
      %3267 = vmatprep.subr.mxu0 0.0
      %3268 = vmatpush1.msra.mxu0 0.0
      %3269 = vmatprep.subr.mxu0 0.0
      %3270 = vmatpush1.msra.mxu0 0.0
      %3271 = vmatprep.subr.mxu0 0.0
      %3272 = vmatpush1.msra.mxu0 0.0
      %3273 = vmatprep.subr.mxu0 0.0
      %3274 = vmatpush1.msra.mxu0 %v365
      %3275 = vmatprep.subr.mxu0 0.0
      %3276 = vmatpush2.msra.mxu0 0.0
      %3277 = vmatprep.subr.mxu0 0.0
      %3278 = vmatpush2.msra.mxu0 0.0
      %3279 = vmatprep.subr.mxu0 0.0
      %3280 = vmatpush2.msra.mxu0 0.0
      %3281 = vmatprep.subr.mxu0 0.0
      %3282 = vmatpush2.msra.mxu0 0.0
      %3283 = vmatprep.subr.mxu0 0.0
      %3284 = vmatpush2.msra.mxu0 0.0
      %3285 = vmatprep.subr.mxu0 0.0
      %3286 = vmatpush2.msra.mxu0 0.0
      %3287 = vmatprep.subr.mxu0 0.0
      %3288 = vmatpush2.msra.mxu0 0.0
      %3289 = vmatprep.subr.mxu0 0.0
      %3290 = vmatpush2.msra.mxu0 0.0
      %3291 = vmatprep.subr.mxu0 0.0
      %3292 = vmatpush2.msra.mxu0 0.0
      %3293 = vmatprep.subr.mxu0 0.0
      %3294 = vmatpush2.msra.mxu0 0.0
      %3295 = vmatprep.subr.mxu0 0.0
      %3296 = vmatpush2.msra.mxu0 0.0
      %3297 = vmatprep.subr.mxu0 0.0
      %3298 = vmatpush2.msra.mxu0 0.0
      %3299 = vmatprep.subr.mxu0 0.0
      %3300 = vmatpush2.msra.mxu0 0.0
      %3301 = vmatprep.subr.mxu0 0.0
      %3302 = vmatpush2.msra.mxu0 0.0
      %3303 = vmatprep.subr.mxu0 0.0
      %3304 = vmatpush2.msra.mxu0 0.0
      %3305 = vmatprep.subr.mxu0 0.0
      %3306 = vmatpush2.msra.mxu0 0.0
      %3307 = vmatprep.mubr.f32.mxu0 0.0
      %3308 = vmatmul.mubr.f32.gmra.mxu0 %v3241
      %v3309 = vpop.f32.mrf.mxu0
      %v3310 = vadd.f32 0.0, %v3309
      %v3311 = vpop.f32.mrf.mxu0
      %3312 = vdwg.mxu0
      %v3313 = vmul.f32 %v3310, 0.6
      %3315 = vset.pattern.permute.xlu0 0
      %3316 = vperm.xlu0 %3315, %v3230
      %v3317 = vpop.permute.xlu0 %3316
      %v3319 = vmul.f32 %v476, %v3317
      %v3320 = vadd.f32 %v3319, %v483
      %v3321 = vmul.f32 %v3320, 0.4
      %v3322 = vadd.f32 %v3313, %v3321
      %vm3323 = vcmp.ge.f32.partialorder %v3230, 0.0
      %v3324 = vsel %vm3323, 1, 0
      %v3325 = vcvt.s32.f32 %v3324
      %3327 = vset.pattern.permute.xlu0 0
      %3328 = vperm.xlu0 %3327, %v3325
      %v3329 = vpop.permute.xlu0 %3328
      %v3331 = vmul.f32 %v3322, %v3329
      %v3332 = vadd.f32 %v3019, %v3331
      %v3333 = vsub.f32 %v3020, %v3331
      %v3334 = vsel %vm3229, 1, 0
      %3335 = vset.pattern.permute.xlu0 0
      %3336 = vperm.xlu0 %3335, %v3334
      %v3337 = vpop.permute.xlu0 %3336
      %vm3338 = vcmp.eq.s32.totalorder %v3337, 1
      %v3339 = vsel %vm3338, %v3020, %v3333
      %v3340 = vsel %vm3229, %v3021, %v3028
      %v3341 = vadd.s32 %v3022, 1
      %vm3342 = vcmp.lt.f32.partialorder %v3230, 0.0
      %vm3343 = vcmp.ge.s32.totalorder %v3341, 16
      %vm3344 = vmor %vm3342, %vm3343
      %v3345 = vsel %vm3344, 1, 0
      %vm3346 = vcmp.gt.s32.totalorder %v3024, %v3345
      %v3347 = vsel %vm3346, %v3024, %v3345
      %3348 = vset.pattern.permute.xlu0 0
      %3349 = vperm.xlu0 %3348, %v3022
      %v3350 = vpop.permute.xlu0 %3349
      %vm3351 = vcmp.eq.s32.totalorder %v374, %v3350
      %v3352 = vsel %vm3027, 1, 0
      %3353 = vset.pattern.permute.xlu0 0
      %3354 = vperm.xlu0 %3353, %v3352
      %v3355 = vpop.permute.xlu0 %3354
      %vm3356 = vcmp.eq.s32.totalorder %v3355, 1
      %vm3357 = vmand %vm3351, %vm3356
      %v3358 = vsel %vm3357, %v3317, %v3012
      %3360 = vset.pattern.permute.xlu0 0
      %3361 = vperm.xlu0 %3360, %v3231
      %v3362 = vpop.permute.xlu0 %3361
      %v3364 = vsel %vm3357, %v3362, %v3018
      %v3365 = vsel %vm3356, %v3332, %v3019
      %v3366 = vsel %vm3356, %v3339, %v3020
      %v3367 = vsel %vm3027, %v3340, %v3021
      %v3368 = vsel %vm3027, %v3341, %v3022
      %v3369 = vsel %vm3027, %v3230, %v3023
      %v3370 = vsel %vm3027, %v3347, %v3024
      %vm3371 = vcmp.eq.s32.totalorder %v3370, 0
      %vm3372 = vcmp.lt.s32.totalorder %v3367, 5
      %vm3373 = vmand %vm3371, %vm3372
      %v3374 = vadd.s32 %v3367, 1
      %v3375 = vcvt.s32.f32 %v3374
      %v3376 = vsub.f32 %v500, %v3375
      %v3377 = vmax.f32 %v3376, 1.0
      %v3378 = vcvt.s32.f32 %v3368
      %3380 = vset.pattern.permute.xlu0 0
      %3381 = vperm.xlu0 %3380, %v3378
      %v3382 = vpop.permute.xlu0 %3381
      %v3384 = vrcp.pop %v3382
      %v3385 = vmul.f32 %v3365, %v3384
      %3387 = vset.pattern.permute.xlu0 0
      %3388 = vperm.xlu0 %3387, %v3377
      %v3389 = vpop.permute.xlu0 %3388
      %v3391 = vrcp.pop %v3389
      %v3392 = vmul.f32 %v3366, %v3391
      %v3394 = vsel %vm656, %v3392, 0
      %3396 = vmatprep.subr.mxu0 0.0
      %3397 = vmatpush1.msra.mxu0 0.0
      %3398 = vmatprep.subr.mxu0 0.0
      %3399 = vmatpush1.msra.mxu0 0.0
      %3400 = vmatprep.subr.mxu0 0.0
      %3401 = vmatpush1.msra.mxu0 0.0
      %3402 = vmatprep.subr.mxu0 0.0
      %3403 = vmatpush1.msra.mxu0 0.0
      %3404 = vmatprep.subr.mxu0 0.0
      %3405 = vmatpush1.msra.mxu0 0.0
      %3406 = vmatprep.subr.mxu0 0.0
      %3407 = vmatpush1.msra.mxu0 0.0
      %3408 = vmatprep.subr.mxu0 0.0
      %3409 = vmatpush1.msra.mxu0 0.0
      %3410 = vmatprep.subr.mxu0 0.0
      %3411 = vmatpush1.msra.mxu0 0.0
      %3412 = vmatprep.subr.mxu0 0.0
      %3413 = vmatpush1.msra.mxu0 0.0
      %3414 = vmatprep.subr.mxu0 0.0
      %3415 = vmatpush1.msra.mxu0 0.0
      %3416 = vmatprep.subr.mxu0 0.0
      %3417 = vmatpush1.msra.mxu0 0.0
      %3418 = vmatprep.subr.mxu0 0.0
      %3419 = vmatpush1.msra.mxu0 0.0
      %3420 = vmatprep.subr.mxu0 0.0
      %3421 = vmatpush1.msra.mxu0 0.0
      %3422 = vmatprep.subr.mxu0 0.0
      %3423 = vmatpush1.msra.mxu0 0.0
      %3424 = vmatprep.subr.mxu0 0.0
      %3425 = vmatpush1.msra.mxu0 %v371
      %3426 = vmatprep.subr.mxu0 0.0
      %3427 = vmatpush1.msra.mxu0 %v370
      %3428 = vmatprep.subr.mxu0 0.0
      %3429 = vmatpush2.msra.mxu0 0.0
      %3430 = vmatprep.subr.mxu0 0.0
      %3431 = vmatpush2.msra.mxu0 0.0
      %3432 = vmatprep.subr.mxu0 0.0
      %3433 = vmatpush2.msra.mxu0 0.0
      %3434 = vmatprep.subr.mxu0 0.0
      %3435 = vmatpush2.msra.mxu0 0.0
      %3436 = vmatprep.subr.mxu0 0.0
      %3437 = vmatpush2.msra.mxu0 0.0
      %3438 = vmatprep.subr.mxu0 0.0
      %3439 = vmatpush2.msra.mxu0 0.0
      %3440 = vmatprep.subr.mxu0 0.0
      %3441 = vmatpush2.msra.mxu0 0.0
      %3442 = vmatprep.subr.mxu0 0.0
      %3443 = vmatpush2.msra.mxu0 0.0
      %3444 = vmatprep.subr.mxu0 0.0
      %3445 = vmatpush2.msra.mxu0 0.0
      %3446 = vmatprep.subr.mxu0 0.0
      %3447 = vmatpush2.msra.mxu0 0.0
      %3448 = vmatprep.subr.mxu0 0.0
      %3449 = vmatpush2.msra.mxu0 0.0
      %3450 = vmatprep.subr.mxu0 0.0
      %3451 = vmatpush2.msra.mxu0 0.0
      %3452 = vmatprep.subr.mxu0 0.0
      %3453 = vmatpush2.msra.mxu0 0.0
      %3454 = vmatprep.subr.mxu0 0.0
      %3455 = vmatpush2.msra.mxu0 0.0
      %3456 = vmatprep.subr.mxu0 0.0
      %3457 = vmatpush2.msra.mxu0 0.0
      %3458 = vmatprep.subr.mxu0 0.0
      %3459 = vmatpush2.msra.mxu0 0.0
      %3460 = vmatprep.mubr.f32.mxu0 0.0
      %3461 = vmatmul.mubr.f32.gmra.mxu0 %v3394
      %v3462 = vpop.f32.mrf.mxu0
      %v3463 = vadd.f32 0.0, %v3462
      %v3464 = vpop.f32.mrf.mxu0
      %3465 = vdwg.mxu0
      %v3467 = vsel %vm656, %v3385, 0
      %3469 = vmatprep.subr.mxu0 0.0
      %3470 = vmatpush1.msra.mxu0 0.0
      %3471 = vmatprep.subr.mxu0 0.0
      %3472 = vmatpush1.msra.mxu0 0.0
      %3473 = vmatprep.subr.mxu0 0.0
      %3474 = vmatpush1.msra.mxu0 0.0
      %3475 = vmatprep.subr.mxu0 0.0
      %3476 = vmatpush1.msra.mxu0 0.0
      %3477 = vmatprep.subr.mxu0 0.0
      %3478 = vmatpush1.msra.mxu0 0.0
      %3479 = vmatprep.subr.mxu0 0.0
      %3480 = vmatpush1.msra.mxu0 0.0
      %3481 = vmatprep.subr.mxu0 0.0
      %3482 = vmatpush1.msra.mxu0 0.0
      %3483 = vmatprep.subr.mxu0 0.0
      %3484 = vmatpush1.msra.mxu0 0.0
      %3485 = vmatprep.subr.mxu0 0.0
      %3486 = vmatpush1.msra.mxu0 0.0
      %3487 = vmatprep.subr.mxu0 0.0
      %3488 = vmatpush1.msra.mxu0 0.0
      %3489 = vmatprep.subr.mxu0 0.0
      %3490 = vmatpush1.msra.mxu0 0.0
      %3491 = vmatprep.subr.mxu0 0.0
      %3492 = vmatpush1.msra.mxu0 0.0
      %3493 = vmatprep.subr.mxu0 0.0
      %3494 = vmatpush1.msra.mxu0 0.0
      %3495 = vmatprep.subr.mxu0 0.0
      %3496 = vmatpush1.msra.mxu0 0.0
      %3497 = vmatprep.subr.mxu0 0.0
      %3498 = vmatpush1.msra.mxu0 %v369
      %3499 = vmatprep.subr.mxu0 0.0
      %3500 = vmatpush1.msra.mxu0 %v368
      %3501 = vmatprep.subr.mxu0 0.0
      %3502 = vmatpush2.msra.mxu0 0.0
      %3503 = vmatprep.subr.mxu0 0.0
      %3504 = vmatpush2.msra.mxu0 0.0
      %3505 = vmatprep.subr.mxu0 0.0
      %3506 = vmatpush2.msra.mxu0 0.0
      %3507 = vmatprep.subr.mxu0 0.0
      %3508 = vmatpush2.msra.mxu0 0.0
      %3509 = vmatprep.subr.mxu0 0.0
      %3510 = vmatpush2.msra.mxu0 0.0
      %3511 = vmatprep.subr.mxu0 0.0
      %3512 = vmatpush2.msra.mxu0 0.0
      %3513 = vmatprep.subr.mxu0 0.0
      %3514 = vmatpush2.msra.mxu0 0.0
      %3515 = vmatprep.subr.mxu0 0.0
      %3516 = vmatpush2.msra.mxu0 0.0
      %3517 = vmatprep.subr.mxu0 0.0
      %3518 = vmatpush2.msra.mxu0 0.0
      %3519 = vmatprep.subr.mxu0 0.0
      %3520 = vmatpush2.msra.mxu0 0.0
      %3521 = vmatprep.subr.mxu0 0.0
      %3522 = vmatpush2.msra.mxu0 0.0
      %3523 = vmatprep.subr.mxu0 0.0
      %3524 = vmatpush2.msra.mxu0 0.0
      %3525 = vmatprep.subr.mxu0 0.0
      %3526 = vmatpush2.msra.mxu0 0.0
      %3527 = vmatprep.subr.mxu0 0.0
      %3528 = vmatpush2.msra.mxu0 0.0
      %3529 = vmatprep.subr.mxu0 0.0
      %3530 = vmatpush2.msra.mxu0 0.0
      %3531 = vmatprep.subr.mxu0 0.0
      %3532 = vmatpush2.msra.mxu0 0.0
      %3533 = vmatprep.mubr.f32.mxu0 0.0
      %3534 = vmatmul.mubr.f32.gmra.mxu0 %v3467
      %v3535 = vpop.f32.mrf.mxu0
      %v3536 = vadd.f32 %v3463, %v3535
      %v3537 = vpop.f32.mrf.mxu0
      %3538 = vdwg.mxu0
      %v3539 = vadd.f32 %v3536, %v807
      %v3540 = vsel %vm397, %v3539, -inf
      %3541 = vmax.xlane.f32.xlu0 %v3540
      %v3542 = vpop.xlane.xlu0 %3541
      %vm3543 = vcmp.eq.f32.partialorder %v3539, %v3542
      %v3544 = vsel %vm3543, %v375, 8.0
      %v3545 = vsel %vm397, %v3544, inf
      %3546 = vmin.xlane.f32.xlu0 %v3545
      %v3547 = vpop.xlane.xlu0 %3546
      %v3548 = vsub.f32 %v3539, %v3542
      %v3549 = vmul.f32 %v3548, 1.442695
      %v3550 = vpow.pop %v3549
      %v3551 = vsel %vm397, %v3550, 0.0
      %3552 = vadd.xlane.f32.xlu0 %v3551
      %v3553 = vpop.xlane.xlu0 %3552
      %vm3554 = vcmp.eq.s32.totalorder %v374, 8
      %v3555 = vsel %vm3554, %v364, 0.0
      %v3556 = vsel %vm656, %v3555, 0.0
      %3557 = vadd.xlane.f32.xlu0 %v3556
      %v3558 = vpop.xlane.xlu0 %3557
      %v3559 = vmul.f32 %v3558, %v3553
      %3560 = vset.pattern.permute.xlu0 0
      %3561 = vperm.xlu0 %3560, %v3374
      %v3562 = vpop.permute.xlu0 %3561
      %vm3563 = vcmp.eq.s32.totalorder %v374, %v3562
      %v3564 = vsel %vm3563, 1, 0
      %v3565 = vcvt.s32.f32 %v3564
      %v3566 = vmul.f32 %v362, %v3565
      %v3567 = vsel %vm497, %v3566, 0.0
      %3568 = vadd.xlane.f32.xlu0 %v3567
      %v3569 = vpop.xlane.xlu0 %3568
      %v3570 = vmul.f32 %v363, %v3565
      %v3571 = vsel %vm497, %v3570, 0.0
      %3572 = vadd.xlane.f32.xlu0 %v3571
      %v3573 = vpop.xlane.xlu0 %3572
      %v3574 = vadd.f32 %v3369, %v3559
      %vm3575 = vcmp.lt.f32.partialorder %v3574, %v3569
      %v3576 = vsel %vm3575, %v3574, %v3569
      %v3577 = vsel %vm3575, %v3547, %v3573
      %v3578 = vadd.f32 %v3577, 0.5
      %v3579 = vcvt.f32.s32.to.zero.pseudo %v3578
      %3580 = vset.pattern.permute.xlu0 0
      %3581 = vperm.xlu0 %3580, %v3579
      %v3582 = vpop.permute.xlu0 %3581
      %vm3583 = vcmp.eq.s32.totalorder %v374, %v3582
      %v3584 = vsel %vm3583, 1, 0
      %v3585 = vcvt.s32.f32 %v3584
      %v3587 = vsel %vm397, %v3585, 0
      %3589 = vmatprep.subr.mxu0 0.0
      %3590 = vmatpush1.msra.mxu0 0.0
      %3591 = vmatprep.subr.mxu0 0.0
      %3592 = vmatpush1.msra.mxu0 0.0
      %3593 = vmatprep.subr.mxu0 0.0
      %3594 = vmatpush1.msra.mxu0 0.0
      %3595 = vmatprep.subr.mxu0 0.0
      %3596 = vmatpush1.msra.mxu0 0.0
      %3597 = vmatprep.subr.mxu0 0.0
      %3598 = vmatpush1.msra.mxu0 0.0
      %3599 = vmatprep.subr.mxu0 0.0
      %3600 = vmatpush1.msra.mxu0 0.0
      %3601 = vmatprep.subr.mxu0 0.0
      %3602 = vmatpush1.msra.mxu0 0.0
      %3603 = vmatprep.subr.mxu0 0.0
      %3604 = vmatpush1.msra.mxu0 0.0
      %3605 = vmatprep.subr.mxu0 0.0
      %3606 = vmatpush1.msra.mxu0 0.0
      %3607 = vmatprep.subr.mxu0 0.0
      %3608 = vmatpush1.msra.mxu0 0.0
      %3609 = vmatprep.subr.mxu0 0.0
      %3610 = vmatpush1.msra.mxu0 0.0
      %3611 = vmatprep.subr.mxu0 0.0
      %3612 = vmatpush1.msra.mxu0 0.0
      %3613 = vmatprep.subr.mxu0 0.0
      %3614 = vmatpush1.msra.mxu0 0.0
      %3615 = vmatprep.subr.mxu0 0.0
      %3616 = vmatpush1.msra.mxu0 0.0
      %3617 = vmatprep.subr.mxu0 0.0
      %3618 = vmatpush1.msra.mxu0 0.0
      %3619 = vmatprep.subr.mxu0 0.0
      %3620 = vmatpush1.msra.mxu0 %v365
      %3621 = vmatprep.subr.mxu0 0.0
      %3622 = vmatpush2.msra.mxu0 0.0
      %3623 = vmatprep.subr.mxu0 0.0
      %3624 = vmatpush2.msra.mxu0 0.0
      %3625 = vmatprep.subr.mxu0 0.0
      %3626 = vmatpush2.msra.mxu0 0.0
      %3627 = vmatprep.subr.mxu0 0.0
      %3628 = vmatpush2.msra.mxu0 0.0
      %3629 = vmatprep.subr.mxu0 0.0
      %3630 = vmatpush2.msra.mxu0 0.0
      %3631 = vmatprep.subr.mxu0 0.0
      %3632 = vmatpush2.msra.mxu0 0.0
      %3633 = vmatprep.subr.mxu0 0.0
      %3634 = vmatpush2.msra.mxu0 0.0
      %3635 = vmatprep.subr.mxu0 0.0
      %3636 = vmatpush2.msra.mxu0 0.0
      %3637 = vmatprep.subr.mxu0 0.0
      %3638 = vmatpush2.msra.mxu0 0.0
      %3639 = vmatprep.subr.mxu0 0.0
      %3640 = vmatpush2.msra.mxu0 0.0
      %3641 = vmatprep.subr.mxu0 0.0
      %3642 = vmatpush2.msra.mxu0 0.0
      %3643 = vmatprep.subr.mxu0 0.0
      %3644 = vmatpush2.msra.mxu0 0.0
      %3645 = vmatprep.subr.mxu0 0.0
      %3646 = vmatpush2.msra.mxu0 0.0
      %3647 = vmatprep.subr.mxu0 0.0
      %3648 = vmatpush2.msra.mxu0 0.0
      %3649 = vmatprep.subr.mxu0 0.0
      %3650 = vmatpush2.msra.mxu0 0.0
      %3651 = vmatprep.subr.mxu0 0.0
      %3652 = vmatpush2.msra.mxu0 0.0
      %3653 = vmatprep.mubr.f32.mxu0 0.0
      %3654 = vmatmul.mubr.f32.gmra.mxu0 %v3587
      %v3655 = vpop.f32.mrf.mxu0
      %v3656 = vadd.f32 0.0, %v3655
      %v3657 = vpop.f32.mrf.mxu0
      %3658 = vdwg.mxu0
      %v3659 = vmul.f32 %v3656, 0.6
      %3661 = vset.pattern.permute.xlu0 0
      %3662 = vperm.xlu0 %3661, %v3576
      %v3663 = vpop.permute.xlu0 %3662
      %v3665 = vmul.f32 %v476, %v3663
      %v3666 = vadd.f32 %v3665, %v483
      %v3667 = vmul.f32 %v3666, 0.4
      %v3668 = vadd.f32 %v3659, %v3667
      %vm3669 = vcmp.ge.f32.partialorder %v3576, 0.0
      %v3670 = vsel %vm3669, 1, 0
      %v3671 = vcvt.s32.f32 %v3670
      %3673 = vset.pattern.permute.xlu0 0
      %3674 = vperm.xlu0 %3673, %v3671
      %v3675 = vpop.permute.xlu0 %3674
      %v3677 = vmul.f32 %v3668, %v3675
      %v3678 = vadd.f32 %v3365, %v3677
      %v3679 = vsub.f32 %v3366, %v3677
      %v3680 = vsel %vm3575, 1, 0
      %3681 = vset.pattern.permute.xlu0 0
      %3682 = vperm.xlu0 %3681, %v3680
      %v3683 = vpop.permute.xlu0 %3682
      %vm3684 = vcmp.eq.s32.totalorder %v3683, 1
      %v3685 = vsel %vm3684, %v3366, %v3679
      %v3686 = vsel %vm3575, %v3367, %v3374
      %v3687 = vadd.s32 %v3368, 1
      %vm3688 = vcmp.lt.f32.partialorder %v3576, 0.0
      %vm3689 = vcmp.ge.s32.totalorder %v3687, 16
      %vm3690 = vmor %vm3688, %vm3689
      %v3691 = vsel %vm3690, 1, 0
      %vm3692 = vcmp.gt.s32.totalorder %v3370, %v3691
      %v3693 = vsel %vm3692, %v3370, %v3691
      %3694 = vset.pattern.permute.xlu0 0
      %3695 = vperm.xlu0 %3694, %v3368
      %v3696 = vpop.permute.xlu0 %3695
      %vm3697 = vcmp.eq.s32.totalorder %v374, %v3696
      %v3698 = vsel %vm3373, 1, 0
      %3699 = vset.pattern.permute.xlu0 0
      %3700 = vperm.xlu0 %3699, %v3698
      %v3701 = vpop.permute.xlu0 %3700
      %vm3702 = vcmp.eq.s32.totalorder %v3701, 1
      %vm3703 = vmand %vm3697, %vm3702
      %v3704 = vsel %vm3703, %v3663, %v3358
      %3706 = vset.pattern.permute.xlu0 0
      %3707 = vperm.xlu0 %3706, %v3577
      %v3708 = vpop.permute.xlu0 %3707
      %v3710 = vsel %vm3703, %v3708, %v3364
      %v3711 = vsel %vm3702, %v3678, %v3365
      %v3712 = vsel %vm3702, %v3685, %v3366
      %v3713 = vsel %vm3373, %v3686, %v3367
      %v3714 = vsel %vm3373, %v3687, %v3368
      %v3715 = vsel %vm3373, %v3576, %v3369
      %v3716 = vsel %vm3373, %v3693, %v3370
      %vm3717 = vcmp.eq.s32.totalorder %v3716, 0
      %vm3718 = vcmp.lt.s32.totalorder %v3713, 5
      %vm3719 = vmand %vm3717, %vm3718
      %v3720 = vadd.s32 %v3713, 1
      %v3721 = vcvt.s32.f32 %v3720
      %v3722 = vsub.f32 %v500, %v3721
      %v3723 = vmax.f32 %v3722, 1.0
      %v3724 = vcvt.s32.f32 %v3714
      %3726 = vset.pattern.permute.xlu0 0
      %3727 = vperm.xlu0 %3726, %v3724
      %v3728 = vpop.permute.xlu0 %3727
      %v3730 = vrcp.pop %v3728
      %v3731 = vmul.f32 %v3711, %v3730
      %3733 = vset.pattern.permute.xlu0 0
      %3734 = vperm.xlu0 %3733, %v3723
      %v3735 = vpop.permute.xlu0 %3734
      %v3737 = vrcp.pop %v3735
      %v3738 = vmul.f32 %v3712, %v3737
      %v3740 = vsel %vm656, %v3738, 0
      %3742 = vmatprep.subr.mxu0 0.0
      %3743 = vmatpush1.msra.mxu0 0.0
      %3744 = vmatprep.subr.mxu0 0.0
      %3745 = vmatpush1.msra.mxu0 0.0
      %3746 = vmatprep.subr.mxu0 0.0
      %3747 = vmatpush1.msra.mxu0 0.0
      %3748 = vmatprep.subr.mxu0 0.0
      %3749 = vmatpush1.msra.mxu0 0.0
      %3750 = vmatprep.subr.mxu0 0.0
      %3751 = vmatpush1.msra.mxu0 0.0
      %3752 = vmatprep.subr.mxu0 0.0
      %3753 = vmatpush1.msra.mxu0 0.0
      %3754 = vmatprep.subr.mxu0 0.0
      %3755 = vmatpush1.msra.mxu0 0.0
      %3756 = vmatprep.subr.mxu0 0.0
      %3757 = vmatpush1.msra.mxu0 0.0
      %3758 = vmatprep.subr.mxu0 0.0
      %3759 = vmatpush1.msra.mxu0 0.0
      %3760 = vmatprep.subr.mxu0 0.0
      %3761 = vmatpush1.msra.mxu0 0.0
      %3762 = vmatprep.subr.mxu0 0.0
      %3763 = vmatpush1.msra.mxu0 0.0
      %3764 = vmatprep.subr.mxu0 0.0
      %3765 = vmatpush1.msra.mxu0 0.0
      %3766 = vmatprep.subr.mxu0 0.0
      %3767 = vmatpush1.msra.mxu0 0.0
      %3768 = vmatprep.subr.mxu0 0.0
      %3769 = vmatpush1.msra.mxu0 0.0
      %3770 = vmatprep.subr.mxu0 0.0
      %3771 = vmatpush1.msra.mxu0 %v371
      %3772 = vmatprep.subr.mxu0 0.0
      %3773 = vmatpush1.msra.mxu0 %v370
      %3774 = vmatprep.subr.mxu0 0.0
      %3775 = vmatpush2.msra.mxu0 0.0
      %3776 = vmatprep.subr.mxu0 0.0
      %3777 = vmatpush2.msra.mxu0 0.0
      %3778 = vmatprep.subr.mxu0 0.0
      %3779 = vmatpush2.msra.mxu0 0.0
      %3780 = vmatprep.subr.mxu0 0.0
      %3781 = vmatpush2.msra.mxu0 0.0
      %3782 = vmatprep.subr.mxu0 0.0
      %3783 = vmatpush2.msra.mxu0 0.0
      %3784 = vmatprep.subr.mxu0 0.0
      %3785 = vmatpush2.msra.mxu0 0.0
      %3786 = vmatprep.subr.mxu0 0.0
      %3787 = vmatpush2.msra.mxu0 0.0
      %3788 = vmatprep.subr.mxu0 0.0
      %3789 = vmatpush2.msra.mxu0 0.0
      %3790 = vmatprep.subr.mxu0 0.0
      %3791 = vmatpush2.msra.mxu0 0.0
      %3792 = vmatprep.subr.mxu0 0.0
      %3793 = vmatpush2.msra.mxu0 0.0
      %3794 = vmatprep.subr.mxu0 0.0
      %3795 = vmatpush2.msra.mxu0 0.0
      %3796 = vmatprep.subr.mxu0 0.0
      %3797 = vmatpush2.msra.mxu0 0.0
      %3798 = vmatprep.subr.mxu0 0.0
      %3799 = vmatpush2.msra.mxu0 0.0
      %3800 = vmatprep.subr.mxu0 0.0
      %3801 = vmatpush2.msra.mxu0 0.0
      %3802 = vmatprep.subr.mxu0 0.0
      %3803 = vmatpush2.msra.mxu0 0.0
      %3804 = vmatprep.subr.mxu0 0.0
      %3805 = vmatpush2.msra.mxu0 0.0
      %3806 = vmatprep.mubr.f32.mxu0 0.0
      %3807 = vmatmul.mubr.f32.gmra.mxu0 %v3740
      %v3808 = vpop.f32.mrf.mxu0
      %v3809 = vadd.f32 0.0, %v3808
      %v3810 = vpop.f32.mrf.mxu0
      %3811 = vdwg.mxu0
      %v3813 = vsel %vm656, %v3731, 0
      %3815 = vmatprep.subr.mxu0 0.0
      %3816 = vmatpush1.msra.mxu0 0.0
      %3817 = vmatprep.subr.mxu0 0.0
      %3818 = vmatpush1.msra.mxu0 0.0
      %3819 = vmatprep.subr.mxu0 0.0
      %3820 = vmatpush1.msra.mxu0 0.0
      %3821 = vmatprep.subr.mxu0 0.0
      %3822 = vmatpush1.msra.mxu0 0.0
      %3823 = vmatprep.subr.mxu0 0.0
      %3824 = vmatpush1.msra.mxu0 0.0
      %3825 = vmatprep.subr.mxu0 0.0
      %3826 = vmatpush1.msra.mxu0 0.0
      %3827 = vmatprep.subr.mxu0 0.0
      %3828 = vmatpush1.msra.mxu0 0.0
      %3829 = vmatprep.subr.mxu0 0.0
      %3830 = vmatpush1.msra.mxu0 0.0
      %3831 = vmatprep.subr.mxu0 0.0
      %3832 = vmatpush1.msra.mxu0 0.0
      %3833 = vmatprep.subr.mxu0 0.0
      %3834 = vmatpush1.msra.mxu0 0.0
      %3835 = vmatprep.subr.mxu0 0.0
      %3836 = vmatpush1.msra.mxu0 0.0
      %3837 = vmatprep.subr.mxu0 0.0
      %3838 = vmatpush1.msra.mxu0 0.0
      %3839 = vmatprep.subr.mxu0 0.0
      %3840 = vmatpush1.msra.mxu0 0.0
      %3841 = vmatprep.subr.mxu0 0.0
      %3842 = vmatpush1.msra.mxu0 0.0
      %3843 = vmatprep.subr.mxu0 0.0
      %3844 = vmatpush1.msra.mxu0 %v369
      %3845 = vmatprep.subr.mxu0 0.0
      %3846 = vmatpush1.msra.mxu0 %v368
      %3847 = vmatprep.subr.mxu0 0.0
      %3848 = vmatpush2.msra.mxu0 0.0
      %3849 = vmatprep.subr.mxu0 0.0
      %3850 = vmatpush2.msra.mxu0 0.0
      %3851 = vmatprep.subr.mxu0 0.0
      %3852 = vmatpush2.msra.mxu0 0.0
      %3853 = vmatprep.subr.mxu0 0.0
      %3854 = vmatpush2.msra.mxu0 0.0
      %3855 = vmatprep.subr.mxu0 0.0
      %3856 = vmatpush2.msra.mxu0 0.0
      %3857 = vmatprep.subr.mxu0 0.0
      %3858 = vmatpush2.msra.mxu0 0.0
      %3859 = vmatprep.subr.mxu0 0.0
      %3860 = vmatpush2.msra.mxu0 0.0
      %3861 = vmatprep.subr.mxu0 0.0
      %3862 = vmatpush2.msra.mxu0 0.0
      %3863 = vmatprep.subr.mxu0 0.0
      %3864 = vmatpush2.msra.mxu0 0.0
      %3865 = vmatprep.subr.mxu0 0.0
      %3866 = vmatpush2.msra.mxu0 0.0
      %3867 = vmatprep.subr.mxu0 0.0
      %3868 = vmatpush2.msra.mxu0 0.0
      %3869 = vmatprep.subr.mxu0 0.0
      %3870 = vmatpush2.msra.mxu0 0.0
      %3871 = vmatprep.subr.mxu0 0.0
      %3872 = vmatpush2.msra.mxu0 0.0
      %3873 = vmatprep.subr.mxu0 0.0
      %3874 = vmatpush2.msra.mxu0 0.0
      %3875 = vmatprep.subr.mxu0 0.0
      %3876 = vmatpush2.msra.mxu0 0.0
      %3877 = vmatprep.subr.mxu0 0.0
      %3878 = vmatpush2.msra.mxu0 0.0
      %3879 = vmatprep.mubr.f32.mxu0 0.0
      %3880 = vmatmul.mubr.f32.gmra.mxu0 %v3813
      %v3881 = vpop.f32.mrf.mxu0
      %v3882 = vadd.f32 %v3809, %v3881
      %v3883 = vpop.f32.mrf.mxu0
      %3884 = vdwg.mxu0
      %v3885 = vadd.f32 %v3882, %v807
      %v3886 = vsel %vm397, %v3885, -inf
      %3887 = vmax.xlane.f32.xlu0 %v3886
      %v3888 = vpop.xlane.xlu0 %3887
      %vm3889 = vcmp.eq.f32.partialorder %v3885, %v3888
      %v3890 = vsel %vm3889, %v375, 8.0
      %v3891 = vsel %vm397, %v3890, inf
      %3892 = vmin.xlane.f32.xlu0 %v3891
      %v3893 = vpop.xlane.xlu0 %3892
      %v3894 = vsub.f32 %v3885, %v3888
      %v3895 = vmul.f32 %v3894, 1.442695
      %v3896 = vpow.pop %v3895
      %v3897 = vsel %vm397, %v3896, 0.0
      %3898 = vadd.xlane.f32.xlu0 %v3897
      %v3899 = vpop.xlane.xlu0 %3898
      %vm3900 = vcmp.eq.s32.totalorder %v374, 9
      %v3901 = vsel %vm3900, %v364, 0.0
      %v3902 = vsel %vm656, %v3901, 0.0
      %3903 = vadd.xlane.f32.xlu0 %v3902
      %v3904 = vpop.xlane.xlu0 %3903
      %v3905 = vmul.f32 %v3904, %v3899
      %3906 = vset.pattern.permute.xlu0 0
      %3907 = vperm.xlu0 %3906, %v3720
      %v3908 = vpop.permute.xlu0 %3907
      %vm3909 = vcmp.eq.s32.totalorder %v374, %v3908
      %v3910 = vsel %vm3909, 1, 0
      %v3911 = vcvt.s32.f32 %v3910
      %v3912 = vmul.f32 %v362, %v3911
      %v3913 = vsel %vm497, %v3912, 0.0
      %3914 = vadd.xlane.f32.xlu0 %v3913
      %v3915 = vpop.xlane.xlu0 %3914
      %v3916 = vmul.f32 %v363, %v3911
      %v3917 = vsel %vm497, %v3916, 0.0
      %3918 = vadd.xlane.f32.xlu0 %v3917
      %v3919 = vpop.xlane.xlu0 %3918
      %v3920 = vadd.f32 %v3715, %v3905
      %vm3921 = vcmp.lt.f32.partialorder %v3920, %v3915
      %v3922 = vsel %vm3921, %v3920, %v3915
      %v3923 = vsel %vm3921, %v3893, %v3919
      %v3924 = vadd.f32 %v3923, 0.5
      %v3925 = vcvt.f32.s32.to.zero.pseudo %v3924
      %3926 = vset.pattern.permute.xlu0 0
      %3927 = vperm.xlu0 %3926, %v3925
      %v3928 = vpop.permute.xlu0 %3927
      %vm3929 = vcmp.eq.s32.totalorder %v374, %v3928
      %v3930 = vsel %vm3929, 1, 0
      %v3931 = vcvt.s32.f32 %v3930
      %v3933 = vsel %vm397, %v3931, 0
      %3935 = vmatprep.subr.mxu0 0.0
      %3936 = vmatpush1.msra.mxu0 0.0
      %3937 = vmatprep.subr.mxu0 0.0
      %3938 = vmatpush1.msra.mxu0 0.0
      %3939 = vmatprep.subr.mxu0 0.0
      %3940 = vmatpush1.msra.mxu0 0.0
      %3941 = vmatprep.subr.mxu0 0.0
      %3942 = vmatpush1.msra.mxu0 0.0
      %3943 = vmatprep.subr.mxu0 0.0
      %3944 = vmatpush1.msra.mxu0 0.0
      %3945 = vmatprep.subr.mxu0 0.0
      %3946 = vmatpush1.msra.mxu0 0.0
      %3947 = vmatprep.subr.mxu0 0.0
      %3948 = vmatpush1.msra.mxu0 0.0
      %3949 = vmatprep.subr.mxu0 0.0
      %3950 = vmatpush1.msra.mxu0 0.0
      %3951 = vmatprep.subr.mxu0 0.0
      %3952 = vmatpush1.msra.mxu0 0.0
      %3953 = vmatprep.subr.mxu0 0.0
      %3954 = vmatpush1.msra.mxu0 0.0
      %3955 = vmatprep.subr.mxu0 0.0
      %3956 = vmatpush1.msra.mxu0 0.0
      %3957 = vmatprep.subr.mxu0 0.0
      %3958 = vmatpush1.msra.mxu0 0.0
      %3959 = vmatprep.subr.mxu0 0.0
      %3960 = vmatpush1.msra.mxu0 0.0
      %3961 = vmatprep.subr.mxu0 0.0
      %3962 = vmatpush1.msra.mxu0 0.0
      %3963 = vmatprep.subr.mxu0 0.0
      %3964 = vmatpush1.msra.mxu0 0.0
      %3965 = vmatprep.subr.mxu0 0.0
      %3966 = vmatpush1.msra.mxu0 %v365
      %3967 = vmatprep.subr.mxu0 0.0
      %3968 = vmatpush2.msra.mxu0 0.0
      %3969 = vmatprep.subr.mxu0 0.0
      %3970 = vmatpush2.msra.mxu0 0.0
      %3971 = vmatprep.subr.mxu0 0.0
      %3972 = vmatpush2.msra.mxu0 0.0
      %3973 = vmatprep.subr.mxu0 0.0
      %3974 = vmatpush2.msra.mxu0 0.0
      %3975 = vmatprep.subr.mxu0 0.0
      %3976 = vmatpush2.msra.mxu0 0.0
      %3977 = vmatprep.subr.mxu0 0.0
      %3978 = vmatpush2.msra.mxu0 0.0
      %3979 = vmatprep.subr.mxu0 0.0
      %3980 = vmatpush2.msra.mxu0 0.0
      %3981 = vmatprep.subr.mxu0 0.0
      %3982 = vmatpush2.msra.mxu0 0.0
      %3983 = vmatprep.subr.mxu0 0.0
      %3984 = vmatpush2.msra.mxu0 0.0
      %3985 = vmatprep.subr.mxu0 0.0
      %3986 = vmatpush2.msra.mxu0 0.0
      %3987 = vmatprep.subr.mxu0 0.0
      %3988 = vmatpush2.msra.mxu0 0.0
      %3989 = vmatprep.subr.mxu0 0.0
      %3990 = vmatpush2.msra.mxu0 0.0
      %3991 = vmatprep.subr.mxu0 0.0
      %3992 = vmatpush2.msra.mxu0 0.0
      %3993 = vmatprep.subr.mxu0 0.0
      %3994 = vmatpush2.msra.mxu0 0.0
      %3995 = vmatprep.subr.mxu0 0.0
      %3996 = vmatpush2.msra.mxu0 0.0
      %3997 = vmatprep.subr.mxu0 0.0
      %3998 = vmatpush2.msra.mxu0 0.0
      %3999 = vmatprep.mubr.f32.mxu0 0.0
      %4000 = vmatmul.mubr.f32.gmra.mxu0 %v3933
      %v4001 = vpop.f32.mrf.mxu0
      %v4002 = vadd.f32 0.0, %v4001
      %v4003 = vpop.f32.mrf.mxu0
      %4004 = vdwg.mxu0
      %v4005 = vmul.f32 %v4002, 0.6
      %4007 = vset.pattern.permute.xlu0 0
      %4008 = vperm.xlu0 %4007, %v3922
      %v4009 = vpop.permute.xlu0 %4008
      %v4011 = vmul.f32 %v476, %v4009
      %v4012 = vadd.f32 %v4011, %v483
      %v4013 = vmul.f32 %v4012, 0.4
      %v4014 = vadd.f32 %v4005, %v4013
      %vm4015 = vcmp.ge.f32.partialorder %v3922, 0.0
      %v4016 = vsel %vm4015, 1, 0
      %v4017 = vcvt.s32.f32 %v4016
      %4019 = vset.pattern.permute.xlu0 0
      %4020 = vperm.xlu0 %4019, %v4017
      %v4021 = vpop.permute.xlu0 %4020
      %v4023 = vmul.f32 %v4014, %v4021
      %v4024 = vadd.f32 %v3711, %v4023
      %v4025 = vsub.f32 %v3712, %v4023
      %v4026 = vsel %vm3921, 1, 0
      %4027 = vset.pattern.permute.xlu0 0
      %4028 = vperm.xlu0 %4027, %v4026
      %v4029 = vpop.permute.xlu0 %4028
      %vm4030 = vcmp.eq.s32.totalorder %v4029, 1
      %v4031 = vsel %vm4030, %v3712, %v4025
      %v4032 = vsel %vm3921, %v3713, %v3720
      %v4033 = vadd.s32 %v3714, 1
      %vm4034 = vcmp.lt.f32.partialorder %v3922, 0.0
      %vm4035 = vcmp.ge.s32.totalorder %v4033, 16
      %vm4036 = vmor %vm4034, %vm4035
      %v4037 = vsel %vm4036, 1, 0
      %vm4038 = vcmp.gt.s32.totalorder %v3716, %v4037
      %v4039 = vsel %vm4038, %v3716, %v4037
      %4040 = vset.pattern.permute.xlu0 0
      %4041 = vperm.xlu0 %4040, %v3714
      %v4042 = vpop.permute.xlu0 %4041
      %vm4043 = vcmp.eq.s32.totalorder %v374, %v4042
      %v4044 = vsel %vm3719, 1, 0
      %4045 = vset.pattern.permute.xlu0 0
      %4046 = vperm.xlu0 %4045, %v4044
      %v4047 = vpop.permute.xlu0 %4046
      %vm4048 = vcmp.eq.s32.totalorder %v4047, 1
      %vm4049 = vmand %vm4043, %vm4048
      %v4050 = vsel %vm4049, %v4009, %v3704
      %4052 = vset.pattern.permute.xlu0 0
      %4053 = vperm.xlu0 %4052, %v3923
      %v4054 = vpop.permute.xlu0 %4053
      %v4056 = vsel %vm4049, %v4054, %v3710
      %v4057 = vsel %vm4048, %v4024, %v3711
      %v4058 = vsel %vm4048, %v4031, %v3712
      %v4059 = vsel %vm3719, %v4032, %v3713
      %v4060 = vsel %vm3719, %v4033, %v3714
      %v4061 = vsel %vm3719, %v3922, %v3715
      %v4062 = vsel %vm3719, %v4039, %v3716
      %vm4063 = vcmp.eq.s32.totalorder %v4062, 0
      %vm4064 = vcmp.lt.s32.totalorder %v4059, 5
      %vm4065 = vmand %vm4063, %vm4064
      %v4066 = vadd.s32 %v4059, 1
      %v4067 = vcvt.s32.f32 %v4066
      %v4068 = vsub.f32 %v500, %v4067
      %v4069 = vmax.f32 %v4068, 1.0
      %v4070 = vcvt.s32.f32 %v4060
      %4072 = vset.pattern.permute.xlu0 0
      %4073 = vperm.xlu0 %4072, %v4070
      %v4074 = vpop.permute.xlu0 %4073
      %v4076 = vrcp.pop %v4074
      %v4077 = vmul.f32 %v4057, %v4076
      %4079 = vset.pattern.permute.xlu0 0
      %4080 = vperm.xlu0 %4079, %v4069
      %v4081 = vpop.permute.xlu0 %4080
      %v4083 = vrcp.pop %v4081
      %v4084 = vmul.f32 %v4058, %v4083
      %v4086 = vsel %vm656, %v4084, 0
      %4088 = vmatprep.subr.mxu0 0.0
      %4089 = vmatpush1.msra.mxu0 0.0
      %4090 = vmatprep.subr.mxu0 0.0
      %4091 = vmatpush1.msra.mxu0 0.0
      %4092 = vmatprep.subr.mxu0 0.0
      %4093 = vmatpush1.msra.mxu0 0.0
      %4094 = vmatprep.subr.mxu0 0.0
      %4095 = vmatpush1.msra.mxu0 0.0
      %4096 = vmatprep.subr.mxu0 0.0
      %4097 = vmatpush1.msra.mxu0 0.0
      %4098 = vmatprep.subr.mxu0 0.0
      %4099 = vmatpush1.msra.mxu0 0.0
      %4100 = vmatprep.subr.mxu0 0.0
      %4101 = vmatpush1.msra.mxu0 0.0
      %4102 = vmatprep.subr.mxu0 0.0
      %4103 = vmatpush1.msra.mxu0 0.0
      %4104 = vmatprep.subr.mxu0 0.0
      %4105 = vmatpush1.msra.mxu0 0.0
      %4106 = vmatprep.subr.mxu0 0.0
      %4107 = vmatpush1.msra.mxu0 0.0
      %4108 = vmatprep.subr.mxu0 0.0
      %4109 = vmatpush1.msra.mxu0 0.0
      %4110 = vmatprep.subr.mxu0 0.0
      %4111 = vmatpush1.msra.mxu0 0.0
      %4112 = vmatprep.subr.mxu0 0.0
      %4113 = vmatpush1.msra.mxu0 0.0
      %4114 = vmatprep.subr.mxu0 0.0
      %4115 = vmatpush1.msra.mxu0 0.0
      %4116 = vmatprep.subr.mxu0 0.0
      %4117 = vmatpush1.msra.mxu0 %v371
      %4118 = vmatprep.subr.mxu0 0.0
      %4119 = vmatpush1.msra.mxu0 %v370
      %4120 = vmatprep.subr.mxu0 0.0
      %4121 = vmatpush2.msra.mxu0 0.0
      %4122 = vmatprep.subr.mxu0 0.0
      %4123 = vmatpush2.msra.mxu0 0.0
      %4124 = vmatprep.subr.mxu0 0.0
      %4125 = vmatpush2.msra.mxu0 0.0
      %4126 = vmatprep.subr.mxu0 0.0
      %4127 = vmatpush2.msra.mxu0 0.0
      %4128 = vmatprep.subr.mxu0 0.0
      %4129 = vmatpush2.msra.mxu0 0.0
      %4130 = vmatprep.subr.mxu0 0.0
      %4131 = vmatpush2.msra.mxu0 0.0
      %4132 = vmatprep.subr.mxu0 0.0
      %4133 = vmatpush2.msra.mxu0 0.0
      %4134 = vmatprep.subr.mxu0 0.0
      %4135 = vmatpush2.msra.mxu0 0.0
      %4136 = vmatprep.subr.mxu0 0.0
      %4137 = vmatpush2.msra.mxu0 0.0
      %4138 = vmatprep.subr.mxu0 0.0
      %4139 = vmatpush2.msra.mxu0 0.0
      %4140 = vmatprep.subr.mxu0 0.0
      %4141 = vmatpush2.msra.mxu0 0.0
      %4142 = vmatprep.subr.mxu0 0.0
      %4143 = vmatpush2.msra.mxu0 0.0
      %4144 = vmatprep.subr.mxu0 0.0
      %4145 = vmatpush2.msra.mxu0 0.0
      %4146 = vmatprep.subr.mxu0 0.0
      %4147 = vmatpush2.msra.mxu0 0.0
      %4148 = vmatprep.subr.mxu0 0.0
      %4149 = vmatpush2.msra.mxu0 0.0
      %4150 = vmatprep.subr.mxu0 0.0
      %4151 = vmatpush2.msra.mxu0 0.0
      %4152 = vmatprep.mubr.f32.mxu0 0.0
      %4153 = vmatmul.mubr.f32.gmra.mxu0 %v4086
      %v4154 = vpop.f32.mrf.mxu0
      %v4155 = vadd.f32 0.0, %v4154
      %v4156 = vpop.f32.mrf.mxu0
      %4157 = vdwg.mxu0
      %v4159 = vsel %vm656, %v4077, 0
      %4161 = vmatprep.subr.mxu0 0.0
      %4162 = vmatpush1.msra.mxu0 0.0
      %4163 = vmatprep.subr.mxu0 0.0
      %4164 = vmatpush1.msra.mxu0 0.0
      %4165 = vmatprep.subr.mxu0 0.0
      %4166 = vmatpush1.msra.mxu0 0.0
      %4167 = vmatprep.subr.mxu0 0.0
      %4168 = vmatpush1.msra.mxu0 0.0
      %4169 = vmatprep.subr.mxu0 0.0
      %4170 = vmatpush1.msra.mxu0 0.0
      %4171 = vmatprep.subr.mxu0 0.0
      %4172 = vmatpush1.msra.mxu0 0.0
      %4173 = vmatprep.subr.mxu0 0.0
      %4174 = vmatpush1.msra.mxu0 0.0
      %4175 = vmatprep.subr.mxu0 0.0
      %4176 = vmatpush1.msra.mxu0 0.0
      %4177 = vmatprep.subr.mxu0 0.0
      %4178 = vmatpush1.msra.mxu0 0.0
      %4179 = vmatprep.subr.mxu0 0.0
      %4180 = vmatpush1.msra.mxu0 0.0
      %4181 = vmatprep.subr.mxu0 0.0
      %4182 = vmatpush1.msra.mxu0 0.0
      %4183 = vmatprep.subr.mxu0 0.0
      %4184 = vmatpush1.msra.mxu0 0.0
      %4185 = vmatprep.subr.mxu0 0.0
      %4186 = vmatpush1.msra.mxu0 0.0
      %4187 = vmatprep.subr.mxu0 0.0
      %4188 = vmatpush1.msra.mxu0 0.0
      %4189 = vmatprep.subr.mxu0 0.0
      %4190 = vmatpush1.msra.mxu0 %v369
      %4191 = vmatprep.subr.mxu0 0.0
      %4192 = vmatpush1.msra.mxu0 %v368
      %4193 = vmatprep.subr.mxu0 0.0
      %4194 = vmatpush2.msra.mxu0 0.0
      %4195 = vmatprep.subr.mxu0 0.0
      %4196 = vmatpush2.msra.mxu0 0.0
      %4197 = vmatprep.subr.mxu0 0.0
      %4198 = vmatpush2.msra.mxu0 0.0
      %4199 = vmatprep.subr.mxu0 0.0
      %4200 = vmatpush2.msra.mxu0 0.0
      %4201 = vmatprep.subr.mxu0 0.0
      %4202 = vmatpush2.msra.mxu0 0.0
      %4203 = vmatprep.subr.mxu0 0.0
      %4204 = vmatpush2.msra.mxu0 0.0
      %4205 = vmatprep.subr.mxu0 0.0
      %4206 = vmatpush2.msra.mxu0 0.0
      %4207 = vmatprep.subr.mxu0 0.0
      %4208 = vmatpush2.msra.mxu0 0.0
      %4209 = vmatprep.subr.mxu0 0.0
      %4210 = vmatpush2.msra.mxu0 0.0
      %4211 = vmatprep.subr.mxu0 0.0
      %4212 = vmatpush2.msra.mxu0 0.0
      %4213 = vmatprep.subr.mxu0 0.0
      %4214 = vmatpush2.msra.mxu0 0.0
      %4215 = vmatprep.subr.mxu0 0.0
      %4216 = vmatpush2.msra.mxu0 0.0
      %4217 = vmatprep.subr.mxu0 0.0
      %4218 = vmatpush2.msra.mxu0 0.0
      %4219 = vmatprep.subr.mxu0 0.0
      %4220 = vmatpush2.msra.mxu0 0.0
      %4221 = vmatprep.subr.mxu0 0.0
      %4222 = vmatpush2.msra.mxu0 0.0
      %4223 = vmatprep.subr.mxu0 0.0
      %4224 = vmatpush2.msra.mxu0 0.0
      %4225 = vmatprep.mubr.f32.mxu0 0.0
      %4226 = vmatmul.mubr.f32.gmra.mxu0 %v4159
      %v4227 = vpop.f32.mrf.mxu0
      %v4228 = vadd.f32 %v4155, %v4227
      %v4229 = vpop.f32.mrf.mxu0
      %4230 = vdwg.mxu0
      %v4231 = vadd.f32 %v4228, %v807
      %v4232 = vsel %vm397, %v4231, -inf
      %4233 = vmax.xlane.f32.xlu0 %v4232
      %v4234 = vpop.xlane.xlu0 %4233
      %vm4235 = vcmp.eq.f32.partialorder %v4231, %v4234
      %v4236 = vsel %vm4235, %v375, 8.0
      %v4237 = vsel %vm397, %v4236, inf
      %4238 = vmin.xlane.f32.xlu0 %v4237
      %v4239 = vpop.xlane.xlu0 %4238
      %v4240 = vsub.f32 %v4231, %v4234
      %v4241 = vmul.f32 %v4240, 1.442695
      %v4242 = vpow.pop %v4241
      %v4243 = vsel %vm397, %v4242, 0.0
      %4244 = vadd.xlane.f32.xlu0 %v4243
      %v4245 = vpop.xlane.xlu0 %4244
      %vm4246 = vcmp.eq.s32.totalorder %v374, 10
      %v4247 = vsel %vm4246, %v364, 0.0
      %v4248 = vsel %vm656, %v4247, 0.0
      %4249 = vadd.xlane.f32.xlu0 %v4248
      %v4250 = vpop.xlane.xlu0 %4249
      %v4251 = vmul.f32 %v4250, %v4245
      %4252 = vset.pattern.permute.xlu0 0
      %4253 = vperm.xlu0 %4252, %v4066
      %v4254 = vpop.permute.xlu0 %4253
      %vm4255 = vcmp.eq.s32.totalorder %v374, %v4254
      %v4256 = vsel %vm4255, 1, 0
      %v4257 = vcvt.s32.f32 %v4256
      %v4258 = vmul.f32 %v362, %v4257
      %v4259 = vsel %vm497, %v4258, 0.0
      %4260 = vadd.xlane.f32.xlu0 %v4259
      %v4261 = vpop.xlane.xlu0 %4260
      %v4262 = vmul.f32 %v363, %v4257
      %v4263 = vsel %vm497, %v4262, 0.0
      %4264 = vadd.xlane.f32.xlu0 %v4263
      %v4265 = vpop.xlane.xlu0 %4264
      %v4266 = vadd.f32 %v4061, %v4251
      %vm4267 = vcmp.lt.f32.partialorder %v4266, %v4261
      %v4268 = vsel %vm4267, %v4266, %v4261
      %v4269 = vsel %vm4267, %v4239, %v4265
      %v4270 = vadd.f32 %v4269, 0.5
      %v4271 = vcvt.f32.s32.to.zero.pseudo %v4270
      %4272 = vset.pattern.permute.xlu0 0
      %4273 = vperm.xlu0 %4272, %v4271
      %v4274 = vpop.permute.xlu0 %4273
      %vm4275 = vcmp.eq.s32.totalorder %v374, %v4274
      %v4276 = vsel %vm4275, 1, 0
      %v4277 = vcvt.s32.f32 %v4276
      %v4279 = vsel %vm397, %v4277, 0
      %4281 = vmatprep.subr.mxu0 0.0
      %4282 = vmatpush1.msra.mxu0 0.0
      %4283 = vmatprep.subr.mxu0 0.0
      %4284 = vmatpush1.msra.mxu0 0.0
      %4285 = vmatprep.subr.mxu0 0.0
      %4286 = vmatpush1.msra.mxu0 0.0
      %4287 = vmatprep.subr.mxu0 0.0
      %4288 = vmatpush1.msra.mxu0 0.0
      %4289 = vmatprep.subr.mxu0 0.0
      %4290 = vmatpush1.msra.mxu0 0.0
      %4291 = vmatprep.subr.mxu0 0.0
      %4292 = vmatpush1.msra.mxu0 0.0
      %4293 = vmatprep.subr.mxu0 0.0
      %4294 = vmatpush1.msra.mxu0 0.0
      %4295 = vmatprep.subr.mxu0 0.0
      %4296 = vmatpush1.msra.mxu0 0.0
      %4297 = vmatprep.subr.mxu0 0.0
      %4298 = vmatpush1.msra.mxu0 0.0
      %4299 = vmatprep.subr.mxu0 0.0
      %4300 = vmatpush1.msra.mxu0 0.0
      %4301 = vmatprep.subr.mxu0 0.0
      %4302 = vmatpush1.msra.mxu0 0.0
      %4303 = vmatprep.subr.mxu0 0.0
      %4304 = vmatpush1.msra.mxu0 0.0
      %4305 = vmatprep.subr.mxu0 0.0
      %4306 = vmatpush1.msra.mxu0 0.0
      %4307 = vmatprep.subr.mxu0 0.0
      %4308 = vmatpush1.msra.mxu0 0.0
      %4309 = vmatprep.subr.mxu0 0.0
      %4310 = vmatpush1.msra.mxu0 0.0
      %4311 = vmatprep.subr.mxu0 0.0
      %4312 = vmatpush1.msra.mxu0 %v365
      %4313 = vmatprep.subr.mxu0 0.0
      %4314 = vmatpush2.msra.mxu0 0.0
      %4315 = vmatprep.subr.mxu0 0.0
      %4316 = vmatpush2.msra.mxu0 0.0
      %4317 = vmatprep.subr.mxu0 0.0
      %4318 = vmatpush2.msra.mxu0 0.0
      %4319 = vmatprep.subr.mxu0 0.0
      %4320 = vmatpush2.msra.mxu0 0.0
      %4321 = vmatprep.subr.mxu0 0.0
      %4322 = vmatpush2.msra.mxu0 0.0
      %4323 = vmatprep.subr.mxu0 0.0
      %4324 = vmatpush2.msra.mxu0 0.0
      %4325 = vmatprep.subr.mxu0 0.0
      %4326 = vmatpush2.msra.mxu0 0.0
      %4327 = vmatprep.subr.mxu0 0.0
      %4328 = vmatpush2.msra.mxu0 0.0
      %4329 = vmatprep.subr.mxu0 0.0
      %4330 = vmatpush2.msra.mxu0 0.0
      %4331 = vmatprep.subr.mxu0 0.0
      %4332 = vmatpush2.msra.mxu0 0.0
      %4333 = vmatprep.subr.mxu0 0.0
      %4334 = vmatpush2.msra.mxu0 0.0
      %4335 = vmatprep.subr.mxu0 0.0
      %4336 = vmatpush2.msra.mxu0 0.0
      %4337 = vmatprep.subr.mxu0 0.0
      %4338 = vmatpush2.msra.mxu0 0.0
      %4339 = vmatprep.subr.mxu0 0.0
      %4340 = vmatpush2.msra.mxu0 0.0
      %4341 = vmatprep.subr.mxu0 0.0
      %4342 = vmatpush2.msra.mxu0 0.0
      %4343 = vmatprep.subr.mxu0 0.0
      %4344 = vmatpush2.msra.mxu0 0.0
      %4345 = vmatprep.mubr.f32.mxu0 0.0
      %4346 = vmatmul.mubr.f32.gmra.mxu0 %v4279
      %v4347 = vpop.f32.mrf.mxu0
      %v4348 = vadd.f32 0.0, %v4347
      %v4349 = vpop.f32.mrf.mxu0
      %4350 = vdwg.mxu0
      %v4351 = vmul.f32 %v4348, 0.6
      %4353 = vset.pattern.permute.xlu0 0
      %4354 = vperm.xlu0 %4353, %v4268
      %v4355 = vpop.permute.xlu0 %4354
      %v4357 = vmul.f32 %v476, %v4355
      %v4358 = vadd.f32 %v4357, %v483
      %v4359 = vmul.f32 %v4358, 0.4
      %v4360 = vadd.f32 %v4351, %v4359
      %vm4361 = vcmp.ge.f32.partialorder %v4268, 0.0
      %v4362 = vsel %vm4361, 1, 0
      %v4363 = vcvt.s32.f32 %v4362
      %4365 = vset.pattern.permute.xlu0 0
      %4366 = vperm.xlu0 %4365, %v4363
      %v4367 = vpop.permute.xlu0 %4366
      %v4369 = vmul.f32 %v4360, %v4367
      %v4370 = vadd.f32 %v4057, %v4369
      %v4371 = vsub.f32 %v4058, %v4369
      %v4372 = vsel %vm4267, 1, 0
      %4373 = vset.pattern.permute.xlu0 0
      %4374 = vperm.xlu0 %4373, %v4372
      %v4375 = vpop.permute.xlu0 %4374
      %vm4376 = vcmp.eq.s32.totalorder %v4375, 1
      %v4377 = vsel %vm4376, %v4058, %v4371
      %v4378 = vsel %vm4267, %v4059, %v4066
      %v4379 = vadd.s32 %v4060, 1
      %vm4380 = vcmp.lt.f32.partialorder %v4268, 0.0
      %vm4381 = vcmp.ge.s32.totalorder %v4379, 16
      %vm4382 = vmor %vm4380, %vm4381
      %v4383 = vsel %vm4382, 1, 0
      %vm4384 = vcmp.gt.s32.totalorder %v4062, %v4383
      %v4385 = vsel %vm4384, %v4062, %v4383
      %4386 = vset.pattern.permute.xlu0 0
      %4387 = vperm.xlu0 %4386, %v4060
      %v4388 = vpop.permute.xlu0 %4387
      %vm4389 = vcmp.eq.s32.totalorder %v374, %v4388
      %v4390 = vsel %vm4065, 1, 0
      %4391 = vset.pattern.permute.xlu0 0
      %4392 = vperm.xlu0 %4391, %v4390
      %v4393 = vpop.permute.xlu0 %4392
      %vm4394 = vcmp.eq.s32.totalorder %v4393, 1
      %vm4395 = vmand %vm4389, %vm4394
      %v4396 = vsel %vm4395, %v4355, %v4050
      %4398 = vset.pattern.permute.xlu0 0
      %4399 = vperm.xlu0 %4398, %v4269
      %v4400 = vpop.permute.xlu0 %4399
      %v4402 = vsel %vm4395, %v4400, %v4056
      %v4403 = vsel %vm4394, %v4370, %v4057
      %v4404 = vsel %vm4394, %v4377, %v4058
      %v4405 = vsel %vm4065, %v4378, %v4059
      %v4406 = vsel %vm4065, %v4379, %v4060
      %v4407 = vsel %vm4065, %v4268, %v4061
      %v4408 = vsel %vm4065, %v4385, %v4062
      %vm4409 = vcmp.eq.s32.totalorder %v4408, 0
      %vm4410 = vcmp.lt.s32.totalorder %v4405, 5
      %vm4411 = vmand %vm4409, %vm4410
      %v4412 = vadd.s32 %v4405, 1
      %v4413 = vcvt.s32.f32 %v4412
      %v4414 = vsub.f32 %v500, %v4413
      %v4415 = vmax.f32 %v4414, 1.0
      %v4416 = vcvt.s32.f32 %v4406
      %4418 = vset.pattern.permute.xlu0 0
      %4419 = vperm.xlu0 %4418, %v4416
      %v4420 = vpop.permute.xlu0 %4419
      %v4422 = vrcp.pop %v4420
      %v4423 = vmul.f32 %v4403, %v4422
      %4425 = vset.pattern.permute.xlu0 0
      %4426 = vperm.xlu0 %4425, %v4415
      %v4427 = vpop.permute.xlu0 %4426
      %v4429 = vrcp.pop %v4427
      %v4430 = vmul.f32 %v4404, %v4429
      %v4432 = vsel %vm656, %v4430, 0
      %4434 = vmatprep.subr.mxu0 0.0
      %4435 = vmatpush1.msra.mxu0 0.0
      %4436 = vmatprep.subr.mxu0 0.0
      %4437 = vmatpush1.msra.mxu0 0.0
      %4438 = vmatprep.subr.mxu0 0.0
      %4439 = vmatpush1.msra.mxu0 0.0
      %4440 = vmatprep.subr.mxu0 0.0
      %4441 = vmatpush1.msra.mxu0 0.0
      %4442 = vmatprep.subr.mxu0 0.0
      %4443 = vmatpush1.msra.mxu0 0.0
      %4444 = vmatprep.subr.mxu0 0.0
      %4445 = vmatpush1.msra.mxu0 0.0
      %4446 = vmatprep.subr.mxu0 0.0
      %4447 = vmatpush1.msra.mxu0 0.0
      %4448 = vmatprep.subr.mxu0 0.0
      %4449 = vmatpush1.msra.mxu0 0.0
      %4450 = vmatprep.subr.mxu0 0.0
      %4451 = vmatpush1.msra.mxu0 0.0
      %4452 = vmatprep.subr.mxu0 0.0
      %4453 = vmatpush1.msra.mxu0 0.0
      %4454 = vmatprep.subr.mxu0 0.0
      %4455 = vmatpush1.msra.mxu0 0.0
      %4456 = vmatprep.subr.mxu0 0.0
      %4457 = vmatpush1.msra.mxu0 0.0
      %4458 = vmatprep.subr.mxu0 0.0
      %4459 = vmatpush1.msra.mxu0 0.0
      %4460 = vmatprep.subr.mxu0 0.0
      %4461 = vmatpush1.msra.mxu0 0.0
      %4462 = vmatprep.subr.mxu0 0.0
      %4463 = vmatpush1.msra.mxu0 %v371
      %4464 = vmatprep.subr.mxu0 0.0
      %4465 = vmatpush1.msra.mxu0 %v370
      %4466 = vmatprep.subr.mxu0 0.0
      %4467 = vmatpush2.msra.mxu0 0.0
      %4468 = vmatprep.subr.mxu0 0.0
      %4469 = vmatpush2.msra.mxu0 0.0
      %4470 = vmatprep.subr.mxu0 0.0
      %4471 = vmatpush2.msra.mxu0 0.0
      %4472 = vmatprep.subr.mxu0 0.0
      %4473 = vmatpush2.msra.mxu0 0.0
      %4474 = vmatprep.subr.mxu0 0.0
      %4475 = vmatpush2.msra.mxu0 0.0
      %4476 = vmatprep.subr.mxu0 0.0
      %4477 = vmatpush2.msra.mxu0 0.0
      %4478 = vmatprep.subr.mxu0 0.0
      %4479 = vmatpush2.msra.mxu0 0.0
      %4480 = vmatprep.subr.mxu0 0.0
      %4481 = vmatpush2.msra.mxu0 0.0
      %4482 = vmatprep.subr.mxu0 0.0
      %4483 = vmatpush2.msra.mxu0 0.0
      %4484 = vmatprep.subr.mxu0 0.0
      %4485 = vmatpush2.msra.mxu0 0.0
      %4486 = vmatprep.subr.mxu0 0.0
      %4487 = vmatpush2.msra.mxu0 0.0
      %4488 = vmatprep.subr.mxu0 0.0
      %4489 = vmatpush2.msra.mxu0 0.0
      %4490 = vmatprep.subr.mxu0 0.0
      %4491 = vmatpush2.msra.mxu0 0.0
      %4492 = vmatprep.subr.mxu0 0.0
      %4493 = vmatpush2.msra.mxu0 0.0
      %4494 = vmatprep.subr.mxu0 0.0
      %4495 = vmatpush2.msra.mxu0 0.0
      %4496 = vmatprep.subr.mxu0 0.0
      %4497 = vmatpush2.msra.mxu0 0.0
      %4498 = vmatprep.mubr.f32.mxu0 0.0
      %4499 = vmatmul.mubr.f32.gmra.mxu0 %v4432
      %v4500 = vpop.f32.mrf.mxu0
      %v4501 = vadd.f32 0.0, %v4500
      %v4502 = vpop.f32.mrf.mxu0
      %4503 = vdwg.mxu0
      %v4505 = vsel %vm656, %v4423, 0
      %4507 = vmatprep.subr.mxu0 0.0
      %4508 = vmatpush1.msra.mxu0 0.0
      %4509 = vmatprep.subr.mxu0 0.0
      %4510 = vmatpush1.msra.mxu0 0.0
      %4511 = vmatprep.subr.mxu0 0.0
      %4512 = vmatpush1.msra.mxu0 0.0
      %4513 = vmatprep.subr.mxu0 0.0
      %4514 = vmatpush1.msra.mxu0 0.0
      %4515 = vmatprep.subr.mxu0 0.0
      %4516 = vmatpush1.msra.mxu0 0.0
      %4517 = vmatprep.subr.mxu0 0.0
      %4518 = vmatpush1.msra.mxu0 0.0
      %4519 = vmatprep.subr.mxu0 0.0
      %4520 = vmatpush1.msra.mxu0 0.0
      %4521 = vmatprep.subr.mxu0 0.0
      %4522 = vmatpush1.msra.mxu0 0.0
      %4523 = vmatprep.subr.mxu0 0.0
      %4524 = vmatpush1.msra.mxu0 0.0
      %4525 = vmatprep.subr.mxu0 0.0
      %4526 = vmatpush1.msra.mxu0 0.0
      %4527 = vmatprep.subr.mxu0 0.0
      %4528 = vmatpush1.msra.mxu0 0.0
      %4529 = vmatprep.subr.mxu0 0.0
      %4530 = vmatpush1.msra.mxu0 0.0
      %4531 = vmatprep.subr.mxu0 0.0
      %4532 = vmatpush1.msra.mxu0 0.0
      %4533 = vmatprep.subr.mxu0 0.0
      %4534 = vmatpush1.msra.mxu0 0.0
      %4535 = vmatprep.subr.mxu0 0.0
      %4536 = vmatpush1.msra.mxu0 %v369
      %4537 = vmatprep.subr.mxu0 0.0
      %4538 = vmatpush1.msra.mxu0 %v368
      %4539 = vmatprep.subr.mxu0 0.0
      %4540 = vmatpush2.msra.mxu0 0.0
      %4541 = vmatprep.subr.mxu0 0.0
      %4542 = vmatpush2.msra.mxu0 0.0
      %4543 = vmatprep.subr.mxu0 0.0
      %4544 = vmatpush2.msra.mxu0 0.0
      %4545 = vmatprep.subr.mxu0 0.0
      %4546 = vmatpush2.msra.mxu0 0.0
      %4547 = vmatprep.subr.mxu0 0.0
      %4548 = vmatpush2.msra.mxu0 0.0
      %4549 = vmatprep.subr.mxu0 0.0
      %4550 = vmatpush2.msra.mxu0 0.0
      %4551 = vmatprep.subr.mxu0 0.0
      %4552 = vmatpush2.msra.mxu0 0.0
      %4553 = vmatprep.subr.mxu0 0.0
      %4554 = vmatpush2.msra.mxu0 0.0
      %4555 = vmatprep.subr.mxu0 0.0
      %4556 = vmatpush2.msra.mxu0 0.0
      %4557 = vmatprep.subr.mxu0 0.0
      %4558 = vmatpush2.msra.mxu0 0.0
      %4559 = vmatprep.subr.mxu0 0.0
      %4560 = vmatpush2.msra.mxu0 0.0
      %4561 = vmatprep.subr.mxu0 0.0
      %4562 = vmatpush2.msra.mxu0 0.0
      %4563 = vmatprep.subr.mxu0 0.0
      %4564 = vmatpush2.msra.mxu0 0.0
      %4565 = vmatprep.subr.mxu0 0.0
      %4566 = vmatpush2.msra.mxu0 0.0
      %4567 = vmatprep.subr.mxu0 0.0
      %4568 = vmatpush2.msra.mxu0 0.0
      %4569 = vmatprep.subr.mxu0 0.0
      %4570 = vmatpush2.msra.mxu0 0.0
      %4571 = vmatprep.mubr.f32.mxu0 0.0
      %4572 = vmatmul.mubr.f32.gmra.mxu0 %v4505
      %v4573 = vpop.f32.mrf.mxu0
      %v4574 = vadd.f32 %v4501, %v4573
      %v4575 = vpop.f32.mrf.mxu0
      %4576 = vdwg.mxu0
      %v4577 = vadd.f32 %v4574, %v807
      %v4578 = vsel %vm397, %v4577, -inf
      %4579 = vmax.xlane.f32.xlu0 %v4578
      %v4580 = vpop.xlane.xlu0 %4579
      %vm4581 = vcmp.eq.f32.partialorder %v4577, %v4580
      %v4582 = vsel %vm4581, %v375, 8.0
      %v4583 = vsel %vm397, %v4582, inf
      %4584 = vmin.xlane.f32.xlu0 %v4583
      %v4585 = vpop.xlane.xlu0 %4584
      %v4586 = vsub.f32 %v4577, %v4580
      %v4587 = vmul.f32 %v4586, 1.442695
      %v4588 = vpow.pop %v4587
      %v4589 = vsel %vm397, %v4588, 0.0
      %4590 = vadd.xlane.f32.xlu0 %v4589
      %v4591 = vpop.xlane.xlu0 %4590
      %vm4592 = vcmp.eq.s32.totalorder %v374, 11
      %v4593 = vsel %vm4592, %v364, 0.0
      %v4594 = vsel %vm656, %v4593, 0.0
      %4595 = vadd.xlane.f32.xlu0 %v4594
      %v4596 = vpop.xlane.xlu0 %4595
      %v4597 = vmul.f32 %v4596, %v4591
      %4598 = vset.pattern.permute.xlu0 0
      %4599 = vperm.xlu0 %4598, %v4412
      %v4600 = vpop.permute.xlu0 %4599
      %vm4601 = vcmp.eq.s32.totalorder %v374, %v4600
      %v4602 = vsel %vm4601, 1, 0
      %v4603 = vcvt.s32.f32 %v4602
      %v4604 = vmul.f32 %v362, %v4603
      %v4605 = vsel %vm497, %v4604, 0.0
      %4606 = vadd.xlane.f32.xlu0 %v4605
      %v4607 = vpop.xlane.xlu0 %4606
      %v4608 = vmul.f32 %v363, %v4603
      %v4609 = vsel %vm497, %v4608, 0.0
      %4610 = vadd.xlane.f32.xlu0 %v4609
      %v4611 = vpop.xlane.xlu0 %4610
      %v4612 = vadd.f32 %v4407, %v4597
      %vm4613 = vcmp.lt.f32.partialorder %v4612, %v4607
      %v4614 = vsel %vm4613, %v4612, %v4607
      %v4615 = vsel %vm4613, %v4585, %v4611
      %v4616 = vadd.f32 %v4615, 0.5
      %v4617 = vcvt.f32.s32.to.zero.pseudo %v4616
      %4618 = vset.pattern.permute.xlu0 0
      %4619 = vperm.xlu0 %4618, %v4617
      %v4620 = vpop.permute.xlu0 %4619
      %vm4621 = vcmp.eq.s32.totalorder %v374, %v4620
      %v4622 = vsel %vm4621, 1, 0
      %v4623 = vcvt.s32.f32 %v4622
      %v4625 = vsel %vm397, %v4623, 0
      %4627 = vmatprep.subr.mxu0 0.0
      %4628 = vmatpush1.msra.mxu0 0.0
      %4629 = vmatprep.subr.mxu0 0.0
      %4630 = vmatpush1.msra.mxu0 0.0
      %4631 = vmatprep.subr.mxu0 0.0
      %4632 = vmatpush1.msra.mxu0 0.0
      %4633 = vmatprep.subr.mxu0 0.0
      %4634 = vmatpush1.msra.mxu0 0.0
      %4635 = vmatprep.subr.mxu0 0.0
      %4636 = vmatpush1.msra.mxu0 0.0
      %4637 = vmatprep.subr.mxu0 0.0
      %4638 = vmatpush1.msra.mxu0 0.0
      %4639 = vmatprep.subr.mxu0 0.0
      %4640 = vmatpush1.msra.mxu0 0.0
      %4641 = vmatprep.subr.mxu0 0.0
      %4642 = vmatpush1.msra.mxu0 0.0
      %4643 = vmatprep.subr.mxu0 0.0
      %4644 = vmatpush1.msra.mxu0 0.0
      %4645 = vmatprep.subr.mxu0 0.0
      %4646 = vmatpush1.msra.mxu0 0.0
      %4647 = vmatprep.subr.mxu0 0.0
      %4648 = vmatpush1.msra.mxu0 0.0
      %4649 = vmatprep.subr.mxu0 0.0
      %4650 = vmatpush1.msra.mxu0 0.0
      %4651 = vmatprep.subr.mxu0 0.0
      %4652 = vmatpush1.msra.mxu0 0.0
      %4653 = vmatprep.subr.mxu0 0.0
      %4654 = vmatpush1.msra.mxu0 0.0
      %4655 = vmatprep.subr.mxu0 0.0
      %4656 = vmatpush1.msra.mxu0 0.0
      %4657 = vmatprep.subr.mxu0 0.0
      %4658 = vmatpush1.msra.mxu0 %v365
      %4659 = vmatprep.subr.mxu0 0.0
      %4660 = vmatpush2.msra.mxu0 0.0
      %4661 = vmatprep.subr.mxu0 0.0
      %4662 = vmatpush2.msra.mxu0 0.0
      %4663 = vmatprep.subr.mxu0 0.0
      %4664 = vmatpush2.msra.mxu0 0.0
      %4665 = vmatprep.subr.mxu0 0.0
      %4666 = vmatpush2.msra.mxu0 0.0
      %4667 = vmatprep.subr.mxu0 0.0
      %4668 = vmatpush2.msra.mxu0 0.0
      %4669 = vmatprep.subr.mxu0 0.0
      %4670 = vmatpush2.msra.mxu0 0.0
      %4671 = vmatprep.subr.mxu0 0.0
      %4672 = vmatpush2.msra.mxu0 0.0
      %4673 = vmatprep.subr.mxu0 0.0
      %4674 = vmatpush2.msra.mxu0 0.0
      %4675 = vmatprep.subr.mxu0 0.0
      %4676 = vmatpush2.msra.mxu0 0.0
      %4677 = vmatprep.subr.mxu0 0.0
      %4678 = vmatpush2.msra.mxu0 0.0
      %4679 = vmatprep.subr.mxu0 0.0
      %4680 = vmatpush2.msra.mxu0 0.0
      %4681 = vmatprep.subr.mxu0 0.0
      %4682 = vmatpush2.msra.mxu0 0.0
      %4683 = vmatprep.subr.mxu0 0.0
      %4684 = vmatpush2.msra.mxu0 0.0
      %4685 = vmatprep.subr.mxu0 0.0
      %4686 = vmatpush2.msra.mxu0 0.0
      %4687 = vmatprep.subr.mxu0 0.0
      %4688 = vmatpush2.msra.mxu0 0.0
      %4689 = vmatprep.subr.mxu0 0.0
      %4690 = vmatpush2.msra.mxu0 0.0
      %4691 = vmatprep.mubr.f32.mxu0 0.0
      %4692 = vmatmul.mubr.f32.gmra.mxu0 %v4625
      %v4693 = vpop.f32.mrf.mxu0
      %v4694 = vadd.f32 0.0, %v4693
      %v4695 = vpop.f32.mrf.mxu0
      %4696 = vdwg.mxu0
      %v4697 = vmul.f32 %v4694, 0.6
      %4699 = vset.pattern.permute.xlu0 0
      %4700 = vperm.xlu0 %4699, %v4614
      %v4701 = vpop.permute.xlu0 %4700
      %v4703 = vmul.f32 %v476, %v4701
      %v4704 = vadd.f32 %v4703, %v483
      %v4705 = vmul.f32 %v4704, 0.4
      %v4706 = vadd.f32 %v4697, %v4705
      %vm4707 = vcmp.ge.f32.partialorder %v4614, 0.0
      %v4708 = vsel %vm4707, 1, 0
      %v4709 = vcvt.s32.f32 %v4708
      %4711 = vset.pattern.permute.xlu0 0
      %4712 = vperm.xlu0 %4711, %v4709
      %v4713 = vpop.permute.xlu0 %4712
      %v4715 = vmul.f32 %v4706, %v4713
      %v4716 = vadd.f32 %v4403, %v4715
      %v4717 = vsub.f32 %v4404, %v4715
      %v4718 = vsel %vm4613, 1, 0
      %4719 = vset.pattern.permute.xlu0 0
      %4720 = vperm.xlu0 %4719, %v4718
      %v4721 = vpop.permute.xlu0 %4720
      %vm4722 = vcmp.eq.s32.totalorder %v4721, 1
      %v4723 = vsel %vm4722, %v4404, %v4717
      %v4724 = vsel %vm4613, %v4405, %v4412
      %v4725 = vadd.s32 %v4406, 1
      %vm4726 = vcmp.lt.f32.partialorder %v4614, 0.0
      %vm4727 = vcmp.ge.s32.totalorder %v4725, 16
      %vm4728 = vmor %vm4726, %vm4727
      %v4729 = vsel %vm4728, 1, 0
      %vm4730 = vcmp.gt.s32.totalorder %v4408, %v4729
      %v4731 = vsel %vm4730, %v4408, %v4729
      %4732 = vset.pattern.permute.xlu0 0
      %4733 = vperm.xlu0 %4732, %v4406
      %v4734 = vpop.permute.xlu0 %4733
      %vm4735 = vcmp.eq.s32.totalorder %v374, %v4734
      %v4736 = vsel %vm4411, 1, 0
      %4737 = vset.pattern.permute.xlu0 0
      %4738 = vperm.xlu0 %4737, %v4736
      %v4739 = vpop.permute.xlu0 %4738
      %vm4740 = vcmp.eq.s32.totalorder %v4739, 1
      %vm4741 = vmand %vm4735, %vm4740
      %v4742 = vsel %vm4741, %v4701, %v4396
      %4744 = vset.pattern.permute.xlu0 0
      %4745 = vperm.xlu0 %4744, %v4615
      %v4746 = vpop.permute.xlu0 %4745
      %v4748 = vsel %vm4741, %v4746, %v4402
      %v4749 = vsel %vm4740, %v4716, %v4403
      %v4750 = vsel %vm4740, %v4723, %v4404
      %v4751 = vsel %vm4411, %v4724, %v4405
      %v4752 = vsel %vm4411, %v4725, %v4406
      %v4753 = vsel %vm4411, %v4614, %v4407
      %v4754 = vsel %vm4411, %v4731, %v4408
      %vm4755 = vcmp.eq.s32.totalorder %v4754, 0
      %vm4756 = vcmp.lt.s32.totalorder %v4751, 5
      %vm4757 = vmand %vm4755, %vm4756
      %v4758 = vadd.s32 %v4751, 1
      %v4759 = vcvt.s32.f32 %v4758
      %v4760 = vsub.f32 %v500, %v4759
      %v4761 = vmax.f32 %v4760, 1.0
      %v4762 = vcvt.s32.f32 %v4752
      %4764 = vset.pattern.permute.xlu0 0
      %4765 = vperm.xlu0 %4764, %v4762
      %v4766 = vpop.permute.xlu0 %4765
      %v4768 = vrcp.pop %v4766
      %v4769 = vmul.f32 %v4749, %v4768
      %4771 = vset.pattern.permute.xlu0 0
      %4772 = vperm.xlu0 %4771, %v4761
      %v4773 = vpop.permute.xlu0 %4772
      %v4775 = vrcp.pop %v4773
      %v4776 = vmul.f32 %v4750, %v4775
      %v4778 = vsel %vm656, %v4776, 0
      %4780 = vmatprep.subr.mxu0 0.0
      %4781 = vmatpush1.msra.mxu0 0.0
      %4782 = vmatprep.subr.mxu0 0.0
      %4783 = vmatpush1.msra.mxu0 0.0
      %4784 = vmatprep.subr.mxu0 0.0
      %4785 = vmatpush1.msra.mxu0 0.0
      %4786 = vmatprep.subr.mxu0 0.0
      %4787 = vmatpush1.msra.mxu0 0.0
      %4788 = vmatprep.subr.mxu0 0.0
      %4789 = vmatpush1.msra.mxu0 0.0
      %4790 = vmatprep.subr.mxu0 0.0
      %4791 = vmatpush1.msra.mxu0 0.0
      %4792 = vmatprep.subr.mxu0 0.0
      %4793 = vmatpush1.msra.mxu0 0.0
      %4794 = vmatprep.subr.mxu0 0.0
      %4795 = vmatpush1.msra.mxu0 0.0
      %4796 = vmatprep.subr.mxu0 0.0
      %4797 = vmatpush1.msra.mxu0 0.0
      %4798 = vmatprep.subr.mxu0 0.0
      %4799 = vmatpush1.msra.mxu0 0.0
      %4800 = vmatprep.subr.mxu0 0.0
      %4801 = vmatpush1.msra.mxu0 0.0
      %4802 = vmatprep.subr.mxu0 0.0
      %4803 = vmatpush1.msra.mxu0 0.0
      %4804 = vmatprep.subr.mxu0 0.0
      %4805 = vmatpush1.msra.mxu0 0.0
      %4806 = vmatprep.subr.mxu0 0.0
      %4807 = vmatpush1.msra.mxu0 0.0
      %4808 = vmatprep.subr.mxu0 0.0
      %4809 = vmatpush1.msra.mxu0 %v371
      %4810 = vmatprep.subr.mxu0 0.0
      %4811 = vmatpush1.msra.mxu0 %v370
      %4812 = vmatprep.subr.mxu0 0.0
      %4813 = vmatpush2.msra.mxu0 0.0
      %4814 = vmatprep.subr.mxu0 0.0
      %4815 = vmatpush2.msra.mxu0 0.0
      %4816 = vmatprep.subr.mxu0 0.0
      %4817 = vmatpush2.msra.mxu0 0.0
      %4818 = vmatprep.subr.mxu0 0.0
      %4819 = vmatpush2.msra.mxu0 0.0
      %4820 = vmatprep.subr.mxu0 0.0
      %4821 = vmatpush2.msra.mxu0 0.0
      %4822 = vmatprep.subr.mxu0 0.0
      %4823 = vmatpush2.msra.mxu0 0.0
      %4824 = vmatprep.subr.mxu0 0.0
      %4825 = vmatpush2.msra.mxu0 0.0
      %4826 = vmatprep.subr.mxu0 0.0
      %4827 = vmatpush2.msra.mxu0 0.0
      %4828 = vmatprep.subr.mxu0 0.0
      %4829 = vmatpush2.msra.mxu0 0.0
      %4830 = vmatprep.subr.mxu0 0.0
      %4831 = vmatpush2.msra.mxu0 0.0
      %4832 = vmatprep.subr.mxu0 0.0
      %4833 = vmatpush2.msra.mxu0 0.0
      %4834 = vmatprep.subr.mxu0 0.0
      %4835 = vmatpush2.msra.mxu0 0.0
      %4836 = vmatprep.subr.mxu0 0.0
      %4837 = vmatpush2.msra.mxu0 0.0
      %4838 = vmatprep.subr.mxu0 0.0
      %4839 = vmatpush2.msra.mxu0 0.0
      %4840 = vmatprep.subr.mxu0 0.0
      %4841 = vmatpush2.msra.mxu0 0.0
      %4842 = vmatprep.subr.mxu0 0.0
      %4843 = vmatpush2.msra.mxu0 0.0
      %4844 = vmatprep.mubr.f32.mxu0 0.0
      %4845 = vmatmul.mubr.f32.gmra.mxu0 %v4778
      %v4846 = vpop.f32.mrf.mxu0
      %v4847 = vadd.f32 0.0, %v4846
      %v4848 = vpop.f32.mrf.mxu0
      %4849 = vdwg.mxu0
      %v4851 = vsel %vm656, %v4769, 0
      %4853 = vmatprep.subr.mxu0 0.0
      %4854 = vmatpush1.msra.mxu0 0.0
      %4855 = vmatprep.subr.mxu0 0.0
      %4856 = vmatpush1.msra.mxu0 0.0
      %4857 = vmatprep.subr.mxu0 0.0
      %4858 = vmatpush1.msra.mxu0 0.0
      %4859 = vmatprep.subr.mxu0 0.0
      %4860 = vmatpush1.msra.mxu0 0.0
      %4861 = vmatprep.subr.mxu0 0.0
      %4862 = vmatpush1.msra.mxu0 0.0
      %4863 = vmatprep.subr.mxu0 0.0
      %4864 = vmatpush1.msra.mxu0 0.0
      %4865 = vmatprep.subr.mxu0 0.0
      %4866 = vmatpush1.msra.mxu0 0.0
      %4867 = vmatprep.subr.mxu0 0.0
      %4868 = vmatpush1.msra.mxu0 0.0
      %4869 = vmatprep.subr.mxu0 0.0
      %4870 = vmatpush1.msra.mxu0 0.0
      %4871 = vmatprep.subr.mxu0 0.0
      %4872 = vmatpush1.msra.mxu0 0.0
      %4873 = vmatprep.subr.mxu0 0.0
      %4874 = vmatpush1.msra.mxu0 0.0
      %4875 = vmatprep.subr.mxu0 0.0
      %4876 = vmatpush1.msra.mxu0 0.0
      %4877 = vmatprep.subr.mxu0 0.0
      %4878 = vmatpush1.msra.mxu0 0.0
      %4879 = vmatprep.subr.mxu0 0.0
      %4880 = vmatpush1.msra.mxu0 0.0
      %4881 = vmatprep.subr.mxu0 0.0
      %4882 = vmatpush1.msra.mxu0 %v369
      %4883 = vmatprep.subr.mxu0 0.0
      %4884 = vmatpush1.msra.mxu0 %v368
      %4885 = vmatprep.subr.mxu0 0.0
      %4886 = vmatpush2.msra.mxu0 0.0
      %4887 = vmatprep.subr.mxu0 0.0
      %4888 = vmatpush2.msra.mxu0 0.0
      %4889 = vmatprep.subr.mxu0 0.0
      %4890 = vmatpush2.msra.mxu0 0.0
      %4891 = vmatprep.subr.mxu0 0.0
      %4892 = vmatpush2.msra.mxu0 0.0
      %4893 = vmatprep.subr.mxu0 0.0
      %4894 = vmatpush2.msra.mxu0 0.0
      %4895 = vmatprep.subr.mxu0 0.0
      %4896 = vmatpush2.msra.mxu0 0.0
      %4897 = vmatprep.subr.mxu0 0.0
      %4898 = vmatpush2.msra.mxu0 0.0
      %4899 = vmatprep.subr.mxu0 0.0
      %4900 = vmatpush2.msra.mxu0 0.0
      %4901 = vmatprep.subr.mxu0 0.0
      %4902 = vmatpush2.msra.mxu0 0.0
      %4903 = vmatprep.subr.mxu0 0.0
      %4904 = vmatpush2.msra.mxu0 0.0
      %4905 = vmatprep.subr.mxu0 0.0
      %4906 = vmatpush2.msra.mxu0 0.0
      %4907 = vmatprep.subr.mxu0 0.0
      %4908 = vmatpush2.msra.mxu0 0.0
      %4909 = vmatprep.subr.mxu0 0.0
      %4910 = vmatpush2.msra.mxu0 0.0
      %4911 = vmatprep.subr.mxu0 0.0
      %4912 = vmatpush2.msra.mxu0 0.0
      %4913 = vmatprep.subr.mxu0 0.0
      %4914 = vmatpush2.msra.mxu0 0.0
      %4915 = vmatprep.subr.mxu0 0.0
      %4916 = vmatpush2.msra.mxu0 0.0
      %4917 = vmatprep.mubr.f32.mxu0 0.0
      %4918 = vmatmul.mubr.f32.gmra.mxu0 %v4851
      %v4919 = vpop.f32.mrf.mxu0
      %v4920 = vadd.f32 %v4847, %v4919
      %v4921 = vpop.f32.mrf.mxu0
      %4922 = vdwg.mxu0
      %v4923 = vadd.f32 %v4920, %v807
      %v4924 = vsel %vm397, %v4923, -inf
      %4925 = vmax.xlane.f32.xlu0 %v4924
      %v4926 = vpop.xlane.xlu0 %4925
      %vm4927 = vcmp.eq.f32.partialorder %v4923, %v4926
      %v4928 = vsel %vm4927, %v375, 8.0
      %v4929 = vsel %vm397, %v4928, inf
      %4930 = vmin.xlane.f32.xlu0 %v4929
      %v4931 = vpop.xlane.xlu0 %4930
      %v4932 = vsub.f32 %v4923, %v4926
      %v4933 = vmul.f32 %v4932, 1.442695
      %v4934 = vpow.pop %v4933
      %v4935 = vsel %vm397, %v4934, 0.0
      %4936 = vadd.xlane.f32.xlu0 %v4935
      %v4937 = vpop.xlane.xlu0 %4936
      %vm4938 = vcmp.eq.s32.totalorder %v374, 12
      %v4939 = vsel %vm4938, %v364, 0.0
      %v4940 = vsel %vm656, %v4939, 0.0
      %4941 = vadd.xlane.f32.xlu0 %v4940
      %v4942 = vpop.xlane.xlu0 %4941
      %v4943 = vmul.f32 %v4942, %v4937
      %4944 = vset.pattern.permute.xlu0 0
      %4945 = vperm.xlu0 %4944, %v4758
      %v4946 = vpop.permute.xlu0 %4945
      %vm4947 = vcmp.eq.s32.totalorder %v374, %v4946
      %v4948 = vsel %vm4947, 1, 0
      %v4949 = vcvt.s32.f32 %v4948
      %v4950 = vmul.f32 %v362, %v4949
      %v4951 = vsel %vm497, %v4950, 0.0
      %4952 = vadd.xlane.f32.xlu0 %v4951
      %v4953 = vpop.xlane.xlu0 %4952
      %v4954 = vmul.f32 %v363, %v4949
      %v4955 = vsel %vm497, %v4954, 0.0
      %4956 = vadd.xlane.f32.xlu0 %v4955
      %v4957 = vpop.xlane.xlu0 %4956
      %v4958 = vadd.f32 %v4753, %v4943
      %vm4959 = vcmp.lt.f32.partialorder %v4958, %v4953
      %v4960 = vsel %vm4959, %v4958, %v4953
      %v4961 = vsel %vm4959, %v4931, %v4957
      %v4962 = vadd.f32 %v4961, 0.5
      %v4963 = vcvt.f32.s32.to.zero.pseudo %v4962
      %4964 = vset.pattern.permute.xlu0 0
      %4965 = vperm.xlu0 %4964, %v4963
      %v4966 = vpop.permute.xlu0 %4965
      %vm4967 = vcmp.eq.s32.totalorder %v374, %v4966
      %v4968 = vsel %vm4967, 1, 0
      %v4969 = vcvt.s32.f32 %v4968
      %v4971 = vsel %vm397, %v4969, 0
      %4973 = vmatprep.subr.mxu0 0.0
      %4974 = vmatpush1.msra.mxu0 0.0
      %4975 = vmatprep.subr.mxu0 0.0
      %4976 = vmatpush1.msra.mxu0 0.0
      %4977 = vmatprep.subr.mxu0 0.0
      %4978 = vmatpush1.msra.mxu0 0.0
      %4979 = vmatprep.subr.mxu0 0.0
      %4980 = vmatpush1.msra.mxu0 0.0
      %4981 = vmatprep.subr.mxu0 0.0
      %4982 = vmatpush1.msra.mxu0 0.0
      %4983 = vmatprep.subr.mxu0 0.0
      %4984 = vmatpush1.msra.mxu0 0.0
      %4985 = vmatprep.subr.mxu0 0.0
      %4986 = vmatpush1.msra.mxu0 0.0
      %4987 = vmatprep.subr.mxu0 0.0
      %4988 = vmatpush1.msra.mxu0 0.0
      %4989 = vmatprep.subr.mxu0 0.0
      %4990 = vmatpush1.msra.mxu0 0.0
      %4991 = vmatprep.subr.mxu0 0.0
      %4992 = vmatpush1.msra.mxu0 0.0
      %4993 = vmatprep.subr.mxu0 0.0
      %4994 = vmatpush1.msra.mxu0 0.0
      %4995 = vmatprep.subr.mxu0 0.0
      %4996 = vmatpush1.msra.mxu0 0.0
      %4997 = vmatprep.subr.mxu0 0.0
      %4998 = vmatpush1.msra.mxu0 0.0
      %4999 = vmatprep.subr.mxu0 0.0
      %5000 = vmatpush1.msra.mxu0 0.0
      %5001 = vmatprep.subr.mxu0 0.0
      %5002 = vmatpush1.msra.mxu0 0.0
      %5003 = vmatprep.subr.mxu0 0.0
      %5004 = vmatpush1.msra.mxu0 %v365
      %5005 = vmatprep.subr.mxu0 0.0
      %5006 = vmatpush2.msra.mxu0 0.0
      %5007 = vmatprep.subr.mxu0 0.0
      %5008 = vmatpush2.msra.mxu0 0.0
      %5009 = vmatprep.subr.mxu0 0.0
      %5010 = vmatpush2.msra.mxu0 0.0
      %5011 = vmatprep.subr.mxu0 0.0
      %5012 = vmatpush2.msra.mxu0 0.0
      %5013 = vmatprep.subr.mxu0 0.0
      %5014 = vmatpush2.msra.mxu0 0.0
      %5015 = vmatprep.subr.mxu0 0.0
      %5016 = vmatpush2.msra.mxu0 0.0
      %5017 = vmatprep.subr.mxu0 0.0
      %5018 = vmatpush2.msra.mxu0 0.0
      %5019 = vmatprep.subr.mxu0 0.0
      %5020 = vmatpush2.msra.mxu0 0.0
      %5021 = vmatprep.subr.mxu0 0.0
      %5022 = vmatpush2.msra.mxu0 0.0
      %5023 = vmatprep.subr.mxu0 0.0
      %5024 = vmatpush2.msra.mxu0 0.0
      %5025 = vmatprep.subr.mxu0 0.0
      %5026 = vmatpush2.msra.mxu0 0.0
      %5027 = vmatprep.subr.mxu0 0.0
      %5028 = vmatpush2.msra.mxu0 0.0
      %5029 = vmatprep.subr.mxu0 0.0
      %5030 = vmatpush2.msra.mxu0 0.0
      %5031 = vmatprep.subr.mxu0 0.0
      %5032 = vmatpush2.msra.mxu0 0.0
      %5033 = vmatprep.subr.mxu0 0.0
      %5034 = vmatpush2.msra.mxu0 0.0
      %5035 = vmatprep.subr.mxu0 0.0
      %5036 = vmatpush2.msra.mxu0 0.0
      %5037 = vmatprep.mubr.f32.mxu0 0.0
      %5038 = vmatmul.mubr.f32.gmra.mxu0 %v4971
      %v5039 = vpop.f32.mrf.mxu0
      %v5040 = vadd.f32 0.0, %v5039
      %v5041 = vpop.f32.mrf.mxu0
      %5042 = vdwg.mxu0
      %v5043 = vmul.f32 %v5040, 0.6
      %5045 = vset.pattern.permute.xlu0 0
      %5046 = vperm.xlu0 %5045, %v4960
      %v5047 = vpop.permute.xlu0 %5046
      %v5049 = vmul.f32 %v476, %v5047
      %v5050 = vadd.f32 %v5049, %v483
      %v5051 = vmul.f32 %v5050, 0.4
      %v5052 = vadd.f32 %v5043, %v5051
      %vm5053 = vcmp.ge.f32.partialorder %v4960, 0.0
      %v5054 = vsel %vm5053, 1, 0
      %v5055 = vcvt.s32.f32 %v5054
      %5057 = vset.pattern.permute.xlu0 0
      %5058 = vperm.xlu0 %5057, %v5055
      %v5059 = vpop.permute.xlu0 %5058
      %v5061 = vmul.f32 %v5052, %v5059
      %v5062 = vadd.f32 %v4749, %v5061
      %v5063 = vsub.f32 %v4750, %v5061
      %v5064 = vsel %vm4959, 1, 0
      %5065 = vset.pattern.permute.xlu0 0
      %5066 = vperm.xlu0 %5065, %v5064
      %v5067 = vpop.permute.xlu0 %5066
      %vm5068 = vcmp.eq.s32.totalorder %v5067, 1
      %v5069 = vsel %vm5068, %v4750, %v5063
      %v5070 = vsel %vm4959, %v4751, %v4758
      %v5071 = vadd.s32 %v4752, 1
      %vm5072 = vcmp.lt.f32.partialorder %v4960, 0.0
      %vm5073 = vcmp.ge.s32.totalorder %v5071, 16
      %vm5074 = vmor %vm5072, %vm5073
      %v5075 = vsel %vm5074, 1, 0
      %vm5076 = vcmp.gt.s32.totalorder %v4754, %v5075
      %v5077 = vsel %vm5076, %v4754, %v5075
      %5078 = vset.pattern.permute.xlu0 0
      %5079 = vperm.xlu0 %5078, %v4752
      %v5080 = vpop.permute.xlu0 %5079
      %vm5081 = vcmp.eq.s32.totalorder %v374, %v5080
      %v5082 = vsel %vm4757, 1, 0
      %5083 = vset.pattern.permute.xlu0 0
      %5084 = vperm.xlu0 %5083, %v5082
      %v5085 = vpop.permute.xlu0 %5084
      %vm5086 = vcmp.eq.s32.totalorder %v5085, 1
      %vm5087 = vmand %vm5081, %vm5086
      %v5088 = vsel %vm5087, %v5047, %v4742
      %5090 = vset.pattern.permute.xlu0 0
      %5091 = vperm.xlu0 %5090, %v4961
      %v5092 = vpop.permute.xlu0 %5091
      %v5094 = vsel %vm5087, %v5092, %v4748
      %v5095 = vsel %vm5086, %v5062, %v4749
      %v5096 = vsel %vm5086, %v5069, %v4750
      %v5097 = vsel %vm4757, %v5070, %v4751
      %v5098 = vsel %vm4757, %v5071, %v4752
      %v5099 = vsel %vm4757, %v4960, %v4753
      %v5100 = vsel %vm4757, %v5077, %v4754
      %vm5101 = vcmp.eq.s32.totalorder %v5100, 0
      %vm5102 = vcmp.lt.s32.totalorder %v5097, 5
      %vm5103 = vmand %vm5101, %vm5102
      %v5104 = vadd.s32 %v5097, 1
      %v5105 = vcvt.s32.f32 %v5104
      %v5106 = vsub.f32 %v500, %v5105
      %v5107 = vmax.f32 %v5106, 1.0
      %v5108 = vcvt.s32.f32 %v5098
      %5110 = vset.pattern.permute.xlu0 0
      %5111 = vperm.xlu0 %5110, %v5108
      %v5112 = vpop.permute.xlu0 %5111
      %v5114 = vrcp.pop %v5112
      %v5115 = vmul.f32 %v5095, %v5114
      %5117 = vset.pattern.permute.xlu0 0
      %5118 = vperm.xlu0 %5117, %v5107
      %v5119 = vpop.permute.xlu0 %5118
      %v5121 = vrcp.pop %v5119
      %v5122 = vmul.f32 %v5096, %v5121
      %v5124 = vsel %vm656, %v5122, 0
      %5126 = vmatprep.subr.mxu0 0.0
      %5127 = vmatpush1.msra.mxu0 0.0
      %5128 = vmatprep.subr.mxu0 0.0
      %5129 = vmatpush1.msra.mxu0 0.0
      %5130 = vmatprep.subr.mxu0 0.0
      %5131 = vmatpush1.msra.mxu0 0.0
      %5132 = vmatprep.subr.mxu0 0.0
      %5133 = vmatpush1.msra.mxu0 0.0
      %5134 = vmatprep.subr.mxu0 0.0
      %5135 = vmatpush1.msra.mxu0 0.0
      %5136 = vmatprep.subr.mxu0 0.0
      %5137 = vmatpush1.msra.mxu0 0.0
      %5138 = vmatprep.subr.mxu0 0.0
      %5139 = vmatpush1.msra.mxu0 0.0
      %5140 = vmatprep.subr.mxu0 0.0
      %5141 = vmatpush1.msra.mxu0 0.0
      %5142 = vmatprep.subr.mxu0 0.0
      %5143 = vmatpush1.msra.mxu0 0.0
      %5144 = vmatprep.subr.mxu0 0.0
      %5145 = vmatpush1.msra.mxu0 0.0
      %5146 = vmatprep.subr.mxu0 0.0
      %5147 = vmatpush1.msra.mxu0 0.0
      %5148 = vmatprep.subr.mxu0 0.0
      %5149 = vmatpush1.msra.mxu0 0.0
      %5150 = vmatprep.subr.mxu0 0.0
      %5151 = vmatpush1.msra.mxu0 0.0
      %5152 = vmatprep.subr.mxu0 0.0
      %5153 = vmatpush1.msra.mxu0 0.0
      %5154 = vmatprep.subr.mxu0 0.0
      %5155 = vmatpush1.msra.mxu0 %v371
      %5156 = vmatprep.subr.mxu0 0.0
      %5157 = vmatpush1.msra.mxu0 %v370
      %5158 = vmatprep.subr.mxu0 0.0
      %5159 = vmatpush2.msra.mxu0 0.0
      %5160 = vmatprep.subr.mxu0 0.0
      %5161 = vmatpush2.msra.mxu0 0.0
      %5162 = vmatprep.subr.mxu0 0.0
      %5163 = vmatpush2.msra.mxu0 0.0
      %5164 = vmatprep.subr.mxu0 0.0
      %5165 = vmatpush2.msra.mxu0 0.0
      %5166 = vmatprep.subr.mxu0 0.0
      %5167 = vmatpush2.msra.mxu0 0.0
      %5168 = vmatprep.subr.mxu0 0.0
      %5169 = vmatpush2.msra.mxu0 0.0
      %5170 = vmatprep.subr.mxu0 0.0
      %5171 = vmatpush2.msra.mxu0 0.0
      %5172 = vmatprep.subr.mxu0 0.0
      %5173 = vmatpush2.msra.mxu0 0.0
      %5174 = vmatprep.subr.mxu0 0.0
      %5175 = vmatpush2.msra.mxu0 0.0
      %5176 = vmatprep.subr.mxu0 0.0
      %5177 = vmatpush2.msra.mxu0 0.0
      %5178 = vmatprep.subr.mxu0 0.0
      %5179 = vmatpush2.msra.mxu0 0.0
      %5180 = vmatprep.subr.mxu0 0.0
      %5181 = vmatpush2.msra.mxu0 0.0
      %5182 = vmatprep.subr.mxu0 0.0
      %5183 = vmatpush2.msra.mxu0 0.0
      %5184 = vmatprep.subr.mxu0 0.0
      %5185 = vmatpush2.msra.mxu0 0.0
      %5186 = vmatprep.subr.mxu0 0.0
      %5187 = vmatpush2.msra.mxu0 0.0
      %5188 = vmatprep.subr.mxu0 0.0
      %5189 = vmatpush2.msra.mxu0 0.0
      %5190 = vmatprep.mubr.f32.mxu0 0.0
      %5191 = vmatmul.mubr.f32.gmra.mxu0 %v5124
      %v5192 = vpop.f32.mrf.mxu0
      %v5193 = vadd.f32 0.0, %v5192
      %v5194 = vpop.f32.mrf.mxu0
      %5195 = vdwg.mxu0
      %v5197 = vsel %vm656, %v5115, 0
      %5199 = vmatprep.subr.mxu0 0.0
      %5200 = vmatpush1.msra.mxu0 0.0
      %5201 = vmatprep.subr.mxu0 0.0
      %5202 = vmatpush1.msra.mxu0 0.0
      %5203 = vmatprep.subr.mxu0 0.0
      %5204 = vmatpush1.msra.mxu0 0.0
      %5205 = vmatprep.subr.mxu0 0.0
      %5206 = vmatpush1.msra.mxu0 0.0
      %5207 = vmatprep.subr.mxu0 0.0
      %5208 = vmatpush1.msra.mxu0 0.0
      %5209 = vmatprep.subr.mxu0 0.0
      %5210 = vmatpush1.msra.mxu0 0.0
      %5211 = vmatprep.subr.mxu0 0.0
      %5212 = vmatpush1.msra.mxu0 0.0
      %5213 = vmatprep.subr.mxu0 0.0
      %5214 = vmatpush1.msra.mxu0 0.0
      %5215 = vmatprep.subr.mxu0 0.0
      %5216 = vmatpush1.msra.mxu0 0.0
      %5217 = vmatprep.subr.mxu0 0.0
      %5218 = vmatpush1.msra.mxu0 0.0
      %5219 = vmatprep.subr.mxu0 0.0
      %5220 = vmatpush1.msra.mxu0 0.0
      %5221 = vmatprep.subr.mxu0 0.0
      %5222 = vmatpush1.msra.mxu0 0.0
      %5223 = vmatprep.subr.mxu0 0.0
      %5224 = vmatpush1.msra.mxu0 0.0
      %5225 = vmatprep.subr.mxu0 0.0
      %5226 = vmatpush1.msra.mxu0 0.0
      %5227 = vmatprep.subr.mxu0 0.0
      %5228 = vmatpush1.msra.mxu0 %v369
      %5229 = vmatprep.subr.mxu0 0.0
      %5230 = vmatpush1.msra.mxu0 %v368
      %5231 = vmatprep.subr.mxu0 0.0
      %5232 = vmatpush2.msra.mxu0 0.0
      %5233 = vmatprep.subr.mxu0 0.0
      %5234 = vmatpush2.msra.mxu0 0.0
      %5235 = vmatprep.subr.mxu0 0.0
      %5236 = vmatpush2.msra.mxu0 0.0
      %5237 = vmatprep.subr.mxu0 0.0
      %5238 = vmatpush2.msra.mxu0 0.0
      %5239 = vmatprep.subr.mxu0 0.0
      %5240 = vmatpush2.msra.mxu0 0.0
      %5241 = vmatprep.subr.mxu0 0.0
      %5242 = vmatpush2.msra.mxu0 0.0
      %5243 = vmatprep.subr.mxu0 0.0
      %5244 = vmatpush2.msra.mxu0 0.0
      %5245 = vmatprep.subr.mxu0 0.0
      %5246 = vmatpush2.msra.mxu0 0.0
      %5247 = vmatprep.subr.mxu0 0.0
      %5248 = vmatpush2.msra.mxu0 0.0
      %5249 = vmatprep.subr.mxu0 0.0
      %5250 = vmatpush2.msra.mxu0 0.0
      %5251 = vmatprep.subr.mxu0 0.0
      %5252 = vmatpush2.msra.mxu0 0.0
      %5253 = vmatprep.subr.mxu0 0.0
      %5254 = vmatpush2.msra.mxu0 0.0
      %5255 = vmatprep.subr.mxu0 0.0
      %5256 = vmatpush2.msra.mxu0 0.0
      %5257 = vmatprep.subr.mxu0 0.0
      %5258 = vmatpush2.msra.mxu0 0.0
      %5259 = vmatprep.subr.mxu0 0.0
      %5260 = vmatpush2.msra.mxu0 0.0
      %5261 = vmatprep.subr.mxu0 0.0
      %5262 = vmatpush2.msra.mxu0 0.0
      %5263 = vmatprep.mubr.f32.mxu0 0.0
      %5264 = vmatmul.mubr.f32.gmra.mxu0 %v5197
      %v5265 = vpop.f32.mrf.mxu0
      %v5266 = vadd.f32 %v5193, %v5265
      %v5267 = vpop.f32.mrf.mxu0
      %5268 = vdwg.mxu0
      %v5269 = vadd.f32 %v5266, %v807
      %v5270 = vsel %vm397, %v5269, -inf
      %5271 = vmax.xlane.f32.xlu0 %v5270
      %v5272 = vpop.xlane.xlu0 %5271
      %vm5273 = vcmp.eq.f32.partialorder %v5269, %v5272
      %v5274 = vsel %vm5273, %v375, 8.0
      %v5275 = vsel %vm397, %v5274, inf
      %5276 = vmin.xlane.f32.xlu0 %v5275
      %v5277 = vpop.xlane.xlu0 %5276
      %v5278 = vsub.f32 %v5269, %v5272
      %v5279 = vmul.f32 %v5278, 1.442695
      %v5280 = vpow.pop %v5279
      %v5281 = vsel %vm397, %v5280, 0.0
      %5282 = vadd.xlane.f32.xlu0 %v5281
      %v5283 = vpop.xlane.xlu0 %5282
      %vm5284 = vcmp.eq.s32.totalorder %v374, 13
      %v5285 = vsel %vm5284, %v364, 0.0
      %v5286 = vsel %vm656, %v5285, 0.0
      %5287 = vadd.xlane.f32.xlu0 %v5286
      %v5288 = vpop.xlane.xlu0 %5287
      %v5289 = vmul.f32 %v5288, %v5283
      %5290 = vset.pattern.permute.xlu0 0
      %5291 = vperm.xlu0 %5290, %v5104
      %v5292 = vpop.permute.xlu0 %5291
      %vm5293 = vcmp.eq.s32.totalorder %v374, %v5292
      %v5294 = vsel %vm5293, 1, 0
      %v5295 = vcvt.s32.f32 %v5294
      %v5296 = vmul.f32 %v362, %v5295
      %v5297 = vsel %vm497, %v5296, 0.0
      %5298 = vadd.xlane.f32.xlu0 %v5297
      %v5299 = vpop.xlane.xlu0 %5298
      %v5300 = vmul.f32 %v363, %v5295
      %v5301 = vsel %vm497, %v5300, 0.0
      %5302 = vadd.xlane.f32.xlu0 %v5301
      %v5303 = vpop.xlane.xlu0 %5302
      %v5304 = vadd.f32 %v5099, %v5289
      %vm5305 = vcmp.lt.f32.partialorder %v5304, %v5299
      %v5306 = vsel %vm5305, %v5304, %v5299
      %v5307 = vsel %vm5305, %v5277, %v5303
      %v5308 = vadd.f32 %v5307, 0.5
      %v5309 = vcvt.f32.s32.to.zero.pseudo %v5308
      %5310 = vset.pattern.permute.xlu0 0
      %5311 = vperm.xlu0 %5310, %v5309
      %v5312 = vpop.permute.xlu0 %5311
      %vm5313 = vcmp.eq.s32.totalorder %v374, %v5312
      %v5314 = vsel %vm5313, 1, 0
      %v5315 = vcvt.s32.f32 %v5314
      %v5317 = vsel %vm397, %v5315, 0
      %5319 = vmatprep.subr.mxu0 0.0
      %5320 = vmatpush1.msra.mxu0 0.0
      %5321 = vmatprep.subr.mxu0 0.0
      %5322 = vmatpush1.msra.mxu0 0.0
      %5323 = vmatprep.subr.mxu0 0.0
      %5324 = vmatpush1.msra.mxu0 0.0
      %5325 = vmatprep.subr.mxu0 0.0
      %5326 = vmatpush1.msra.mxu0 0.0
      %5327 = vmatprep.subr.mxu0 0.0
      %5328 = vmatpush1.msra.mxu0 0.0
      %5329 = vmatprep.subr.mxu0 0.0
      %5330 = vmatpush1.msra.mxu0 0.0
      %5331 = vmatprep.subr.mxu0 0.0
      %5332 = vmatpush1.msra.mxu0 0.0
      %5333 = vmatprep.subr.mxu0 0.0
      %5334 = vmatpush1.msra.mxu0 0.0
      %5335 = vmatprep.subr.mxu0 0.0
      %5336 = vmatpush1.msra.mxu0 0.0
      %5337 = vmatprep.subr.mxu0 0.0
      %5338 = vmatpush1.msra.mxu0 0.0
      %5339 = vmatprep.subr.mxu0 0.0
      %5340 = vmatpush1.msra.mxu0 0.0
      %5341 = vmatprep.subr.mxu0 0.0
      %5342 = vmatpush1.msra.mxu0 0.0
      %5343 = vmatprep.subr.mxu0 0.0
      %5344 = vmatpush1.msra.mxu0 0.0
      %5345 = vmatprep.subr.mxu0 0.0
      %5346 = vmatpush1.msra.mxu0 0.0
      %5347 = vmatprep.subr.mxu0 0.0
      %5348 = vmatpush1.msra.mxu0 0.0
      %5349 = vmatprep.subr.mxu0 0.0
      %5350 = vmatpush1.msra.mxu0 %v365
      %5351 = vmatprep.subr.mxu0 0.0
      %5352 = vmatpush2.msra.mxu0 0.0
      %5353 = vmatprep.subr.mxu0 0.0
      %5354 = vmatpush2.msra.mxu0 0.0
      %5355 = vmatprep.subr.mxu0 0.0
      %5356 = vmatpush2.msra.mxu0 0.0
      %5357 = vmatprep.subr.mxu0 0.0
      %5358 = vmatpush2.msra.mxu0 0.0
      %5359 = vmatprep.subr.mxu0 0.0
      %5360 = vmatpush2.msra.mxu0 0.0
      %5361 = vmatprep.subr.mxu0 0.0
      %5362 = vmatpush2.msra.mxu0 0.0
      %5363 = vmatprep.subr.mxu0 0.0
      %5364 = vmatpush2.msra.mxu0 0.0
      %5365 = vmatprep.subr.mxu0 0.0
      %5366 = vmatpush2.msra.mxu0 0.0
      %5367 = vmatprep.subr.mxu0 0.0
      %5368 = vmatpush2.msra.mxu0 0.0
      %5369 = vmatprep.subr.mxu0 0.0
      %5370 = vmatpush2.msra.mxu0 0.0
      %5371 = vmatprep.subr.mxu0 0.0
      %5372 = vmatpush2.msra.mxu0 0.0
      %5373 = vmatprep.subr.mxu0 0.0
      %5374 = vmatpush2.msra.mxu0 0.0
      %5375 = vmatprep.subr.mxu0 0.0
      %5376 = vmatpush2.msra.mxu0 0.0
      %5377 = vmatprep.subr.mxu0 0.0
      %5378 = vmatpush2.msra.mxu0 0.0
      %5379 = vmatprep.subr.mxu0 0.0
      %5380 = vmatpush2.msra.mxu0 0.0
      %5381 = vmatprep.subr.mxu0 0.0
      %5382 = vmatpush2.msra.mxu0 0.0
      %5383 = vmatprep.mubr.f32.mxu0 0.0
      %5384 = vmatmul.mubr.f32.gmra.mxu0 %v5317
      %v5385 = vpop.f32.mrf.mxu0
      %v5386 = vadd.f32 0.0, %v5385
      %v5387 = vpop.f32.mrf.mxu0
      %5388 = vdwg.mxu0
      %v5389 = vmul.f32 %v5386, 0.6
      %5391 = vset.pattern.permute.xlu0 0
      %5392 = vperm.xlu0 %5391, %v5306
      %v5393 = vpop.permute.xlu0 %5392
      %v5395 = vmul.f32 %v476, %v5393
      %v5396 = vadd.f32 %v5395, %v483
      %v5397 = vmul.f32 %v5396, 0.4
      %v5398 = vadd.f32 %v5389, %v5397
      %vm5399 = vcmp.ge.f32.partialorder %v5306, 0.0
      %v5400 = vsel %vm5399, 1, 0
      %v5401 = vcvt.s32.f32 %v5400
      %5403 = vset.pattern.permute.xlu0 0
      %5404 = vperm.xlu0 %5403, %v5401
      %v5405 = vpop.permute.xlu0 %5404
      %v5407 = vmul.f32 %v5398, %v5405
      %v5408 = vadd.f32 %v5095, %v5407
      %v5409 = vsub.f32 %v5096, %v5407
      %v5410 = vsel %vm5305, 1, 0
      %5411 = vset.pattern.permute.xlu0 0
      %5412 = vperm.xlu0 %5411, %v5410
      %v5413 = vpop.permute.xlu0 %5412
      %vm5414 = vcmp.eq.s32.totalorder %v5413, 1
      %v5415 = vsel %vm5414, %v5096, %v5409
      %v5416 = vsel %vm5305, %v5097, %v5104
      %v5417 = vadd.s32 %v5098, 1
      %vm5418 = vcmp.lt.f32.partialorder %v5306, 0.0
      %vm5419 = vcmp.ge.s32.totalorder %v5417, 16
      %vm5420 = vmor %vm5418, %vm5419
      %v5421 = vsel %vm5420, 1, 0
      %vm5422 = vcmp.gt.s32.totalorder %v5100, %v5421
      %v5423 = vsel %vm5422, %v5100, %v5421
      %5424 = vset.pattern.permute.xlu0 0
      %5425 = vperm.xlu0 %5424, %v5098
      %v5426 = vpop.permute.xlu0 %5425
      %vm5427 = vcmp.eq.s32.totalorder %v374, %v5426
      %v5428 = vsel %vm5103, 1, 0
      %5429 = vset.pattern.permute.xlu0 0
      %5430 = vperm.xlu0 %5429, %v5428
      %v5431 = vpop.permute.xlu0 %5430
      %vm5432 = vcmp.eq.s32.totalorder %v5431, 1
      %vm5433 = vmand %vm5427, %vm5432
      %v5434 = vsel %vm5433, %v5393, %v5088
      %5436 = vset.pattern.permute.xlu0 0
      %5437 = vperm.xlu0 %5436, %v5307
      %v5438 = vpop.permute.xlu0 %5437
      %v5440 = vsel %vm5433, %v5438, %v5094
      %v5441 = vsel %vm5432, %v5408, %v5095
      %v5442 = vsel %vm5432, %v5415, %v5096
      %v5443 = vsel %vm5103, %v5416, %v5097
      %v5444 = vsel %vm5103, %v5417, %v5098
      %v5445 = vsel %vm5103, %v5306, %v5099
      %v5446 = vsel %vm5103, %v5423, %v5100
      %vm5447 = vcmp.eq.s32.totalorder %v5446, 0
      %vm5448 = vcmp.lt.s32.totalorder %v5443, 5
      %vm5449 = vmand %vm5447, %vm5448
      %v5450 = vadd.s32 %v5443, 1
      %v5451 = vcvt.s32.f32 %v5450
      %v5452 = vsub.f32 %v500, %v5451
      %v5453 = vmax.f32 %v5452, 1.0
      %v5454 = vcvt.s32.f32 %v5444
      %5456 = vset.pattern.permute.xlu0 0
      %5457 = vperm.xlu0 %5456, %v5454
      %v5458 = vpop.permute.xlu0 %5457
      %v5460 = vrcp.pop %v5458
      %v5461 = vmul.f32 %v5441, %v5460
      %5463 = vset.pattern.permute.xlu0 0
      %5464 = vperm.xlu0 %5463, %v5453
      %v5465 = vpop.permute.xlu0 %5464
      %v5467 = vrcp.pop %v5465
      %v5468 = vmul.f32 %v5442, %v5467
      %v5470 = vsel %vm656, %v5468, 0
      %5472 = vmatprep.subr.mxu0 0.0
      %5473 = vmatpush1.msra.mxu0 0.0
      %5474 = vmatprep.subr.mxu0 0.0
      %5475 = vmatpush1.msra.mxu0 0.0
      %5476 = vmatprep.subr.mxu0 0.0
      %5477 = vmatpush1.msra.mxu0 0.0
      %5478 = vmatprep.subr.mxu0 0.0
      %5479 = vmatpush1.msra.mxu0 0.0
      %5480 = vmatprep.subr.mxu0 0.0
      %5481 = vmatpush1.msra.mxu0 0.0
      %5482 = vmatprep.subr.mxu0 0.0
      %5483 = vmatpush1.msra.mxu0 0.0
      %5484 = vmatprep.subr.mxu0 0.0
      %5485 = vmatpush1.msra.mxu0 0.0
      %5486 = vmatprep.subr.mxu0 0.0
      %5487 = vmatpush1.msra.mxu0 0.0
      %5488 = vmatprep.subr.mxu0 0.0
      %5489 = vmatpush1.msra.mxu0 0.0
      %5490 = vmatprep.subr.mxu0 0.0
      %5491 = vmatpush1.msra.mxu0 0.0
      %5492 = vmatprep.subr.mxu0 0.0
      %5493 = vmatpush1.msra.mxu0 0.0
      %5494 = vmatprep.subr.mxu0 0.0
      %5495 = vmatpush1.msra.mxu0 0.0
      %5496 = vmatprep.subr.mxu0 0.0
      %5497 = vmatpush1.msra.mxu0 0.0
      %5498 = vmatprep.subr.mxu0 0.0
      %5499 = vmatpush1.msra.mxu0 0.0
      %5500 = vmatprep.subr.mxu0 0.0
      %5501 = vmatpush1.msra.mxu0 %v371
      %5502 = vmatprep.subr.mxu0 0.0
      %5503 = vmatpush1.msra.mxu0 %v370
      %5504 = vmatprep.subr.mxu0 0.0
      %5505 = vmatpush2.msra.mxu0 0.0
      %5506 = vmatprep.subr.mxu0 0.0
      %5507 = vmatpush2.msra.mxu0 0.0
      %5508 = vmatprep.subr.mxu0 0.0
      %5509 = vmatpush2.msra.mxu0 0.0
      %5510 = vmatprep.subr.mxu0 0.0
      %5511 = vmatpush2.msra.mxu0 0.0
      %5512 = vmatprep.subr.mxu0 0.0
      %5513 = vmatpush2.msra.mxu0 0.0
      %5514 = vmatprep.subr.mxu0 0.0
      %5515 = vmatpush2.msra.mxu0 0.0
      %5516 = vmatprep.subr.mxu0 0.0
      %5517 = vmatpush2.msra.mxu0 0.0
      %5518 = vmatprep.subr.mxu0 0.0
      %5519 = vmatpush2.msra.mxu0 0.0
      %5520 = vmatprep.subr.mxu0 0.0
      %5521 = vmatpush2.msra.mxu0 0.0
      %5522 = vmatprep.subr.mxu0 0.0
      %5523 = vmatpush2.msra.mxu0 0.0
      %5524 = vmatprep.subr.mxu0 0.0
      %5525 = vmatpush2.msra.mxu0 0.0
      %5526 = vmatprep.subr.mxu0 0.0
      %5527 = vmatpush2.msra.mxu0 0.0
      %5528 = vmatprep.subr.mxu0 0.0
      %5529 = vmatpush2.msra.mxu0 0.0
      %5530 = vmatprep.subr.mxu0 0.0
      %5531 = vmatpush2.msra.mxu0 0.0
      %5532 = vmatprep.subr.mxu0 0.0
      %5533 = vmatpush2.msra.mxu0 0.0
      %5534 = vmatprep.subr.mxu0 0.0
      %5535 = vmatpush2.msra.mxu0 0.0
      %5536 = vmatprep.mubr.f32.mxu0 0.0
      %5537 = vmatmul.mubr.f32.gmra.mxu0 %v5470
      %v5538 = vpop.f32.mrf.mxu0
      %v5539 = vadd.f32 0.0, %v5538
      %v5540 = vpop.f32.mrf.mxu0
      %5541 = vdwg.mxu0
      %v5543 = vsel %vm656, %v5461, 0
      %5545 = vmatprep.subr.mxu0 0.0
      %5546 = vmatpush1.msra.mxu0 0.0
      %5547 = vmatprep.subr.mxu0 0.0
      %5548 = vmatpush1.msra.mxu0 0.0
      %5549 = vmatprep.subr.mxu0 0.0
      %5550 = vmatpush1.msra.mxu0 0.0
      %5551 = vmatprep.subr.mxu0 0.0
      %5552 = vmatpush1.msra.mxu0 0.0
      %5553 = vmatprep.subr.mxu0 0.0
      %5554 = vmatpush1.msra.mxu0 0.0
      %5555 = vmatprep.subr.mxu0 0.0
      %5556 = vmatpush1.msra.mxu0 0.0
      %5557 = vmatprep.subr.mxu0 0.0
      %5558 = vmatpush1.msra.mxu0 0.0
      %5559 = vmatprep.subr.mxu0 0.0
      %5560 = vmatpush1.msra.mxu0 0.0
      %5561 = vmatprep.subr.mxu0 0.0
      %5562 = vmatpush1.msra.mxu0 0.0
      %5563 = vmatprep.subr.mxu0 0.0
      %5564 = vmatpush1.msra.mxu0 0.0
      %5565 = vmatprep.subr.mxu0 0.0
      %5566 = vmatpush1.msra.mxu0 0.0
      %5567 = vmatprep.subr.mxu0 0.0
      %5568 = vmatpush1.msra.mxu0 0.0
      %5569 = vmatprep.subr.mxu0 0.0
      %5570 = vmatpush1.msra.mxu0 0.0
      %5571 = vmatprep.subr.mxu0 0.0
      %5572 = vmatpush1.msra.mxu0 0.0
      %5573 = vmatprep.subr.mxu0 0.0
      %5574 = vmatpush1.msra.mxu0 %v369
      %5575 = vmatprep.subr.mxu0 0.0
      %5576 = vmatpush1.msra.mxu0 %v368
      %5577 = vmatprep.subr.mxu0 0.0
      %5578 = vmatpush2.msra.mxu0 0.0
      %5579 = vmatprep.subr.mxu0 0.0
      %5580 = vmatpush2.msra.mxu0 0.0
      %5581 = vmatprep.subr.mxu0 0.0
      %5582 = vmatpush2.msra.mxu0 0.0
      %5583 = vmatprep.subr.mxu0 0.0
      %5584 = vmatpush2.msra.mxu0 0.0
      %5585 = vmatprep.subr.mxu0 0.0
      %5586 = vmatpush2.msra.mxu0 0.0
      %5587 = vmatprep.subr.mxu0 0.0
      %5588 = vmatpush2.msra.mxu0 0.0
      %5589 = vmatprep.subr.mxu0 0.0
      %5590 = vmatpush2.msra.mxu0 0.0
      %5591 = vmatprep.subr.mxu0 0.0
      %5592 = vmatpush2.msra.mxu0 0.0
      %5593 = vmatprep.subr.mxu0 0.0
      %5594 = vmatpush2.msra.mxu0 0.0
      %5595 = vmatprep.subr.mxu0 0.0
      %5596 = vmatpush2.msra.mxu0 0.0
      %5597 = vmatprep.subr.mxu0 0.0
      %5598 = vmatpush2.msra.mxu0 0.0
      %5599 = vmatprep.subr.mxu0 0.0
      %5600 = vmatpush2.msra.mxu0 0.0
      %5601 = vmatprep.subr.mxu0 0.0
      %5602 = vmatpush2.msra.mxu0 0.0
      %5603 = vmatprep.subr.mxu0 0.0
      %5604 = vmatpush2.msra.mxu0 0.0
      %5605 = vmatprep.subr.mxu0 0.0
      %5606 = vmatpush2.msra.mxu0 0.0
      %5607 = vmatprep.subr.mxu0 0.0
      %5608 = vmatpush2.msra.mxu0 0.0
      %5609 = vmatprep.mubr.f32.mxu0 0.0
      %5610 = vmatmul.mubr.f32.gmra.mxu0 %v5543
      %v5611 = vpop.f32.mrf.mxu0
      %v5612 = vadd.f32 %v5539, %v5611
      %v5613 = vpop.f32.mrf.mxu0
      %5614 = vdwg.mxu0
      %v5615 = vadd.f32 %v5612, %v807
      %v5616 = vsel %vm397, %v5615, -inf
      %5617 = vmax.xlane.f32.xlu0 %v5616
      %v5618 = vpop.xlane.xlu0 %5617
      %vm5619 = vcmp.eq.f32.partialorder %v5615, %v5618
      %v5620 = vsel %vm5619, %v375, 8.0
      %v5621 = vsel %vm397, %v5620, inf
      %5622 = vmin.xlane.f32.xlu0 %v5621
      %v5623 = vpop.xlane.xlu0 %5622
      %v5624 = vsub.f32 %v5615, %v5618
      %v5625 = vmul.f32 %v5624, 1.442695
      %v5626 = vpow.pop %v5625
      %v5627 = vsel %vm397, %v5626, 0.0
      %5628 = vadd.xlane.f32.xlu0 %v5627
      %v5629 = vpop.xlane.xlu0 %5628
      %vm5630 = vcmp.eq.s32.totalorder %v374, 14
      %v5631 = vsel %vm5630, %v364, 0.0
      %v5632 = vsel %vm656, %v5631, 0.0
      %5633 = vadd.xlane.f32.xlu0 %v5632
      %v5634 = vpop.xlane.xlu0 %5633
      %v5635 = vmul.f32 %v5634, %v5629
      %5636 = vset.pattern.permute.xlu0 0
      %5637 = vperm.xlu0 %5636, %v5450
      %v5638 = vpop.permute.xlu0 %5637
      %vm5639 = vcmp.eq.s32.totalorder %v374, %v5638
      %v5640 = vsel %vm5639, 1, 0
      %v5641 = vcvt.s32.f32 %v5640
      %v5642 = vmul.f32 %v362, %v5641
      %v5643 = vsel %vm497, %v5642, 0.0
      %5644 = vadd.xlane.f32.xlu0 %v5643
      %v5645 = vpop.xlane.xlu0 %5644
      %v5646 = vmul.f32 %v363, %v5641
      %v5647 = vsel %vm497, %v5646, 0.0
      %5648 = vadd.xlane.f32.xlu0 %v5647
      %v5649 = vpop.xlane.xlu0 %5648
      %v5650 = vadd.f32 %v5445, %v5635
      %vm5651 = vcmp.lt.f32.partialorder %v5650, %v5645
      %v5652 = vsel %vm5651, %v5650, %v5645
      %v5653 = vsel %vm5651, %v5623, %v5649
      %5654 = vset.pattern.permute.xlu0 0
      %5655 = vperm.xlu0 %5654, %v5444
      %v5656 = vpop.permute.xlu0 %5655
      %vm5657 = vcmp.eq.s32.totalorder %v374, %v5656
      %v5658 = vsel %vm5449, 1, 0
      %5659 = vset.pattern.permute.xlu0 0
      %5660 = vperm.xlu0 %5659, %v5658
      %v5661 = vpop.permute.xlu0 %5660
      %vm5662 = vcmp.eq.s32.totalorder %v5661, 1
      %vm5663 = vmand %vm5657, %vm5662
      %5665 = vset.pattern.permute.xlu0 0
      %5666 = vperm.xlu0 %5665, %v5652
      %v5667 = vpop.permute.xlu0 %5666
      %v5669 = vsel %vm5663, %v5667, %v5434
      %5671 = vset.pattern.permute.xlu0 0
      %5672 = vperm.xlu0 %5671, %v5653
      %v5673 = vpop.permute.xlu0 %5672
      %v5675 = vsel %vm5663, %v5673, %v5440
      %5677 = vrot.lane.b32.xlu0 %v5675, 16
      %v5678 = vpop.permute.xlu0 %5677
      %v5680 = vsel %vm656, %v5669, %v5678
      %vm5681 = vcmask 261120
      %5682 = vst.msk [vmem:[%s361] sm:$0xff] %vm5681, %v5680
      %p5683 = scmp.lt.s32.totalorder %s20, 1
      %s5684 = scalar_select %p5683, %s20, 1
      %s5685 = smul.addr %s5684, 8
      %s5686 = scalar_lea.vmem %s9, %s5685
      // Predicated region
      $region57: #{piles_forward.1} parent=55 // pred_check
        %p5687 = pneg %p242
      $region58: #{piles_forward.1} parent=55 // pred_check_branch
        %5689 = sbr.rel (%p5687) target = $region60
      $region59: #{piles_forward.1} parent=55 // pred_region
        _
      $region60: #{piles_forward.1} parent=55 // pred_fallthru
        _
    $region56: #{piles_forward.1} parent=5 // pred_fallthru
      _
    %p5690 = scmp.le.s32.totalorder 2, %s15
    // Predicated region
    $region61: #{piles_forward.1} parent=5 // pred_check
      %p5691 = pneg %p5690
    $region62: #{piles_forward.1} parent=5 // pred_check_branch
      %5693 = sbr.rel (%p5691) target = $region64
    $region63: #{piles_forward.1} parent=5 // pred_region
      %s5694 = ssub.s32 %s15, 2
      // Predicated region
      $region65: #{piles_forward.1} parent=63 // pred_check
        %p5695 = pneg %p248
      $region66: #{piles_forward.1} parent=63 // pred_check_branch
        %5697 = sbr.rel (%p5695) target = $region68
      $region67: #{piles_forward.1} parent=63 // pred_region
        %p5698 = scmp.lt.s32.totalorder %s21, 1
        %s5699 = scalar_select %p5698, %s21, 1
        %s5700 = smul.addr %s5699, 8
        %s5701 = scalar_lea.vmem %s9, %s5700
      $region68: #{piles_forward.1} parent=63 // pred_fallthru
        _
    $region64: #{piles_forward.1} parent=5 // pred_fallthru
      _
  $region6: #{piles_forward.1} parent=0 // loop_footer
    %s19 = sadd.s32 1, %s15
  $region7: #{piles_forward.1} parent=0 // loop_footer_branch
    %14 = sbr.rel target = $region3
  $region8: #{piles_forward.1} parent=0 // loop_exit
    _

</llo_original>
